<compile_context>
chip_gen: v6e
topology: v6e:2x2x1
jax: 0.10.0
libtpu: 0.0.40
codegen_flags: <defaults>
</compile_context>

<pallas_src>
import jax
import jax.numpy as jnp
from jax import lax
from jax.experimental import pallas as pl
from jax.experimental.pallas import tpu as pltpu


# ------------------------------ kernel helpers ------------------------------

def _gate_activations(gates, H, is_g):
    """i/f/o -> sigmoid, g -> tanh.

    If H is lane-aligned (multiple of 128) slice per gate so the EUP evaluates
    exactly one transcendental per lane (4H lanes / step).  For small non-aligned
    H, evaluate both over the full vreg and blend with a hoisted lane mask
    instead of four sub-128-lane sliced transcendentals.
    """
    if is_g is None:
        i = jax.nn.sigmoid(gates[:, 0:H])
        f = jax.nn.sigmoid(gates[:, H:2 * H])
        g = jnp.tanh(gates[:, 2 * H:3 * H])
        o = jax.nn.sigmoid(gates[:, 3 * H:4 * H])
        return i, f, g, o
    act = jnp.where(is_g, jnp.tanh(gates), jax.nn.sigmoid(gates))
    return act[:, 0:H], act[:, H:2 * H], act[:, 2 * H:3 * H], act[:, 3 * H:4 * H]


def bilstm_kernel(x_ref, wih_f_ref, whh_f_ref, bf_ref,
                  wih_b_ref, bb_ref,
                  wfc_f_ref, wfc_b_ref, bfc_ref,
                  out_ref, h_ref, c_ref, xg_ref):
    t = pl.program_id(1)
    nt = pl.num_programs(1)

    t_chunk, b_tile, E = x_ref.shape
    H = whh_f_ref.shape[0]
    cd = wih_f_ref.dtype                      # matmul compute dtype (bf16 or f32)

    @pl.when(t == 0)
    def _():
        h_ref[...] = jnp.zeros_like(h_ref)
        c_ref[...] = jnp.zeros_like(c_ref)

    # Hoisted input projection: one (t_chunk*b_tile, E) x (E, 4H) MXU matmul per
    # time chunk, written to VMEM scratch so the recurrence only keeps the
    # current b_tile-row slice live (spill-proof at large t_chunk).
    xg_ref[...] = (
        jnp.dot(x_ref[...].reshape(t_chunk * b_tile, E), wih_f_ref[...],
                preferred_element_type=jnp.float32)
        + bf_ref[...])

    w_hh = whh_f_ref[...]

    is_g = None
    if H % 128 != 0:
        lane = lax.broadcasted_iota(jnp.int32, (b_tile, 4 * H), 1)
        is_g = (lane >= 2 * H) & (lane < 3 * H)

    def step(s, carry):
        h, c = carry
        row = pl.multiple_of(s * b_tile, b_tile)
        gates = xg_ref[pl.ds(row, b_tile), :] + jnp.dot(
            h.astype(cd), w_hh, preferred_element_type=jnp.float32)
        i, f, g, o = _gate_activations(gates, H, is_g)
        c = f * c + i * g
        h = o * jnp.tanh(c)
        return h, c

    # Serial recurrence over the chunk: only h @ w_hh + elementwise per step.
    h, c = lax.fori_loop(0, t_chunk, step, (h_ref[...], c_ref[...]), unroll=True)
    h_ref[...] = h
    c_ref[...] = c

    # Last time chunk: backward-direction single step + FC on the last timestep.
    @pl.when(t == nt - 1)
    def _():
        # Backward output at position T-1 is its first step from zero state, so
        # the h0 @ w_hh_b term is identically zero and is dropped entirely.
        gates_b = (jnp.dot(x_ref[t_chunk - 1], wih_b_ref[...],
                           preferred_element_type=jnp.float32) + bb_ref[...])
        i_b, _, g_b, o_b = _gate_activations(gates_b, H, is_g)
        c_b = i_b * g_b
        h_b = o_b * jnp.tanh(c_b)
        # FC pre-split (w_fc[:H], w_fc[H:]) -> no in-kernel concat; the output
        # slab is padded to a multiple of 128 lanes -> unmasked full-width store.
        out = (jnp.dot(h.astype(cd), wfc_f_ref[...],
                       preferred_element_type=jnp.float32)
               + jnp.dot(h_b.astype(cd), wfc_b_ref[...],
                         preferred_element_type=jnp.float32)
               + bfc_ref[...])
        out_ref[...] = out.astype(out_ref.dtype)


# ------------------------------ host-side sizing ----------------------------

def _round_up(x, m):
    return ((x + m - 1) // m) * m


def _largest_divisor_leq(n, k):
    k = max(1, min(int(k), int(n)))
    while n % k:
        k -= 1
    return k


def _vmem_capacity_bytes():
    try:
        cap = getattr(pltpu.get_tpu_info(), "vmem_capacity_bytes", None)
        if cap:
            return int(cap)
    except Exception:
        pass
    return 64 * 1024 * 1024       # v7x per-core floor; safe on every generation


def _vmem_estimate(t_chunk, b_tile, E, H, C_pad, itemsize):
    x_bytes = 2 * t_chunk * b_tile * E * itemsize                  # dbl-buffered x
    w_bytes = 2 * itemsize * (2 * E * 4 * H + H * 4 * H + 2 * H * C_pad)
    b_bytes = 2 * 4 * (2 * 4 * H + C_pad)                          # f32 biases
    scr_bytes = 4 * (t_chunk * b_tile * 4 * H + 2 * b_tile * H)    # xg + h + c
    out_bytes = 2 * b_tile * C_pad * 4
    return x_bytes + w_bytes + b_bytes + scr_bytes + out_bytes


def bilstm_forward(tokens, params, *, compute_dtype=jnp.bfloat16,
                   t_chunk=32, b_tile=128):
    """Matches BiLSTM.forward: embedding -> biLSTM -> fc(lstm_out[:, -1, :])."""
    # Embedding gathered directly in time-major order: avoids a (B,T,E)->(T,B,E)
    # transpose round-trip through HBM.
    # TODO(synk): the embedding layer's padding-mask output has no consumer in
    # the module's forward(), so it is not produced.
    x = params["embedding"][tokens.T].astype(compute_dtype)        # (T, B, E)
    T, B, E = x.shape
    H = params["w_hh_f"].shape[0]
    C = params["b_fc"].shape[-1]
    C_pad = _round_up(C, 128)
    cd = compute_dtype
    itemsize = jnp.dtype(cd).itemsize

    # ---- batch tiling: wide tiles for MXU M-dim fill; guarantee >=2 tiles so
    # ---- the "parallel" axis can feed both v7x TensorCores.
    b_tile = max(8, (int(b_tile) // 8) * 8)
    b_pad = _round_up(max(B, b_tile), b_tile)
    if b_pad // b_tile == 1 and b_tile >= 16 and (b_tile // 2) % 8 == 0:
        b_tile //= 2
    n_btiles = b_pad // b_tile

    # ---- time chunking: largest divisor of T under the VMEM budget (proper
    # ---- tail handling instead of the old t_chunk=T fallback).
    vmem_cap = _vmem_capacity_bytes()
    budget = int(0.70 * vmem_cap)
    req = max(1, min(int(t_chunk), T))
    tc = _largest_divisor_leq(T, req)
    if tc * 4 <= req and _vmem_estimate(T, b_tile, E, H, C_pad, itemsize) <= budget:
        tc = T                      # awkward divisors, short sequence: take it whole
    while tc > 1 and _vmem_estimate(tc, b_tile, E, H, C_pad, itemsize) > budget:
        tc = _largest_divisor_leq(T, tc - 1)
    t_chunk = tc

    est = _vmem_estimate(t_chunk, b_tile, E, H, C_pad, itemsize)
    vmem_limit = int(min(max(32 * 1024 * 1024, est + (8 << 20)),
                         int(0.75 * vmem_cap)))

    if b_pad != B:
        x = jnp.pad(x, ((0, 0), (0, b_pad - B), (0, 0)))

    wih_f = params["w_ih_f"].astype(cd)
    whh_f = params["w_hh_f"].astype(cd)
    wih_b = params["w_ih_b"].astype(cd)
    wfc_pad = jnp.pad(params["w_fc"], ((0, 0), (0, C_pad - C)))
    wfc_f = wfc_pad[:H].astype(cd)           # FC pre-split: no in-kernel concat
    wfc_b = wfc_pad[H:].astype(cd)
    bfc = jnp.pad(params["b_fc"], ((0, 0), (0, C_pad - C)))
    bf = params["b_f"]
    bb = params["b_b"]

    grid = (n_btiles, T // t_chunk)          # (batch tiles "parallel", time "arbitrary")
    const = lambda b, t: (0, 0)              # resident weights

    def run(single_buffer_weights):
        if single_buffer_weights:
            resident = lambda shape: pl.BlockSpec(shape, const,
                                                  pipeline_mode=pl.Buffered(1))
        else:
            resident = lambda shape: pl.BlockSpec(shape, const)
        return pl.pallas_call(
            bilstm_kernel,
            out_shape=jax.ShapeDtypeStruct((b_pad, C_pad), jnp.float32),
            grid_spec=pltpu.PrefetchScalarGridSpec(
                num_scalar_prefetch=0,
                grid=grid,
                in_specs=[
                    pl.BlockSpec((t_chunk, b_tile, E), lambda b, t: (t, b, 0)),
                    resident((E, 4 * H)),
                    resident((H, 4 * H)),
                    resident((1, 4 * H)),
                    resident((E, 4 * H)),
                    resident((1, 4 * H)),
                    resident((H, C_pad)),
                    resident((H, C_pad)),
                    resident((1, C_pad)),
                ],
                out_specs=pl.BlockSpec((b_tile, C_pad), lambda b, t: (b, 0)),
                scratch_shapes=[
                    pltpu.VMEM((b_tile, H), jnp.float32),                # h carry
                    pltpu.VMEM((b_tile, H), jnp.float32),                # c carry
                    pltpu.VMEM((t_chunk * b_tile, 4 * H), jnp.float32),  # xg
                ]),
            compiler_params=pltpu.CompilerParams(
                dimension_semantics=("parallel", "arbitrary"),
                vmem_limit_bytes=vmem_limit),
        )(x, wih_f, whh_f, bf, wih_b, bb, wfc_f, wfc_b, bfc)

    if hasattr(pl, "Buffered"):
        try:
            out = run(True)
        except Exception:           # older jax without pipeline_mode=Buffered(1)
            out = run(False)
    else:
        out = run(False)
    return out[:B, :C]


# ------------------------- pure-JAX reference (f32) -------------------------

def _lstm_step_ref(x_t, h, c, w_ih, w_hh, b, H):
    gates = x_t @ w_ih + h @ w_hh + b
    i = jax.nn.sigmoid(gates[:, 0 * H:1 * H])
    f = jax.nn.sigmoid(gates[:, 1 * H:2 * H])
    g = jnp.tanh(gates[:, 2 * H:3 * H])
    o = jax.nn.sigmoid(gates[:, 3 * H:4 * H])
    c_new = f * c + i * g
    return o * jnp.tanh(c_new), c_new


def reference_forward(tokens, params):
    """Full bidirectional scan with PyTorch LSTM semantics."""
    emb = params["embedding"][tokens]          # (B, T, E)
    B = emb.shape[0]
    H = params["w_hh_f"].shape[0]
    xs = jnp.transpose(emb, (1, 0, 2))         # (T, B, E)

    def run_dir(xs_dir, w_ih, w_hh, b):
        def step(carry, x_t):
            h, c = _lstm_step_ref(x_t, carry[0], carry[1], w_ih, w_hh, b, H)
            return (h, c), h
        h0 = jnp.zeros((B, H), jnp.float32)
        c0 = jnp.zeros((B, H), jnp.float32)
        _, hs = lax.scan(step, (h0, c0), xs_dir)
        return hs                              # (T, B, H)

    hs_f = run_dir(xs, params["w_ih_f"], params["w_hh_f"], params["b_f"])
    hs_b = run_dir(xs[::-1], params["w_ih_b"], params["w_hh_b"], params["b_b"])[::-1]
    lstm_out_last = jnp.concatenate([hs_f[-1], hs_b[-1]], axis=-1)   # (B, 2H)
    return lstm_out_last @ params["w_fc"] + params["b_fc"]


def init_params(key, vocab, E, H, C):
    ks = jax.random.split(key, 12)
    s_lstm = 1.0 / float(H) ** 0.5
    s_fc = 1.0 / float(2 * H) ** 0.5

    def u(k, shape, s):
        return jax.random.uniform(k, shape, jnp.float32, -s, s)

    emb = jax.random.normal(ks[0], (vocab, E), jnp.float32)
    # PyTorch shapes: weight_ih (4H, E), weight_hh (4H, H), biases (4H,)
    w_ih_f = u(ks[1], (4 * H, E), s_lstm)
    w_hh_f = u(ks[2], (4 * H, H), s_lstm)
    b_ih_f = u(ks[3], (4 * H,), s_lstm)
    b_hh_f = u(ks[4], (4 * H,), s_lstm)
    w_ih_b = u(ks[5], (4 * H, E), s_lstm)
    w_hh_b = u(ks[6], (4 * H, H), s_lstm)
    b_ih_b = u(ks[7], (4 * H,), s_lstm)
    b_hh_b = u(ks[8], (4 * H,), s_lstm)
    w_fc = u(ks[9], (C, 2 * H), s_fc)
    b_fc = u(ks[10], (C,), s_fc)

    return dict(
        embedding=emb,
        w_ih_f=w_ih_f.T, w_hh_f=w_hh_f.T, b_f=(b_ih_f + b_hh_f)[None, :],
        w_ih_b=w_ih_b.T, w_hh_b=w_hh_b.T, b_b=(b_ih_b + b_hh_b)[None, :],
        w_fc=w_fc.T, b_fc=b_fc[None, :],
    )


if __name__ == "__main__":
    B, T, E, H, C, VOCAB = 2, 8, 32, 32, 4, 50
    key = jax.random.PRNGKey(0)
    k_params, k_tokens = jax.random.split(key)

    params = init_params(k_params, VOCAB, E, H, C)
    tokens = jax.random.randint(k_tokens, (B, T), 0, VOCAB, dtype=jnp.int32)

    ref = reference_forward(tokens, params)

    # f32 path: tight-tolerance correctness check against the pure-JAX reference.
    out_f32 = jax.block_until_ready(
        bilstm_forward(tokens, params, compute_dtype=jnp.float32))
    assert out_f32.shape == (B, C), out_f32.shape
    assert jnp.allclose(out_f32, ref, atol=1e-5, rtol=1e-5), (out_f32, ref)

    # bf16 path (production config: 2x MXU rate, half the VMEM/HBM traffic).
    out_bf16 = jax.block_until_ready(
        bilstm_forward(tokens, params, compute_dtype=jnp.bfloat16))
    assert jnp.allclose(out_bf16, ref, atol=5e-2, rtol=5e-2), (out_bf16, ref)

    print("KERNEL_OK")
</pallas_src>

<mosaic_0001>
module attributes {stable_mosaic.version = 11 : i64} {
  func.func @bilstm_kernel(%arg0: i32, %arg1: i32, %arg2: memref<8x64x32xf32, #tpu.memory_space<vmem>>, %arg3: memref<32x128xf32, #tpu.memory_space<vmem>>, %arg4: memref<32x128xf32, #tpu.memory_space<vmem>>, %arg5: memref<1x128xf32, #tpu.memory_space<vmem>>, %arg6: memref<32x128xf32, #tpu.memory_space<vmem>>, %arg7: memref<1x128xf32, #tpu.memory_space<vmem>>, %arg8: memref<32x128xf32, #tpu.memory_space<vmem>>, %arg9: memref<32x128xf32, #tpu.memory_space<vmem>>, %arg10: memref<1x128xf32, #tpu.memory_space<vmem>>, %arg11: memref<64x128xf32, #tpu.memory_space<vmem>>, %arg12: memref<64x32xf32, #tpu.memory_space<vmem>>, %arg13: memref<64x32xf32, #tpu.memory_space<vmem>>, %arg14: memref<512x128xf32, #tpu.memory_space<vmem>>) attributes {dimension_semantics = [#tpu.dimension_semantics<parallel>, #tpu.dimension_semantics<arbitrary>], iteration_bounds = array<i64: 2, 1>, scalar_prefetch = 0 : i64, scratch_operands = 3 : i64, tpu.core_type = #tpu.core_type<tc>, window_params = [{transform_indices = @transform_0, window_bounds = array<i64: 8, 64, 32>}, {pipeline_mode = #tpu.pipeline_mode<synchronous>, transform_indices = @transform_1, window_bounds = array<i64: 32, 128>}, {pipeline_mode = #tpu.pipeline_mode<synchronous>, transform_indices = @transform_2, window_bounds = array<i64: 32, 128>}, {pipeline_mode = #tpu.pipeline_mode<synchronous>, transform_indices = @transform_3, window_bounds = array<i64: 1, 128>}, {pipeline_mode = #tpu.pipeline_mode<synchronous>, transform_indices = @transform_4, window_bounds = array<i64: 32, 128>}, {pipeline_mode = #tpu.pipeline_mode<synchronous>, transform_indices = @transform_5, window_bounds = array<i64: 1, 128>}, {pipeline_mode = #tpu.pipeline_mode<synchronous>, transform_indices = @transform_6, window_bounds = array<i64: 32, 128>}, {pipeline_mode = #tpu.pipeline_mode<synchronous>, transform_indices = @transform_7, window_bounds = array<i64: 32, 128>}, {pipeline_mode = #tpu.pipeline_mode<synchronous>, transform_indices = @transform_8, window_bounds = array<i64: 1, 128>}, {transform_indices = @transform_9, window_bounds = array<i64: 64, 128>}]} {
    %c0_i32 = arith.constant 0 : i32
    %0 = arith.cmpi eq, %arg1, %c0_i32 : i32
    %1 = arith.extui %0 : i1 to i32
    %c0_i32_0 = arith.constant 0 : i32
    %2 = arith.cmpi ne, %1, %c0_i32_0 : i32
    scf.if %2 {
      %cst_54 = arith.constant 0.000000e+00 : f32
      %201 = vector.broadcast %cst_54 : f32 to vector<64x32xf32>
      %c0_55 = arith.constant 0 : index
      %c0_56 = arith.constant 0 : index
      %202 = vector.load %arg12[%c0_55, %c0_56] : memref<64x32xf32, #tpu.memory_space<vmem>>, vector<64x32xf32>
      tpu.vector_store %arg12[%c0_55, %c0_56], %201 {strides = array<i32>} : memref<64x32xf32, #tpu.memory_space<vmem>>, vector<64x32xf32>,
      %cst_57 = arith.constant 0.000000e+00 : f32
      %203 = vector.broadcast %cst_57 : f32 to vector<64x32xf32>
      %c0_58 = arith.constant 0 : index
      %c0_59 = arith.constant 0 : index
      %204 = vector.load %arg13[%c0_58, %c0_59] : memref<64x32xf32, #tpu.memory_space<vmem>>, vector<64x32xf32>
      tpu.vector_store %arg13[%c0_58, %c0_59], %203 {strides = array<i32>} : memref<64x32xf32, #tpu.memory_space<vmem>>, vector<64x32xf32>,
    } else {
    }
    %c0 = arith.constant 0 : index
    %c0_1 = arith.constant 0 : index
    %c0_2 = arith.constant 0 : index
    %3 = vector.load %arg2[%c0, %c0_1, %c0_2] : memref<8x64x32xf32, #tpu.memory_space<vmem>>, vector<8x64x32xf32>
    %4 = vector.shape_cast %3 : vector<8x64x32xf32> to vector<512x32xf32>
    %c0_3 = arith.constant 0 : index
    %c0_4 = arith.constant 0 : index
    %5 = vector.load %arg3[%c0_3, %c0_4] : memref<32x128xf32, #tpu.memory_space<vmem>>, vector<32x128xf32>
    %cst = arith.constant dense<0.000000e+00> : vector<512x128xf32>
    %6 = tpu.matmul %4, %5, %cst {dimension_numbers = #tpu.dot_dimension_numbers<[1], [0], [0], [1], [0, 0, 1, 1], [], []>} : vector<512x32xf32>, vector<32x128xf32>, vector<512x128xf32> -> vector<512x128xf32>
    %c0_5 = arith.constant 0 : index
    %c0_6 = arith.constant 0 : index
    %7 = vector.load %arg5[%c0_5, %c0_6] : memref<1x128xf32, #tpu.memory_space<vmem>>, vector<1x128xf32>
    %8 = vector.broadcast %7 : vector<1x128xf32> to vector<512x128xf32>
    %9 = arith.addf %6, %8 : vector<512x128xf32>
    %c0_7 = arith.constant 0 : index
    %c0_8 = arith.constant 0 : index
    %10 = vector.load %arg14[%c0_7, %c0_8] : memref<512x128xf32, #tpu.memory_space<vmem>>, vector<512x128xf32>
    tpu.vector_store %arg14[%c0_7, %c0_8], %9 {strides = array<i32>} : memref<512x128xf32, #tpu.memory_space<vmem>>, vector<512x128xf32>,
    %c0_9 = arith.constant 0 : index
    %c0_10 = arith.constant 0 : index
    %11 = vector.load %arg4[%c0_9, %c0_10] : memref<32x128xf32, #tpu.memory_space<vmem>>, vector<32x128xf32>
    %12 = tpu.iota {dimensions = array<i32: 1>} : vector<64x128xi32>
    %c64_i32 = arith.constant 64 : i32
    %13 = vector.broadcast %c64_i32 : i32 to vector<64x128xi32>
    %14 = arith.cmpi sge, %12, %13 : vector<64x128xi32>
    %c96_i32 = arith.constant 96 : i32
    %15 = vector.broadcast %c96_i32 : i32 to vector<64x128xi32>
    %16 = arith.cmpi slt, %12, %15 : vector<64x128xi32>
    %17 = arith.andi %14, %16 : vector<64x128xi1>
    %c0_11 = arith.constant 0 : index
    %c0_12 = arith.constant 0 : index
    %18 = vector.load %arg12[%c0_11, %c0_12] : memref<64x32xf32, #tpu.memory_space<vmem>>, vector<64x32xf32>
    %c0_13 = arith.constant 0 : index
    %c0_14 = arith.constant 0 : index
    %19 = vector.load %arg13[%c0_13, %c0_14] : memref<64x32xf32, #tpu.memory_space<vmem>>, vector<64x32xf32>
    %c0_i32_15 = arith.constant 0 : i32
    %c64_i32_16 = arith.constant 64 : i32
    %20 = arith.muli %c0_i32_15, %c64_i32_16 : i32
    %21 = tpu.assume_multiple %20, 64 : i32
    %22 = arith.index_cast %21 : i32 to index
    %c0_17 = arith.constant 0 : index
    %23 = vector.load %arg14[%22, %c0_17] : memref<512x128xf32, #tpu.memory_space<vmem>>, vector<64x128xf32>
    %cst_18 = arith.constant dense<0.000000e+00> : vector<64x128xf32>
    %24 = tpu.matmul %18, %11, %cst_18 {dimension_numbers = #tpu.dot_dimension_numbers<[1], [0], [0], [1], [0, 0, 1, 1], [], []>} : vector<64x32xf32>, vector<32x128xf32>, vector<64x128xf32> -> vector<64x128xf32>
    %25 = arith.addf %23, %24 : vector<64x128xf32>
    %26 = math.tanh %25 : vector<64x128xf32>
    %27 = arith.negf %25 : vector<64x128xf32>
    %28 = math.exp %27 : vector<64x128xf32>
    %cst_19 = arith.constant 1.000000e+00 : f32
    %29 = vector.broadcast %cst_19 : f32 to vector<64x128xf32>
    %30 = arith.addf %29, %28 : vector<64x128xf32>
    %31 = arith.divf %29, %30 : vector<64x128xf32>
    %32 = arith.select %17, %26, %31 : vector<64x128xi1>, vector<64x128xf32>
    %33 = vector.extract_strided_slice %32 {offsets = [0, 0], sizes = [64, 32], strides = [1, 1]} : vector<64x128xf32> to vector<64x32xf32>
    %34 = vector.extract_strided_slice %32 {offsets = [0, 32], sizes = [64, 32], strides = [1, 1]} : vector<64x128xf32> to vector<64x32xf32>
    %35 = vector.extract_strided_slice %32 {offsets = [0, 64], sizes = [64, 32], strides = [1, 1]} : vector<64x128xf32> to vector<64x32xf32>
    %36 = vector.extract_strided_slice %32 {offsets = [0, 96], sizes = [64, 32], strides = [1, 1]} : vector<64x128xf32> to vector<64x32xf32>
    %37 = arith.mulf %34, %19 : vector<64x32xf32>
    %38 = arith.mulf %33, %35 : vector<64x32xf32>
    %39 = arith.addf %37, %38 : vector<64x32xf32>
    %40 = math.tanh %39 : vector<64x32xf32>
    %41 = arith.mulf %36, %40 : vector<64x32xf32>
    %c1_i32 = arith.constant 1 : i32
    %c64_i32_20 = arith.constant 64 : i32
    %42 = arith.muli %c1_i32, %c64_i32_20 : i32
    %43 = tpu.assume_multiple %42, 64 : i32
    %44 = arith.index_cast %43 : i32 to index
    %c0_21 = arith.constant 0 : index
    %45 = vector.load %arg14[%44, %c0_21] : memref<512x128xf32, #tpu.memory_space<vmem>>, vector<64x128xf32>
    %cst_22 = arith.constant dense<0.000000e+00> : vector<64x128xf32>
    %46 = tpu.matmul %41, %11, %cst_22 {dimension_numbers = #tpu.dot_dimension_numbers<[1], [0], [0], [1], [0, 0, 1, 1], [], []>} : vector<64x32xf32>, vector<32x128xf32>, vector<64x128xf32> -> vector<64x128xf32>
    %47 = arith.addf %45, %46 : vector<64x128xf32>
    %48 = math.tanh %47 : vector<64x128xf32>
    %49 = arith.negf %47 : vector<64x128xf32>
    %50 = math.exp %49 : vector<64x128xf32>
    %cst_23 = arith.constant 1.000000e+00 : f32
    %51 = vector.broadcast %cst_23 : f32 to vector<64x128xf32>
    %52 = arith.addf %51, %50 : vector<64x128xf32>
    %53 = arith.divf %51, %52 : vector<64x128xf32>
    %54 = arith.select %17, %48, %53 : vector<64x128xi1>, vector<64x128xf32>
    %55 = vector.extract_strided_slice %54 {offsets = [0, 0], sizes = [64, 32], strides = [1, 1]} : vector<64x128xf32> to vector<64x32xf32>
    %56 = vector.extract_strided_slice %54 {offsets = [0, 32], sizes = [64, 32], strides = [1, 1]} : vector<64x128xf32> to vector<64x32xf32>
    %57 = vector.extract_strided_slice %54 {offsets = [0, 64], sizes = [64, 32], strides = [1, 1]} : vector<64x128xf32> to vector<64x32xf32>
    %58 = vector.extract_strided_slice %54 {offsets = [0, 96], sizes = [64, 32], strides = [1, 1]} : vector<64x128xf32> to vector<64x32xf32>
    %59 = arith.mulf %56, %39 : vector<64x32xf32>
    %60 = arith.mulf %55, %57 : vector<64x32xf32>
    %61 = arith.addf %59, %60 : vector<64x32xf32>
    %62 = math.tanh %61 : vector<64x32xf32>
    %63 = arith.mulf %58, %62 : vector<64x32xf32>
    %c2_i32 = arith.constant 2 : i32
    %c64_i32_24 = arith.constant 64 : i32
    %64 = arith.muli %c2_i32, %c64_i32_24 : i32
    %65 = tpu.assume_multiple %64, 64 : i32
    %66 = arith.index_cast %65 : i32 to index
    %c0_25 = arith.constant 0 : index
    %67 = vector.load %arg14[%66, %c0_25] : memref<512x128xf32, #tpu.memory_space<vmem>>, vector<64x128xf32>
    %cst_26 = arith.constant dense<0.000000e+00> : vector<64x128xf32>
    %68 = tpu.matmul %63, %11, %cst_26 {dimension_numbers = #tpu.dot_dimension_numbers<[1], [0], [0], [1], [0, 0, 1, 1], [], []>} : vector<64x32xf32>, vector<32x128xf32>, vector<64x128xf32> -> vector<64x128xf32>
    %69 = arith.addf %67, %68 : vector<64x128xf32>
    %70 = math.tanh %69 : vector<64x128xf32>
    %71 = arith.negf %69 : vector<64x128xf32>
    %72 = math.exp %71 : vector<64x128xf32>
    %cst_27 = arith.constant 1.000000e+00 : f32
    %73 = vector.broadcast %cst_27 : f32 to vector<64x128xf32>
    %74 = arith.addf %73, %72 : vector<64x128xf32>
    %75 = arith.divf %73, %74 : vector<64x128xf32>
    %76 = arith.select %17, %70, %75 : vector<64x128xi1>, vector<64x128xf32>
    %77 = vector.extract_strided_slice %76 {offsets = [0, 0], sizes = [64, 32], strides = [1, 1]} : vector<64x128xf32> to vector<64x32xf32>
    %78 = vector.extract_strided_slice %76 {offsets = [0, 32], sizes = [64, 32], strides = [1, 1]} : vector<64x128xf32> to vector<64x32xf32>
    %79 = vector.extract_strided_slice %76 {offsets = [0, 64], sizes = [64, 32], strides = [1, 1]} : vector<64x128xf32> to vector<64x32xf32>
    %80 = vector.extract_strided_slice %76 {offsets = [0, 96], sizes = [64, 32], strides = [1, 1]} : vector<64x128xf32> to vector<64x32xf32>
    %81 = arith.mulf %78, %61 : vector<64x32xf32>
    %82 = arith.mulf %77, %79 : vector<64x32xf32>
    %83 = arith.addf %81, %82 : vector<64x32xf32>
    %84 = math.tanh %83 : vector<64x32xf32>
    %85 = arith.mulf %80, %84 : vector<64x32xf32>
    %c3_i32 = arith.constant 3 : i32
    %c64_i32_28 = arith.constant 64 : i32
    %86 = arith.muli %c3_i32, %c64_i32_28 : i32
    %87 = tpu.assume_multiple %86, 64 : i32
    %88 = arith.index_cast %87 : i32 to index
    %c0_29 = arith.constant 0 : index
    %89 = vector.load %arg14[%88, %c0_29] : memref<512x128xf32, #tpu.memory_space<vmem>>, vector<64x128xf32>
    %cst_30 = arith.constant dense<0.000000e+00> : vector<64x128xf32>
    %90 = tpu.matmul %85, %11, %cst_30 {dimension_numbers = #tpu.dot_dimension_numbers<[1], [0], [0], [1], [0, 0, 1, 1], [], []>} : vector<64x32xf32>, vector<32x128xf32>, vector<64x128xf32> -> vector<64x128xf32>
    %91 = arith.addf %89, %90 : vector<64x128xf32>
    %92 = math.tanh %91 : vector<64x128xf32>
    %93 = arith.negf %91 : vector<64x128xf32>
    %94 = math.exp %93 : vector<64x128xf32>
    %cst_31 = arith.constant 1.000000e+00 : f32
    %95 = vector.broadcast %cst_31 : f32 to vector<64x128xf32>
    %96 = arith.addf %95, %94 : vector<64x128xf32>
    %97 = arith.divf %95, %96 : vector<64x128xf32>
    %98 = arith.select %17, %92, %97 : vector<64x128xi1>, vector<64x128xf32>
    %99 = vector.extract_strided_slice %98 {offsets = [0, 0], sizes = [64, 32], strides = [1, 1]} : vector<64x128xf32> to vector<64x32xf32>
    %100 = vector.extract_strided_slice %98 {offsets = [0, 32], sizes = [64, 32], strides = [1, 1]} : vector<64x128xf32> to vector<64x32xf32>
    %101 = vector.extract_strided_slice %98 {offsets = [0, 64], sizes = [64, 32], strides = [1, 1]} : vector<64x128xf32> to vector<64x32xf32>
    %102 = vector.extract_strided_slice %98 {offsets = [0, 96], sizes = [64, 32], strides = [1, 1]} : vector<64x128xf32> to vector<64x32xf32>
    %103 = arith.mulf %100, %83 : vector<64x32xf32>
    %104 = arith.mulf %99, %101 : vector<64x32xf32>
    %105 = arith.addf %103, %104 : vector<64x32xf32>
    %106 = math.tanh %105 : vector<64x32xf32>
    %107 = arith.mulf %102, %106 : vector<64x32xf32>
    %c4_i32 = arith.constant 4 : i32
    %c64_i32_32 = arith.constant 64 : i32
    %108 = arith.muli %c4_i32, %c64_i32_32 : i32
    %109 = tpu.assume_multiple %108, 64 : i32
    %110 = arith.index_cast %109 : i32 to index
    %c0_33 = arith.constant 0 : index
    %111 = vector.load %arg14[%110, %c0_33] : memref<512x128xf32, #tpu.memory_space<vmem>>, vector<64x128xf32>
    %cst_34 = arith.constant dense<0.000000e+00> : vector<64x128xf32>
    %112 = tpu.matmul %107, %11, %cst_34 {dimension_numbers = #tpu.dot_dimension_numbers<[1], [0], [0], [1], [0, 0, 1, 1], [], []>} : vector<64x32xf32>, vector<32x128xf32>, vector<64x128xf32> -> vector<64x128xf32>
    %113 = arith.addf %111, %112 : vector<64x128xf32>
    %114 = math.tanh %113 : vector<64x128xf32>
    %115 = arith.negf %113 : vector<64x128xf32>
    %116 = math.exp %115 : vector<64x128xf32>
    %cst_35 = arith.constant 1.000000e+00 : f32
    %117 = vector.broadcast %cst_35 : f32 to vector<64x128xf32>
    %118 = arith.addf %117, %116 : vector<64x128xf32>
    %119 = arith.divf %117, %118 : vector<64x128xf32>
    %120 = arith.select %17, %114, %119 : vector<64x128xi1>, vector<64x128xf32>
    %121 = vector.extract_strided_slice %120 {offsets = [0, 0], sizes = [64, 32], strides = [1, 1]} : vector<64x128xf32> to vector<64x32xf32>
    %122 = vector.extract_strided_slice %120 {offsets = [0, 32], sizes = [64, 32], strides = [1, 1]} : vector<64x128xf32> to vector<64x32xf32>
    %123 = vector.extract_strided_slice %120 {offsets = [0, 64], sizes = [64, 32], strides = [1, 1]} : vector<64x128xf32> to vector<64x32xf32>
    %124 = vector.extract_strided_slice %120 {offsets = [0, 96], sizes = [64, 32], strides = [1, 1]} : vector<64x128xf32> to vector<64x32xf32>
    %125 = arith.mulf %122, %105 : vector<64x32xf32>
    %126 = arith.mulf %121, %123 : vector<64x32xf32>
    %127 = arith.addf %125, %126 : vector<64x32xf32>
    %128 = math.tanh %127 : vector<64x32xf32>
    %129 = arith.mulf %124, %128 : vector<64x32xf32>
    %c5_i32 = arith.constant 5 : i32
    %c64_i32_36 = arith.constant 64 : i32
    %130 = arith.muli %c5_i32, %c64_i32_36 : i32
    %131 = tpu.assume_multiple %130, 64 : i32
    %132 = arith.index_cast %131 : i32 to index
    %c0_37 = arith.constant 0 : index
    %133 = vector.load %arg14[%132, %c0_37] : memref<512x128xf32, #tpu.memory_space<vmem>>, vector<64x128xf32>
    %cst_38 = arith.constant dense<0.000000e+00> : vector<64x128xf32>
    %134 = tpu.matmul %129, %11, %cst_38 {dimension_numbers = #tpu.dot_dimension_numbers<[1], [0], [0], [1], [0, 0, 1, 1], [], []>} : vector<64x32xf32>, vector<32x128xf32>, vector<64x128xf32> -> vector<64x128xf32>
    %135 = arith.addf %133, %134 : vector<64x128xf32>
    %136 = math.tanh %135 : vector<64x128xf32>
    %137 = arith.negf %135 : vector<64x128xf32>
    %138 = math.exp %137 : vector<64x128xf32>
    %cst_39 = arith.constant 1.000000e+00 : f32
    %139 = vector.broadcast %cst_39 : f32 to vector<64x128xf32>
    %140 = arith.addf %139, %138 : vector<64x128xf32>
    %141 = arith.divf %139, %140 : vector<64x128xf32>
    %142 = arith.select %17, %136, %141 : vector<64x128xi1>, vector<64x128xf32>
    %143 = vector.extract_strided_slice %142 {offsets = [0, 0], sizes = [64, 32], strides = [1, 1]} : vector<64x128xf32> to vector<64x32xf32>
    %144 = vector.extract_strided_slice %142 {offsets = [0, 32], sizes = [64, 32], strides = [1, 1]} : vector<64x128xf32> to vector<64x32xf32>
    %145 = vector.extract_strided_slice %142 {offsets = [0, 64], sizes = [64, 32], strides = [1, 1]} : vector<64x128xf32> to vector<64x32xf32>
    %146 = vector.extract_strided_slice %142 {offsets = [0, 96], sizes = [64, 32], strides = [1, 1]} : vector<64x128xf32> to vector<64x32xf32>
    %147 = arith.mulf %144, %127 : vector<64x32xf32>
    %148 = arith.mulf %143, %145 : vector<64x32xf32>
    %149 = arith.addf %147, %148 : vector<64x32xf32>
    %150 = math.tanh %149 : vector<64x32xf32>
    %151 = arith.mulf %146, %150 : vector<64x32xf32>
    %c6_i32 = arith.constant 6 : i32
    %c64_i32_40 = arith.constant 64 : i32
    %152 = arith.muli %c6_i32, %c64_i32_40 : i32
    %153 = tpu.assume_multiple %152, 64 : i32
    %154 = arith.index_cast %153 : i32 to index
    %c0_41 = arith.constant 0 : index
    %155 = vector.load %arg14[%154, %c0_41] : memref<512x128xf32, #tpu.memory_space<vmem>>, vector<64x128xf32>
    %cst_42 = arith.constant dense<0.000000e+00> : vector<64x128xf32>
    %156 = tpu.matmul %151, %11, %cst_42 {dimension_numbers = #tpu.dot_dimension_numbers<[1], [0], [0], [1], [0, 0, 1, 1], [], []>} : vector<64x32xf32>, vector<32x128xf32>, vector<64x128xf32> -> vector<64x128xf32>
    %157 = arith.addf %155, %156 : vector<64x128xf32>
    %158 = math.tanh %157 : vector<64x128xf32>
    %159 = arith.negf %157 : vector<64x128xf32>
    %160 = math.exp %159 : vector<64x128xf32>
    %cst_43 = arith.constant 1.000000e+00 : f32
    %161 = vector.broadcast %cst_43 : f32 to vector<64x128xf32>
    %162 = arith.addf %161, %160 : vector<64x128xf32>
    %163 = arith.divf %161, %162 : vector<64x128xf32>
    %164 = arith.select %17, %158, %163 : vector<64x128xi1>, vector<64x128xf32>
    %165 = vector.extract_strided_slice %164 {offsets = [0, 0], sizes = [64, 32], strides = [1, 1]} : vector<64x128xf32> to vector<64x32xf32>
    %166 = vector.extract_strided_slice %164 {offsets = [0, 32], sizes = [64, 32], strides = [1, 1]} : vector<64x128xf32> to vector<64x32xf32>
    %167 = vector.extract_strided_slice %164 {offsets = [0, 64], sizes = [64, 32], strides = [1, 1]} : vector<64x128xf32> to vector<64x32xf32>
    %168 = vector.extract_strided_slice %164 {offsets = [0, 96], sizes = [64, 32], strides = [1, 1]} : vector<64x128xf32> to vector<64x32xf32>
    %169 = arith.mulf %166, %149 : vector<64x32xf32>
    %170 = arith.mulf %165, %167 : vector<64x32xf32>
    %171 = arith.addf %169, %170 : vector<64x32xf32>
    %172 = math.tanh %171 : vector<64x32xf32>
    %173 = arith.mulf %168, %172 : vector<64x32xf32>
    %c7_i32 = arith.constant 7 : i32
    %c64_i32_44 = arith.constant 64 : i32
    %174 = arith.muli %c7_i32, %c64_i32_44 : i32
    %175 = tpu.assume_multiple %174, 64 : i32
    %176 = arith.index_cast %175 : i32 to index
    %c0_45 = arith.constant 0 : index
    %177 = vector.load %arg14[%176, %c0_45] : memref<512x128xf32, #tpu.memory_space<vmem>>, vector<64x128xf32>
    %cst_46 = arith.constant dense<0.000000e+00> : vector<64x128xf32>
    %178 = tpu.matmul %173, %11, %cst_46 {dimension_numbers = #tpu.dot_dimension_numbers<[1], [0], [0], [1], [0, 0, 1, 1], [], []>} : vector<64x32xf32>, vector<32x128xf32>, vector<64x128xf32> -> vector<64x128xf32>
    %179 = arith.addf %177, %178 : vector<64x128xf32>
    %180 = math.tanh %179 : vector<64x128xf32>
    %181 = arith.negf %179 : vector<64x128xf32>
    %182 = math.exp %181 : vector<64x128xf32>
    %cst_47 = arith.constant 1.000000e+00 : f32
    %183 = vector.broadcast %cst_47 : f32 to vector<64x128xf32>
    %184 = arith.addf %183, %182 : vector<64x128xf32>
    %185 = arith.divf %183, %184 : vector<64x128xf32>
    %186 = arith.select %17, %180, %185 : vector<64x128xi1>, vector<64x128xf32>
    %187 = vector.extract_strided_slice %186 {offsets = [0, 0], sizes = [64, 32], strides = [1, 1]} : vector<64x128xf32> to vector<64x32xf32>
    %188 = vector.extract_strided_slice %186 {offsets = [0, 32], sizes = [64, 32], strides = [1, 1]} : vector<64x128xf32> to vector<64x32xf32>
    %189 = vector.extract_strided_slice %186 {offsets = [0, 64], sizes = [64, 32], strides = [1, 1]} : vector<64x128xf32> to vector<64x32xf32>
    %190 = vector.extract_strided_slice %186 {offsets = [0, 96], sizes = [64, 32], strides = [1, 1]} : vector<64x128xf32> to vector<64x32xf32>
    %191 = arith.mulf %188, %171 : vector<64x32xf32>
    %192 = arith.mulf %187, %189 : vector<64x32xf32>
    %193 = arith.addf %191, %192 : vector<64x32xf32>
    %194 = math.tanh %193 : vector<64x32xf32>
    %195 = arith.mulf %190, %194 : vector<64x32xf32>
    %c8_i32 = arith.constant 8 : i32
    %c0_48 = arith.constant 0 : index
    %c0_49 = arith.constant 0 : index
    %196 = vector.load %arg12[%c0_48, %c0_49] : memref<64x32xf32, #tpu.memory_space<vmem>>, vector<64x32xf32>
    tpu.vector_store %arg12[%c0_48, %c0_49], %195 {strides = array<i32>} : memref<64x32xf32, #tpu.memory_space<vmem>>, vector<64x32xf32>,
    %c0_50 = arith.constant 0 : index
    %c0_51 = arith.constant 0 : index
    %197 = vector.load %arg13[%c0_50, %c0_51] : memref<64x32xf32, #tpu.memory_space<vmem>>, vector<64x32xf32>
    tpu.vector_store %arg13[%c0_50, %c0_51], %193 {strides = array<i32>} : memref<64x32xf32, #tpu.memory_space<vmem>>, vector<64x32xf32>,
    %c0_i32_52 = arith.constant 0 : i32
    %198 = arith.cmpi eq, %arg1, %c0_i32_52 : i32
    %199 = arith.extui %198 : i1 to i32
    %c0_i32_53 = arith.constant 0 : i32
    %200 = arith.cmpi ne, %199, %c0_i32_53 : i32
    scf.if %200 {
      %c7 = arith.constant 7 : index
      %c0_54 = arith.constant 0 : index
      %c0_55 = arith.constant 0 : index
      %201 = vector.load %arg2[%c7, %c0_54, %c0_55] : memref<8x64x32xf32, #tpu.memory_space<vmem>>, vector<1x64x32xf32>
      %202 = vector.shape_cast %201 : vector<1x64x32xf32> to vector<64x32xf32>
      %c0_56 = arith.constant 0 : index
      %c0_57 = arith.constant 0 : index
      %203 = vector.load %arg6[%c0_56, %c0_57] : memref<32x128xf32, #tpu.memory_space<vmem>>, vector<32x128xf32>
      %cst_58 = arith.constant dense<0.000000e+00> : vector<64x128xf32>
      %204 = tpu.matmul %202, %203, %cst_58 {dimension_numbers = #tpu.dot_dimension_numbers<[1], [0], [0], [1], [0, 0, 1, 1], [], []>} : vector<64x32xf32>, vector<32x128xf32>, vector<64x128xf32> -> vector<64x128xf32>
      %c0_59 = arith.constant 0 : index
      %c0_60 = arith.constant 0 : index
      %205 = vector.load %arg7[%c0_59, %c0_60] : memref<1x128xf32, #tpu.memory_space<vmem>>, vector<1x128xf32>
      %206 = vector.broadcast %205 : vector<1x128xf32> to vector<64x128xf32>
      %207 = arith.addf %204, %206 : vector<64x128xf32>
      %208 = math.tanh %207 : vector<64x128xf32>
      %209 = arith.negf %207 : vector<64x128xf32>
      %210 = math.exp %209 : vector<64x128xf32>
      %cst_61 = arith.constant 1.000000e+00 : f32
      %211 = vector.broadcast %cst_61 : f32 to vector<64x128xf32>
      %212 = arith.addf %211, %210 : vector<64x128xf32>
      %213 = arith.divf %211, %212 : vector<64x128xf32>
      %214 = arith.select %17, %208, %213 : vector<64x128xi1>, vector<64x128xf32>
      %215 = vector.extract_strided_slice %214 {offsets = [0, 0], sizes = [64, 32], strides = [1, 1]} : vector<64x128xf32> to vector<64x32xf32>
      %216 = vector.extract_strided_slice %214 {offsets = [0, 64], sizes = [64, 32], strides = [1, 1]} : vector<64x128xf32> to vector<64x32xf32>
      %217 = vector.extract_strided_slice %214 {offsets = [0, 96], sizes = [64, 32], strides = [1, 1]} : vector<64x128xf32> to vector<64x32xf32>
      %218 = arith.mulf %215, %216 : vector<64x32xf32>
      %219 = math.tanh %218 : vector<64x32xf32>
      %220 = arith.mulf %217, %219 : vector<64x32xf32>
      %c0_62 = arith.constant 0 : index
      %c0_63 = arith.constant 0 : index
      %221 = vector.load %arg8[%c0_62, %c0_63] : memref<32x128xf32, #tpu.memory_space<vmem>>, vector<32x128xf32>
      %cst_64 = arith.constant dense<0.000000e+00> : vector<64x128xf32>
      %222 = tpu.matmul %195, %221, %cst_64 {dimension_numbers = #tpu.dot_dimension_numbers<[1], [0], [0], [1], [0, 0, 1, 1], [], []>} : vector<64x32xf32>, vector<32x128xf32>, vector<64x128xf32> -> vector<64x128xf32>
      %c0_65 = arith.constant 0 : index
      %c0_66 = arith.constant 0 : index
      %223 = vector.load %arg9[%c0_65, %c0_66] : memref<32x128xf32, #tpu.memory_space<vmem>>, vector<32x128xf32>
      %cst_67 = arith.constant dense<0.000000e+00> : vector<64x128xf32>
      %224 = tpu.matmul %220, %223, %cst_67 {dimension_numbers = #tpu.dot_dimension_numbers<[1], [0], [0], [1], [0, 0, 1, 1], [], []>} : vector<64x32xf32>, vector<32x128xf32>, vector<64x128xf32> -> vector<64x128xf32>
      %225 = arith.addf %222, %224 : vector<64x128xf32>
      %c0_68 = arith.constant 0 : index
      %c0_69 = arith.constant 0 : index
      %226 = vector.load %arg10[%c0_68, %c0_69] : memref<1x128xf32, #tpu.memory_space<vmem>>, vector<1x128xf32>
      %227 = vector.broadcast %226 : vector<1x128xf32> to vector<64x128xf32>
      %228 = arith.addf %225, %227 : vector<64x128xf32>
      %c0_70 = arith.constant 0 : index
      %c0_71 = arith.constant 0 : index
      %229 = vector.load %arg11[%c0_70, %c0_71] : memref<64x128xf32, #tpu.memory_space<vmem>>, vector<64x128xf32>
      tpu.vector_store %arg11[%c0_70, %c0_71], %228 {strides = array<i32>} : memref<64x128xf32, #tpu.memory_space<vmem>>, vector<64x128xf32>,
    } else {
    }
    return
  }
  func.func @transform_0(%arg0: i32, %arg1: i32) -> (i32, i32, i32) {
    %c0_i32 = arith.constant 0 : i32
    %c0_i32_0 = arith.constant 0 : i32
    return %arg1, %arg0, %c0_i32 : i32, i32, i32
  }
  func.func @transform_1(%arg0: i32, %arg1: i32) -> (i32, i32) {
    %c0_i32 = arith.constant 0 : i32
    %c0_i32_0 = arith.constant 0 : i32
    %c0_i32_1 = arith.constant 0 : i32
    return %c0_i32, %c0_i32_0 : i32, i32
  }
  func.func @transform_2(%arg0: i32, %arg1: i32) -> (i32, i32) {
    %c0_i32 = arith.constant 0 : i32
    %c0_i32_0 = arith.constant 0 : i32
    %c0_i32_1 = arith.constant 0 : i32
    return %c0_i32, %c0_i32_0 : i32, i32
  }
  func.func @transform_3(%arg0: i32, %arg1: i32) -> (i32, i32) {
    %c0_i32 = arith.constant 0 : i32
    %c0_i32_0 = arith.constant 0 : i32
    %c0_i32_1 = arith.constant 0 : i32
    return %c0_i32, %c0_i32_0 : i32, i32
  }
  func.func @transform_4(%arg0: i32, %arg1: i32) -> (i32, i32) {
    %c0_i32 = arith.constant 0 : i32
    %c0_i32_0 = arith.constant 0 : i32
    %c0_i32_1 = arith.constant 0 : i32
    return %c0_i32, %c0_i32_0 : i32, i32
  }
  func.func @transform_5(%arg0: i32, %arg1: i32) -> (i32, i32) {
    %c0_i32 = arith.constant 0 : i32
    %c0_i32_0 = arith.constant 0 : i32
    %c0_i32_1 = arith.constant 0 : i32
    return %c0_i32, %c0_i32_0 : i32, i32
  }
  func.func @transform_6(%arg0: i32, %arg1: i32) -> (i32, i32) {
    %c0_i32 = arith.constant 0 : i32
    %c0_i32_0 = arith.constant 0 : i32
    %c0_i32_1 = arith.constant 0 : i32
    return %c0_i32, %c0_i32_0 : i32, i32
  }
  func.func @transform_7(%arg0: i32, %arg1: i32) -> (i32, i32) {
    %c0_i32 = arith.constant 0 : i32
    %c0_i32_0 = arith.constant 0 : i32
    %c0_i32_1 = arith.constant 0 : i32
    return %c0_i32, %c0_i32_0 : i32, i32
  }
  func.func @transform_8(%arg0: i32, %arg1: i32) -> (i32, i32) {
    %c0_i32 = arith.constant 0 : i32
    %c0_i32_0 = arith.constant 0 : i32
    %c0_i32_1 = arith.constant 0 : i32
    return %c0_i32, %c0_i32_0 : i32, i32
  }
  func.func @transform_9(%arg0: i32, %arg1: i32) -> (i32, i32) {
    %c0_i32 = arith.constant 0 : i32
    %c0_i32_0 = arith.constant 0 : i32
    return %arg0, %c0_i32 : i32, i32
  }
}

module attributes {stable_mosaic.version = 11 : i64} {
  func.func @bilstm_kernel(%arg0: i32, %arg1: i32, %arg2: memref<8x64x32xf32, #tpu.memory_space<vmem>>, %arg3: memref<32x128xf32, #tpu.memory_space<vmem>>, %arg4: memref<32x128xf32, #tpu.memory_space<vmem>>, %arg5: memref<1x128xf32, #tpu.memory_space<vmem>>, %arg6: memref<32x128xf32, #tpu.memory_space<vmem>>, %arg7: memref<1x128xf32, #tpu.memory_space<vmem>>, %arg8: memref<32x128xf32, #tpu.memory_space<vmem>>, %arg9: memref<32x128xf32, #tpu.memory_space<vmem>>, %arg10: memref<1x128xf32, #tpu.memory_space<vmem>>, %arg11: memref<64x128xf32, #tpu.memory_space<vmem>>, %arg12: memref<64x32xf32, #tpu.memory_space<vmem>>, %arg13: memref<64x32xf32, #tpu.memory_space<vmem>>, %arg14: memref<512x128xf32, #tpu.memory_space<vmem>>) attributes {dimension_semantics = [#tpu.dimension_semantics<parallel>, #tpu.dimension_semantics<arbitrary>], iteration_bounds = array<i64: 2, 1>, scalar_prefetch = 0 : i64, scratch_operands = 3 : i64, tpu.core_type = #tpu.core_type<tc>, window_params = [{transform_indices = @transform_0, window_bounds = array<i64: 8, 64, 32>}, {pipeline_mode = #tpu.pipeline_mode<synchronous>, transform_indices = @transform_1, window_bounds = array<i64: 32, 128>}, {pipeline_mode = #tpu.pipeline_mode<synchronous>, transform_indices = @transform_2, window_bounds = array<i64: 32, 128>}, {pipeline_mode = #tpu.pipeline_mode<synchronous>, transform_indices = @transform_3, window_bounds = array<i64: 1, 128>}, {pipeline_mode = #tpu.pipeline_mode<synchronous>, transform_indices = @transform_4, window_bounds = array<i64: 32, 128>}, {pipeline_mode = #tpu.pipeline_mode<synchronous>, transform_indices = @transform_5, window_bounds = array<i64: 1, 128>}, {pipeline_mode = #tpu.pipeline_mode<synchronous>, transform_indices = @transform_6, window_bounds = array<i64: 32, 128>}, {pipeline_mode = #tpu.pipeline_mode<synchronous>, transform_indices = @transform_7, window_bounds = array<i64: 32, 128>}, {pipeline_mode = #tpu.pipeline_mode<synchronous>, transform_indices = @transform_8, window_bounds = array<i64: 1, 128>}, {transform_indices = @transform_9, window_bounds = array<i64: 64, 128>}]} {
    %c0_i32 = arith.constant 0 : i32
    %0 = arith.cmpi eq, %arg1, %c0_i32 : i32
    %1 = arith.extui %0 : i1 to i32
    %c0_i32_0 = arith.constant 0 : i32
    %2 = arith.cmpi ne, %1, %c0_i32_0 : i32
    scf.if %2 {
      %cst_54 = arith.constant 0.000000e+00 : f32
      %201 = vector.broadcast %cst_54 : f32 to vector<64x32xf32>
      %c0_55 = arith.constant 0 : index
      %c0_56 = arith.constant 0 : index
      %202 = vector.load %arg12[%c0_55, %c0_56] : memref<64x32xf32, #tpu.memory_space<vmem>>, vector<64x32xf32>
      tpu.vector_store %arg12[%c0_55, %c0_56], %201 {strides = array<i32>} : memref<64x32xf32, #tpu.memory_space<vmem>>, vector<64x32xf32>,
      %cst_57 = arith.constant 0.000000e+00 : f32
      %203 = vector.broadcast %cst_57 : f32 to vector<64x32xf32>
      %c0_58 = arith.constant 0 : index
      %c0_59 = arith.constant 0 : index
      %204 = vector.load %arg13[%c0_58, %c0_59] : memref<64x32xf32, #tpu.memory_space<vmem>>, vector<64x32xf32>
      tpu.vector_store %arg13[%c0_58, %c0_59], %203 {strides = array<i32>} : memref<64x32xf32, #tpu.memory_space<vmem>>, vector<64x32xf32>,
    } else {
    }
    %c0 = arith.constant 0 : index
    %c0_1 = arith.constant 0 : index
    %c0_2 = arith.constant 0 : index
    %3 = vector.load %arg2[%c0, %c0_1, %c0_2] : memref<8x64x32xf32, #tpu.memory_space<vmem>>, vector<8x64x32xf32>
    %4 = vector.shape_cast %3 : vector<8x64x32xf32> to vector<512x32xf32>
    %c0_3 = arith.constant 0 : index
    %c0_4 = arith.constant 0 : index
    %5 = vector.load %arg3[%c0_3, %c0_4] : memref<32x128xf32, #tpu.memory_space<vmem>>, vector<32x128xf32>
    %cst = arith.constant dense<0.000000e+00> : vector<512x128xf32>
    %6 = tpu.matmul %4, %5, %cst {dimension_numbers = #tpu.dot_dimension_numbers<[1], [0], [0], [1], [0, 0, 1, 1], [], []>} : vector<512x32xf32>, vector<32x128xf32>, vector<512x128xf32> -> vector<512x128xf32>
    %c0_5 = arith.constant 0 : index
    %c0_6 = arith.constant 0 : index
    %7 = vector.load %arg5[%c0_5, %c0_6] : memref<1x128xf32, #tpu.memory_space<vmem>>, vector<1x128xf32>
    %8 = vector.broadcast %7 : vector<1x128xf32> to vector<512x128xf32>
    %9 = arith.addf %6, %8 : vector<512x128xf32>
    %c0_7 = arith.constant 0 : index
    %c0_8 = arith.constant 0 : index
    %10 = vector.load %arg14[%c0_7, %c0_8] : memref<512x128xf32, #tpu.memory_space<vmem>>, vector<512x128xf32>
    tpu.vector_store %arg14[%c0_7, %c0_8], %9 {strides = array<i32>} : memref<512x128xf32, #tpu.memory_space<vmem>>, vector<512x128xf32>,
    %c0_9 = arith.constant 0 : index
    %c0_10 = arith.constant 0 : index
    %11 = vector.load %arg4[%c0_9, %c0_10] : memref<32x128xf32, #tpu.memory_space<vmem>>, vector<32x128xf32>
    %12 = tpu.iota {dimensions = array<i32: 1>} : vector<64x128xi32>
    %c64_i32 = arith.constant 64 : i32
    %13 = vector.broadcast %c64_i32 : i32 to vector<64x128xi32>
    %14 = arith.cmpi sge, %12, %13 : vector<64x128xi32>
    %c96_i32 = arith.constant 96 : i32
    %15 = vector.broadcast %c96_i32 : i32 to vector<64x128xi32>
    %16 = arith.cmpi slt, %12, %15 : vector<64x128xi32>
    %17 = arith.andi %14, %16 : vector<64x128xi1>
    %c0_11 = arith.constant 0 : index
    %c0_12 = arith.constant 0 : index
    %18 = vector.load %arg12[%c0_11, %c0_12] : memref<64x32xf32, #tpu.memory_space<vmem>>, vector<64x32xf32>
    %c0_13 = arith.constant 0 : index
    %c0_14 = arith.constant 0 : index
    %19 = vector.load %arg13[%c0_13, %c0_14] : memref<64x32xf32, #tpu.memory_space<vmem>>, vector<64x32xf32>
    %c0_i32_15 = arith.constant 0 : i32
    %c64_i32_16 = arith.constant 64 : i32
    %20 = arith.muli %c0_i32_15, %c64_i32_16 : i32
    %21 = tpu.assume_multiple %20, 64 : i32
    %22 = arith.index_cast %21 : i32 to index
    %c0_17 = arith.constant 0 : index
    %23 = vector.load %arg14[%22, %c0_17] : memref<512x128xf32, #tpu.memory_space<vmem>>, vector<64x128xf32>
    %cst_18 = arith.constant dense<0.000000e+00> : vector<64x128xf32>
    %24 = tpu.matmul %18, %11, %cst_18 {dimension_numbers = #tpu.dot_dimension_numbers<[1], [0], [0], [1], [0, 0, 1, 1], [], []>} : vector<64x32xf32>, vector<32x128xf32>, vector<64x128xf32> -> vector<64x128xf32>
    %25 = arith.addf %23, %24 : vector<64x128xf32>
    %26 = math.tanh %25 : vector<64x128xf32>
    %27 = arith.negf %25 : vector<64x128xf32>
    %28 = math.exp %27 : vector<64x128xf32>
    %cst_19 = arith.constant 1.000000e+00 : f32
    %29 = vector.broadcast %cst_19 : f32 to vector<64x128xf32>
    %30 = arith.addf %29, %28 : vector<64x128xf32>
    %31 = arith.divf %29, %30 : vector<64x128xf32>
    %32 = arith.select %17, %26, %31 : vector<64x128xi1>, vector<64x128xf32>
    %33 = vector.extract_strided_slice %32 {offsets = [0, 0], sizes = [64, 32], strides = [1, 1]} : vector<64x128xf32> to vector<64x32xf32>
    %34 = vector.extract_strided_slice %32 {offsets = [0, 32], sizes = [64, 32], strides = [1, 1]} : vector<64x128xf32> to vector<64x32xf32>
    %35 = vector.extract_strided_slice %32 {offsets = [0, 64], sizes = [64, 32], strides = [1, 1]} : vector<64x128xf32> to vector<64x32xf32>
    %36 = vector.extract_strided_slice %32 {offsets = [0, 96], sizes = [64, 32], strides = [1, 1]} : vector<64x128xf32> to vector<64x32xf32>
    %37 = arith.mulf %34, %19 : vector<64x32xf32>
    %38 = arith.mulf %33, %35 : vector<64x32xf32>
    %39 = arith.addf %37, %38 : vector<64x32xf32>
    %40 = math.tanh %39 : vector<64x32xf32>
    %41 = arith.mulf %36, %40 : vector<64x32xf32>
    %c1_i32 = arith.constant 1 : i32
    %c64_i32_20 = arith.constant 64 : i32
    %42 = arith.muli %c1_i32, %c64_i32_20 : i32
    %43 = tpu.assume_multiple %42, 64 : i32
    %44 = arith.index_cast %43 : i32 to index
    %c0_21 = arith.constant 0 : index
    %45 = vector.load %arg14[%44, %c0_21] : memref<512x128xf32, #tpu.memory_space<vmem>>, vector<64x128xf32>
    %cst_22 = arith.constant dense<0.000000e+00> : vector<64x128xf32>
    %46 = tpu.matmul %41, %11, %cst_22 {dimension_numbers = #tpu.dot_dimension_numbers<[1], [0], [0], [1], [0, 0, 1, 1], [], []>} : vector<64x32xf32>, vector<32x128xf32>, vector<64x128xf32> -> vector<64x128xf32>
    %47 = arith.addf %45, %46 : vector<64x128xf32>
    %48 = math.tanh %47 : vector<64x128xf32>
    %49 = arith.negf %47 : vector<64x128xf32>
    %50 = math.exp %49 : vector<64x128xf32>
    %cst_23 = arith.constant 1.000000e+00 : f32
    %51 = vector.broadcast %cst_23 : f32 to vector<64x128xf32>
    %52 = arith.addf %51, %50 : vector<64x128xf32>
    %53 = arith.divf %51, %52 : vector<64x128xf32>
    %54 = arith.select %17, %48, %53 : vector<64x128xi1>, vector<64x128xf32>
    %55 = vector.extract_strided_slice %54 {offsets = [0, 0], sizes = [64, 32], strides = [1, 1]} : vector<64x128xf32> to vector<64x32xf32>
    %56 = vector.extract_strided_slice %54 {offsets = [0, 32], sizes = [64, 32], strides = [1, 1]} : vector<64x128xf32> to vector<64x32xf32>
    %57 = vector.extract_strided_slice %54 {offsets = [0, 64], sizes = [64, 32], strides = [1, 1]} : vector<64x128xf32> to vector<64x32xf32>
    %58 = vector.extract_strided_slice %54 {offsets = [0, 96], sizes = [64, 32], strides = [1, 1]} : vector<64x128xf32> to vector<64x32xf32>
    %59 = arith.mulf %56, %39 : vector<64x32xf32>
    %60 = arith.mulf %55, %57 : vector<64x32xf32>
    %61 = arith.addf %59, %60 : vector<64x32xf32>
    %62 = math.tanh %61 : vector<64x32xf32>
    %63 = arith.mulf %58, %62 : vector<64x32xf32>
    %c2_i32 = arith.constant 2 : i32
    %c64_i32_24 = arith.constant 64 : i32
    %64 = arith.muli %c2_i32, %c64_i32_24 : i32
    %65 = tpu.assume_multiple %64, 64 : i32
    %66 = arith.index_cast %65 : i32 to index
    %c0_25 = arith.constant 0 : index
    %67 = vector.load %arg14[%66, %c0_25] : memref<512x128xf32, #tpu.memory_space<vmem>>, vector<64x128xf32>
    %cst_26 = arith.constant dense<0.000000e+00> : vector<64x128xf32>
    %68 = tpu.matmul %63, %11, %cst_26 {dimension_numbers = #tpu.dot_dimension_numbers<[1], [0], [0], [1], [0, 0, 1, 1], [], []>} : vector<64x32xf32>, vector<32x128xf32>, vector<64x128xf32> -> vector<64x128xf32>
    %69 = arith.addf %67, %68 : vector<64x128xf32>
    %70 = math.tanh %69 : vector<64x128xf32>
    %71 = arith.negf %69 : vector<64x128xf32>
    %72 = math.exp %71 : vector<64x128xf32>
    %cst_27 = arith.constant 1.000000e+00 : f32
    %73 = vector.broadcast %cst_27 : f32 to vector<64x128xf32>
    %74 = arith.addf %73, %72 : vector<64x128xf32>
    %75 = arith.divf %73, %74 : vector<64x128xf32>
    %76 = arith.select %17, %70, %75 : vector<64x128xi1>, vector<64x128xf32>
    %77 = vector.extract_strided_slice %76 {offsets = [0, 0], sizes = [64, 32], strides = [1, 1]} : vector<64x128xf32> to vector<64x32xf32>
    %78 = vector.extract_strided_slice %76 {offsets = [0, 32], sizes = [64, 32], strides = [1, 1]} : vector<64x128xf32> to vector<64x32xf32>
    %79 = vector.extract_strided_slice %76 {offsets = [0, 64], sizes = [64, 32], strides = [1, 1]} : vector<64x128xf32> to vector<64x32xf32>
    %80 = vector.extract_strided_slice %76 {offsets = [0, 96], sizes = [64, 32], strides = [1, 1]} : vector<64x128xf32> to vector<64x32xf32>
    %81 = arith.mulf %78, %61 : vector<64x32xf32>
    %82 = arith.mulf %77, %79 : vector<64x32xf32>
    %83 = arith.addf %81, %82 : vector<64x32xf32>
    %84 = math.tanh %83 : vector<64x32xf32>
    %85 = arith.mulf %80, %84 : vector<64x32xf32>
    %c3_i32 = arith.constant 3 : i32
    %c64_i32_28 = arith.constant 64 : i32
    %86 = arith.muli %c3_i32, %c64_i32_28 : i32
    %87 = tpu.assume_multiple %86, 64 : i32
    %88 = arith.index_cast %87 : i32 to index
    %c0_29 = arith.constant 0 : index
    %89 = vector.load %arg14[%88, %c0_29] : memref<512x128xf32, #tpu.memory_space<vmem>>, vector<64x128xf32>
    %cst_30 = arith.constant dense<0.000000e+00> : vector<64x128xf32>
    %90 = tpu.matmul %85, %11, %cst_30 {dimension_numbers = #tpu.dot_dimension_numbers<[1], [0], [0], [1], [0, 0, 1, 1], [], []>} : vector<64x32xf32>, vector<32x128xf32>, vector<64x128xf32> -> vector<64x128xf32>
    %91 = arith.addf %89, %90 : vector<64x128xf32>
    %92 = math.tanh %91 : vector<64x128xf32>
    %93 = arith.negf %91 : vector<64x128xf32>
    %94 = math.exp %93 : vector<64x128xf32>
    %cst_31 = arith.constant 1.000000e+00 : f32
    %95 = vector.broadcast %cst_31 : f32 to vector<64x128xf32>
    %96 = arith.addf %95, %94 : vector<64x128xf32>
    %97 = arith.divf %95, %96 : vector<64x128xf32>
    %98 = arith.select %17, %92, %97 : vector<64x128xi1>, vector<64x128xf32>
    %99 = vector.extract_strided_slice %98 {offsets = [0, 0], sizes = [64, 32], strides = [1, 1]} : vector<64x128xf32> to vector<64x32xf32>
    %100 = vector.extract_strided_slice %98 {offsets = [0, 32], sizes = [64, 32], strides = [1, 1]} : vector<64x128xf32> to vector<64x32xf32>
    %101 = vector.extract_strided_slice %98 {offsets = [0, 64], sizes = [64, 32], strides = [1, 1]} : vector<64x128xf32> to vector<64x32xf32>
    %102 = vector.extract_strided_slice %98 {offsets = [0, 96], sizes = [64, 32], strides = [1, 1]} : vector<64x128xf32> to vector<64x32xf32>
    %103 = arith.mulf %100, %83 : vector<64x32xf32>
    %104 = arith.mulf %99, %101 : vector<64x32xf32>
    %105 = arith.addf %103, %104 : vector<64x32xf32>
    %106 = math.tanh %105 : vector<64x32xf32>
    %107 = arith.mulf %102, %106 : vector<64x32xf32>
    %c4_i32 = arith.constant 4 : i32
    %c64_i32_32 = arith.constant 64 : i32
    %108 = arith.muli %c4_i32, %c64_i32_32 : i32
    %109 = tpu.assume_multiple %108, 64 : i32
    %110 = arith.index_cast %109 : i32 to index
    %c0_33 = arith.constant 0 : index
    %111 = vector.load %arg14[%110, %c0_33] : memref<512x128xf32, #tpu.memory_space<vmem>>, vector<64x128xf32>
    %cst_34 = arith.constant dense<0.000000e+00> : vector<64x128xf32>
    %112 = tpu.matmul %107, %11, %cst_34 {dimension_numbers = #tpu.dot_dimension_numbers<[1], [0], [0], [1], [0, 0, 1, 1], [], []>} : vector<64x32xf32>, vector<32x128xf32>, vector<64x128xf32> -> vector<64x128xf32>
    %113 = arith.addf %111, %112 : vector<64x128xf32>
    %114 = math.tanh %113 : vector<64x128xf32>
    %115 = arith.negf %113 : vector<64x128xf32>
    %116 = math.exp %115 : vector<64x128xf32>
    %cst_35 = arith.constant 1.000000e+00 : f32
    %117 = vector.broadcast %cst_35 : f32 to vector<64x128xf32>
    %118 = arith.addf %117, %116 : vector<64x128xf32>
    %119 = arith.divf %117, %118 : vector<64x128xf32>
    %120 = arith.select %17, %114, %119 : vector<64x128xi1>, vector<64x128xf32>
    %121 = vector.extract_strided_slice %120 {offsets = [0, 0], sizes = [64, 32], strides = [1, 1]} : vector<64x128xf32> to vector<64x32xf32>
    %122 = vector.extract_strided_slice %120 {offsets = [0, 32], sizes = [64, 32], strides = [1, 1]} : vector<64x128xf32> to vector<64x32xf32>
    %123 = vector.extract_strided_slice %120 {offsets = [0, 64], sizes = [64, 32], strides = [1, 1]} : vector<64x128xf32> to vector<64x32xf32>
    %124 = vector.extract_strided_slice %120 {offsets = [0, 96], sizes = [64, 32], strides = [1, 1]} : vector<64x128xf32> to vector<64x32xf32>
    %125 = arith.mulf %122, %105 : vector<64x32xf32>
    %126 = arith.mulf %121, %123 : vector<64x32xf32>
    %127 = arith.addf %125, %126 : vector<64x32xf32>
    %128 = math.tanh %127 : vector<64x32xf32>
    %129 = arith.mulf %124, %128 : vector<64x32xf32>
    %c5_i32 = arith.constant 5 : i32
    %c64_i32_36 = arith.constant 64 : i32
    %130 = arith.muli %c5_i32, %c64_i32_36 : i32
    %131 = tpu.assume_multiple %130, 64 : i32
    %132 = arith.index_cast %131 : i32 to index
    %c0_37 = arith.constant 0 : index
    %133 = vector.load %arg14[%132, %c0_37] : memref<512x128xf32, #tpu.memory_space<vmem>>, vector<64x128xf32>
    %cst_38 = arith.constant dense<0.000000e+00> : vector<64x128xf32>
    %134 = tpu.matmul %129, %11, %cst_38 {dimension_numbers = #tpu.dot_dimension_numbers<[1], [0], [0], [1], [0, 0, 1, 1], [], []>} : vector<64x32xf32>, vector<32x128xf32>, vector<64x128xf32> -> vector<64x128xf32>
    %135 = arith.addf %133, %134 : vector<64x128xf32>
    %136 = math.tanh %135 : vector<64x128xf32>
    %137 = arith.negf %135 : vector<64x128xf32>
    %138 = math.exp %137 : vector<64x128xf32>
    %cst_39 = arith.constant 1.000000e+00 : f32
    %139 = vector.broadcast %cst_39 : f32 to vector<64x128xf32>
    %140 = arith.addf %139, %138 : vector<64x128xf32>
    %141 = arith.divf %139, %140 : vector<64x128xf32>
    %142 = arith.select %17, %136, %141 : vector<64x128xi1>, vector<64x128xf32>
    %143 = vector.extract_strided_slice %142 {offsets = [0, 0], sizes = [64, 32], strides = [1, 1]} : vector<64x128xf32> to vector<64x32xf32>
    %144 = vector.extract_strided_slice %142 {offsets = [0, 32], sizes = [64, 32], strides = [1, 1]} : vector<64x128xf32> to vector<64x32xf32>
    %145 = vector.extract_strided_slice %142 {offsets = [0, 64], sizes = [64, 32], strides = [1, 1]} : vector<64x128xf32> to vector<64x32xf32>
    %146 = vector.extract_strided_slice %142 {offsets = [0, 96], sizes = [64, 32], strides = [1, 1]} : vector<64x128xf32> to vector<64x32xf32>
    %147 = arith.mulf %144, %127 : vector<64x32xf32>
    %148 = arith.mulf %143, %145 : vector<64x32xf32>
    %149 = arith.addf %147, %148 : vector<64x32xf32>
    %150 = math.tanh %149 : vector<64x32xf32>
    %151 = arith.mulf %146, %150 : vector<64x32xf32>
    %c6_i32 = arith.constant 6 : i32
    %c64_i32_40 = arith.constant 64 : i32
    %152 = arith.muli %c6_i32, %c64_i32_40 : i32
    %153 = tpu.assume_multiple %152, 64 : i32
    %154 = arith.index_cast %153 : i32 to index
    %c0_41 = arith.constant 0 : index
    %155 = vector.load %arg14[%154, %c0_41] : memref<512x128xf32, #tpu.memory_space<vmem>>, vector<64x128xf32>
    %cst_42 = arith.constant dense<0.000000e+00> : vector<64x128xf32>
    %156 = tpu.matmul %151, %11, %cst_42 {dimension_numbers = #tpu.dot_dimension_numbers<[1], [0], [0], [1], [0, 0, 1, 1], [], []>} : vector<64x32xf32>, vector<32x128xf32>, vector<64x128xf32> -> vector<64x128xf32>
    %157 = arith.addf %155, %156 : vector<64x128xf32>
    %158 = math.tanh %157 : vector<64x128xf32>
    %159 = arith.negf %157 : vector<64x128xf32>
    %160 = math.exp %159 : vector<64x128xf32>
    %cst_43 = arith.constant 1.000000e+00 : f32
    %161 = vector.broadcast %cst_43 : f32 to vector<64x128xf32>
    %162 = arith.addf %161, %160 : vector<64x128xf32>
    %163 = arith.divf %161, %162 : vector<64x128xf32>
    %164 = arith.select %17, %158, %163 : vector<64x128xi1>, vector<64x128xf32>
    %165 = vector.extract_strided_slice %164 {offsets = [0, 0], sizes = [64, 32], strides = [1, 1]} : vector<64x128xf32> to vector<64x32xf32>
    %166 = vector.extract_strided_slice %164 {offsets = [0, 32], sizes = [64, 32], strides = [1, 1]} : vector<64x128xf32> to vector<64x32xf32>
    %167 = vector.extract_strided_slice %164 {offsets = [0, 64], sizes = [64, 32], strides = [1, 1]} : vector<64x128xf32> to vector<64x32xf32>
    %168 = vector.extract_strided_slice %164 {offsets = [0, 96], sizes = [64, 32], strides = [1, 1]} : vector<64x128xf32> to vector<64x32xf32>
    %169 = arith.mulf %166, %149 : vector<64x32xf32>
    %170 = arith.mulf %165, %167 : vector<64x32xf32>
    %171 = arith.addf %169, %170 : vector<64x32xf32>
    %172 = math.tanh %171 : vector<64x32xf32>
    %173 = arith.mulf %168, %172 : vector<64x32xf32>
    %c7_i32 = arith.constant 7 : i32
    %c64_i32_44 = arith.constant 64 : i32
    %174 = arith.muli %c7_i32, %c64_i32_44 : i32
    %175 = tpu.assume_multiple %174, 64 : i32
    %176 = arith.index_cast %175 : i32 to index
    %c0_45 = arith.constant 0 : index
    %177 = vector.load %arg14[%176, %c0_45] : memref<512x128xf32, #tpu.memory_space<vmem>>, vector<64x128xf32>
    %cst_46 = arith.constant dense<0.000000e+00> : vector<64x128xf32>
    %178 = tpu.matmul %173, %11, %cst_46 {dimension_numbers = #tpu.dot_dimension_numbers<[1], [0], [0], [1], [0, 0, 1, 1], [], []>} : vector<64x32xf32>, vector<32x128xf32>, vector<64x128xf32> -> vector<64x128xf32>
    %179 = arith.addf %177, %178 : vector<64x128xf32>
    %180 = math.tanh %179 : vector<64x128xf32>
    %181 = arith.negf %179 : vector<64x128xf32>
    %182 = math.exp %181 : vector<64x128xf32>
    %cst_47 = arith.constant 1.000000e+00 : f32
    %183 = vector.broadcast %cst_47 : f32 to vector<64x128xf32>
    %184 = arith.addf %183, %182 : vector<64x128xf32>
    %185 = arith.divf %183, %184 : vector<64x128xf32>
    %186 = arith.select %17, %180, %185 : vector<64x128xi1>, vector<64x128xf32>
    %187 = vector.extract_strided_slice %186 {offsets = [0, 0], sizes = [64, 32], strides = [1, 1]} : vector<64x128xf32> to vector<64x32xf32>
    %188 = vector.extract_strided_slice %186 {offsets = [0, 32], sizes = [64, 32], strides = [1, 1]} : vector<64x128xf32> to vector<64x32xf32>
    %189 = vector.extract_strided_slice %186 {offsets = [0, 64], sizes = [64, 32], strides = [1, 1]} : vector<64x128xf32> to vector<64x32xf32>
    %190 = vector.extract_strided_slice %186 {offsets = [0, 96], sizes = [64, 32], strides = [1, 1]} : vector<64x128xf32> to vector<64x32xf32>
    %191 = arith.mulf %188, %171 : vector<64x32xf32>
    %192 = arith.mulf %187, %189 : vector<64x32xf32>
    %193 = arith.addf %191, %192 : vector<64x32xf32>
    %194 = math.tanh %193 : vector<64x32xf32>
    %195 = arith.mulf %190, %194 : vector<64x32xf32>
    %c8_i32 = arith.constant 8 : i32
    %c0_48 = arith.constant 0 : index
    %c0_49 = arith.constant 0 : index
    %196 = vector.load %arg12[%c0_48, %c0_49] : memref<64x32xf32, #tpu.memory_space<vmem>>, vector<64x32xf32>
    tpu.vector_store %arg12[%c0_48, %c0_49], %195 {strides = array<i32>} : memref<64x32xf32, #tpu.memory_space<vmem>>, vector<64x32xf32>,
    %c0_50 = arith.constant 0 : index
    %c0_51 = arith.constant 0 : index
    %197 = vector.load %arg13[%c0_50, %c0_51] : memref<64x32xf32, #tpu.memory_space<vmem>>, vector<64x32xf32>
    tpu.vector_store %arg13[%c0_50, %c0_51], %193 {strides = array<i32>} : memref<64x32xf32, #tpu.memory_space<vmem>>, vector<64x32xf32>,
    %c0_i32_52 = arith.constant 0 : i32
    %198 = arith.cmpi eq, %arg1, %c0_i32_52 : i32
    %199 = arith.extui %198 : i1 to i32
    %c0_i32_53 = arith.constant 0 : i32
    %200 = arith.cmpi ne, %199, %c0_i32_53 : i32
    scf.if %200 {
      %c7 = arith.constant 7 : index
      %c0_54 = arith.constant 0 : index
      %c0_55 = arith.constant 0 : index
      %201 = vector.load %arg2[%c7, %c0_54, %c0_55] : memref<8x64x32xf32, #tpu.memory_space<vmem>>, vector<1x64x32xf32>
      %202 = vector.shape_cast %201 : vector<1x64x32xf32> to vector<64x32xf32>
      %c0_56 = arith.constant 0 : index
      %c0_57 = arith.constant 0 : index
      %203 = vector.load %arg6[%c0_56, %c0_57] : memref<32x128xf32, #tpu.memory_space<vmem>>, vector<32x128xf32>
      %cst_58 = arith.constant dense<0.000000e+00> : vector<64x128xf32>
      %204 = tpu.matmul %202, %203, %cst_58 {dimension_numbers = #tpu.dot_dimension_numbers<[1], [0], [0], [1], [0, 0, 1, 1], [], []>} : vector<64x32xf32>, vector<32x128xf32>, vector<64x128xf32> -> vector<64x128xf32>
      %c0_59 = arith.constant 0 : index
      %c0_60 = arith.constant 0 : index
      %205 = vector.load %arg7[%c0_59, %c0_60] : memref<1x128xf32, #tpu.memory_space<vmem>>, vector<1x128xf32>
      %206 = vector.broadcast %205 : vector<1x128xf32> to vector<64x128xf32>
      %207 = arith.addf %204, %206 : vector<64x128xf32>
      %208 = math.tanh %207 : vector<64x128xf32>
      %209 = arith.negf %207 : vector<64x128xf32>
      %210 = math.exp %209 : vector<64x128xf32>
      %cst_61 = arith.constant 1.000000e+00 : f32
      %211 = vector.broadcast %cst_61 : f32 to vector<64x128xf32>
      %212 = arith.addf %211, %210 : vector<64x128xf32>
      %213 = arith.divf %211, %212 : vector<64x128xf32>
      %214 = arith.select %17, %208, %213 : vector<64x128xi1>, vector<64x128xf32>
      %215 = vector.extract_strided_slice %214 {offsets = [0, 0], sizes = [64, 32], strides = [1, 1]} : vector<64x128xf32> to vector<64x32xf32>
      %216 = vector.extract_strided_slice %214 {offsets = [0, 64], sizes = [64, 32], strides = [1, 1]} : vector<64x128xf32> to vector<64x32xf32>
      %217 = vector.extract_strided_slice %214 {offsets = [0, 96], sizes = [64, 32], strides = [1, 1]} : vector<64x128xf32> to vector<64x32xf32>
      %218 = arith.mulf %215, %216 : vector<64x32xf32>
      %219 = math.tanh %218 : vector<64x32xf32>
      %220 = arith.mulf %217, %219 : vector<64x32xf32>
      %c0_62 = arith.constant 0 : index
      %c0_63 = arith.constant 0 : index
      %221 = vector.load %arg8[%c0_62, %c0_63] : memref<32x128xf32, #tpu.memory_space<vmem>>, vector<32x128xf32>
      %cst_64 = arith.constant dense<0.000000e+00> : vector<64x128xf32>
      %222 = tpu.matmul %195, %221, %cst_64 {dimension_numbers = #tpu.dot_dimension_numbers<[1], [0], [0], [1], [0, 0, 1, 1], [], []>} : vector<64x32xf32>, vector<32x128xf32>, vector<64x128xf32> -> vector<64x128xf32>
      %c0_65 = arith.constant 0 : index
      %c0_66 = arith.constant 0 : index
      %223 = vector.load %arg9[%c0_65, %c0_66] : memref<32x128xf32, #tpu.memory_space<vmem>>, vector<32x128xf32>
      %cst_67 = arith.constant dense<0.000000e+00> : vector<64x128xf32>
      %224 = tpu.matmul %220, %223, %cst_67 {dimension_numbers = #tpu.dot_dimension_numbers<[1], [0], [0], [1], [0, 0, 1, 1], [], []>} : vector<64x32xf32>, vector<32x128xf32>, vector<64x128xf32> -> vector<64x128xf32>
      %225 = arith.addf %222, %224 : vector<64x128xf32>
      %c0_68 = arith.constant 0 : index
      %c0_69 = arith.constant 0 : index
      %226 = vector.load %arg10[%c0_68, %c0_69] : memref<1x128xf32, #tpu.memory_space<vmem>>, vector<1x128xf32>
      %227 = vector.broadcast %226 : vector<1x128xf32> to vector<64x128xf32>
      %228 = arith.addf %225, %227 : vector<64x128xf32>
      %c0_70 = arith.constant 0 : index
      %c0_71 = arith.constant 0 : index
      %229 = vector.load %arg11[%c0_70, %c0_71] : memref<64x128xf32, #tpu.memory_space<vmem>>, vector<64x128xf32>
      tpu.vector_store %arg11[%c0_70, %c0_71], %228 {strides = array<i32>} : memref<64x128xf32, #tpu.memory_space<vmem>>, vector<64x128xf32>,
    } else {
    }
    return
  }
  func.func @transform_0(%arg0: i32, %arg1: i32) -> (i32, i32, i32) {
    %c0_i32 = arith.constant 0 : i32
    %c0_i32_0 = arith.constant 0 : i32
    return %arg1, %arg0, %c0_i32 : i32, i32, i32
  }
  func.func @transform_1(%arg0: i32, %arg1: i32) -> (i32, i32) {
    %c0_i32 = arith.constant 0 : i32
    %c0_i32_0 = arith.constant 0 : i32
    %c0_i32_1 = arith.constant 0 : i32
    return %c0_i32, %c0_i32_0 : i32, i32
  }
  func.func @transform_2(%arg0: i32, %arg1: i32) -> (i32, i32) {
    %c0_i32 = arith.constant 0 : i32
    %c0_i32_0 = arith.constant 0 : i32
    %c0_i32_1 = arith.constant 0 : i32
    return %c0_i32, %c0_i32_0 : i32, i32
  }
  func.func @transform_3(%arg0: i32, %arg1: i32) -> (i32, i32) {
    %c0_i32 = arith.constant 0 : i32
    %c0_i32_0 = arith.constant 0 : i32
    %c0_i32_1 = arith.constant 0 : i32
    return %c0_i32, %c0_i32_0 : i32, i32
  }
  func.func @transform_4(%arg0: i32, %arg1: i32) -> (i32, i32) {
    %c0_i32 = arith.constant 0 : i32
    %c0_i32_0 = arith.constant 0 : i32
    %c0_i32_1 = arith.constant 0 : i32
    return %c0_i32, %c0_i32_0 : i32, i32
  }
  func.func @transform_5(%arg0: i32, %arg1: i32) -> (i32, i32) {
    %c0_i32 = arith.constant 0 : i32
    %c0_i32_0 = arith.constant 0 : i32
    %c0_i32_1 = arith.constant 0 : i32
    return %c0_i32, %c0_i32_0 : i32, i32
  }
  func.func @transform_6(%arg0: i32, %arg1: i32) -> (i32, i32) {
    %c0_i32 = arith.constant 0 : i32
    %c0_i32_0 = arith.constant 0 : i32
    %c0_i32_1 = arith.constant 0 : i32
    return %c0_i32, %c0_i32_0 : i32, i32
  }
  func.func @transform_7(%arg0: i32, %arg1: i32) -> (i32, i32) {
    %c0_i32 = arith.constant 0 : i32
    %c0_i32_0 = arith.constant 0 : i32
    %c0_i32_1 = arith.constant 0 : i32
    return %c0_i32, %c0_i32_0 : i32, i32
  }
  func.func @transform_8(%arg0: i32, %arg1: i32) -> (i32, i32) {
    %c0_i32 = arith.constant 0 : i32
    %c0_i32_0 = arith.constant 0 : i32
    %c0_i32_1 = arith.constant 0 : i32
    return %c0_i32, %c0_i32_0 : i32, i32
  }
  func.func @transform_9(%arg0: i32, %arg1: i32) -> (i32, i32) {
    %c0_i32 = arith.constant 0 : i32
    %c0_i32_0 = arith.constant 0 : i32
    return %arg0, %c0_i32 : i32, i32
  }
}

</mosaic_0001>

<llo_original>
// kernel: tpu_custom_call.1
$region0: #{tpu_custom_call.1}
  #allocation0 [shape = 'u32[]', space=smem, size = 0x4, offset = 0x4, fixed_abs, tag = 'smem constant byte address 0x4 - core index']
  #allocation1 [shape = 'u32[144,128]{1,0:T(1,128)}', space=vmem, size = 0x12000, scoped, tag = 'internal scratch']
  #allocation2 [shape = 'f32[64,32]{1,0:T(8,128)}', space=vmem, size = 0x8000, scoped, tag = 'scratch operand']
  #allocation3 [shape = 'f32[64,32]{1,0:T(8,128)}', space=vmem, size = 0x8000, scoped, tag = 'scratch operand']
  #allocation4 [shape = 'f32[512,128]{1,0:T(8,128)}', space=vmem, size = 0x40000, scoped, tag = 'scratch operand']
  %s0 = inlined_call_operand.vmem [shape: f32[8,128,32], index: 0, kind: input, shape index: {}]
  %s1 = inlined_call_operand.vmem [shape: f32[32,128], index: 1, kind: input, shape index: {}]
  %s2 = inlined_call_operand.vmem [shape: f32[32,128], index: 2, kind: input, shape index: {}]
  %s3 = inlined_call_operand.vmem [shape: f32[1,128], index: 3, kind: input, shape index: {}]
  %s4 = inlined_call_operand.vmem [shape: f32[32,128], index: 4, kind: input, shape index: {}]
  %s5 = inlined_call_operand.vmem [shape: f32[1,128], index: 5, kind: input, shape index: {}]
  %s6 = inlined_call_operand.vmem [shape: f32[32,128], index: 6, kind: input, shape index: {}]
  %s7 = inlined_call_operand.vmem [shape: f32[32,128], index: 7, kind: input, shape index: {}]
  %s8 = inlined_call_operand.vmem [shape: f32[1,128], index: 8, kind: input, shape index: {}]
  %s9 = inlined_call_operand.hbm [shape: f32[128,128], index: 9, kind: output, shape index: {}]
  %s10 = sld [smem:[#allocation0]]
  $region115: #{tpu_custom_call.1} parent=0
    _
  %s12 = ssub.s32 1, %s10
  %s13 = scalar_select 0, %s12, %s10
  $region1: #{tpu_custom_call.1} parent=0
    #allocation5 [shape = 'u8[524288]{0}', space=vmem, size = 0x80000, scoped, tag = 'input window, operand 0']
    #allocation6 [shape = 'u8[65536]{0}', space=vmem, size = 0x10000, scoped, tag = 'output window, operand 0']
    #allocation7 [shape = 's32[2]{0}', space=sflag, size = 0x8, scoped, tag = 'scoped memory for tpu_custom_call.1']
    %14 = vsyncpa [#allocation7], 0
    %s15 = scalar_lea.sflag [#allocation7], 1
    %16 = vsyncpa %s15, 0
    loop: start=0, step=1, limit=4
    $region2: #{tpu_custom_call.1} parent=1 // loop_pre_header
      _
    $region3: #{tpu_custom_call.1} parent=1 // loop_header
      %s18 = sphi 0, %s22
      %p19 = scmp.ge.s32.totalorder %s18, 4
      %s25 = sphi 0, %s37
      %s26 = sphi 0, %s33
      %s27 = sphi 0, %s25
      %s28 = sphi 0, %s26
      %s29 = sphi 0, %s27
      %s30 = sphi 0, %s28
      %s42 = sphi 0, %s44
      %s45 = sphi 0, %s42
      %s46 = sphi 0, %s45
      %s62 = sphi 0, %s46
      %s66 = sphi 0, %s66
      %s68 = sphi 0, %s66
      %s69 = sphi 0, %s68
      %s83 = sphi 0, %s69
      %s87 = sphi 0, %s87
      %s89 = sphi 0, %s87
      %s90 = sphi 0, %s89
      %s104 = sphi 0, %s90
      %s108 = sphi 0, %s108
      %s110 = sphi 0, %s108
      %s111 = sphi 0, %s110
      %s125 = sphi 0, %s111
      %s129 = sphi 0, %s129
      %s131 = sphi 0, %s129
      %s132 = sphi 0, %s131
      %s146 = sphi 0, %s132
      %s150 = sphi 0, %s150
      %s152 = sphi 0, %s150
      %s153 = sphi 0, %s152
      %s167 = sphi 0, %s153
      %s171 = sphi 0, %s171
      %s173 = sphi 0, %s171
      %s174 = sphi 0, %s173
      %s188 = sphi 0, %s174
      %s192 = sphi 0, %s192
      %s194 = sphi 0, %s192
      %s195 = sphi 0, %s194
      %s209 = sphi 0, %s195
      %s213 = sphi 0, %s213
      %s215 = sphi 0, %s213
      %s216 = sphi 0, %s215
      %s230 = sphi 0, %s216
      %s236 = sphi 0, %s238
      %s239 = sphi 0, %s236
      %s240 = sphi 0, %s239
      %s256 = sphi 0, %s240
    $region4: #{tpu_custom_call.1} parent=1 // loop_header_branch
      %21 = sbr.rel (%p19) target = $region8
    $region5: #{tpu_custom_call.1} parent=1 // loop_body
      %s23 = ssub.s32 %s18, 1
      %s24 = ssub.s32 %s18, 2
      %s31 = sadd.s32 1, %s26
      %p32 = scmp.ge.s32.totalorder %s31, 1
      %s33 = scalar_select %p32, 0, %s31
      %s34 = sadd.s32 1, %s25
      %s35 = scalar_select %p32, %s34, %s25
      %p36 = scmp.ge.s32.totalorder %s35, 2
      %s37 = scalar_select %p36, 0, %s35
      %s38 = ssub.s32 %s26, %s33
      %s39 = ssub.s32 %s25, %s37
      %s40 = sor.u32 %s38, %s39
      %p41 = scmp.eq.s32.totalorder %s40, 0
      %s43 = sadd.s32 %s42, 1
      %s44 = scalar_select %p41, %s42, %s43
      %p47 = pneg %p41
      %p48 = scmp.eq.s32.totalorder %s18, 1
      %p49 = por %p47, %p48
      %p50 = scmp.ne.s32.totalorder %s42, %s45
      %p51 = scmp.eq.s32.totalorder %s18, 0
      %p52 = por %p50, %p51
      %p53 = scmp.ne.s32.totalorder %s42, %s45
      %p54 = scmp.eq.s32.totalorder %s23, 1
      %p55 = por %p53, %p54
      %p56 = scmp.ne.s32.totalorder %s45, %s46
      %p57 = scmp.eq.s32.totalorder %s23, 0
      %p58 = por %p56, %p57
      %p59 = scmp.ne.s32.totalorder %s45, %s46
      %p60 = scmp.eq.s32.totalorder %s24, 1
      %p61 = por %p59, %p60
      %p63 = scmp.ne.s32.totalorder %s46, %s62
      %p64 = scmp.eq.s32.totalorder %s24, 0
      %p65 = por %p63, %p64
      %s67 = sadd.s32 %s66, 1
      %p70 = scmp.eq.s32.totalorder %s18, 1
      %p71 = scmp.ne.s32.totalorder %s66, %s68
      %p72 = scmp.eq.s32.totalorder %s18, 0
      %p73 = por %p71, %p72
      %p74 = scmp.ne.s32.totalorder %s66, %s68
      %p75 = scmp.eq.s32.totalorder %s23, 1
      %p76 = por %p74, %p75
      %p77 = scmp.ne.s32.totalorder %s68, %s69
      %p78 = scmp.eq.s32.totalorder %s23, 0
      %p79 = por %p77, %p78
      %p80 = scmp.ne.s32.totalorder %s68, %s69
      %p81 = scmp.eq.s32.totalorder %s24, 1
      %p82 = por %p80, %p81
      %p84 = scmp.ne.s32.totalorder %s69, %s83
      %p85 = scmp.eq.s32.totalorder %s24, 0
      %p86 = por %p84, %p85
      %s88 = sadd.s32 %s87, 1
      %p91 = scmp.eq.s32.totalorder %s18, 1
      %p92 = scmp.ne.s32.totalorder %s87, %s89
      %p93 = scmp.eq.s32.totalorder %s18, 0
      %p94 = por %p92, %p93
      %p95 = scmp.ne.s32.totalorder %s87, %s89
      %p96 = scmp.eq.s32.totalorder %s23, 1
      %p97 = por %p95, %p96
      %p98 = scmp.ne.s32.totalorder %s89, %s90
      %p99 = scmp.eq.s32.totalorder %s23, 0
      %p100 = por %p98, %p99
      %p101 = scmp.ne.s32.totalorder %s89, %s90
      %p102 = scmp.eq.s32.totalorder %s24, 1
      %p103 = por %p101, %p102
      %p105 = scmp.ne.s32.totalorder %s90, %s104
      %p106 = scmp.eq.s32.totalorder %s24, 0
      %p107 = por %p105, %p106
      %s109 = sadd.s32 %s108, 1
      %p112 = scmp.eq.s32.totalorder %s18, 1
      %p113 = scmp.ne.s32.totalorder %s108, %s110
      %p114 = scmp.eq.s32.totalorder %s18, 0
      %p115 = por %p113, %p114
      %p116 = scmp.ne.s32.totalorder %s108, %s110
      %p117 = scmp.eq.s32.totalorder %s23, 1
      %p118 = por %p116, %p117
      %p119 = scmp.ne.s32.totalorder %s110, %s111
      %p120 = scmp.eq.s32.totalorder %s23, 0
      %p121 = por %p119, %p120
      %p122 = scmp.ne.s32.totalorder %s110, %s111
      %p123 = scmp.eq.s32.totalorder %s24, 1
      %p124 = por %p122, %p123
      %p126 = scmp.ne.s32.totalorder %s111, %s125
      %p127 = scmp.eq.s32.totalorder %s24, 0
      %p128 = por %p126, %p127
      %s130 = sadd.s32 %s129, 1
      %p133 = scmp.eq.s32.totalorder %s18, 1
      %p134 = scmp.ne.s32.totalorder %s129, %s131
      %p135 = scmp.eq.s32.totalorder %s18, 0
      %p136 = por %p134, %p135
      %p137 = scmp.ne.s32.totalorder %s129, %s131
      %p138 = scmp.eq.s32.totalorder %s23, 1
      %p139 = por %p137, %p138
      %p140 = scmp.ne.s32.totalorder %s131, %s132
      %p141 = scmp.eq.s32.totalorder %s23, 0
      %p142 = por %p140, %p141
      %p143 = scmp.ne.s32.totalorder %s131, %s132
      %p144 = scmp.eq.s32.totalorder %s24, 1
      %p145 = por %p143, %p144
      %p147 = scmp.ne.s32.totalorder %s132, %s146
      %p148 = scmp.eq.s32.totalorder %s24, 0
      %p149 = por %p147, %p148
      %s151 = sadd.s32 %s150, 1
      %p154 = scmp.eq.s32.totalorder %s18, 1
      %p155 = scmp.ne.s32.totalorder %s150, %s152
      %p156 = scmp.eq.s32.totalorder %s18, 0
      %p157 = por %p155, %p156
      %p158 = scmp.ne.s32.totalorder %s150, %s152
      %p159 = scmp.eq.s32.totalorder %s23, 1
      %p160 = por %p158, %p159
      %p161 = scmp.ne.s32.totalorder %s152, %s153
      %p162 = scmp.eq.s32.totalorder %s23, 0
      %p163 = por %p161, %p162
      %p164 = scmp.ne.s32.totalorder %s152, %s153
      %p165 = scmp.eq.s32.totalorder %s24, 1
      %p166 = por %p164, %p165
      %p168 = scmp.ne.s32.totalorder %s153, %s167
      %p169 = scmp.eq.s32.totalorder %s24, 0
      %p170 = por %p168, %p169
      %s172 = sadd.s32 %s171, 1
      %p175 = scmp.eq.s32.totalorder %s18, 1
      %p176 = scmp.ne.s32.totalorder %s171, %s173
      %p177 = scmp.eq.s32.totalorder %s18, 0
      %p178 = por %p176, %p177
      %p179 = scmp.ne.s32.totalorder %s171, %s173
      %p180 = scmp.eq.s32.totalorder %s23, 1
      %p181 = por %p179, %p180
      %p182 = scmp.ne.s32.totalorder %s173, %s174
      %p183 = scmp.eq.s32.totalorder %s23, 0
      %p184 = por %p182, %p183
      %p185 = scmp.ne.s32.totalorder %s173, %s174
      %p186 = scmp.eq.s32.totalorder %s24, 1
      %p187 = por %p185, %p186
      %p189 = scmp.ne.s32.totalorder %s174, %s188
      %p190 = scmp.eq.s32.totalorder %s24, 0
      %p191 = por %p189, %p190
      %s193 = sadd.s32 %s192, 1
      %p196 = scmp.eq.s32.totalorder %s18, 1
      %p197 = scmp.ne.s32.totalorder %s192, %s194
      %p198 = scmp.eq.s32.totalorder %s18, 0
      %p199 = por %p197, %p198
      %p200 = scmp.ne.s32.totalorder %s192, %s194
      %p201 = scmp.eq.s32.totalorder %s23, 1
      %p202 = por %p200, %p201
      %p203 = scmp.ne.s32.totalorder %s194, %s195
      %p204 = scmp.eq.s32.totalorder %s23, 0
      %p205 = por %p203, %p204
      %p206 = scmp.ne.s32.totalorder %s194, %s195
      %p207 = scmp.eq.s32.totalorder %s24, 1
      %p208 = por %p206, %p207
      %p210 = scmp.ne.s32.totalorder %s195, %s209
      %p211 = scmp.eq.s32.totalorder %s24, 0
      %p212 = por %p210, %p211
      %s214 = sadd.s32 %s213, 1
      %p217 = scmp.eq.s32.totalorder %s18, 1
      %p218 = scmp.ne.s32.totalorder %s213, %s215
      %p219 = scmp.eq.s32.totalorder %s18, 0
      %p220 = por %p218, %p219
      %p221 = scmp.ne.s32.totalorder %s213, %s215
      %p222 = scmp.eq.s32.totalorder %s23, 1
      %p223 = por %p221, %p222
      %p224 = scmp.ne.s32.totalorder %s215, %s216
      %p225 = scmp.eq.s32.totalorder %s23, 0
      %p226 = por %p224, %p225
      %p227 = scmp.ne.s32.totalorder %s215, %s216
      %p228 = scmp.eq.s32.totalorder %s24, 1
      %p229 = por %p227, %p228
      %p231 = scmp.ne.s32.totalorder %s216, %s230
      %p232 = scmp.eq.s32.totalorder %s24, 0
      %p233 = por %p231, %p232
      %s234 = ssub.s32 %s25, %s37
      %p235 = scmp.eq.s32.totalorder %s234, 0
      %s237 = sadd.s32 %s236, 1
      %s238 = scalar_select %p235, %s236, %s237
      %p241 = pneg %p235
      %p242 = scmp.eq.s32.totalorder %s18, 1
      %p243 = por %p241, %p242
      %p244 = scmp.ne.s32.totalorder %s236, %s239
      %p245 = scmp.eq.s32.totalorder %s18, 0
      %p246 = por %p244, %p245
      %p247 = scmp.ne.s32.totalorder %s236, %s239
      %p248 = scmp.eq.s32.totalorder %s23, 1
      %p249 = por %p247, %p248
      %p250 = scmp.ne.s32.totalorder %s239, %s240
      %p251 = scmp.eq.s32.totalorder %s23, 0
      %p252 = por %p250, %p251
      %p253 = scmp.ne.s32.totalorder %s239, %s240
      %p254 = scmp.eq.s32.totalorder %s24, 1
      %p255 = por %p253, %p254
      %p257 = scmp.ne.s32.totalorder %s240, %s256
      %p258 = scmp.eq.s32.totalorder %s24, 0
      %p259 = por %p257, %p258
      %p260 = scmp.le.s32.totalorder 1, %s18
      %p261 = scmp.lt.s32.totalorder %s18, 3
      %p262 = pnand %p260, %p261
      %p263 = pneg %p262
      // Predicated region
      $region9: #{tpu_custom_call.1} parent=5 // pred_check
        _
      $region10: #{tpu_custom_call.1} parent=5 // pred_check_branch
        %265 = sbr.rel (%p262) target = $region12
      $region11: #{tpu_custom_call.1} parent=5 // pred_region
        %s266 = ssub.s32 %s18, 1
        // Predicated region
        $region13: #{tpu_custom_call.1} parent=11 // pred_check
          %p267 = pneg %p79
        $region14: #{tpu_custom_call.1} parent=11 // pred_check_branch
          %269 = sbr.rel (%p267) target = $region16
        $region15: #{tpu_custom_call.1} parent=11 // pred_region
          _
        $region16: #{tpu_custom_call.1} parent=11 // pred_fallthru
          _
        // Predicated region
        $region17: #{tpu_custom_call.1} parent=11 // pred_check
          %p270 = pneg %p100
        $region18: #{tpu_custom_call.1} parent=11 // pred_check_branch
          %272 = sbr.rel (%p270) target = $region20
        $region19: #{tpu_custom_call.1} parent=11 // pred_region
          _
        $region20: #{tpu_custom_call.1} parent=11 // pred_fallthru
          _
        // Predicated region
        $region21: #{tpu_custom_call.1} parent=11 // pred_check
          %p273 = pneg %p121
        $region22: #{tpu_custom_call.1} parent=11 // pred_check_branch
          %275 = sbr.rel (%p273) target = $region24
        $region23: #{tpu_custom_call.1} parent=11 // pred_region
          _
        $region24: #{tpu_custom_call.1} parent=11 // pred_fallthru
          _
        // Predicated region
        $region25: #{tpu_custom_call.1} parent=11 // pred_check
          %p276 = pneg %p142
        $region26: #{tpu_custom_call.1} parent=11 // pred_check_branch
          %278 = sbr.rel (%p276) target = $region28
        $region27: #{tpu_custom_call.1} parent=11 // pred_region
          _
        $region28: #{tpu_custom_call.1} parent=11 // pred_fallthru
          _
        // Predicated region
        $region29: #{tpu_custom_call.1} parent=11 // pred_check
          %p279 = pneg %p163
        $region30: #{tpu_custom_call.1} parent=11 // pred_check_branch
          %281 = sbr.rel (%p279) target = $region32
        $region31: #{tpu_custom_call.1} parent=11 // pred_region
          _
        $region32: #{tpu_custom_call.1} parent=11 // pred_fallthru
          _
        // Predicated region
        $region33: #{tpu_custom_call.1} parent=11 // pred_check
          %p282 = pneg %p184
        $region34: #{tpu_custom_call.1} parent=11 // pred_check_branch
          %284 = sbr.rel (%p282) target = $region36
        $region35: #{tpu_custom_call.1} parent=11 // pred_region
          _
        $region36: #{tpu_custom_call.1} parent=11 // pred_fallthru
          _
        // Predicated region
        $region37: #{tpu_custom_call.1} parent=11 // pred_check
          %p285 = pneg %p205
        $region38: #{tpu_custom_call.1} parent=11 // pred_check_branch
          %287 = sbr.rel (%p285) target = $region40
        $region39: #{tpu_custom_call.1} parent=11 // pred_region
          _
        $region40: #{tpu_custom_call.1} parent=11 // pred_fallthru
          _
        // Predicated region
        $region41: #{tpu_custom_call.1} parent=11 // pred_check
          %p288 = pneg %p226
        $region42: #{tpu_custom_call.1} parent=11 // pred_check_branch
          %290 = sbr.rel (%p288) target = $region44
        $region43: #{tpu_custom_call.1} parent=11 // pred_region
          _
        $region44: #{tpu_custom_call.1} parent=11 // pred_fallthru
          _
      $region12: #{tpu_custom_call.1} parent=5 // pred_fallthru
        _
      %p291 = scmp.lt.s32.totalorder %s18, 2
      // Predicated region
      $region45: #{tpu_custom_call.1} parent=5 // pred_check
        %p292 = pneg %p291
      $region46: #{tpu_custom_call.1} parent=5 // pred_check_branch
        %294 = sbr.rel (%p292) target = $region48
      $region47: #{tpu_custom_call.1} parent=5 // pred_region
        // Predicated region
        $region49: #{tpu_custom_call.1} parent=47 // pred_check
          %p295 = pneg %p52
        $region50: #{tpu_custom_call.1} parent=47 // pred_check_branch
          %297 = sbr.rel (%p295) target = $region52
        $region51: #{tpu_custom_call.1} parent=47 // pred_region
          %s298 = sand.u32 %s42, 1
          %s299 = sand.u32 %s42, 1
          %s300 = smul.addr %s299, 512
          %s301 = scalar_lea.vmem [#allocation5], %s300
          %s302 = smul.u32 8, %s26
          %s303 = smul.u32 8, %s25
          %s304 = smul.addr %s302, 16
          %s305 = sadd.s32 %s303, %s304
          %s306 = smul.addr %s305, 8
          %s307 = scalar_lea.vmem %s0, %s306
          // Predicated region
          $region53: #{tpu_custom_call.1} parent=51 // pred_check
            _
          $region54: #{tpu_custom_call.1} parent=51 // pred_check_branch
            %309 = sbr.rel (0) target = $region56
          $region55: #{tpu_custom_call.1} parent=51 // pred_region
            // Predicated region
            $region57: #{tpu_custom_call.1} parent=55 // pred_check
              _
            $region58: #{tpu_custom_call.1} parent=55 // pred_check_branch
              %311 = sbr.rel (0) target = $region60
            $region59: #{tpu_custom_call.1} parent=55 // pred_region
              // Predicated region
              $region72: #{tpu_custom_call.1} parent=59 // pred_check
                _
              $region73: #{tpu_custom_call.1} parent=59 // pred_check_branch
                %453 = sbr.rel (0) target = $region75
              $region74: #{tpu_custom_call.1} parent=59 // pred_region
                loop: start=0, step=1, limit=1
                $region76: #{tpu_custom_call.1} parent=74 // loop_pre_header
                  _
                $region77: #{tpu_custom_call.1} parent=74 // loop_header
                  %s455 = sphi 0, %s459
                  %p456 = scmp.ge.s32.totalorder %s455, 1
                  %s460 = sphi %s307, %s307
                  %s461 = sphi %s301, %s301
                $region78: #{tpu_custom_call.1} parent=74 // loop_header_branch
                  %458 = sbr.rel (%p456) target = $region82
                $region79: #{tpu_custom_call.1} parent=74 // loop_body
                  %v462 = vld [vmem:[%s460] sm:$0xff]
                  %463 = vst [vmem:[%s461] sm:$0xff] %v462
                  %v464 = vld [vmem:[%s460 + $0x8] sm:$0xff]
                  %465 = vst [vmem:[%s461 + $0x8] sm:$0xff] %v464
                  %v466 = vld [vmem:[%s460 + $0x10] sm:$0xff]
                  %467 = vst [vmem:[%s461 + $0x10] sm:$0xff] %v466
                  %v468 = vld [vmem:[%s460 + $0x18] sm:$0xff]
                  %469 = vst [vmem:[%s461 + $0x18] sm:$0xff] %v468
                  %v470 = vld [vmem:[%s460 + $0x20] sm:$0xff]
                  %471 = vst [vmem:[%s461 + $0x20] sm:$0xff] %v470
                  %v472 = vld [vmem:[%s460 + $0x28] sm:$0xff]
                  %473 = vst [vmem:[%s461 + $0x28] sm:$0xff] %v472
                  %v474 = vld [vmem:[%s460 + $0x30] sm:$0xff]
                  %475 = vst [vmem:[%s461 + $0x30] sm:$0xff] %v474
                  %v476 = vld [vmem:[%s460 + $0x38] sm:$0xff]
                  %477 = vst [vmem:[%s461 + $0x38] sm:$0xff] %v476
                  %v478 = vld [vmem:[%s460 + $0x80] sm:$0xff]
                  %479 = vst [vmem:[%s461 + $0x40] sm:$0xff] %v478
                  %v480 = vld [vmem:[%s460 + $0x88] sm:$0xff]
                  %481 = vst [vmem:[%s461 + $0x48] sm:$0xff] %v480
                  %v482 = vld [vmem:[%s460 + $0x90] sm:$0xff]
                  %483 = vst [vmem:[%s461 + $0x50] sm:$0xff] %v482
                  %v484 = vld [vmem:[%s460 + $0x98] sm:$0xff]
                  %485 = vst [vmem:[%s461 + $0x58] sm:$0xff] %v484
                  %v486 = vld [vmem:[%s460 + $0xa0] sm:$0xff]
                  %487 = vst [vmem:[%s461 + $0x60] sm:$0xff] %v486
                  %v488 = vld [vmem:[%s460 + $0xa8] sm:$0xff]
                  %489 = vst [vmem:[%s461 + $0x68] sm:$0xff] %v488
                  %v490 = vld [vmem:[%s460 + $0xb0] sm:$0xff]
                  %491 = vst [vmem:[%s461 + $0x70] sm:$0xff] %v490
                  %v492 = vld [vmem:[%s460 + $0xb8] sm:$0xff]
                  %493 = vst [vmem:[%s461 + $0x78] sm:$0xff] %v492
                  %v494 = vld [vmem:[%s460 + $0x100] sm:$0xff]
                  %495 = vst [vmem:[%s461 + $0x80] sm:$0xff] %v494
                  %v496 = vld [vmem:[%s460 + $0x108] sm:$0xff]
                  %497 = vst [vmem:[%s461 + $0x88] sm:$0xff] %v496
                  %v498 = vld [vmem:[%s460 + $0x110] sm:$0xff]
                  %499 = vst [vmem:[%s461 + $0x90] sm:$0xff] %v498
                  %v500 = vld [vmem:[%s460 + $0x118] sm:$0xff]
                  %501 = vst [vmem:[%s461 + $0x98] sm:$0xff] %v500
                  %v502 = vld [vmem:[%s460 + $0x120] sm:$0xff]
                  %503 = vst [vmem:[%s461 + $0xa0] sm:$0xff] %v502
                  %v504 = vld [vmem:[%s460 + $0x128] sm:$0xff]
                  %505 = vst [vmem:[%s461 + $0xa8] sm:$0xff] %v504
                  %v506 = vld [vmem:[%s460 + $0x130] sm:$0xff]
                  %507 = vst [vmem:[%s461 + $0xb0] sm:$0xff] %v506
                  %v508 = vld [vmem:[%s460 + $0x138] sm:$0xff]
                  %509 = vst [vmem:[%s461 + $0xb8] sm:$0xff] %v508
                  %v510 = vld [vmem:[%s460 + $0x180] sm:$0xff]
                  %511 = vst [vmem:[%s461 + $0xc0] sm:$0xff] %v510
                  %v512 = vld [vmem:[%s460 + $0x188] sm:$0xff]
                  %513 = vst [vmem:[%s461 + $0xc8] sm:$0xff] %v512
                  %v514 = vld [vmem:[%s460 + $0x190] sm:$0xff]
                  %515 = vst [vmem:[%s461 + $0xd0] sm:$0xff] %v514
                  %v516 = vld [vmem:[%s460 + $0x198] sm:$0xff]
                  %517 = vst [vmem:[%s461 + $0xd8] sm:$0xff] %v516
                  %v518 = vld [vmem:[%s460 + $0x1a0] sm:$0xff]
                  %519 = vst [vmem:[%s461 + $0xe0] sm:$0xff] %v518
                  %v520 = vld [vmem:[%s460 + $0x1a8] sm:$0xff]
                  %521 = vst [vmem:[%s461 + $0xe8] sm:$0xff] %v520
                  %v522 = vld [vmem:[%s460 + $0x1b0] sm:$0xff]
                  %523 = vst [vmem:[%s461 + $0xf0] sm:$0xff] %v522
                  %v524 = vld [vmem:[%s460 + $0x1b8] sm:$0xff]
                  %525 = vst [vmem:[%s461 + $0xf8] sm:$0xff] %v524
                  %v526 = vld [vmem:[%s460 + $0x200] sm:$0xff]
                  %527 = vst [vmem:[%s461 + $0x100] sm:$0xff] %v526
                  %v528 = vld [vmem:[%s460 + $0x208] sm:$0xff]
                  %529 = vst [vmem:[%s461 + $0x108] sm:$0xff] %v528
                  %v530 = vld [vmem:[%s460 + $0x210] sm:$0xff]
                  %531 = vst [vmem:[%s461 + $0x110] sm:$0xff] %v530
                  %v532 = vld [vmem:[%s460 + $0x218] sm:$0xff]
                  %533 = vst [vmem:[%s461 + $0x118] sm:$0xff] %v532
                  %v534 = vld [vmem:[%s460 + $0x220] sm:$0xff]
                  %535 = vst [vmem:[%s461 + $0x120] sm:$0xff] %v534
                  %v536 = vld [vmem:[%s460 + $0x228] sm:$0xff]
                  %537 = vst [vmem:[%s461 + $0x128] sm:$0xff] %v536
                  %v538 = vld [vmem:[%s460 + $0x230] sm:$0xff]
                  %539 = vst [vmem:[%s461 + $0x130] sm:$0xff] %v538
                  %v540 = vld [vmem:[%s460 + $0x238] sm:$0xff]
                  %541 = vst [vmem:[%s461 + $0x138] sm:$0xff] %v540
                  %v542 = vld [vmem:[%s460 + $0x280] sm:$0xff]
                  %543 = vst [vmem:[%s461 + $0x140] sm:$0xff] %v542
                  %v544 = vld [vmem:[%s460 + $0x288] sm:$0xff]
                  %545 = vst [vmem:[%s461 + $0x148] sm:$0xff] %v544
                  %v546 = vld [vmem:[%s460 + $0x290] sm:$0xff]
                  %547 = vst [vmem:[%s461 + $0x150] sm:$0xff] %v546
                  %v548 = vld [vmem:[%s460 + $0x298] sm:$0xff]
                  %549 = vst [vmem:[%s461 + $0x158] sm:$0xff] %v548
                  %v550 = vld [vmem:[%s460 + $0x2a0] sm:$0xff]
                  %551 = vst [vmem:[%s461 + $0x160] sm:$0xff] %v550
                  %v552 = vld [vmem:[%s460 + $0x2a8] sm:$0xff]
                  %553 = vst [vmem:[%s461 + $0x168] sm:$0xff] %v552
                  %v554 = vld [vmem:[%s460 + $0x2b0] sm:$0xff]
                  %555 = vst [vmem:[%s461 + $0x170] sm:$0xff] %v554
                  %v556 = vld [vmem:[%s460 + $0x2b8] sm:$0xff]
                  %557 = vst [vmem:[%s461 + $0x178] sm:$0xff] %v556
                  %v558 = vld [vmem:[%s460 + $0x300] sm:$0xff]
                  %559 = vst [vmem:[%s461 + $0x180] sm:$0xff] %v558
                  %v560 = vld [vmem:[%s460 + $0x308] sm:$0xff]
                  %561 = vst [vmem:[%s461 + $0x188] sm:$0xff] %v560
                  %v562 = vld [vmem:[%s460 + $0x310] sm:$0xff]
                  %563 = vst [vmem:[%s461 + $0x190] sm:$0xff] %v562
                  %v564 = vld [vmem:[%s460 + $0x318] sm:$0xff]
                  %565 = vst [vmem:[%s461 + $0x198] sm:$0xff] %v564
                  %v566 = vld [vmem:[%s460 + $0x320] sm:$0xff]
                  %567 = vst [vmem:[%s461 + $0x1a0] sm:$0xff] %v566
                  %v568 = vld [vmem:[%s460 + $0x328] sm:$0xff]
                  %569 = vst [vmem:[%s461 + $0x1a8] sm:$0xff] %v568
                  %v570 = vld [vmem:[%s460 + $0x330] sm:$0xff]
                  %571 = vst [vmem:[%s461 + $0x1b0] sm:$0xff] %v570
                  %v572 = vld [vmem:[%s460 + $0x338] sm:$0xff]
                  %573 = vst [vmem:[%s461 + $0x1b8] sm:$0xff] %v572
                  %v574 = vld [vmem:[%s460 + $0x380] sm:$0xff]
                  %575 = vst [vmem:[%s461 + $0x1c0] sm:$0xff] %v574
                  %v576 = vld [vmem:[%s460 + $0x388] sm:$0xff]
                  %577 = vst [vmem:[%s461 + $0x1c8] sm:$0xff] %v576
                  %v578 = vld [vmem:[%s460 + $0x390] sm:$0xff]
                  %579 = vst [vmem:[%s461 + $0x1d0] sm:$0xff] %v578
                  %v580 = vld [vmem:[%s460 + $0x398] sm:$0xff]
                  %581 = vst [vmem:[%s461 + $0x1d8] sm:$0xff] %v580
                  %v582 = vld [vmem:[%s460 + $0x3a0] sm:$0xff]
                  %583 = vst [vmem:[%s461 + $0x1e0] sm:$0xff] %v582
                  %v584 = vld [vmem:[%s460 + $0x3a8] sm:$0xff]
                  %585 = vst [vmem:[%s461 + $0x1e8] sm:$0xff] %v584
                  %v586 = vld [vmem:[%s460 + $0x3b0] sm:$0xff]
                  %587 = vst [vmem:[%s461 + $0x1f0] sm:$0xff] %v586
                  %v588 = vld [vmem:[%s460 + $0x3b8] sm:$0xff]
                  %589 = vst [vmem:[%s461 + $0x1f8] sm:$0xff] %v588
                $region80: #{tpu_custom_call.1} parent=74 // loop_footer
                  %s459 = sadd.s32 1, %s455
                $region81: #{tpu_custom_call.1} parent=74 // loop_footer_branch
                  %454 = sbr.rel target = $region77
                $region82: #{tpu_custom_call.1} parent=74 // loop_exit
                  _
              $region75: #{tpu_custom_call.1} parent=59 // pred_fallthru
                _
              // Predicated region
              $region83: #{tpu_custom_call.1} parent=59 // pred_check
                _
              $region84: #{tpu_custom_call.1} parent=59 // pred_check_branch
                %591 = sbr.rel target = $region86
              $region85: #{tpu_custom_call.1} parent=59 // pred_region
                _
              $region86: #{tpu_custom_call.1} parent=59 // pred_fallthru
                _
            $region60: #{tpu_custom_call.1} parent=55 // pred_fallthru
              _
            // Predicated region
            $region61: #{tpu_custom_call.1} parent=55 // pred_check
              _
            $region62: #{tpu_custom_call.1} parent=55 // pred_check_branch
              %313 = sbr.rel target = $region64
            $region63: #{tpu_custom_call.1} parent=55 // pred_region
              %s315 = ssub.s32 256, 1
              loop: start=0, step=1, limit=1
              $region65: #{tpu_custom_call.1} parent=63 // loop_pre_header
                _
              $region66: #{tpu_custom_call.1} parent=63 // loop_header
                %s317 = sphi 0, %s321
                %p318 = scmp.ge.s32.totalorder %s317, 1
                %s322 = sphi %s307, %s307
                %s323 = sphi %s301, %s301
              $region67: #{tpu_custom_call.1} parent=63 // loop_header_branch
                %320 = sbr.rel (%p318) target = $region71
              $region68: #{tpu_custom_call.1} parent=63 // loop_body
                %v324 = vld [vmem:[%s322] sm:%s315]
                %325 = vst [vmem:[%s323] sm:%s315] %v324
                %v326 = vld [vmem:[%s322 + $0x8] sm:%s315]
                %327 = vst [vmem:[%s323 + $0x8] sm:%s315] %v326
                %v328 = vld [vmem:[%s322 + $0x10] sm:%s315]
                %329 = vst [vmem:[%s323 + $0x10] sm:%s315] %v328
                %v330 = vld [vmem:[%s322 + $0x18] sm:%s315]
                %331 = vst [vmem:[%s323 + $0x18] sm:%s315] %v330
                %v332 = vld [vmem:[%s322 + $0x20] sm:%s315]
                %333 = vst [vmem:[%s323 + $0x20] sm:%s315] %v332
                %v334 = vld [vmem:[%s322 + $0x28] sm:%s315]
                %335 = vst [vmem:[%s323 + $0x28] sm:%s315] %v334
                %v336 = vld [vmem:[%s322 + $0x30] sm:%s315]
                %337 = vst [vmem:[%s323 + $0x30] sm:%s315] %v336
                %v338 = vld [vmem:[%s322 + $0x38] sm:%s315]
                %339 = vst [vmem:[%s323 + $0x38] sm:%s315] %v338
                %v340 = vld [vmem:[%s322 + $0x80] sm:%s315]
                %341 = vst [vmem:[%s323 + $0x40] sm:%s315] %v340
                %v342 = vld [vmem:[%s322 + $0x88] sm:%s315]
                %343 = vst [vmem:[%s323 + $0x48] sm:%s315] %v342
                %v344 = vld [vmem:[%s322 + $0x90] sm:%s315]
                %345 = vst [vmem:[%s323 + $0x50] sm:%s315] %v344
                %v346 = vld [vmem:[%s322 + $0x98] sm:%s315]
                %347 = vst [vmem:[%s323 + $0x58] sm:%s315] %v346
                %v348 = vld [vmem:[%s322 + $0xa0] sm:%s315]
                %349 = vst [vmem:[%s323 + $0x60] sm:%s315] %v348
                %v350 = vld [vmem:[%s322 + $0xa8] sm:%s315]
                %351 = vst [vmem:[%s323 + $0x68] sm:%s315] %v350
                %v352 = vld [vmem:[%s322 + $0xb0] sm:%s315]
                %353 = vst [vmem:[%s323 + $0x70] sm:%s315] %v352
                %v354 = vld [vmem:[%s322 + $0xb8] sm:%s315]
                %355 = vst [vmem:[%s323 + $0x78] sm:%s315] %v354
                %v356 = vld [vmem:[%s322 + $0x100] sm:%s315]
                %357 = vst [vmem:[%s323 + $0x80] sm:%s315] %v356
                %v358 = vld [vmem:[%s322 + $0x108] sm:%s315]
                %359 = vst [vmem:[%s323 + $0x88] sm:%s315] %v358
                %v360 = vld [vmem:[%s322 + $0x110] sm:%s315]
                %361 = vst [vmem:[%s323 + $0x90] sm:%s315] %v360
                %v362 = vld [vmem:[%s322 + $0x118] sm:%s315]
                %363 = vst [vmem:[%s323 + $0x98] sm:%s315] %v362
                %v364 = vld [vmem:[%s322 + $0x120] sm:%s315]
                %365 = vst [vmem:[%s323 + $0xa0] sm:%s315] %v364
                %v366 = vld [vmem:[%s322 + $0x128] sm:%s315]
                %367 = vst [vmem:[%s323 + $0xa8] sm:%s315] %v366
                %v368 = vld [vmem:[%s322 + $0x130] sm:%s315]
                %369 = vst [vmem:[%s323 + $0xb0] sm:%s315] %v368
                %v370 = vld [vmem:[%s322 + $0x138] sm:%s315]
                %371 = vst [vmem:[%s323 + $0xb8] sm:%s315] %v370
                %v372 = vld [vmem:[%s322 + $0x180] sm:%s315]
                %373 = vst [vmem:[%s323 + $0xc0] sm:%s315] %v372
                %v374 = vld [vmem:[%s322 + $0x188] sm:%s315]
                %375 = vst [vmem:[%s323 + $0xc8] sm:%s315] %v374
                %v376 = vld [vmem:[%s322 + $0x190] sm:%s315]
                %377 = vst [vmem:[%s323 + $0xd0] sm:%s315] %v376
                %v378 = vld [vmem:[%s322 + $0x198] sm:%s315]
                %379 = vst [vmem:[%s323 + $0xd8] sm:%s315] %v378
                %v380 = vld [vmem:[%s322 + $0x1a0] sm:%s315]
                %381 = vst [vmem:[%s323 + $0xe0] sm:%s315] %v380
                %v382 = vld [vmem:[%s322 + $0x1a8] sm:%s315]
                %383 = vst [vmem:[%s323 + $0xe8] sm:%s315] %v382
                %v384 = vld [vmem:[%s322 + $0x1b0] sm:%s315]
                %385 = vst [vmem:[%s323 + $0xf0] sm:%s315] %v384
                %v386 = vld [vmem:[%s322 + $0x1b8] sm:%s315]
                %387 = vst [vmem:[%s323 + $0xf8] sm:%s315] %v386
                %v388 = vld [vmem:[%s322 + $0x200] sm:%s315]
                %389 = vst [vmem:[%s323 + $0x100] sm:%s315] %v388
                %v390 = vld [vmem:[%s322 + $0x208] sm:%s315]
                %391 = vst [vmem:[%s323 + $0x108] sm:%s315] %v390
                %v392 = vld [vmem:[%s322 + $0x210] sm:%s315]
                %393 = vst [vmem:[%s323 + $0x110] sm:%s315] %v392
                %v394 = vld [vmem:[%s322 + $0x218] sm:%s315]
                %395 = vst [vmem:[%s323 + $0x118] sm:%s315] %v394
                %v396 = vld [vmem:[%s322 + $0x220] sm:%s315]
                %397 = vst [vmem:[%s323 + $0x120] sm:%s315] %v396
                %v398 = vld [vmem:[%s322 + $0x228] sm:%s315]
                %399 = vst [vmem:[%s323 + $0x128] sm:%s315] %v398
                %v400 = vld [vmem:[%s322 + $0x230] sm:%s315]
                %401 = vst [vmem:[%s323 + $0x130] sm:%s315] %v400
                %v402 = vld [vmem:[%s322 + $0x238] sm:%s315]
                %403 = vst [vmem:[%s323 + $0x138] sm:%s315] %v402
                %v404 = vld [vmem:[%s322 + $0x280] sm:%s315]
                %405 = vst [vmem:[%s323 + $0x140] sm:%s315] %v404
                %v406 = vld [vmem:[%s322 + $0x288] sm:%s315]
                %407 = vst [vmem:[%s323 + $0x148] sm:%s315] %v406
                %v408 = vld [vmem:[%s322 + $0x290] sm:%s315]
                %409 = vst [vmem:[%s323 + $0x150] sm:%s315] %v408
                %v410 = vld [vmem:[%s322 + $0x298] sm:%s315]
                %411 = vst [vmem:[%s323 + $0x158] sm:%s315] %v410
                %v412 = vld [vmem:[%s322 + $0x2a0] sm:%s315]
                %413 = vst [vmem:[%s323 + $0x160] sm:%s315] %v412
                %v414 = vld [vmem:[%s322 + $0x2a8] sm:%s315]
                %415 = vst [vmem:[%s323 + $0x168] sm:%s315] %v414
                %v416 = vld [vmem:[%s322 + $0x2b0] sm:%s315]
                %417 = vst [vmem:[%s323 + $0x170] sm:%s315] %v416
                %v418 = vld [vmem:[%s322 + $0x2b8] sm:%s315]
                %419 = vst [vmem:[%s323 + $0x178] sm:%s315] %v418
                %v420 = vld [vmem:[%s322 + $0x300] sm:%s315]
                %421 = vst [vmem:[%s323 + $0x180] sm:%s315] %v420
                %v422 = vld [vmem:[%s322 + $0x308] sm:%s315]
                %423 = vst [vmem:[%s323 + $0x188] sm:%s315] %v422
                %v424 = vld [vmem:[%s322 + $0x310] sm:%s315]
                %425 = vst [vmem:[%s323 + $0x190] sm:%s315] %v424
                %v426 = vld [vmem:[%s322 + $0x318] sm:%s315]
                %427 = vst [vmem:[%s323 + $0x198] sm:%s315] %v426
                %v428 = vld [vmem:[%s322 + $0x320] sm:%s315]
                %429 = vst [vmem:[%s323 + $0x1a0] sm:%s315] %v428
                %v430 = vld [vmem:[%s322 + $0x328] sm:%s315]
                %431 = vst [vmem:[%s323 + $0x1a8] sm:%s315] %v430
                %v432 = vld [vmem:[%s322 + $0x330] sm:%s315]
                %433 = vst [vmem:[%s323 + $0x1b0] sm:%s315] %v432
                %v434 = vld [vmem:[%s322 + $0x338] sm:%s315]
                %435 = vst [vmem:[%s323 + $0x1b8] sm:%s315] %v434
                %v436 = vld [vmem:[%s322 + $0x380] sm:%s315]
                %437 = vst [vmem:[%s323 + $0x1c0] sm:%s315] %v436
                %v438 = vld [vmem:[%s322 + $0x388] sm:%s315]
                %439 = vst [vmem:[%s323 + $0x1c8] sm:%s315] %v438
                %v440 = vld [vmem:[%s322 + $0x390] sm:%s315]
                %441 = vst [vmem:[%s323 + $0x1d0] sm:%s315] %v440
                %v442 = vld [vmem:[%s322 + $0x398] sm:%s315]
                %443 = vst [vmem:[%s323 + $0x1d8] sm:%s315] %v442
                %v444 = vld [vmem:[%s322 + $0x3a0] sm:%s315]
                %445 = vst [vmem:[%s323 + $0x1e0] sm:%s315] %v444
                %v446 = vld [vmem:[%s322 + $0x3a8] sm:%s315]
                %447 = vst [vmem:[%s323 + $0x1e8] sm:%s315] %v446
                %v448 = vld [vmem:[%s322 + $0x3b0] sm:%s315]
                %449 = vst [vmem:[%s323 + $0x1f0] sm:%s315] %v448
                %v450 = vld [vmem:[%s322 + $0x3b8] sm:%s315]
                %451 = vst [vmem:[%s323 + $0x1f8] sm:%s315] %v450
              $region69: #{tpu_custom_call.1} parent=63 // loop_footer
                %s321 = sadd.s32 1, %s317
              $region70: #{tpu_custom_call.1} parent=63 // loop_footer_branch
                %316 = sbr.rel target = $region66
              $region71: #{tpu_custom_call.1} parent=63 // loop_exit
                _
            $region64: #{tpu_custom_call.1} parent=55 // pred_fallthru
              _
          $region56: #{tpu_custom_call.1} parent=51 // pred_fallthru
            _
          %592 = vnop
        $region52: #{tpu_custom_call.1} parent=47 // pred_fallthru
          _
      $region48: #{tpu_custom_call.1} parent=5 // pred_fallthru
        _
      %p593 = scmp.le.s32.totalorder 1, %s18
      %p594 = scmp.lt.s32.totalorder %s18, 3
      %p595 = pnand %p593, %p594
      %p596 = pneg %p595
      // Predicated region
      $region87: #{tpu_custom_call.1} parent=5 // pred_check
        _
      $region88: #{tpu_custom_call.1} parent=5 // pred_check_branch
        %598 = sbr.rel (%p595) target = $region90
      $region89: #{tpu_custom_call.1} parent=5 // pred_region
        %s599 = ssub.s32 %s18, 1
        %s600 = sand.u32 %s45, 1
        %s601 = sand.u32 %s45, 1
        %s602 = smul.addr %s601, 512
        %s603 = scalar_lea.vmem [#allocation5], %s602
        // Predicated region
        $region91: #{tpu_custom_call.1} parent=89 // pred_check
          %p604 = pneg %p58
        $region92: #{tpu_custom_call.1} parent=89 // pred_check_branch
          %606 = sbr.rel (%p604) target = $region94
        $region93: #{tpu_custom_call.1} parent=89 // pred_region
          _
        $region94: #{tpu_custom_call.1} parent=89 // pred_fallthru
          _
        %s607 = sand.u32 %s45, 1
        %s608 = sand.u32 %s45, 1
        %s609 = smul.addr %s608, 512
        %s610 = scalar_lea.vmem [#allocation5], %s609
        %p611 = pneg %p58
        %p612 = pneg %p55
        %p613 = pneg %p79
        %p614 = pneg %p76
        %p615 = pneg %p100
        %p616 = pneg %p97
        %p617 = pneg %p121
        %p618 = pneg %p118
        %p619 = pneg %p142
        %p620 = pneg %p139
        %p621 = pneg %p163
        %p622 = pneg %p160
        %p623 = pneg %p184
        %p624 = pneg %p181
        %p625 = pneg %p205
        %p626 = pneg %p202
        %p627 = pneg %p226
        %p628 = pneg %p223
        %p629 = pneg %p252
        %p630 = pneg %p249
        %s631 = sand.u32 %s239, 1
        %s632 = scalar_lea.sflag [#allocation7], %s631
        %s633 = sand.u32 %s239, 1
        %s634 = smul.addr %s633, 64
        %s635 = scalar_lea.vmem [#allocation6], %s634
        %s636 = smul.u32 8, %s28
        %s637 = smul.u32 8, %s27
        %s638 = smul.u32 8, %s27
        %p639 = scmp.eq.s32.totalorder %s28, 0
        // Predicated region
        $region95: #{tpu_custom_call.1} parent=89 // pred_check
          %p640 = pneg %p639
        $region96: #{tpu_custom_call.1} parent=89 // pred_check_branch
          %642 = sbr.rel (%p640) target = $region98
        $region97: #{tpu_custom_call.1} parent=89 // pred_region
          %vm643 = vcmask 261120
          %644 = vst.msk [vmem:[#allocation2] sm:$0xff] %vm643, 0.0
          %645 = vst.msk [vmem:[#allocation2 + $0x8] sm:$0xff] %vm643, 0.0
          %646 = vst.msk [vmem:[#allocation2 + $0x10] sm:$0xff] %vm643, 0.0
          %647 = vst.msk [vmem:[#allocation2 + $0x18] sm:$0xff] %vm643, 0.0
          %648 = vst.msk [vmem:[#allocation2 + $0x20] sm:$0xff] %vm643, 0.0
          %649 = vst.msk [vmem:[#allocation2 + $0x28] sm:$0xff] %vm643, 0.0
          %650 = vst.msk [vmem:[#allocation2 + $0x30] sm:$0xff] %vm643, 0.0
          %651 = vst.msk [vmem:[#allocation2 + $0x38] sm:$0xff] %vm643, 0.0
          %652 = vst.msk [vmem:[#allocation3] sm:$0xff] %vm643, 0.0
          %653 = vst.msk [vmem:[#allocation3 + $0x8] sm:$0xff] %vm643, 0.0
          %654 = vst.msk [vmem:[#allocation3 + $0x10] sm:$0xff] %vm643, 0.0
          %655 = vst.msk [vmem:[#allocation3 + $0x18] sm:$0xff] %vm643, 0.0
          %656 = vst.msk [vmem:[#allocation3 + $0x20] sm:$0xff] %vm643, 0.0
          %657 = vst.msk [vmem:[#allocation3 + $0x28] sm:$0xff] %vm643, 0.0
          %658 = vst.msk [vmem:[#allocation3 + $0x30] sm:$0xff] %vm643, 0.0
          %659 = vst.msk [vmem:[#allocation3 + $0x38] sm:$0xff] %vm643, 0.0
        $region98: #{tpu_custom_call.1} parent=89 // pred_fallthru
          _
        %v660 = vld [vmem:[%s603] sm:$0xff]
        %v661 = vld [vmem:[%s603 + $0x8] sm:$0xff]
        %v662 = vld [vmem:[%s603 + $0x10] sm:$0xff]
        %v663 = vld [vmem:[%s603 + $0x18] sm:$0xff]
        %v664 = vld [vmem:[%s603 + $0x20] sm:$0xff]
        %v665 = vld [vmem:[%s603 + $0x28] sm:$0xff]
        %v666 = vld [vmem:[%s603 + $0x30] sm:$0xff]
        %v667 = vld [vmem:[%s603 + $0x38] sm:$0xff]
        %v668 = vld [vmem:[%s603 + $0x40] sm:$0xff]
        %v669 = vld [vmem:[%s603 + $0x48] sm:$0xff]
        %v670 = vld [vmem:[%s603 + $0x50] sm:$0xff]
        %v671 = vld [vmem:[%s603 + $0x58] sm:$0xff]
        %v672 = vld [vmem:[%s603 + $0x60] sm:$0xff]
        %v673 = vld [vmem:[%s603 + $0x68] sm:$0xff]
        %v674 = vld [vmem:[%s603 + $0x70] sm:$0xff]
        %v675 = vld [vmem:[%s603 + $0x78] sm:$0xff]
        %v676 = vld [vmem:[%s603 + $0x80] sm:$0xff]
        %v677 = vld [vmem:[%s603 + $0x88] sm:$0xff]
        %v678 = vld [vmem:[%s603 + $0x90] sm:$0xff]
        %v679 = vld [vmem:[%s603 + $0x98] sm:$0xff]
        %v680 = vld [vmem:[%s603 + $0xa0] sm:$0xff]
        %v681 = vld [vmem:[%s603 + $0xa8] sm:$0xff]
        %v682 = vld [vmem:[%s603 + $0xb0] sm:$0xff]
        %v683 = vld [vmem:[%s603 + $0xb8] sm:$0xff]
        %v684 = vld [vmem:[%s603 + $0xc0] sm:$0xff]
        %v685 = vld [vmem:[%s603 + $0xc8] sm:$0xff]
        %v686 = vld [vmem:[%s603 + $0xd0] sm:$0xff]
        %v687 = vld [vmem:[%s603 + $0xd8] sm:$0xff]
        %v688 = vld [vmem:[%s603 + $0xe0] sm:$0xff]
        %v689 = vld [vmem:[%s603 + $0xe8] sm:$0xff]
        %v690 = vld [vmem:[%s603 + $0xf0] sm:$0xff]
        %v691 = vld [vmem:[%s603 + $0xf8] sm:$0xff]
        %v692 = vld [vmem:[%s603 + $0x100] sm:$0xff]
        %v693 = vld [vmem:[%s603 + $0x108] sm:$0xff]
        %v694 = vld [vmem:[%s603 + $0x110] sm:$0xff]
        %v695 = vld [vmem:[%s603 + $0x118] sm:$0xff]
        %v696 = vld [vmem:[%s603 + $0x120] sm:$0xff]
        %v697 = vld [vmem:[%s603 + $0x128] sm:$0xff]
        %v698 = vld [vmem:[%s603 + $0x130] sm:$0xff]
        %v699 = vld [vmem:[%s603 + $0x138] sm:$0xff]
        %v700 = vld [vmem:[%s603 + $0x140] sm:$0xff]
        %v701 = vld [vmem:[%s603 + $0x148] sm:$0xff]
        %v702 = vld [vmem:[%s603 + $0x150] sm:$0xff]
        %v703 = vld [vmem:[%s603 + $0x158] sm:$0xff]
        %v704 = vld [vmem:[%s603 + $0x160] sm:$0xff]
        %v705 = vld [vmem:[%s603 + $0x168] sm:$0xff]
        %v706 = vld [vmem:[%s603 + $0x170] sm:$0xff]
        %v707 = vld [vmem:[%s603 + $0x178] sm:$0xff]
        %v708 = vld [vmem:[%s603 + $0x180] sm:$0xff]
        %v709 = vld [vmem:[%s603 + $0x188] sm:$0xff]
        %v710 = vld [vmem:[%s603 + $0x190] sm:$0xff]
        %v711 = vld [vmem:[%s603 + $0x198] sm:$0xff]
        %v712 = vld [vmem:[%s603 + $0x1a0] sm:$0xff]
        %v713 = vld [vmem:[%s603 + $0x1a8] sm:$0xff]
        %v714 = vld [vmem:[%s603 + $0x1b0] sm:$0xff]
        %v715 = vld [vmem:[%s603 + $0x1b8] sm:$0xff]
        %v716 = vld [vmem:[%s603 + $0x1c0] sm:$0xff]
        %v717 = vld [vmem:[%s603 + $0x1c8] sm:$0xff]
        %v718 = vld [vmem:[%s603 + $0x1d0] sm:$0xff]
        %v719 = vld [vmem:[%s603 + $0x1d8] sm:$0xff]
        %v720 = vld [vmem:[%s603 + $0x1e0] sm:$0xff]
        %v721 = vld [vmem:[%s603 + $0x1e8] sm:$0xff]
        %v722 = vld [vmem:[%s603 + $0x1f0] sm:$0xff]
        %v723 = vld [vmem:[%s603 + $0x1f8] sm:$0xff]
        %v724 = vld [vmem:[%s1] sm:$0xff]
        %v725 = vld [vmem:[%s1 + $0x8] sm:$0xff]
        %v726 = vld [vmem:[%s1 + $0x10] sm:$0xff]
        %v727 = vld [vmem:[%s1 + $0x18] sm:$0xff]
        %v728 = vld [vmem:[%s3] sm:$0x1]
        %v730 = vlaneseq
        %v731 = vshrl.u32 %v730, 7
        %v732 = vsub.s32 0, %v731
        %v733 = vrot.slane %v728, %v732
        %vm735 = vcmask 261120
        %v737 = vsel %vm735, %v660, 0
        %v740 = vsel %vm735, %v661, 0
        %v743 = vsel %vm735, %v662, 0
        %v746 = vsel %vm735, %v663, 0
        %v749 = vsel %vm735, %v664, 0
        %v752 = vsel %vm735, %v665, 0
        %v755 = vsel %vm735, %v666, 0
        %v758 = vsel %vm735, %v667, 0
        %v761 = vsel %vm735, %v668, 0
        %v764 = vsel %vm735, %v669, 0
        %v767 = vsel %vm735, %v670, 0
        %v770 = vsel %vm735, %v671, 0
        %v773 = vsel %vm735, %v672, 0
        %v776 = vsel %vm735, %v673, 0
        %v779 = vsel %vm735, %v674, 0
        %v782 = vsel %vm735, %v675, 0
        %v785 = vsel %vm735, %v676, 0
        %v788 = vsel %vm735, %v677, 0
        %v791 = vsel %vm735, %v678, 0
        %v794 = vsel %vm735, %v679, 0
        %v797 = vsel %vm735, %v680, 0
        %v800 = vsel %vm735, %v681, 0
        %v803 = vsel %vm735, %v682, 0
        %v806 = vsel %vm735, %v683, 0
        %v809 = vsel %vm735, %v684, 0
        %v812 = vsel %vm735, %v685, 0
        %v815 = vsel %vm735, %v686, 0
        %v818 = vsel %vm735, %v687, 0
        %v821 = vsel %vm735, %v688, 0
        %v824 = vsel %vm735, %v689, 0
        %v827 = vsel %vm735, %v690, 0
        %v830 = vsel %vm735, %v691, 0
        %v833 = vsel %vm735, %v692, 0
        %v836 = vsel %vm735, %v693, 0
        %v839 = vsel %vm735, %v694, 0
        %v842 = vsel %vm735, %v695, 0
        %v845 = vsel %vm735, %v696, 0
        %v848 = vsel %vm735, %v697, 0
        %v851 = vsel %vm735, %v698, 0
        %v854 = vsel %vm735, %v699, 0
        %v857 = vsel %vm735, %v700, 0
        %v860 = vsel %vm735, %v701, 0
        %v863 = vsel %vm735, %v702, 0
        %v866 = vsel %vm735, %v703, 0
        %v869 = vsel %vm735, %v704, 0
        %v872 = vsel %vm735, %v705, 0
        %v875 = vsel %vm735, %v706, 0
        %v878 = vsel %vm735, %v707, 0
        %v881 = vsel %vm735, %v708, 0
        %v884 = vsel %vm735, %v709, 0
        %v887 = vsel %vm735, %v710, 0
        %v890 = vsel %vm735, %v711, 0
        %v893 = vsel %vm735, %v712, 0
        %v896 = vsel %vm735, %v713, 0
        %v899 = vsel %vm735, %v714, 0
        %v902 = vsel %vm735, %v715, 0
        %v905 = vsel %vm735, %v716, 0
        %v908 = vsel %vm735, %v717, 0
        %v911 = vsel %vm735, %v718, 0
        %v914 = vsel %vm735, %v719, 0
        %v917 = vsel %vm735, %v720, 0
        %v920 = vsel %vm735, %v721, 0
        %v923 = vsel %vm735, %v722, 0
        %v926 = vsel %vm735, %v723, 0
        %928 = vmatprep.subr.mxu0 0.0
        %929 = vmatpush1.msra.mxu0 0.0
        %930 = vmatprep.subr.mxu0 0.0
        %931 = vmatpush1.msra.mxu0 0.0
        %932 = vmatprep.subr.mxu0 0.0
        %933 = vmatpush1.msra.mxu0 0.0
        %934 = vmatprep.subr.mxu0 0.0
        %935 = vmatpush1.msra.mxu0 0.0
        %936 = vmatprep.subr.mxu0 0.0
        %937 = vmatpush1.msra.mxu0 0.0
        %938 = vmatprep.subr.mxu0 0.0
        %939 = vmatpush1.msra.mxu0 0.0
        %940 = vmatprep.subr.mxu0 0.0
        %941 = vmatpush1.msra.mxu0 0.0
        %942 = vmatprep.subr.mxu0 0.0
        %943 = vmatpush1.msra.mxu0 0.0
        %944 = vmatprep.subr.mxu0 0.0
        %945 = vmatpush1.msra.mxu0 0.0
        %946 = vmatprep.subr.mxu0 0.0
        %947 = vmatpush1.msra.mxu0 0.0
        %948 = vmatprep.subr.mxu0 0.0
        %949 = vmatpush1.msra.mxu0 0.0
        %950 = vmatprep.subr.mxu0 0.0
        %951 = vmatpush1.msra.mxu0 0.0
        %952 = vmatprep.subr.mxu0 0.0
        %953 = vmatpush1.msra.mxu0 %v727
        %954 = vmatprep.subr.mxu0 0.0
        %955 = vmatpush1.msra.mxu0 %v726
        %956 = vmatprep.subr.mxu0 0.0
        %957 = vmatpush1.msra.mxu0 %v725
        %958 = vmatprep.subr.mxu0 0.0
        %959 = vmatpush1.msra.mxu0 %v724
        %960 = vmatprep.subr.mxu0 0.0
        %961 = vmatpush2.msra.mxu0 0.0
        %962 = vmatprep.subr.mxu0 0.0
        %963 = vmatpush2.msra.mxu0 0.0
        %964 = vmatprep.subr.mxu0 0.0
        %965 = vmatpush2.msra.mxu0 0.0
        %966 = vmatprep.subr.mxu0 0.0
        %967 = vmatpush2.msra.mxu0 0.0
        %968 = vmatprep.subr.mxu0 0.0
        %969 = vmatpush2.msra.mxu0 0.0
        %970 = vmatprep.subr.mxu0 0.0
        %971 = vmatpush2.msra.mxu0 0.0
        %972 = vmatprep.subr.mxu0 0.0
        %973 = vmatpush2.msra.mxu0 0.0
        %974 = vmatprep.subr.mxu0 0.0
        %975 = vmatpush2.msra.mxu0 0.0
        %976 = vmatprep.subr.mxu0 0.0
        %977 = vmatpush2.msra.mxu0 0.0
        %978 = vmatprep.subr.mxu0 0.0
        %979 = vmatpush2.msra.mxu0 0.0
        %980 = vmatprep.subr.mxu0 0.0
        %981 = vmatpush2.msra.mxu0 0.0
        %982 = vmatprep.subr.mxu0 0.0
        %983 = vmatpush2.msra.mxu0 0.0
        %984 = vmatprep.subr.mxu0 0.0
        %985 = vmatpush2.msra.mxu0 0.0
        %986 = vmatprep.subr.mxu0 0.0
        %987 = vmatpush2.msra.mxu0 0.0
        %988 = vmatprep.subr.mxu0 0.0
        %989 = vmatpush2.msra.mxu0 0.0
        %990 = vmatprep.subr.mxu0 0.0
        %991 = vmatpush2.msra.mxu0 0.0
        %992 = vmatprep.mubr.f32.mxu0 0.0
        %993 = vmatmul.mubr.f32.gmra.mxu0 %v737
        %v994 = vpop.f32.mrf.mxu0
        %v995 = vadd.f32 %v733, %v994
        %v996 = vpop.f32.mrf.mxu0
        %997 = vmatprep.mubr.f32.mxu0 0.0
        %998 = vmatmul.mubr.f32.gmra.mxu0 %v740
        %v999 = vpop.f32.mrf.mxu0
        %v1000 = vadd.f32 %v733, %v999
        %v1001 = vpop.f32.mrf.mxu0
        %1002 = vmatprep.mubr.f32.mxu0 0.0
        %1003 = vmatmul.mubr.f32.gmra.mxu0 %v743
        %v1004 = vpop.f32.mrf.mxu0
        %v1005 = vadd.f32 %v733, %v1004
        %v1006 = vpop.f32.mrf.mxu0
        %1007 = vmatprep.mubr.f32.mxu0 0.0
        %1008 = vmatmul.mubr.f32.gmra.mxu0 %v746
        %v1009 = vpop.f32.mrf.mxu0
        %v1010 = vadd.f32 %v733, %v1009
        %v1011 = vpop.f32.mrf.mxu0
        %1012 = vmatprep.mubr.f32.mxu0 0.0
        %1013 = vmatmul.mubr.f32.gmra.mxu0 %v749
        %v1014 = vpop.f32.mrf.mxu0
        %v1015 = vadd.f32 %v733, %v1014
        %v1016 = vpop.f32.mrf.mxu0
        %1017 = vmatprep.mubr.f32.mxu0 0.0
        %1018 = vmatmul.mubr.f32.gmra.mxu0 %v752
        %v1019 = vpop.f32.mrf.mxu0
        %v1020 = vadd.f32 %v733, %v1019
        %v1021 = vpop.f32.mrf.mxu0
        %1022 = vmatprep.mubr.f32.mxu0 0.0
        %1023 = vmatmul.mubr.f32.gmra.mxu0 %v755
        %v1024 = vpop.f32.mrf.mxu0
        %v1025 = vadd.f32 %v733, %v1024
        %v1026 = vpop.f32.mrf.mxu0
        %1027 = vmatprep.mubr.f32.mxu0 0.0
        %1028 = vmatmul.mubr.f32.gmra.mxu0 %v758
        %v1029 = vpop.f32.mrf.mxu0
        %v1030 = vadd.f32 %v733, %v1029
        %v1031 = vpop.f32.mrf.mxu0
        %1032 = vmatprep.mubr.f32.mxu0 0.0
        %1033 = vmatmul.mubr.f32.gmra.mxu0 %v761
        %v1034 = vpop.f32.mrf.mxu0
        %v1035 = vadd.f32 %v733, %v1034
        %v1036 = vpop.f32.mrf.mxu0
        %1037 = vmatprep.mubr.f32.mxu0 0.0
        %1038 = vmatmul.mubr.f32.gmra.mxu0 %v764
        %v1039 = vpop.f32.mrf.mxu0
        %v1040 = vadd.f32 %v733, %v1039
        %v1041 = vpop.f32.mrf.mxu0
        %1042 = vmatprep.mubr.f32.mxu0 0.0
        %1043 = vmatmul.mubr.f32.gmra.mxu0 %v767
        %v1044 = vpop.f32.mrf.mxu0
        %v1045 = vadd.f32 %v733, %v1044
        %v1046 = vpop.f32.mrf.mxu0
        %1047 = vmatprep.mubr.f32.mxu0 0.0
        %1048 = vmatmul.mubr.f32.gmra.mxu0 %v770
        %v1049 = vpop.f32.mrf.mxu0
        %v1050 = vadd.f32 %v733, %v1049
        %v1051 = vpop.f32.mrf.mxu0
        %1052 = vmatprep.mubr.f32.mxu0 0.0
        %1053 = vmatmul.mubr.f32.gmra.mxu0 %v773
        %v1054 = vpop.f32.mrf.mxu0
        %v1055 = vadd.f32 %v733, %v1054
        %v1056 = vpop.f32.mrf.mxu0
        %1057 = vmatprep.mubr.f32.mxu0 0.0
        %1058 = vmatmul.mubr.f32.gmra.mxu0 %v776
        %v1059 = vpop.f32.mrf.mxu0
        %v1060 = vadd.f32 %v733, %v1059
        %v1061 = vpop.f32.mrf.mxu0
        %1062 = vmatprep.mubr.f32.mxu0 0.0
        %1063 = vmatmul.mubr.f32.gmra.mxu0 %v779
        %v1064 = vpop.f32.mrf.mxu0
        %v1065 = vadd.f32 %v733, %v1064
        %v1066 = vpop.f32.mrf.mxu0
        %1067 = vmatprep.mubr.f32.mxu0 0.0
        %1068 = vmatmul.mubr.f32.gmra.mxu0 %v782
        %v1069 = vpop.f32.mrf.mxu0
        %v1070 = vadd.f32 %v733, %v1069
        %v1071 = vpop.f32.mrf.mxu0
        %1072 = vmatprep.mubr.f32.mxu0 0.0
        %1073 = vmatmul.mubr.f32.gmra.mxu0 %v785
        %v1074 = vpop.f32.mrf.mxu0
        %v1075 = vadd.f32 %v733, %v1074
        %v1076 = vpop.f32.mrf.mxu0
        %1077 = vmatprep.mubr.f32.mxu0 0.0
        %1078 = vmatmul.mubr.f32.gmra.mxu0 %v788
        %v1079 = vpop.f32.mrf.mxu0
        %v1080 = vadd.f32 %v733, %v1079
        %v1081 = vpop.f32.mrf.mxu0
        %1082 = vmatprep.mubr.f32.mxu0 0.0
        %1083 = vmatmul.mubr.f32.gmra.mxu0 %v791
        %v1084 = vpop.f32.mrf.mxu0
        %v1085 = vadd.f32 %v733, %v1084
        %v1086 = vpop.f32.mrf.mxu0
        %1087 = vmatprep.mubr.f32.mxu0 0.0
        %1088 = vmatmul.mubr.f32.gmra.mxu0 %v794
        %v1089 = vpop.f32.mrf.mxu0
        %v1090 = vadd.f32 %v733, %v1089
        %v1091 = vpop.f32.mrf.mxu0
        %1092 = vmatprep.mubr.f32.mxu0 0.0
        %1093 = vmatmul.mubr.f32.gmra.mxu0 %v797
        %v1094 = vpop.f32.mrf.mxu0
        %v1095 = vadd.f32 %v733, %v1094
        %v1096 = vpop.f32.mrf.mxu0
        %1097 = vmatprep.mubr.f32.mxu0 0.0
        %1098 = vmatmul.mubr.f32.gmra.mxu0 %v800
        %v1099 = vpop.f32.mrf.mxu0
        %v1100 = vadd.f32 %v733, %v1099
        %v1101 = vpop.f32.mrf.mxu0
        %1102 = vmatprep.mubr.f32.mxu0 0.0
        %1103 = vmatmul.mubr.f32.gmra.mxu0 %v803
        %v1104 = vpop.f32.mrf.mxu0
        %v1105 = vadd.f32 %v733, %v1104
        %v1106 = vpop.f32.mrf.mxu0
        %1107 = vmatprep.mubr.f32.mxu0 0.0
        %1108 = vmatmul.mubr.f32.gmra.mxu0 %v806
        %v1109 = vpop.f32.mrf.mxu0
        %v1110 = vadd.f32 %v733, %v1109
        %v1111 = vpop.f32.mrf.mxu0
        %1112 = vmatprep.mubr.f32.mxu0 0.0
        %1113 = vmatmul.mubr.f32.gmra.mxu0 %v809
        %v1114 = vpop.f32.mrf.mxu0
        %v1115 = vadd.f32 %v733, %v1114
        %v1116 = vpop.f32.mrf.mxu0
        %1117 = vmatprep.mubr.f32.mxu0 0.0
        %1118 = vmatmul.mubr.f32.gmra.mxu0 %v812
        %v1119 = vpop.f32.mrf.mxu0
        %v1120 = vadd.f32 %v733, %v1119
        %v1121 = vpop.f32.mrf.mxu0
        %1122 = vmatprep.mubr.f32.mxu0 0.0
        %1123 = vmatmul.mubr.f32.gmra.mxu0 %v815
        %v1124 = vpop.f32.mrf.mxu0
        %v1125 = vadd.f32 %v733, %v1124
        %v1126 = vpop.f32.mrf.mxu0
        %1127 = vmatprep.mubr.f32.mxu0 0.0
        %1128 = vmatmul.mubr.f32.gmra.mxu0 %v818
        %v1129 = vpop.f32.mrf.mxu0
        %v1130 = vadd.f32 %v733, %v1129
        %v1131 = vpop.f32.mrf.mxu0
        %1132 = vmatprep.mubr.f32.mxu0 0.0
        %1133 = vmatmul.mubr.f32.gmra.mxu0 %v821
        %v1134 = vpop.f32.mrf.mxu0
        %v1135 = vadd.f32 %v733, %v1134
        %v1136 = vpop.f32.mrf.mxu0
        %1137 = vmatprep.mubr.f32.mxu0 0.0
        %1138 = vmatmul.mubr.f32.gmra.mxu0 %v824
        %v1139 = vpop.f32.mrf.mxu0
        %v1140 = vadd.f32 %v733, %v1139
        %v1141 = vpop.f32.mrf.mxu0
        %1142 = vmatprep.mubr.f32.mxu0 0.0
        %1143 = vmatmul.mubr.f32.gmra.mxu0 %v827
        %v1144 = vpop.f32.mrf.mxu0
        %v1145 = vadd.f32 %v733, %v1144
        %v1146 = vpop.f32.mrf.mxu0
        %1147 = vmatprep.mubr.f32.mxu0 0.0
        %1148 = vmatmul.mubr.f32.gmra.mxu0 %v830
        %v1149 = vpop.f32.mrf.mxu0
        %v1150 = vadd.f32 %v733, %v1149
        %v1151 = vpop.f32.mrf.mxu0
        %1152 = vmatprep.mubr.f32.mxu0 0.0
        %1153 = vmatmul.mubr.f32.gmra.mxu0 %v833
        %v1154 = vpop.f32.mrf.mxu0
        %v1155 = vadd.f32 %v733, %v1154
        %v1156 = vpop.f32.mrf.mxu0
        %1157 = vmatprep.mubr.f32.mxu0 0.0
        %1158 = vmatmul.mubr.f32.gmra.mxu0 %v836
        %v1159 = vpop.f32.mrf.mxu0
        %v1160 = vadd.f32 %v733, %v1159
        %v1161 = vpop.f32.mrf.mxu0
        %1162 = vmatprep.mubr.f32.mxu0 0.0
        %1163 = vmatmul.mubr.f32.gmra.mxu0 %v839
        %v1164 = vpop.f32.mrf.mxu0
        %v1165 = vadd.f32 %v733, %v1164
        %v1166 = vpop.f32.mrf.mxu0
        %1167 = vmatprep.mubr.f32.mxu0 0.0
        %1168 = vmatmul.mubr.f32.gmra.mxu0 %v842
        %v1169 = vpop.f32.mrf.mxu0
        %v1170 = vadd.f32 %v733, %v1169
        %v1171 = vpop.f32.mrf.mxu0
        %1172 = vmatprep.mubr.f32.mxu0 0.0
        %1173 = vmatmul.mubr.f32.gmra.mxu0 %v845
        %v1174 = vpop.f32.mrf.mxu0
        %v1175 = vadd.f32 %v733, %v1174
        %v1176 = vpop.f32.mrf.mxu0
        %1177 = vmatprep.mubr.f32.mxu0 0.0
        %1178 = vmatmul.mubr.f32.gmra.mxu0 %v848
        %v1179 = vpop.f32.mrf.mxu0
        %v1180 = vadd.f32 %v733, %v1179
        %v1181 = vpop.f32.mrf.mxu0
        %1182 = vmatprep.mubr.f32.mxu0 0.0
        %1183 = vmatmul.mubr.f32.gmra.mxu0 %v851
        %v1184 = vpop.f32.mrf.mxu0
        %v1185 = vadd.f32 %v733, %v1184
        %v1186 = vpop.f32.mrf.mxu0
        %1187 = vmatprep.mubr.f32.mxu0 0.0
        %1188 = vmatmul.mubr.f32.gmra.mxu0 %v854
        %v1189 = vpop.f32.mrf.mxu0
        %v1190 = vadd.f32 %v733, %v1189
        %v1191 = vpop.f32.mrf.mxu0
        %1192 = vmatprep.mubr.f32.mxu0 0.0
        %1193 = vmatmul.mubr.f32.gmra.mxu0 %v857
        %v1194 = vpop.f32.mrf.mxu0
        %v1195 = vadd.f32 %v733, %v1194
        %v1196 = vpop.f32.mrf.mxu0
        %1197 = vmatprep.mubr.f32.mxu0 0.0
        %1198 = vmatmul.mubr.f32.gmra.mxu0 %v860
        %v1199 = vpop.f32.mrf.mxu0
        %v1200 = vadd.f32 %v733, %v1199
        %v1201 = vpop.f32.mrf.mxu0
        %1202 = vmatprep.mubr.f32.mxu0 0.0
        %1203 = vmatmul.mubr.f32.gmra.mxu0 %v863
        %v1204 = vpop.f32.mrf.mxu0
        %v1205 = vadd.f32 %v733, %v1204
        %v1206 = vpop.f32.mrf.mxu0
        %1207 = vmatprep.mubr.f32.mxu0 0.0
        %1208 = vmatmul.mubr.f32.gmra.mxu0 %v866
        %v1209 = vpop.f32.mrf.mxu0
        %v1210 = vadd.f32 %v733, %v1209
        %v1211 = vpop.f32.mrf.mxu0
        %1212 = vmatprep.mubr.f32.mxu0 0.0
        %1213 = vmatmul.mubr.f32.gmra.mxu0 %v869
        %v1214 = vpop.f32.mrf.mxu0
        %v1215 = vadd.f32 %v733, %v1214
        %v1216 = vpop.f32.mrf.mxu0
        %1217 = vmatprep.mubr.f32.mxu0 0.0
        %1218 = vmatmul.mubr.f32.gmra.mxu0 %v872
        %v1219 = vpop.f32.mrf.mxu0
        %v1220 = vadd.f32 %v733, %v1219
        %v1221 = vpop.f32.mrf.mxu0
        %1222 = vmatprep.mubr.f32.mxu0 0.0
        %1223 = vmatmul.mubr.f32.gmra.mxu0 %v875
        %v1224 = vpop.f32.mrf.mxu0
        %v1225 = vadd.f32 %v733, %v1224
        %v1226 = vpop.f32.mrf.mxu0
        %1227 = vmatprep.mubr.f32.mxu0 0.0
        %1228 = vmatmul.mubr.f32.gmra.mxu0 %v878
        %v1229 = vpop.f32.mrf.mxu0
        %v1230 = vadd.f32 %v733, %v1229
        %v1231 = vpop.f32.mrf.mxu0
        %1232 = vmatprep.mubr.f32.mxu0 0.0
        %1233 = vmatmul.mubr.f32.gmra.mxu0 %v881
        %v1234 = vpop.f32.mrf.mxu0
        %v1235 = vadd.f32 %v733, %v1234
        %v1236 = vpop.f32.mrf.mxu0
        %1237 = vmatprep.mubr.f32.mxu0 0.0
        %1238 = vmatmul.mubr.f32.gmra.mxu0 %v884
        %v1239 = vpop.f32.mrf.mxu0
        %v1240 = vadd.f32 %v733, %v1239
        %v1241 = vpop.f32.mrf.mxu0
        %1242 = vmatprep.mubr.f32.mxu0 0.0
        %1243 = vmatmul.mubr.f32.gmra.mxu0 %v887
        %v1244 = vpop.f32.mrf.mxu0
        %v1245 = vadd.f32 %v733, %v1244
        %v1246 = vpop.f32.mrf.mxu0
        %1247 = vmatprep.mubr.f32.mxu0 0.0
        %1248 = vmatmul.mubr.f32.gmra.mxu0 %v890
        %v1249 = vpop.f32.mrf.mxu0
        %v1250 = vadd.f32 %v733, %v1249
        %v1251 = vpop.f32.mrf.mxu0
        %1252 = vmatprep.mubr.f32.mxu0 0.0
        %1253 = vmatmul.mubr.f32.gmra.mxu0 %v893
        %v1254 = vpop.f32.mrf.mxu0
        %v1255 = vadd.f32 %v733, %v1254
        %v1256 = vpop.f32.mrf.mxu0
        %1257 = vmatprep.mubr.f32.mxu0 0.0
        %1258 = vmatmul.mubr.f32.gmra.mxu0 %v896
        %v1259 = vpop.f32.mrf.mxu0
        %v1260 = vadd.f32 %v733, %v1259
        %v1261 = vpop.f32.mrf.mxu0
        %1262 = vmatprep.mubr.f32.mxu0 0.0
        %1263 = vmatmul.mubr.f32.gmra.mxu0 %v899
        %v1264 = vpop.f32.mrf.mxu0
        %v1265 = vadd.f32 %v733, %v1264
        %v1266 = vpop.f32.mrf.mxu0
        %1267 = vmatprep.mubr.f32.mxu0 0.0
        %1268 = vmatmul.mubr.f32.gmra.mxu0 %v902
        %v1269 = vpop.f32.mrf.mxu0
        %v1270 = vadd.f32 %v733, %v1269
        %v1271 = vpop.f32.mrf.mxu0
        %1272 = vmatprep.mubr.f32.mxu0 0.0
        %1273 = vmatmul.mubr.f32.gmra.mxu0 %v905
        %v1274 = vpop.f32.mrf.mxu0
        %v1275 = vadd.f32 %v733, %v1274
        %v1276 = vpop.f32.mrf.mxu0
        %1277 = vmatprep.mubr.f32.mxu0 0.0
        %1278 = vmatmul.mubr.f32.gmra.mxu0 %v908
        %v1279 = vpop.f32.mrf.mxu0
        %v1280 = vadd.f32 %v733, %v1279
        %v1281 = vpop.f32.mrf.mxu0
        %1282 = vmatprep.mubr.f32.mxu0 0.0
        %1283 = vmatmul.mubr.f32.gmra.mxu0 %v911
        %v1284 = vpop.f32.mrf.mxu0
        %v1285 = vadd.f32 %v733, %v1284
        %v1286 = vpop.f32.mrf.mxu0
        %1287 = vmatprep.mubr.f32.mxu0 0.0
        %1288 = vmatmul.mubr.f32.gmra.mxu0 %v914
        %v1289 = vpop.f32.mrf.mxu0
        %v1290 = vadd.f32 %v733, %v1289
        %v1291 = vpop.f32.mrf.mxu0
        %1292 = vmatprep.mubr.f32.mxu0 0.0
        %1293 = vmatmul.mubr.f32.gmra.mxu0 %v917
        %v1294 = vpop.f32.mrf.mxu0
        %v1295 = vadd.f32 %v733, %v1294
        %v1296 = vpop.f32.mrf.mxu0
        %1297 = vmatprep.mubr.f32.mxu0 0.0
        %1298 = vmatmul.mubr.f32.gmra.mxu0 %v920
        %v1299 = vpop.f32.mrf.mxu0
        %v1300 = vadd.f32 %v733, %v1299
        %v1301 = vpop.f32.mrf.mxu0
        %1302 = vmatprep.mubr.f32.mxu0 0.0
        %1303 = vmatmul.mubr.f32.gmra.mxu0 %v923
        %v1304 = vpop.f32.mrf.mxu0
        %v1305 = vadd.f32 %v733, %v1304
        %v1306 = vpop.f32.mrf.mxu0
        %1307 = vmatprep.mubr.f32.mxu0 0.0
        %1308 = vmatmul.mubr.f32.gmra.mxu0 %v926
        %v1309 = vpop.f32.mrf.mxu0
        %v1310 = vadd.f32 %v733, %v1309
        %v1311 = vpop.f32.mrf.mxu0
        %1312 = vdwg.mxu0
        %1313 = vst [vmem:[#allocation4] sm:$0xff] %v995
        %1314 = vst [vmem:[#allocation4 + $0x8] sm:$0xff] %v1000
        %1315 = vst [vmem:[#allocation4 + $0x10] sm:$0xff] %v1005
        %1316 = vst [vmem:[#allocation4 + $0x18] sm:$0xff] %v1010
        %1317 = vst [vmem:[#allocation4 + $0x20] sm:$0xff] %v1015
        %1318 = vst [vmem:[#allocation4 + $0x28] sm:$0xff] %v1020
        %1319 = vst [vmem:[#allocation4 + $0x30] sm:$0xff] %v1025
        %1320 = vst [vmem:[#allocation4 + $0x38] sm:$0xff] %v1030
        %1321 = vst [vmem:[#allocation4 + $0x40] sm:$0xff] %v1035
        %1322 = vst [vmem:[#allocation4 + $0x48] sm:$0xff] %v1040
        %1323 = vst [vmem:[#allocation4 + $0x50] sm:$0xff] %v1045
        %1324 = vst [vmem:[#allocation4 + $0x58] sm:$0xff] %v1050
        %1325 = vst [vmem:[#allocation4 + $0x60] sm:$0xff] %v1055
        %1326 = vst [vmem:[#allocation4 + $0x68] sm:$0xff] %v1060
        %1327 = vst [vmem:[#allocation4 + $0x70] sm:$0xff] %v1065
        %1328 = vst [vmem:[#allocation4 + $0x78] sm:$0xff] %v1070
        %1329 = vst [vmem:[#allocation4 + $0x80] sm:$0xff] %v1075
        %1330 = vst [vmem:[#allocation4 + $0x88] sm:$0xff] %v1080
        %1331 = vst [vmem:[#allocation4 + $0x90] sm:$0xff] %v1085
        %1332 = vst [vmem:[#allocation4 + $0x98] sm:$0xff] %v1090
        %1333 = vst [vmem:[#allocation4 + $0xa0] sm:$0xff] %v1095
        %1334 = vst [vmem:[#allocation4 + $0xa8] sm:$0xff] %v1100
        %1335 = vst [vmem:[#allocation4 + $0xb0] sm:$0xff] %v1105
        %1336 = vst [vmem:[#allocation4 + $0xb8] sm:$0xff] %v1110
        %1337 = vst [vmem:[#allocation4 + $0xc0] sm:$0xff] %v1115
        %1338 = vst [vmem:[#allocation4 + $0xc8] sm:$0xff] %v1120
        %1339 = vst [vmem:[#allocation4 + $0xd0] sm:$0xff] %v1125
        %1340 = vst [vmem:[#allocation4 + $0xd8] sm:$0xff] %v1130
        %1341 = vst [vmem:[#allocation4 + $0xe0] sm:$0xff] %v1135
        %1342 = vst [vmem:[#allocation4 + $0xe8] sm:$0xff] %v1140
        %1343 = vst [vmem:[#allocation4 + $0xf0] sm:$0xff] %v1145
        %1344 = vst [vmem:[#allocation4 + $0xf8] sm:$0xff] %v1150
        %1345 = vst [vmem:[#allocation4 + $0x100] sm:$0xff] %v1155
        %1346 = vst [vmem:[#allocation4 + $0x108] sm:$0xff] %v1160
        %1347 = vst [vmem:[#allocation4 + $0x110] sm:$0xff] %v1165
        %1348 = vst [vmem:[#allocation4 + $0x118] sm:$0xff] %v1170
        %1349 = vst [vmem:[#allocation4 + $0x120] sm:$0xff] %v1175
        %1350 = vst [vmem:[#allocation4 + $0x128] sm:$0xff] %v1180
        %1351 = vst [vmem:[#allocation4 + $0x130] sm:$0xff] %v1185
        %1352 = vst [vmem:[#allocation4 + $0x138] sm:$0xff] %v1190
        %1353 = vst [vmem:[#allocation4 + $0x140] sm:$0xff] %v1195
        %1354 = vst [vmem:[#allocation4 + $0x148] sm:$0xff] %v1200
        %1355 = vst [vmem:[#allocation4 + $0x150] sm:$0xff] %v1205
        %1356 = vst [vmem:[#allocation4 + $0x158] sm:$0xff] %v1210
        %1357 = vst [vmem:[#allocation4 + $0x160] sm:$0xff] %v1215
        %1358 = vst [vmem:[#allocation4 + $0x168] sm:$0xff] %v1220
        %1359 = vst [vmem:[#allocation4 + $0x170] sm:$0xff] %v1225
        %1360 = vst [vmem:[#allocation4 + $0x178] sm:$0xff] %v1230
        %1361 = vst [vmem:[#allocation4 + $0x180] sm:$0xff] %v1235
        %1362 = vst [vmem:[#allocation4 + $0x188] sm:$0xff] %v1240
        %1363 = vst [vmem:[#allocation4 + $0x190] sm:$0xff] %v1245
        %1364 = vst [vmem:[#allocation4 + $0x198] sm:$0xff] %v1250
        %1365 = vst [vmem:[#allocation4 + $0x1a0] sm:$0xff] %v1255
        %1366 = vst [vmem:[#allocation4 + $0x1a8] sm:$0xff] %v1260
        %1367 = vst [vmem:[#allocation4 + $0x1b0] sm:$0xff] %v1265
        %1368 = vst [vmem:[#allocation4 + $0x1b8] sm:$0xff] %v1270
        %1369 = vst [vmem:[#allocation4 + $0x1c0] sm:$0xff] %v1275
        %1370 = vst [vmem:[#allocation4 + $0x1c8] sm:$0xff] %v1280
        %1371 = vst [vmem:[#allocation4 + $0x1d0] sm:$0xff] %v1285
        %1372 = vst [vmem:[#allocation4 + $0x1d8] sm:$0xff] %v1290
        %1373 = vst [vmem:[#allocation4 + $0x1e0] sm:$0xff] %v1295
        %1374 = vst [vmem:[#allocation4 + $0x1e8] sm:$0xff] %v1300
        %1375 = vst [vmem:[#allocation4 + $0x1f0] sm:$0xff] %v1305
        %1376 = vst [vmem:[#allocation4 + $0x1f8] sm:$0xff] %v1310
        %v1377 = vld [vmem:[%s2] sm:$0xff]
        %v1378 = vld [vmem:[%s2 + $0x8] sm:$0xff]
        %v1379 = vld [vmem:[%s2 + $0x10] sm:$0xff]
        %v1380 = vld [vmem:[%s2 + $0x18] sm:$0xff]
        %v1381 = vlaneseq
        %v1382 = vand.u32 %v1381, 127
        %vm1383 = vcmp.ge.s32.totalorder %v1382, 64
        %vm1384 = vcmp.lt.s32.totalorder %v1382, 96
        %vm1385 = vmand %vm1383, %vm1384
        %v1386 = vld [vmem:[#allocation2] sm:$0xff]
        %v1387 = vld [vmem:[#allocation2 + $0x8] sm:$0xff]
        %v1388 = vld [vmem:[#allocation2 + $0x10] sm:$0xff]
        %v1389 = vld [vmem:[#allocation2 + $0x18] sm:$0xff]
        %v1390 = vld [vmem:[#allocation2 + $0x20] sm:$0xff]
        %v1391 = vld [vmem:[#allocation2 + $0x28] sm:$0xff]
        %v1392 = vld [vmem:[#allocation2 + $0x30] sm:$0xff]
        %v1393 = vld [vmem:[#allocation2 + $0x38] sm:$0xff]
        %v1394 = vld [vmem:[#allocation3] sm:$0xff]
        %v1395 = vld [vmem:[#allocation3 + $0x8] sm:$0xff]
        %v1396 = vld [vmem:[#allocation3 + $0x10] sm:$0xff]
        %v1397 = vld [vmem:[#allocation3 + $0x18] sm:$0xff]
        %v1398 = vld [vmem:[#allocation3 + $0x20] sm:$0xff]
        %v1399 = vld [vmem:[#allocation3 + $0x28] sm:$0xff]
        %v1400 = vld [vmem:[#allocation3 + $0x30] sm:$0xff]
        %v1401 = vld [vmem:[#allocation3 + $0x38] sm:$0xff]
        %v1402 = vld [vmem:[#allocation4] sm:$0xff]
        %v1403 = vld [vmem:[#allocation4 + $0x8] sm:$0xff]
        %v1404 = vld [vmem:[#allocation4 + $0x10] sm:$0xff]
        %v1405 = vld [vmem:[#allocation4 + $0x18] sm:$0xff]
        %v1406 = vld [vmem:[#allocation4 + $0x20] sm:$0xff]
        %v1407 = vld [vmem:[#allocation4 + $0x28] sm:$0xff]
        %v1408 = vld [vmem:[#allocation4 + $0x30] sm:$0xff]
        %v1409 = vld [vmem:[#allocation4 + $0x38] sm:$0xff]
        %v1411 = vsel %vm735, %v1386, 0
        %v1414 = vsel %vm735, %v1387, 0
        %v1417 = vsel %vm735, %v1388, 0
        %v1420 = vsel %vm735, %v1389, 0
        %v1423 = vsel %vm735, %v1390, 0
        %v1426 = vsel %vm735, %v1391, 0
        %v1429 = vsel %vm735, %v1392, 0
        %v1432 = vsel %vm735, %v1393, 0
        %1434 = vmatprep.subr.mxu0 0.0
        %1435 = vmatpush1.msra.mxu0 0.0
        %1436 = vmatprep.subr.mxu0 0.0
        %1437 = vmatpush1.msra.mxu0 0.0
        %1438 = vmatprep.subr.mxu0 0.0
        %1439 = vmatpush1.msra.mxu0 0.0
        %1440 = vmatprep.subr.mxu0 0.0
        %1441 = vmatpush1.msra.mxu0 0.0
        %1442 = vmatprep.subr.mxu0 0.0
        %1443 = vmatpush1.msra.mxu0 0.0
        %1444 = vmatprep.subr.mxu0 0.0
        %1445 = vmatpush1.msra.mxu0 0.0
        %1446 = vmatprep.subr.mxu0 0.0
        %1447 = vmatpush1.msra.mxu0 0.0
        %1448 = vmatprep.subr.mxu0 0.0
        %1449 = vmatpush1.msra.mxu0 0.0
        %1450 = vmatprep.subr.mxu0 0.0
        %1451 = vmatpush1.msra.mxu0 0.0
        %1452 = vmatprep.subr.mxu0 0.0
        %1453 = vmatpush1.msra.mxu0 0.0
        %1454 = vmatprep.subr.mxu0 0.0
        %1455 = vmatpush1.msra.mxu0 0.0
        %1456 = vmatprep.subr.mxu0 0.0
        %1457 = vmatpush1.msra.mxu0 0.0
        %1458 = vmatprep.subr.mxu0 0.0
        %1459 = vmatpush1.msra.mxu0 %v1380
        %1460 = vmatprep.subr.mxu0 0.0
        %1461 = vmatpush1.msra.mxu0 %v1379
        %1462 = vmatprep.subr.mxu0 0.0
        %1463 = vmatpush1.msra.mxu0 %v1378
        %1464 = vmatprep.subr.mxu0 0.0
        %1465 = vmatpush1.msra.mxu0 %v1377
        %1466 = vmatprep.subr.mxu0 0.0
        %1467 = vmatpush2.msra.mxu0 0.0
        %1468 = vmatprep.subr.mxu0 0.0
        %1469 = vmatpush2.msra.mxu0 0.0
        %1470 = vmatprep.subr.mxu0 0.0
        %1471 = vmatpush2.msra.mxu0 0.0
        %1472 = vmatprep.subr.mxu0 0.0
        %1473 = vmatpush2.msra.mxu0 0.0
        %1474 = vmatprep.subr.mxu0 0.0
        %1475 = vmatpush2.msra.mxu0 0.0
        %1476 = vmatprep.subr.mxu0 0.0
        %1477 = vmatpush2.msra.mxu0 0.0
        %1478 = vmatprep.subr.mxu0 0.0
        %1479 = vmatpush2.msra.mxu0 0.0
        %1480 = vmatprep.subr.mxu0 0.0
        %1481 = vmatpush2.msra.mxu0 0.0
        %1482 = vmatprep.subr.mxu0 0.0
        %1483 = vmatpush2.msra.mxu0 0.0
        %1484 = vmatprep.subr.mxu0 0.0
        %1485 = vmatpush2.msra.mxu0 0.0
        %1486 = vmatprep.subr.mxu0 0.0
        %1487 = vmatpush2.msra.mxu0 0.0
        %1488 = vmatprep.subr.mxu0 0.0
        %1489 = vmatpush2.msra.mxu0 0.0
        %1490 = vmatprep.subr.mxu0 0.0
        %1491 = vmatpush2.msra.mxu0 0.0
        %1492 = vmatprep.subr.mxu0 0.0
        %1493 = vmatpush2.msra.mxu0 0.0
        %1494 = vmatprep.subr.mxu0 0.0
        %1495 = vmatpush2.msra.mxu0 0.0
        %1496 = vmatprep.subr.mxu0 0.0
        %1497 = vmatpush2.msra.mxu0 0.0
        %1498 = vmatprep.mubr.f32.mxu0 0.0
        %1499 = vmatmul.mubr.f32.gmra.mxu0 %v1411
        %v1500 = vpop.f32.mrf.mxu0
        %v1501 = vadd.f32 0.0, %v1500
        %v1502 = vpop.f32.mrf.mxu0
        %1503 = vmatprep.mubr.f32.mxu0 0.0
        %1504 = vmatmul.mubr.f32.gmra.mxu0 %v1414
        %v1505 = vpop.f32.mrf.mxu0
        %v1506 = vadd.f32 0.0, %v1505
        %v1507 = vpop.f32.mrf.mxu0
        %1508 = vmatprep.mubr.f32.mxu0 0.0
        %1509 = vmatmul.mubr.f32.gmra.mxu0 %v1417
        %v1510 = vpop.f32.mrf.mxu0
        %v1511 = vadd.f32 0.0, %v1510
        %v1512 = vpop.f32.mrf.mxu0
        %1513 = vmatprep.mubr.f32.mxu0 0.0
        %1514 = vmatmul.mubr.f32.gmra.mxu0 %v1420
        %v1515 = vpop.f32.mrf.mxu0
        %v1516 = vadd.f32 0.0, %v1515
        %v1517 = vpop.f32.mrf.mxu0
        %1518 = vmatprep.mubr.f32.mxu0 0.0
        %1519 = vmatmul.mubr.f32.gmra.mxu0 %v1423
        %v1520 = vpop.f32.mrf.mxu0
        %v1521 = vadd.f32 0.0, %v1520
        %v1522 = vpop.f32.mrf.mxu0
        %1523 = vmatprep.mubr.f32.mxu0 0.0
        %1524 = vmatmul.mubr.f32.gmra.mxu0 %v1426
        %v1525 = vpop.f32.mrf.mxu0
        %v1526 = vadd.f32 0.0, %v1525
        %v1527 = vpop.f32.mrf.mxu0
        %1528 = vmatprep.mubr.f32.mxu0 0.0
        %1529 = vmatmul.mubr.f32.gmra.mxu0 %v1429
        %v1530 = vpop.f32.mrf.mxu0
        %v1531 = vadd.f32 0.0, %v1530
        %v1532 = vpop.f32.mrf.mxu0
        %1533 = vmatprep.mubr.f32.mxu0 0.0
        %1534 = vmatmul.mubr.f32.gmra.mxu0 %v1432
        %v1535 = vpop.f32.mrf.mxu0
        %v1536 = vadd.f32 0.0, %v1535
        %v1537 = vpop.f32.mrf.mxu0
        %1538 = vdwg.mxu0
        %v1539 = vadd.f32 %v1402, %v1501
        %v1540 = vadd.f32 %v1403, %v1506
        %v1541 = vadd.f32 %v1404, %v1511
        %v1542 = vadd.f32 %v1405, %v1516
        %v1543 = vadd.f32 %v1406, %v1521
        %v1544 = vadd.f32 %v1407, %v1526
        %v1545 = vadd.f32 %v1408, %v1531
        %v1546 = vadd.f32 %v1409, %v1536
        %v1547 = vtanh.pop %v1539
        %v1548 = vtanh.pop %v1540
        %v1549 = vtanh.pop %v1541
        %v1550 = vtanh.pop %v1542
        %v1551 = vtanh.pop %v1543
        %v1552 = vtanh.pop %v1544
        %v1553 = vtanh.pop %v1545
        %v1554 = vtanh.pop %v1546
        %v1555 = vxor.u32 %v1539, 2147483648
        %v1556 = vxor.u32 %v1540, 2147483648
        %v1557 = vxor.u32 %v1541, 2147483648
        %v1558 = vxor.u32 %v1542, 2147483648
        %v1559 = vxor.u32 %v1543, 2147483648
        %v1560 = vxor.u32 %v1544, 2147483648
        %v1561 = vxor.u32 %v1545, 2147483648
        %v1562 = vxor.u32 %v1546, 2147483648
        %v1563 = vmul.f32 %v1555, 1.442695
        %v1564 = vpow.pop %v1563
        %v1565 = vmul.f32 %v1556, 1.442695
        %v1566 = vpow.pop %v1565
        %v1567 = vmul.f32 %v1557, 1.442695
        %v1568 = vpow.pop %v1567
        %v1569 = vmul.f32 %v1558, 1.442695
        %v1570 = vpow.pop %v1569
        %v1571 = vmul.f32 %v1559, 1.442695
        %v1572 = vpow.pop %v1571
        %v1573 = vmul.f32 %v1560, 1.442695
        %v1574 = vpow.pop %v1573
        %v1575 = vmul.f32 %v1561, 1.442695
        %v1576 = vpow.pop %v1575
        %v1577 = vmul.f32 %v1562, 1.442695
        %v1578 = vpow.pop %v1577
        %v1579 = vadd.f32 %v1564, 1.0
        %v1580 = vadd.f32 %v1566, 1.0
        %v1581 = vadd.f32 %v1568, 1.0
        %v1582 = vadd.f32 %v1570, 1.0
        %v1583 = vadd.f32 %v1572, 1.0
        %v1584 = vadd.f32 %v1574, 1.0
        %v1585 = vadd.f32 %v1576, 1.0
        %v1586 = vadd.f32 %v1578, 1.0
        %v1587 = vrcp.pop %v1579
        %v1588 = vmul.f32 1.0, %v1587
        %v1589 = vrcp.pop %v1580
        %v1590 = vmul.f32 1.0, %v1589
        %v1591 = vrcp.pop %v1581
        %v1592 = vmul.f32 1.0, %v1591
        %v1593 = vrcp.pop %v1582
        %v1594 = vmul.f32 1.0, %v1593
        %v1595 = vrcp.pop %v1583
        %v1596 = vmul.f32 1.0, %v1595
        %v1597 = vrcp.pop %v1584
        %v1598 = vmul.f32 1.0, %v1597
        %v1599 = vrcp.pop %v1585
        %v1600 = vmul.f32 1.0, %v1599
        %v1601 = vrcp.pop %v1586
        %v1602 = vmul.f32 1.0, %v1601
        %v1603 = vsel %vm1385, %v1547, %v1588
        %v1604 = vsel %vm1385, %v1548, %v1590
        %v1605 = vsel %vm1385, %v1549, %v1592
        %v1606 = vsel %vm1385, %v1550, %v1594
        %v1607 = vsel %vm1385, %v1551, %v1596
        %v1608 = vsel %vm1385, %v1552, %v1598
        %v1609 = vsel %vm1385, %v1553, %v1600
        %v1610 = vsel %vm1385, %v1554, %v1602
        %1619 = vrot.lane.b32.xlu0 %v1394, 32
        %v1620 = vpop.permute.xlu0 %1619
        %1621 = vrot.lane.b32.xlu0 %v1395, 32
        %v1622 = vpop.permute.xlu0 %1621
        %1623 = vrot.lane.b32.xlu0 %v1396, 32
        %v1624 = vpop.permute.xlu0 %1623
        %1625 = vrot.lane.b32.xlu0 %v1397, 32
        %v1626 = vpop.permute.xlu0 %1625
        %1627 = vrot.lane.b32.xlu0 %v1398, 32
        %v1628 = vpop.permute.xlu0 %1627
        %1629 = vrot.lane.b32.xlu0 %v1399, 32
        %v1630 = vpop.permute.xlu0 %1629
        %1631 = vrot.lane.b32.xlu0 %v1400, 32
        %v1632 = vpop.permute.xlu0 %1631
        %1633 = vrot.lane.b32.xlu0 %v1401, 32
        %v1634 = vpop.permute.xlu0 %1633
        %v1643 = vmul.f32 %v1603, %v1620
        %v1644 = vmul.f32 %v1604, %v1622
        %v1645 = vmul.f32 %v1605, %v1624
        %v1646 = vmul.f32 %v1606, %v1626
        %v1647 = vmul.f32 %v1607, %v1628
        %v1648 = vmul.f32 %v1608, %v1630
        %v1649 = vmul.f32 %v1609, %v1632
        %v1650 = vmul.f32 %v1610, %v1634
        %1659 = vrot.lane.b32.xlu0 %v1603, 64
        %v1660 = vpop.permute.xlu0 %1659
        %1661 = vrot.lane.b32.xlu0 %v1604, 64
        %v1662 = vpop.permute.xlu0 %1661
        %1663 = vrot.lane.b32.xlu0 %v1605, 64
        %v1664 = vpop.permute.xlu0 %1663
        %1665 = vrot.lane.b32.xlu0 %v1606, 64
        %v1666 = vpop.permute.xlu0 %1665
        %1667 = vrot.lane.b32.xlu0 %v1607, 64
        %v1668 = vpop.permute.xlu0 %1667
        %1669 = vrot.lane.b32.xlu0 %v1608, 64
        %v1670 = vpop.permute.xlu0 %1669
        %1671 = vrot.lane.b32.xlu0 %v1609, 64
        %v1672 = vpop.permute.xlu0 %1671
        %1673 = vrot.lane.b32.xlu0 %v1610, 64
        %v1674 = vpop.permute.xlu0 %1673
        %v1683 = vmul.f32 %v1603, %v1660
        %v1684 = vmul.f32 %v1604, %v1662
        %v1685 = vmul.f32 %v1605, %v1664
        %v1686 = vmul.f32 %v1606, %v1666
        %v1687 = vmul.f32 %v1607, %v1668
        %v1688 = vmul.f32 %v1608, %v1670
        %v1689 = vmul.f32 %v1609, %v1672
        %v1690 = vmul.f32 %v1610, %v1674
        %1699 = vrot.lane.b32.xlu0 %v1683, 32
        %v1700 = vpop.permute.xlu0 %1699
        %1701 = vrot.lane.b32.xlu0 %v1684, 32
        %v1702 = vpop.permute.xlu0 %1701
        %1703 = vrot.lane.b32.xlu0 %v1685, 32
        %v1704 = vpop.permute.xlu0 %1703
        %1705 = vrot.lane.b32.xlu0 %v1686, 32
        %v1706 = vpop.permute.xlu0 %1705
        %1707 = vrot.lane.b32.xlu0 %v1687, 32
        %v1708 = vpop.permute.xlu0 %1707
        %1709 = vrot.lane.b32.xlu0 %v1688, 32
        %v1710 = vpop.permute.xlu0 %1709
        %1711 = vrot.lane.b32.xlu0 %v1689, 32
        %v1712 = vpop.permute.xlu0 %1711
        %1713 = vrot.lane.b32.xlu0 %v1690, 32
        %v1714 = vpop.permute.xlu0 %1713
        %v1723 = vadd.f32 %v1643, %v1700
        %v1724 = vadd.f32 %v1644, %v1702
        %v1725 = vadd.f32 %v1645, %v1704
        %v1726 = vadd.f32 %v1646, %v1706
        %v1727 = vadd.f32 %v1647, %v1708
        %v1728 = vadd.f32 %v1648, %v1710
        %v1729 = vadd.f32 %v1649, %v1712
        %v1730 = vadd.f32 %v1650, %v1714
        %v1731 = vtanh.pop %v1723
        %v1732 = vtanh.pop %v1724
        %v1733 = vtanh.pop %v1725
        %v1734 = vtanh.pop %v1726
        %v1735 = vtanh.pop %v1727
        %v1736 = vtanh.pop %v1728
        %v1737 = vtanh.pop %v1729
        %v1738 = vtanh.pop %v1730
        %1747 = vrot.lane.b32.xlu0 %v1731, 64
        %v1748 = vpop.permute.xlu0 %1747
        %1749 = vrot.lane.b32.xlu0 %v1732, 64
        %v1750 = vpop.permute.xlu0 %1749
        %1751 = vrot.lane.b32.xlu0 %v1733, 64
        %v1752 = vpop.permute.xlu0 %1751
        %1753 = vrot.lane.b32.xlu0 %v1734, 64
        %v1754 = vpop.permute.xlu0 %1753
        %1755 = vrot.lane.b32.xlu0 %v1735, 64
        %v1756 = vpop.permute.xlu0 %1755
        %1757 = vrot.lane.b32.xlu0 %v1736, 64
        %v1758 = vpop.permute.xlu0 %1757
        %1759 = vrot.lane.b32.xlu0 %v1737, 64
        %v1760 = vpop.permute.xlu0 %1759
        %1761 = vrot.lane.b32.xlu0 %v1738, 64
        %v1762 = vpop.permute.xlu0 %1761
        %v1771 = vmul.f32 %v1603, %v1748
        %v1772 = vmul.f32 %v1604, %v1750
        %v1773 = vmul.f32 %v1605, %v1752
        %v1774 = vmul.f32 %v1606, %v1754
        %v1775 = vmul.f32 %v1607, %v1756
        %v1776 = vmul.f32 %v1608, %v1758
        %v1777 = vmul.f32 %v1609, %v1760
        %v1778 = vmul.f32 %v1610, %v1762
        %s1779 = scalar_lea.vmem [#allocation4], 64
        %v1780 = vld [vmem:[%s1779] sm:$0xff]
        %v1781 = vld [vmem:[%s1779 + $0x8] sm:$0xff]
        %v1782 = vld [vmem:[%s1779 + $0x10] sm:$0xff]
        %v1783 = vld [vmem:[%s1779 + $0x18] sm:$0xff]
        %v1784 = vld [vmem:[%s1779 + $0x20] sm:$0xff]
        %v1785 = vld [vmem:[%s1779 + $0x28] sm:$0xff]
        %v1786 = vld [vmem:[%s1779 + $0x30] sm:$0xff]
        %v1787 = vld [vmem:[%s1779 + $0x38] sm:$0xff]
        %1796 = vrot.lane.b32.xlu0 %v1771, 32
        %v1797 = vpop.permute.xlu0 %1796
        %1798 = vrot.lane.b32.xlu0 %v1772, 32
        %v1799 = vpop.permute.xlu0 %1798
        %1800 = vrot.lane.b32.xlu0 %v1773, 32
        %v1801 = vpop.permute.xlu0 %1800
        %1802 = vrot.lane.b32.xlu0 %v1774, 32
        %v1803 = vpop.permute.xlu0 %1802
        %1804 = vrot.lane.b32.xlu0 %v1775, 32
        %v1805 = vpop.permute.xlu0 %1804
        %1806 = vrot.lane.b32.xlu0 %v1776, 32
        %v1807 = vpop.permute.xlu0 %1806
        %1808 = vrot.lane.b32.xlu0 %v1777, 32
        %v1809 = vpop.permute.xlu0 %1808
        %1810 = vrot.lane.b32.xlu0 %v1778, 32
        %v1811 = vpop.permute.xlu0 %1810
        %v1812 = vsel %vm735, %v1797, 0
        %v1814 = vsel %vm735, %v1799, 0
        %v1816 = vsel %vm735, %v1801, 0
        %v1818 = vsel %vm735, %v1803, 0
        %v1820 = vsel %vm735, %v1805, 0
        %v1822 = vsel %vm735, %v1807, 0
        %v1824 = vsel %vm735, %v1809, 0
        %v1826 = vsel %vm735, %v1811, 0
        %1828 = vmatprep.subr.mxu0 0.0
        %1829 = vmatpush1.msra.mxu0 0.0
        %1830 = vmatprep.subr.mxu0 0.0
        %1831 = vmatpush1.msra.mxu0 0.0
        %1832 = vmatprep.subr.mxu0 0.0
        %1833 = vmatpush1.msra.mxu0 0.0
        %1834 = vmatprep.subr.mxu0 0.0
        %1835 = vmatpush1.msra.mxu0 0.0
        %1836 = vmatprep.subr.mxu0 0.0
        %1837 = vmatpush1.msra.mxu0 0.0
        %1838 = vmatprep.subr.mxu0 0.0
        %1839 = vmatpush1.msra.mxu0 0.0
        %1840 = vmatprep.subr.mxu0 0.0
        %1841 = vmatpush1.msra.mxu0 0.0
        %1842 = vmatprep.subr.mxu0 0.0
        %1843 = vmatpush1.msra.mxu0 0.0
        %1844 = vmatprep.subr.mxu0 0.0
        %1845 = vmatpush1.msra.mxu0 0.0
        %1846 = vmatprep.subr.mxu0 0.0
        %1847 = vmatpush1.msra.mxu0 0.0
        %1848 = vmatprep.subr.mxu0 0.0
        %1849 = vmatpush1.msra.mxu0 0.0
        %1850 = vmatprep.subr.mxu0 0.0
        %1851 = vmatpush1.msra.mxu0 0.0
        %1852 = vmatprep.subr.mxu0 0.0
        %1853 = vmatpush1.msra.mxu0 %v1380
        %1854 = vmatprep.subr.mxu0 0.0
        %1855 = vmatpush1.msra.mxu0 %v1379
        %1856 = vmatprep.subr.mxu0 0.0
        %1857 = vmatpush1.msra.mxu0 %v1378
        %1858 = vmatprep.subr.mxu0 0.0
        %1859 = vmatpush1.msra.mxu0 %v1377
        %1860 = vmatprep.subr.mxu0 0.0
        %1861 = vmatpush2.msra.mxu0 0.0
        %1862 = vmatprep.subr.mxu0 0.0
        %1863 = vmatpush2.msra.mxu0 0.0
        %1864 = vmatprep.subr.mxu0 0.0
        %1865 = vmatpush2.msra.mxu0 0.0
        %1866 = vmatprep.subr.mxu0 0.0
        %1867 = vmatpush2.msra.mxu0 0.0
        %1868 = vmatprep.subr.mxu0 0.0
        %1869 = vmatpush2.msra.mxu0 0.0
        %1870 = vmatprep.subr.mxu0 0.0
        %1871 = vmatpush2.msra.mxu0 0.0
        %1872 = vmatprep.subr.mxu0 0.0
        %1873 = vmatpush2.msra.mxu0 0.0
        %1874 = vmatprep.subr.mxu0 0.0
        %1875 = vmatpush2.msra.mxu0 0.0
        %1876 = vmatprep.subr.mxu0 0.0
        %1877 = vmatpush2.msra.mxu0 0.0
        %1878 = vmatprep.subr.mxu0 0.0
        %1879 = vmatpush2.msra.mxu0 0.0
        %1880 = vmatprep.subr.mxu0 0.0
        %1881 = vmatpush2.msra.mxu0 0.0
        %1882 = vmatprep.subr.mxu0 0.0
        %1883 = vmatpush2.msra.mxu0 0.0
        %1884 = vmatprep.subr.mxu0 0.0
        %1885 = vmatpush2.msra.mxu0 0.0
        %1886 = vmatprep.subr.mxu0 0.0
        %1887 = vmatpush2.msra.mxu0 0.0
        %1888 = vmatprep.subr.mxu0 0.0
        %1889 = vmatpush2.msra.mxu0 0.0
        %1890 = vmatprep.subr.mxu0 0.0
        %1891 = vmatpush2.msra.mxu0 0.0
        %1892 = vmatprep.mubr.f32.mxu0 0.0
        %1893 = vmatmul.mubr.f32.gmra.mxu0 %v1812
        %v1894 = vpop.f32.mrf.mxu0
        %v1895 = vadd.f32 0.0, %v1894
        %v1896 = vpop.f32.mrf.mxu0
        %1897 = vmatprep.mubr.f32.mxu0 0.0
        %1898 = vmatmul.mubr.f32.gmra.mxu0 %v1814
        %v1899 = vpop.f32.mrf.mxu0
        %v1900 = vadd.f32 0.0, %v1899
        %v1901 = vpop.f32.mrf.mxu0
        %1902 = vmatprep.mubr.f32.mxu0 0.0
        %1903 = vmatmul.mubr.f32.gmra.mxu0 %v1816
        %v1904 = vpop.f32.mrf.mxu0
        %v1905 = vadd.f32 0.0, %v1904
        %v1906 = vpop.f32.mrf.mxu0
        %1907 = vmatprep.mubr.f32.mxu0 0.0
        %1908 = vmatmul.mubr.f32.gmra.mxu0 %v1818
        %v1909 = vpop.f32.mrf.mxu0
        %v1910 = vadd.f32 0.0, %v1909
        %v1911 = vpop.f32.mrf.mxu0
        %1912 = vmatprep.mubr.f32.mxu0 0.0
        %1913 = vmatmul.mubr.f32.gmra.mxu0 %v1820
        %v1914 = vpop.f32.mrf.mxu0
        %v1915 = vadd.f32 0.0, %v1914
        %v1916 = vpop.f32.mrf.mxu0
        %1917 = vmatprep.mubr.f32.mxu0 0.0
        %1918 = vmatmul.mubr.f32.gmra.mxu0 %v1822
        %v1919 = vpop.f32.mrf.mxu0
        %v1920 = vadd.f32 0.0, %v1919
        %v1921 = vpop.f32.mrf.mxu0
        %1922 = vmatprep.mubr.f32.mxu0 0.0
        %1923 = vmatmul.mubr.f32.gmra.mxu0 %v1824
        %v1924 = vpop.f32.mrf.mxu0
        %v1925 = vadd.f32 0.0, %v1924
        %v1926 = vpop.f32.mrf.mxu0
        %1927 = vmatprep.mubr.f32.mxu0 0.0
        %1928 = vmatmul.mubr.f32.gmra.mxu0 %v1826
        %v1929 = vpop.f32.mrf.mxu0
        %v1930 = vadd.f32 0.0, %v1929
        %v1931 = vpop.f32.mrf.mxu0
        %1932 = vdwg.mxu0
        %v1933 = vadd.f32 %v1780, %v1895
        %v1934 = vadd.f32 %v1781, %v1900
        %v1935 = vadd.f32 %v1782, %v1905
        %v1936 = vadd.f32 %v1783, %v1910
        %v1937 = vadd.f32 %v1784, %v1915
        %v1938 = vadd.f32 %v1785, %v1920
        %v1939 = vadd.f32 %v1786, %v1925
        %v1940 = vadd.f32 %v1787, %v1930
        %v1941 = vtanh.pop %v1933
        %v1942 = vtanh.pop %v1934
        %v1943 = vtanh.pop %v1935
        %v1944 = vtanh.pop %v1936
        %v1945 = vtanh.pop %v1937
        %v1946 = vtanh.pop %v1938
        %v1947 = vtanh.pop %v1939
        %v1948 = vtanh.pop %v1940
        %v1949 = vxor.u32 %v1933, 2147483648
        %v1950 = vxor.u32 %v1934, 2147483648
        %v1951 = vxor.u32 %v1935, 2147483648
        %v1952 = vxor.u32 %v1936, 2147483648
        %v1953 = vxor.u32 %v1937, 2147483648
        %v1954 = vxor.u32 %v1938, 2147483648
        %v1955 = vxor.u32 %v1939, 2147483648
        %v1956 = vxor.u32 %v1940, 2147483648
        %v1957 = vmul.f32 %v1949, 1.442695
        %v1958 = vpow.pop %v1957
        %v1959 = vmul.f32 %v1950, 1.442695
        %v1960 = vpow.pop %v1959
        %v1961 = vmul.f32 %v1951, 1.442695
        %v1962 = vpow.pop %v1961
        %v1963 = vmul.f32 %v1952, 1.442695
        %v1964 = vpow.pop %v1963
        %v1965 = vmul.f32 %v1953, 1.442695
        %v1966 = vpow.pop %v1965
        %v1967 = vmul.f32 %v1954, 1.442695
        %v1968 = vpow.pop %v1967
        %v1969 = vmul.f32 %v1955, 1.442695
        %v1970 = vpow.pop %v1969
        %v1971 = vmul.f32 %v1956, 1.442695
        %v1972 = vpow.pop %v1971
        %v1973 = vadd.f32 %v1958, 1.0
        %v1974 = vadd.f32 %v1960, 1.0
        %v1975 = vadd.f32 %v1962, 1.0
        %v1976 = vadd.f32 %v1964, 1.0
        %v1977 = vadd.f32 %v1966, 1.0
        %v1978 = vadd.f32 %v1968, 1.0
        %v1979 = vadd.f32 %v1970, 1.0
        %v1980 = vadd.f32 %v1972, 1.0
        %v1981 = vrcp.pop %v1973
        %v1982 = vmul.f32 1.0, %v1981
        %v1983 = vrcp.pop %v1974
        %v1984 = vmul.f32 1.0, %v1983
        %v1985 = vrcp.pop %v1975
        %v1986 = vmul.f32 1.0, %v1985
        %v1987 = vrcp.pop %v1976
        %v1988 = vmul.f32 1.0, %v1987
        %v1989 = vrcp.pop %v1977
        %v1990 = vmul.f32 1.0, %v1989
        %v1991 = vrcp.pop %v1978
        %v1992 = vmul.f32 1.0, %v1991
        %v1993 = vrcp.pop %v1979
        %v1994 = vmul.f32 1.0, %v1993
        %v1995 = vrcp.pop %v1980
        %v1996 = vmul.f32 1.0, %v1995
        %v1997 = vsel %vm1385, %v1941, %v1982
        %v1998 = vsel %vm1385, %v1942, %v1984
        %v1999 = vsel %vm1385, %v1943, %v1986
        %v2000 = vsel %vm1385, %v1944, %v1988
        %v2001 = vsel %vm1385, %v1945, %v1990
        %v2002 = vsel %vm1385, %v1946, %v1992
        %v2003 = vsel %vm1385, %v1947, %v1994
        %v2004 = vsel %vm1385, %v1948, %v1996
        %v2005 = vmul.f32 %v1997, %v1723
        %v2006 = vmul.f32 %v1998, %v1724
        %v2007 = vmul.f32 %v1999, %v1725
        %v2008 = vmul.f32 %v2000, %v1726
        %v2009 = vmul.f32 %v2001, %v1727
        %v2010 = vmul.f32 %v2002, %v1728
        %v2011 = vmul.f32 %v2003, %v1729
        %v2012 = vmul.f32 %v2004, %v1730
        %2021 = vrot.lane.b32.xlu0 %v1997, 64
        %v2022 = vpop.permute.xlu0 %2021
        %2023 = vrot.lane.b32.xlu0 %v1998, 64
        %v2024 = vpop.permute.xlu0 %2023
        %2025 = vrot.lane.b32.xlu0 %v1999, 64
        %v2026 = vpop.permute.xlu0 %2025
        %2027 = vrot.lane.b32.xlu0 %v2000, 64
        %v2028 = vpop.permute.xlu0 %2027
        %2029 = vrot.lane.b32.xlu0 %v2001, 64
        %v2030 = vpop.permute.xlu0 %2029
        %2031 = vrot.lane.b32.xlu0 %v2002, 64
        %v2032 = vpop.permute.xlu0 %2031
        %2033 = vrot.lane.b32.xlu0 %v2003, 64
        %v2034 = vpop.permute.xlu0 %2033
        %2035 = vrot.lane.b32.xlu0 %v2004, 64
        %v2036 = vpop.permute.xlu0 %2035
        %v2045 = vmul.f32 %v1997, %v2022
        %v2046 = vmul.f32 %v1998, %v2024
        %v2047 = vmul.f32 %v1999, %v2026
        %v2048 = vmul.f32 %v2000, %v2028
        %v2049 = vmul.f32 %v2001, %v2030
        %v2050 = vmul.f32 %v2002, %v2032
        %v2051 = vmul.f32 %v2003, %v2034
        %v2052 = vmul.f32 %v2004, %v2036
        %2061 = vrot.lane.b32.xlu0 %v2045, 32
        %v2062 = vpop.permute.xlu0 %2061
        %2063 = vrot.lane.b32.xlu0 %v2046, 32
        %v2064 = vpop.permute.xlu0 %2063
        %2065 = vrot.lane.b32.xlu0 %v2047, 32
        %v2066 = vpop.permute.xlu0 %2065
        %2067 = vrot.lane.b32.xlu0 %v2048, 32
        %v2068 = vpop.permute.xlu0 %2067
        %2069 = vrot.lane.b32.xlu0 %v2049, 32
        %v2070 = vpop.permute.xlu0 %2069
        %2071 = vrot.lane.b32.xlu0 %v2050, 32
        %v2072 = vpop.permute.xlu0 %2071
        %2073 = vrot.lane.b32.xlu0 %v2051, 32
        %v2074 = vpop.permute.xlu0 %2073
        %2075 = vrot.lane.b32.xlu0 %v2052, 32
        %v2076 = vpop.permute.xlu0 %2075
        %v2085 = vadd.f32 %v2005, %v2062
        %v2086 = vadd.f32 %v2006, %v2064
        %v2087 = vadd.f32 %v2007, %v2066
        %v2088 = vadd.f32 %v2008, %v2068
        %v2089 = vadd.f32 %v2009, %v2070
        %v2090 = vadd.f32 %v2010, %v2072
        %v2091 = vadd.f32 %v2011, %v2074
        %v2092 = vadd.f32 %v2012, %v2076
        %v2093 = vtanh.pop %v2085
        %v2094 = vtanh.pop %v2086
        %v2095 = vtanh.pop %v2087
        %v2096 = vtanh.pop %v2088
        %v2097 = vtanh.pop %v2089
        %v2098 = vtanh.pop %v2090
        %v2099 = vtanh.pop %v2091
        %v2100 = vtanh.pop %v2092
        %2109 = vrot.lane.b32.xlu0 %v2093, 64
        %v2110 = vpop.permute.xlu0 %2109
        %2111 = vrot.lane.b32.xlu0 %v2094, 64
        %v2112 = vpop.permute.xlu0 %2111
        %2113 = vrot.lane.b32.xlu0 %v2095, 64
        %v2114 = vpop.permute.xlu0 %2113
        %2115 = vrot.lane.b32.xlu0 %v2096, 64
        %v2116 = vpop.permute.xlu0 %2115
        %2117 = vrot.lane.b32.xlu0 %v2097, 64
        %v2118 = vpop.permute.xlu0 %2117
        %2119 = vrot.lane.b32.xlu0 %v2098, 64
        %v2120 = vpop.permute.xlu0 %2119
        %2121 = vrot.lane.b32.xlu0 %v2099, 64
        %v2122 = vpop.permute.xlu0 %2121
        %2123 = vrot.lane.b32.xlu0 %v2100, 64
        %v2124 = vpop.permute.xlu0 %2123
        %v2133 = vmul.f32 %v1997, %v2110
        %v2134 = vmul.f32 %v1998, %v2112
        %v2135 = vmul.f32 %v1999, %v2114
        %v2136 = vmul.f32 %v2000, %v2116
        %v2137 = vmul.f32 %v2001, %v2118
        %v2138 = vmul.f32 %v2002, %v2120
        %v2139 = vmul.f32 %v2003, %v2122
        %v2140 = vmul.f32 %v2004, %v2124
        %s2141 = scalar_lea.vmem [#allocation4], 128
        %v2142 = vld [vmem:[%s2141] sm:$0xff]
        %v2143 = vld [vmem:[%s2141 + $0x8] sm:$0xff]
        %v2144 = vld [vmem:[%s2141 + $0x10] sm:$0xff]
        %v2145 = vld [vmem:[%s2141 + $0x18] sm:$0xff]
        %v2146 = vld [vmem:[%s2141 + $0x20] sm:$0xff]
        %v2147 = vld [vmem:[%s2141 + $0x28] sm:$0xff]
        %v2148 = vld [vmem:[%s2141 + $0x30] sm:$0xff]
        %v2149 = vld [vmem:[%s2141 + $0x38] sm:$0xff]
        %2158 = vrot.lane.b32.xlu0 %v2133, 32
        %v2159 = vpop.permute.xlu0 %2158
        %2160 = vrot.lane.b32.xlu0 %v2134, 32
        %v2161 = vpop.permute.xlu0 %2160
        %2162 = vrot.lane.b32.xlu0 %v2135, 32
        %v2163 = vpop.permute.xlu0 %2162
        %2164 = vrot.lane.b32.xlu0 %v2136, 32
        %v2165 = vpop.permute.xlu0 %2164
        %2166 = vrot.lane.b32.xlu0 %v2137, 32
        %v2167 = vpop.permute.xlu0 %2166
        %2168 = vrot.lane.b32.xlu0 %v2138, 32
        %v2169 = vpop.permute.xlu0 %2168
        %2170 = vrot.lane.b32.xlu0 %v2139, 32
        %v2171 = vpop.permute.xlu0 %2170
        %2172 = vrot.lane.b32.xlu0 %v2140, 32
        %v2173 = vpop.permute.xlu0 %2172
        %v2174 = vsel %vm735, %v2159, 0
        %v2176 = vsel %vm735, %v2161, 0
        %v2178 = vsel %vm735, %v2163, 0
        %v2180 = vsel %vm735, %v2165, 0
        %v2182 = vsel %vm735, %v2167, 0
        %v2184 = vsel %vm735, %v2169, 0
        %v2186 = vsel %vm735, %v2171, 0
        %v2188 = vsel %vm735, %v2173, 0
        %2190 = vmatprep.subr.mxu0 0.0
        %2191 = vmatpush1.msra.mxu0 0.0
        %2192 = vmatprep.subr.mxu0 0.0
        %2193 = vmatpush1.msra.mxu0 0.0
        %2194 = vmatprep.subr.mxu0 0.0
        %2195 = vmatpush1.msra.mxu0 0.0
        %2196 = vmatprep.subr.mxu0 0.0
        %2197 = vmatpush1.msra.mxu0 0.0
        %2198 = vmatprep.subr.mxu0 0.0
        %2199 = vmatpush1.msra.mxu0 0.0
        %2200 = vmatprep.subr.mxu0 0.0
        %2201 = vmatpush1.msra.mxu0 0.0
        %2202 = vmatprep.subr.mxu0 0.0
        %2203 = vmatpush1.msra.mxu0 0.0
        %2204 = vmatprep.subr.mxu0 0.0
        %2205 = vmatpush1.msra.mxu0 0.0
        %2206 = vmatprep.subr.mxu0 0.0
        %2207 = vmatpush1.msra.mxu0 0.0
        %2208 = vmatprep.subr.mxu0 0.0
        %2209 = vmatpush1.msra.mxu0 0.0
        %2210 = vmatprep.subr.mxu0 0.0
        %2211 = vmatpush1.msra.mxu0 0.0
        %2212 = vmatprep.subr.mxu0 0.0
        %2213 = vmatpush1.msra.mxu0 0.0
        %2214 = vmatprep.subr.mxu0 0.0
        %2215 = vmatpush1.msra.mxu0 %v1380
        %2216 = vmatprep.subr.mxu0 0.0
        %2217 = vmatpush1.msra.mxu0 %v1379
        %2218 = vmatprep.subr.mxu0 0.0
        %2219 = vmatpush1.msra.mxu0 %v1378
        %2220 = vmatprep.subr.mxu0 0.0
        %2221 = vmatpush1.msra.mxu0 %v1377
        %2222 = vmatprep.subr.mxu0 0.0
        %2223 = vmatpush2.msra.mxu0 0.0
        %2224 = vmatprep.subr.mxu0 0.0
        %2225 = vmatpush2.msra.mxu0 0.0
        %2226 = vmatprep.subr.mxu0 0.0
        %2227 = vmatpush2.msra.mxu0 0.0
        %2228 = vmatprep.subr.mxu0 0.0
        %2229 = vmatpush2.msra.mxu0 0.0
        %2230 = vmatprep.subr.mxu0 0.0
        %2231 = vmatpush2.msra.mxu0 0.0
        %2232 = vmatprep.subr.mxu0 0.0
        %2233 = vmatpush2.msra.mxu0 0.0
        %2234 = vmatprep.subr.mxu0 0.0
        %2235 = vmatpush2.msra.mxu0 0.0
        %2236 = vmatprep.subr.mxu0 0.0
        %2237 = vmatpush2.msra.mxu0 0.0
        %2238 = vmatprep.subr.mxu0 0.0
        %2239 = vmatpush2.msra.mxu0 0.0
        %2240 = vmatprep.subr.mxu0 0.0
        %2241 = vmatpush2.msra.mxu0 0.0
        %2242 = vmatprep.subr.mxu0 0.0
        %2243 = vmatpush2.msra.mxu0 0.0
        %2244 = vmatprep.subr.mxu0 0.0
        %2245 = vmatpush2.msra.mxu0 0.0
        %2246 = vmatprep.subr.mxu0 0.0
        %2247 = vmatpush2.msra.mxu0 0.0
        %2248 = vmatprep.subr.mxu0 0.0
        %2249 = vmatpush2.msra.mxu0 0.0
        %2250 = vmatprep.subr.mxu0 0.0
        %2251 = vmatpush2.msra.mxu0 0.0
        %2252 = vmatprep.subr.mxu0 0.0
        %2253 = vmatpush2.msra.mxu0 0.0
        %2254 = vmatprep.mubr.f32.mxu0 0.0
        %2255 = vmatmul.mubr.f32.gmra.mxu0 %v2174
        %v2256 = vpop.f32.mrf.mxu0
        %v2257 = vadd.f32 0.0, %v2256
        %v2258 = vpop.f32.mrf.mxu0
        %2259 = vmatprep.mubr.f32.mxu0 0.0
        %2260 = vmatmul.mubr.f32.gmra.mxu0 %v2176
        %v2261 = vpop.f32.mrf.mxu0
        %v2262 = vadd.f32 0.0, %v2261
        %v2263 = vpop.f32.mrf.mxu0
        %2264 = vmatprep.mubr.f32.mxu0 0.0
        %2265 = vmatmul.mubr.f32.gmra.mxu0 %v2178
        %v2266 = vpop.f32.mrf.mxu0
        %v2267 = vadd.f32 0.0, %v2266
        %v2268 = vpop.f32.mrf.mxu0
        %2269 = vmatprep.mubr.f32.mxu0 0.0
        %2270 = vmatmul.mubr.f32.gmra.mxu0 %v2180
        %v2271 = vpop.f32.mrf.mxu0
        %v2272 = vadd.f32 0.0, %v2271
        %v2273 = vpop.f32.mrf.mxu0
        %2274 = vmatprep.mubr.f32.mxu0 0.0
        %2275 = vmatmul.mubr.f32.gmra.mxu0 %v2182
        %v2276 = vpop.f32.mrf.mxu0
        %v2277 = vadd.f32 0.0, %v2276
        %v2278 = vpop.f32.mrf.mxu0
        %2279 = vmatprep.mubr.f32.mxu0 0.0
        %2280 = vmatmul.mubr.f32.gmra.mxu0 %v2184
        %v2281 = vpop.f32.mrf.mxu0
        %v2282 = vadd.f32 0.0, %v2281
        %v2283 = vpop.f32.mrf.mxu0
        %2284 = vmatprep.mubr.f32.mxu0 0.0
        %2285 = vmatmul.mubr.f32.gmra.mxu0 %v2186
        %v2286 = vpop.f32.mrf.mxu0
        %v2287 = vadd.f32 0.0, %v2286
        %v2288 = vpop.f32.mrf.mxu0
        %2289 = vmatprep.mubr.f32.mxu0 0.0
        %2290 = vmatmul.mubr.f32.gmra.mxu0 %v2188
        %v2291 = vpop.f32.mrf.mxu0
        %v2292 = vadd.f32 0.0, %v2291
        %v2293 = vpop.f32.mrf.mxu0
        %2294 = vdwg.mxu0
        %v2295 = vadd.f32 %v2142, %v2257
        %v2296 = vadd.f32 %v2143, %v2262
        %v2297 = vadd.f32 %v2144, %v2267
        %v2298 = vadd.f32 %v2145, %v2272
        %v2299 = vadd.f32 %v2146, %v2277
        %v2300 = vadd.f32 %v2147, %v2282
        %v2301 = vadd.f32 %v2148, %v2287
        %v2302 = vadd.f32 %v2149, %v2292
        %v2303 = vtanh.pop %v2295
        %v2304 = vtanh.pop %v2296
        %v2305 = vtanh.pop %v2297
        %v2306 = vtanh.pop %v2298
        %v2307 = vtanh.pop %v2299
        %v2308 = vtanh.pop %v2300
        %v2309 = vtanh.pop %v2301
        %v2310 = vtanh.pop %v2302
        %v2311 = vxor.u32 %v2295, 2147483648
        %v2312 = vxor.u32 %v2296, 2147483648
        %v2313 = vxor.u32 %v2297, 2147483648
        %v2314 = vxor.u32 %v2298, 2147483648
        %v2315 = vxor.u32 %v2299, 2147483648
        %v2316 = vxor.u32 %v2300, 2147483648
        %v2317 = vxor.u32 %v2301, 2147483648
        %v2318 = vxor.u32 %v2302, 2147483648
        %v2319 = vmul.f32 %v2311, 1.442695
        %v2320 = vpow.pop %v2319
        %v2321 = vmul.f32 %v2312, 1.442695
        %v2322 = vpow.pop %v2321
        %v2323 = vmul.f32 %v2313, 1.442695
        %v2324 = vpow.pop %v2323
        %v2325 = vmul.f32 %v2314, 1.442695
        %v2326 = vpow.pop %v2325
        %v2327 = vmul.f32 %v2315, 1.442695
        %v2328 = vpow.pop %v2327
        %v2329 = vmul.f32 %v2316, 1.442695
        %v2330 = vpow.pop %v2329
        %v2331 = vmul.f32 %v2317, 1.442695
        %v2332 = vpow.pop %v2331
        %v2333 = vmul.f32 %v2318, 1.442695
        %v2334 = vpow.pop %v2333
        %v2335 = vadd.f32 %v2320, 1.0
        %v2336 = vadd.f32 %v2322, 1.0
        %v2337 = vadd.f32 %v2324, 1.0
        %v2338 = vadd.f32 %v2326, 1.0
        %v2339 = vadd.f32 %v2328, 1.0
        %v2340 = vadd.f32 %v2330, 1.0
        %v2341 = vadd.f32 %v2332, 1.0
        %v2342 = vadd.f32 %v2334, 1.0
        %v2343 = vrcp.pop %v2335
        %v2344 = vmul.f32 1.0, %v2343
        %v2345 = vrcp.pop %v2336
        %v2346 = vmul.f32 1.0, %v2345
        %v2347 = vrcp.pop %v2337
        %v2348 = vmul.f32 1.0, %v2347
        %v2349 = vrcp.pop %v2338
        %v2350 = vmul.f32 1.0, %v2349
        %v2351 = vrcp.pop %v2339
        %v2352 = vmul.f32 1.0, %v2351
        %v2353 = vrcp.pop %v2340
        %v2354 = vmul.f32 1.0, %v2353
        %v2355 = vrcp.pop %v2341
        %v2356 = vmul.f32 1.0, %v2355
        %v2357 = vrcp.pop %v2342
        %v2358 = vmul.f32 1.0, %v2357
        %v2359 = vsel %vm1385, %v2303, %v2344
        %v2360 = vsel %vm1385, %v2304, %v2346
        %v2361 = vsel %vm1385, %v2305, %v2348
        %v2362 = vsel %vm1385, %v2306, %v2350
        %v2363 = vsel %vm1385, %v2307, %v2352
        %v2364 = vsel %vm1385, %v2308, %v2354
        %v2365 = vsel %vm1385, %v2309, %v2356
        %v2366 = vsel %vm1385, %v2310, %v2358
        %v2367 = vmul.f32 %v2359, %v2085
        %v2368 = vmul.f32 %v2360, %v2086
        %v2369 = vmul.f32 %v2361, %v2087
        %v2370 = vmul.f32 %v2362, %v2088
        %v2371 = vmul.f32 %v2363, %v2089
        %v2372 = vmul.f32 %v2364, %v2090
        %v2373 = vmul.f32 %v2365, %v2091
        %v2374 = vmul.f32 %v2366, %v2092
        %2383 = vrot.lane.b32.xlu0 %v2359, 64
        %v2384 = vpop.permute.xlu0 %2383
        %2385 = vrot.lane.b32.xlu0 %v2360, 64
        %v2386 = vpop.permute.xlu0 %2385
        %2387 = vrot.lane.b32.xlu0 %v2361, 64
        %v2388 = vpop.permute.xlu0 %2387
        %2389 = vrot.lane.b32.xlu0 %v2362, 64
        %v2390 = vpop.permute.xlu0 %2389
        %2391 = vrot.lane.b32.xlu0 %v2363, 64
        %v2392 = vpop.permute.xlu0 %2391
        %2393 = vrot.lane.b32.xlu0 %v2364, 64
        %v2394 = vpop.permute.xlu0 %2393
        %2395 = vrot.lane.b32.xlu0 %v2365, 64
        %v2396 = vpop.permute.xlu0 %2395
        %2397 = vrot.lane.b32.xlu0 %v2366, 64
        %v2398 = vpop.permute.xlu0 %2397
        %v2407 = vmul.f32 %v2359, %v2384
        %v2408 = vmul.f32 %v2360, %v2386
        %v2409 = vmul.f32 %v2361, %v2388
        %v2410 = vmul.f32 %v2362, %v2390
        %v2411 = vmul.f32 %v2363, %v2392
        %v2412 = vmul.f32 %v2364, %v2394
        %v2413 = vmul.f32 %v2365, %v2396
        %v2414 = vmul.f32 %v2366, %v2398
        %2423 = vrot.lane.b32.xlu0 %v2407, 32
        %v2424 = vpop.permute.xlu0 %2423
        %2425 = vrot.lane.b32.xlu0 %v2408, 32
        %v2426 = vpop.permute.xlu0 %2425
        %2427 = vrot.lane.b32.xlu0 %v2409, 32
        %v2428 = vpop.permute.xlu0 %2427
        %2429 = vrot.lane.b32.xlu0 %v2410, 32
        %v2430 = vpop.permute.xlu0 %2429
        %2431 = vrot.lane.b32.xlu0 %v2411, 32
        %v2432 = vpop.permute.xlu0 %2431
        %2433 = vrot.lane.b32.xlu0 %v2412, 32
        %v2434 = vpop.permute.xlu0 %2433
        %2435 = vrot.lane.b32.xlu0 %v2413, 32
        %v2436 = vpop.permute.xlu0 %2435
        %2437 = vrot.lane.b32.xlu0 %v2414, 32
        %v2438 = vpop.permute.xlu0 %2437
        %v2447 = vadd.f32 %v2367, %v2424
        %v2448 = vadd.f32 %v2368, %v2426
        %v2449 = vadd.f32 %v2369, %v2428
        %v2450 = vadd.f32 %v2370, %v2430
        %v2451 = vadd.f32 %v2371, %v2432
        %v2452 = vadd.f32 %v2372, %v2434
        %v2453 = vadd.f32 %v2373, %v2436
        %v2454 = vadd.f32 %v2374, %v2438
        %v2455 = vtanh.pop %v2447
        %v2456 = vtanh.pop %v2448
        %v2457 = vtanh.pop %v2449
        %v2458 = vtanh.pop %v2450
        %v2459 = vtanh.pop %v2451
        %v2460 = vtanh.pop %v2452
        %v2461 = vtanh.pop %v2453
        %v2462 = vtanh.pop %v2454
        %2471 = vrot.lane.b32.xlu0 %v2455, 64
        %v2472 = vpop.permute.xlu0 %2471
        %2473 = vrot.lane.b32.xlu0 %v2456, 64
        %v2474 = vpop.permute.xlu0 %2473
        %2475 = vrot.lane.b32.xlu0 %v2457, 64
        %v2476 = vpop.permute.xlu0 %2475
        %2477 = vrot.lane.b32.xlu0 %v2458, 64
        %v2478 = vpop.permute.xlu0 %2477
        %2479 = vrot.lane.b32.xlu0 %v2459, 64
        %v2480 = vpop.permute.xlu0 %2479
        %2481 = vrot.lane.b32.xlu0 %v2460, 64
        %v2482 = vpop.permute.xlu0 %2481
        %2483 = vrot.lane.b32.xlu0 %v2461, 64
        %v2484 = vpop.permute.xlu0 %2483
        %2485 = vrot.lane.b32.xlu0 %v2462, 64
        %v2486 = vpop.permute.xlu0 %2485
        %v2495 = vmul.f32 %v2359, %v2472
        %v2496 = vmul.f32 %v2360, %v2474
        %v2497 = vmul.f32 %v2361, %v2476
        %v2498 = vmul.f32 %v2362, %v2478
        %v2499 = vmul.f32 %v2363, %v2480
        %v2500 = vmul.f32 %v2364, %v2482
        %v2501 = vmul.f32 %v2365, %v2484
        %v2502 = vmul.f32 %v2366, %v2486
        %s2503 = scalar_lea.vmem [#allocation4], 192
        %v2504 = vld [vmem:[%s2503] sm:$0xff]
        %v2505 = vld [vmem:[%s2503 + $0x8] sm:$0xff]
        %v2506 = vld [vmem:[%s2503 + $0x10] sm:$0xff]
        %v2507 = vld [vmem:[%s2503 + $0x18] sm:$0xff]
        %v2508 = vld [vmem:[%s2503 + $0x20] sm:$0xff]
        %v2509 = vld [vmem:[%s2503 + $0x28] sm:$0xff]
        %v2510 = vld [vmem:[%s2503 + $0x30] sm:$0xff]
        %v2511 = vld [vmem:[%s2503 + $0x38] sm:$0xff]
        %2520 = vrot.lane.b32.xlu0 %v2495, 32
        %v2521 = vpop.permute.xlu0 %2520
        %2522 = vrot.lane.b32.xlu0 %v2496, 32
        %v2523 = vpop.permute.xlu0 %2522
        %2524 = vrot.lane.b32.xlu0 %v2497, 32
        %v2525 = vpop.permute.xlu0 %2524
        %2526 = vrot.lane.b32.xlu0 %v2498, 32
        %v2527 = vpop.permute.xlu0 %2526
        %2528 = vrot.lane.b32.xlu0 %v2499, 32
        %v2529 = vpop.permute.xlu0 %2528
        %2530 = vrot.lane.b32.xlu0 %v2500, 32
        %v2531 = vpop.permute.xlu0 %2530
        %2532 = vrot.lane.b32.xlu0 %v2501, 32
        %v2533 = vpop.permute.xlu0 %2532
        %2534 = vrot.lane.b32.xlu0 %v2502, 32
        %v2535 = vpop.permute.xlu0 %2534
        %v2536 = vsel %vm735, %v2521, 0
        %v2538 = vsel %vm735, %v2523, 0
        %v2540 = vsel %vm735, %v2525, 0
        %v2542 = vsel %vm735, %v2527, 0
        %v2544 = vsel %vm735, %v2529, 0
        %v2546 = vsel %vm735, %v2531, 0
        %v2548 = vsel %vm735, %v2533, 0
        %v2550 = vsel %vm735, %v2535, 0
        %2552 = vmatprep.subr.mxu0 0.0
        %2553 = vmatpush1.msra.mxu0 0.0
        %2554 = vmatprep.subr.mxu0 0.0
        %2555 = vmatpush1.msra.mxu0 0.0
        %2556 = vmatprep.subr.mxu0 0.0
        %2557 = vmatpush1.msra.mxu0 0.0
        %2558 = vmatprep.subr.mxu0 0.0
        %2559 = vmatpush1.msra.mxu0 0.0
        %2560 = vmatprep.subr.mxu0 0.0
        %2561 = vmatpush1.msra.mxu0 0.0
        %2562 = vmatprep.subr.mxu0 0.0
        %2563 = vmatpush1.msra.mxu0 0.0
        %2564 = vmatprep.subr.mxu0 0.0
        %2565 = vmatpush1.msra.mxu0 0.0
        %2566 = vmatprep.subr.mxu0 0.0
        %2567 = vmatpush1.msra.mxu0 0.0
        %2568 = vmatprep.subr.mxu0 0.0
        %2569 = vmatpush1.msra.mxu0 0.0
        %2570 = vmatprep.subr.mxu0 0.0
        %2571 = vmatpush1.msra.mxu0 0.0
        %2572 = vmatprep.subr.mxu0 0.0
        %2573 = vmatpush1.msra.mxu0 0.0
        %2574 = vmatprep.subr.mxu0 0.0
        %2575 = vmatpush1.msra.mxu0 0.0
        %2576 = vmatprep.subr.mxu0 0.0
        %2577 = vmatpush1.msra.mxu0 %v1380
        %2578 = vmatprep.subr.mxu0 0.0
        %2579 = vmatpush1.msra.mxu0 %v1379
        %2580 = vmatprep.subr.mxu0 0.0
        %2581 = vmatpush1.msra.mxu0 %v1378
        %2582 = vmatprep.subr.mxu0 0.0
        %2583 = vmatpush1.msra.mxu0 %v1377
        %2584 = vmatprep.subr.mxu0 0.0
        %2585 = vmatpush2.msra.mxu0 0.0
        %2586 = vmatprep.subr.mxu0 0.0
        %2587 = vmatpush2.msra.mxu0 0.0
        %2588 = vmatprep.subr.mxu0 0.0
        %2589 = vmatpush2.msra.mxu0 0.0
        %2590 = vmatprep.subr.mxu0 0.0
        %2591 = vmatpush2.msra.mxu0 0.0
        %2592 = vmatprep.subr.mxu0 0.0
        %2593 = vmatpush2.msra.mxu0 0.0
        %2594 = vmatprep.subr.mxu0 0.0
        %2595 = vmatpush2.msra.mxu0 0.0
        %2596 = vmatprep.subr.mxu0 0.0
        %2597 = vmatpush2.msra.mxu0 0.0
        %2598 = vmatprep.subr.mxu0 0.0
        %2599 = vmatpush2.msra.mxu0 0.0
        %2600 = vmatprep.subr.mxu0 0.0
        %2601 = vmatpush2.msra.mxu0 0.0
        %2602 = vmatprep.subr.mxu0 0.0
        %2603 = vmatpush2.msra.mxu0 0.0
        %2604 = vmatprep.subr.mxu0 0.0
        %2605 = vmatpush2.msra.mxu0 0.0
        %2606 = vmatprep.subr.mxu0 0.0
        %2607 = vmatpush2.msra.mxu0 0.0
        %2608 = vmatprep.subr.mxu0 0.0
        %2609 = vmatpush2.msra.mxu0 0.0
        %2610 = vmatprep.subr.mxu0 0.0
        %2611 = vmatpush2.msra.mxu0 0.0
        %2612 = vmatprep.subr.mxu0 0.0
        %2613 = vmatpush2.msra.mxu0 0.0
        %2614 = vmatprep.subr.mxu0 0.0
        %2615 = vmatpush2.msra.mxu0 0.0
        %2616 = vmatprep.mubr.f32.mxu0 0.0
        %2617 = vmatmul.mubr.f32.gmra.mxu0 %v2536
        %v2618 = vpop.f32.mrf.mxu0
        %v2619 = vadd.f32 0.0, %v2618
        %v2620 = vpop.f32.mrf.mxu0
        %2621 = vmatprep.mubr.f32.mxu0 0.0
        %2622 = vmatmul.mubr.f32.gmra.mxu0 %v2538
        %v2623 = vpop.f32.mrf.mxu0
        %v2624 = vadd.f32 0.0, %v2623
        %v2625 = vpop.f32.mrf.mxu0
        %2626 = vmatprep.mubr.f32.mxu0 0.0
        %2627 = vmatmul.mubr.f32.gmra.mxu0 %v2540
        %v2628 = vpop.f32.mrf.mxu0
        %v2629 = vadd.f32 0.0, %v2628
        %v2630 = vpop.f32.mrf.mxu0
        %2631 = vmatprep.mubr.f32.mxu0 0.0
        %2632 = vmatmul.mubr.f32.gmra.mxu0 %v2542
        %v2633 = vpop.f32.mrf.mxu0
        %v2634 = vadd.f32 0.0, %v2633
        %v2635 = vpop.f32.mrf.mxu0
        %2636 = vmatprep.mubr.f32.mxu0 0.0
        %2637 = vmatmul.mubr.f32.gmra.mxu0 %v2544
        %v2638 = vpop.f32.mrf.mxu0
        %v2639 = vadd.f32 0.0, %v2638
        %v2640 = vpop.f32.mrf.mxu0
        %2641 = vmatprep.mubr.f32.mxu0 0.0
        %2642 = vmatmul.mubr.f32.gmra.mxu0 %v2546
        %v2643 = vpop.f32.mrf.mxu0
        %v2644 = vadd.f32 0.0, %v2643
        %v2645 = vpop.f32.mrf.mxu0
        %2646 = vmatprep.mubr.f32.mxu0 0.0
        %2647 = vmatmul.mubr.f32.gmra.mxu0 %v2548
        %v2648 = vpop.f32.mrf.mxu0
        %v2649 = vadd.f32 0.0, %v2648
        %v2650 = vpop.f32.mrf.mxu0
        %2651 = vmatprep.mubr.f32.mxu0 0.0
        %2652 = vmatmul.mubr.f32.gmra.mxu0 %v2550
        %v2653 = vpop.f32.mrf.mxu0
        %v2654 = vadd.f32 0.0, %v2653
        %v2655 = vpop.f32.mrf.mxu0
        %2656 = vdwg.mxu0
        %v2657 = vadd.f32 %v2504, %v2619
        %v2658 = vadd.f32 %v2505, %v2624
        %v2659 = vadd.f32 %v2506, %v2629
        %v2660 = vadd.f32 %v2507, %v2634
        %v2661 = vadd.f32 %v2508, %v2639
        %v2662 = vadd.f32 %v2509, %v2644
        %v2663 = vadd.f32 %v2510, %v2649
        %v2664 = vadd.f32 %v2511, %v2654
        %v2665 = vtanh.pop %v2657
        %v2666 = vtanh.pop %v2658
        %v2667 = vtanh.pop %v2659
        %v2668 = vtanh.pop %v2660
        %v2669 = vtanh.pop %v2661
        %v2670 = vtanh.pop %v2662
        %v2671 = vtanh.pop %v2663
        %v2672 = vtanh.pop %v2664
        %v2673 = vxor.u32 %v2657, 2147483648
        %v2674 = vxor.u32 %v2658, 2147483648
        %v2675 = vxor.u32 %v2659, 2147483648
        %v2676 = vxor.u32 %v2660, 2147483648
        %v2677 = vxor.u32 %v2661, 2147483648
        %v2678 = vxor.u32 %v2662, 2147483648
        %v2679 = vxor.u32 %v2663, 2147483648
        %v2680 = vxor.u32 %v2664, 2147483648
        %v2681 = vmul.f32 %v2673, 1.442695
        %v2682 = vpow.pop %v2681
        %v2683 = vmul.f32 %v2674, 1.442695
        %v2684 = vpow.pop %v2683
        %v2685 = vmul.f32 %v2675, 1.442695
        %v2686 = vpow.pop %v2685
        %v2687 = vmul.f32 %v2676, 1.442695
        %v2688 = vpow.pop %v2687
        %v2689 = vmul.f32 %v2677, 1.442695
        %v2690 = vpow.pop %v2689
        %v2691 = vmul.f32 %v2678, 1.442695
        %v2692 = vpow.pop %v2691
        %v2693 = vmul.f32 %v2679, 1.442695
        %v2694 = vpow.pop %v2693
        %v2695 = vmul.f32 %v2680, 1.442695
        %v2696 = vpow.pop %v2695
        %v2697 = vadd.f32 %v2682, 1.0
        %v2698 = vadd.f32 %v2684, 1.0
        %v2699 = vadd.f32 %v2686, 1.0
        %v2700 = vadd.f32 %v2688, 1.0
        %v2701 = vadd.f32 %v2690, 1.0
        %v2702 = vadd.f32 %v2692, 1.0
        %v2703 = vadd.f32 %v2694, 1.0
        %v2704 = vadd.f32 %v2696, 1.0
        %v2705 = vrcp.pop %v2697
        %v2706 = vmul.f32 1.0, %v2705
        %v2707 = vrcp.pop %v2698
        %v2708 = vmul.f32 1.0, %v2707
        %v2709 = vrcp.pop %v2699
        %v2710 = vmul.f32 1.0, %v2709
        %v2711 = vrcp.pop %v2700
        %v2712 = vmul.f32 1.0, %v2711
        %v2713 = vrcp.pop %v2701
        %v2714 = vmul.f32 1.0, %v2713
        %v2715 = vrcp.pop %v2702
        %v2716 = vmul.f32 1.0, %v2715
        %v2717 = vrcp.pop %v2703
        %v2718 = vmul.f32 1.0, %v2717
        %v2719 = vrcp.pop %v2704
        %v2720 = vmul.f32 1.0, %v2719
        %v2721 = vsel %vm1385, %v2665, %v2706
        %v2722 = vsel %vm1385, %v2666, %v2708
        %v2723 = vsel %vm1385, %v2667, %v2710
        %v2724 = vsel %vm1385, %v2668, %v2712
        %v2725 = vsel %vm1385, %v2669, %v2714
        %v2726 = vsel %vm1385, %v2670, %v2716
        %v2727 = vsel %vm1385, %v2671, %v2718
        %v2728 = vsel %vm1385, %v2672, %v2720
        %v2729 = vmul.f32 %v2721, %v2447
        %v2730 = vmul.f32 %v2722, %v2448
        %v2731 = vmul.f32 %v2723, %v2449
        %v2732 = vmul.f32 %v2724, %v2450
        %v2733 = vmul.f32 %v2725, %v2451
        %v2734 = vmul.f32 %v2726, %v2452
        %v2735 = vmul.f32 %v2727, %v2453
        %v2736 = vmul.f32 %v2728, %v2454
        %2745 = vrot.lane.b32.xlu0 %v2721, 64
        %v2746 = vpop.permute.xlu0 %2745
        %2747 = vrot.lane.b32.xlu0 %v2722, 64
        %v2748 = vpop.permute.xlu0 %2747
        %2749 = vrot.lane.b32.xlu0 %v2723, 64
        %v2750 = vpop.permute.xlu0 %2749
        %2751 = vrot.lane.b32.xlu0 %v2724, 64
        %v2752 = vpop.permute.xlu0 %2751
        %2753 = vrot.lane.b32.xlu0 %v2725, 64
        %v2754 = vpop.permute.xlu0 %2753
        %2755 = vrot.lane.b32.xlu0 %v2726, 64
        %v2756 = vpop.permute.xlu0 %2755
        %2757 = vrot.lane.b32.xlu0 %v2727, 64
        %v2758 = vpop.permute.xlu0 %2757
        %2759 = vrot.lane.b32.xlu0 %v2728, 64
        %v2760 = vpop.permute.xlu0 %2759
        %v2769 = vmul.f32 %v2721, %v2746
        %v2770 = vmul.f32 %v2722, %v2748
        %v2771 = vmul.f32 %v2723, %v2750
        %v2772 = vmul.f32 %v2724, %v2752
        %v2773 = vmul.f32 %v2725, %v2754
        %v2774 = vmul.f32 %v2726, %v2756
        %v2775 = vmul.f32 %v2727, %v2758
        %v2776 = vmul.f32 %v2728, %v2760
        %2785 = vrot.lane.b32.xlu0 %v2769, 32
        %v2786 = vpop.permute.xlu0 %2785
        %2787 = vrot.lane.b32.xlu0 %v2770, 32
        %v2788 = vpop.permute.xlu0 %2787
        %2789 = vrot.lane.b32.xlu0 %v2771, 32
        %v2790 = vpop.permute.xlu0 %2789
        %2791 = vrot.lane.b32.xlu0 %v2772, 32
        %v2792 = vpop.permute.xlu0 %2791
        %2793 = vrot.lane.b32.xlu0 %v2773, 32
        %v2794 = vpop.permute.xlu0 %2793
        %2795 = vrot.lane.b32.xlu0 %v2774, 32
        %v2796 = vpop.permute.xlu0 %2795
        %2797 = vrot.lane.b32.xlu0 %v2775, 32
        %v2798 = vpop.permute.xlu0 %2797
        %2799 = vrot.lane.b32.xlu0 %v2776, 32
        %v2800 = vpop.permute.xlu0 %2799
        %v2809 = vadd.f32 %v2729, %v2786
        %v2810 = vadd.f32 %v2730, %v2788
        %v2811 = vadd.f32 %v2731, %v2790
        %v2812 = vadd.f32 %v2732, %v2792
        %v2813 = vadd.f32 %v2733, %v2794
        %v2814 = vadd.f32 %v2734, %v2796
        %v2815 = vadd.f32 %v2735, %v2798
        %v2816 = vadd.f32 %v2736, %v2800
        %v2817 = vtanh.pop %v2809
        %v2818 = vtanh.pop %v2810
        %v2819 = vtanh.pop %v2811
        %v2820 = vtanh.pop %v2812
        %v2821 = vtanh.pop %v2813
        %v2822 = vtanh.pop %v2814
        %v2823 = vtanh.pop %v2815
        %v2824 = vtanh.pop %v2816
        %2833 = vrot.lane.b32.xlu0 %v2817, 64
        %v2834 = vpop.permute.xlu0 %2833
        %2835 = vrot.lane.b32.xlu0 %v2818, 64
        %v2836 = vpop.permute.xlu0 %2835
        %2837 = vrot.lane.b32.xlu0 %v2819, 64
        %v2838 = vpop.permute.xlu0 %2837
        %2839 = vrot.lane.b32.xlu0 %v2820, 64
        %v2840 = vpop.permute.xlu0 %2839
        %2841 = vrot.lane.b32.xlu0 %v2821, 64
        %v2842 = vpop.permute.xlu0 %2841
        %2843 = vrot.lane.b32.xlu0 %v2822, 64
        %v2844 = vpop.permute.xlu0 %2843
        %2845 = vrot.lane.b32.xlu0 %v2823, 64
        %v2846 = vpop.permute.xlu0 %2845
        %2847 = vrot.lane.b32.xlu0 %v2824, 64
        %v2848 = vpop.permute.xlu0 %2847
        %v2857 = vmul.f32 %v2721, %v2834
        %v2858 = vmul.f32 %v2722, %v2836
        %v2859 = vmul.f32 %v2723, %v2838
        %v2860 = vmul.f32 %v2724, %v2840
        %v2861 = vmul.f32 %v2725, %v2842
        %v2862 = vmul.f32 %v2726, %v2844
        %v2863 = vmul.f32 %v2727, %v2846
        %v2864 = vmul.f32 %v2728, %v2848
        %s2865 = scalar_lea.vmem [#allocation4], 256
        %v2866 = vld [vmem:[%s2865] sm:$0xff]
        %v2867 = vld [vmem:[%s2865 + $0x8] sm:$0xff]
        %v2868 = vld [vmem:[%s2865 + $0x10] sm:$0xff]
        %v2869 = vld [vmem:[%s2865 + $0x18] sm:$0xff]
        %v2870 = vld [vmem:[%s2865 + $0x20] sm:$0xff]
        %v2871 = vld [vmem:[%s2865 + $0x28] sm:$0xff]
        %v2872 = vld [vmem:[%s2865 + $0x30] sm:$0xff]
        %v2873 = vld [vmem:[%s2865 + $0x38] sm:$0xff]
        %2882 = vrot.lane.b32.xlu0 %v2857, 32
        %v2883 = vpop.permute.xlu0 %2882
        %2884 = vrot.lane.b32.xlu0 %v2858, 32
        %v2885 = vpop.permute.xlu0 %2884
        %2886 = vrot.lane.b32.xlu0 %v2859, 32
        %v2887 = vpop.permute.xlu0 %2886
        %2888 = vrot.lane.b32.xlu0 %v2860, 32
        %v2889 = vpop.permute.xlu0 %2888
        %2890 = vrot.lane.b32.xlu0 %v2861, 32
        %v2891 = vpop.permute.xlu0 %2890
        %2892 = vrot.lane.b32.xlu0 %v2862, 32
        %v2893 = vpop.permute.xlu0 %2892
        %2894 = vrot.lane.b32.xlu0 %v2863, 32
        %v2895 = vpop.permute.xlu0 %2894
        %2896 = vrot.lane.b32.xlu0 %v2864, 32
        %v2897 = vpop.permute.xlu0 %2896
        %v2898 = vsel %vm735, %v2883, 0
        %v2900 = vsel %vm735, %v2885, 0
        %v2902 = vsel %vm735, %v2887, 0
        %v2904 = vsel %vm735, %v2889, 0
        %v2906 = vsel %vm735, %v2891, 0
        %v2908 = vsel %vm735, %v2893, 0
        %v2910 = vsel %vm735, %v2895, 0
        %v2912 = vsel %vm735, %v2897, 0
        %2914 = vmatprep.subr.mxu0 0.0
        %2915 = vmatpush1.msra.mxu0 0.0
        %2916 = vmatprep.subr.mxu0 0.0
        %2917 = vmatpush1.msra.mxu0 0.0
        %2918 = vmatprep.subr.mxu0 0.0
        %2919 = vmatpush1.msra.mxu0 0.0
        %2920 = vmatprep.subr.mxu0 0.0
        %2921 = vmatpush1.msra.mxu0 0.0
        %2922 = vmatprep.subr.mxu0 0.0
        %2923 = vmatpush1.msra.mxu0 0.0
        %2924 = vmatprep.subr.mxu0 0.0
        %2925 = vmatpush1.msra.mxu0 0.0
        %2926 = vmatprep.subr.mxu0 0.0
        %2927 = vmatpush1.msra.mxu0 0.0
        %2928 = vmatprep.subr.mxu0 0.0
        %2929 = vmatpush1.msra.mxu0 0.0
        %2930 = vmatprep.subr.mxu0 0.0
        %2931 = vmatpush1.msra.mxu0 0.0
        %2932 = vmatprep.subr.mxu0 0.0
        %2933 = vmatpush1.msra.mxu0 0.0
        %2934 = vmatprep.subr.mxu0 0.0
        %2935 = vmatpush1.msra.mxu0 0.0
        %2936 = vmatprep.subr.mxu0 0.0
        %2937 = vmatpush1.msra.mxu0 0.0
        %2938 = vmatprep.subr.mxu0 0.0
        %2939 = vmatpush1.msra.mxu0 %v1380
        %2940 = vmatprep.subr.mxu0 0.0
        %2941 = vmatpush1.msra.mxu0 %v1379
        %2942 = vmatprep.subr.mxu0 0.0
        %2943 = vmatpush1.msra.mxu0 %v1378
        %2944 = vmatprep.subr.mxu0 0.0
        %2945 = vmatpush1.msra.mxu0 %v1377
        %2946 = vmatprep.subr.mxu0 0.0
        %2947 = vmatpush2.msra.mxu0 0.0
        %2948 = vmatprep.subr.mxu0 0.0
        %2949 = vmatpush2.msra.mxu0 0.0
        %2950 = vmatprep.subr.mxu0 0.0
        %2951 = vmatpush2.msra.mxu0 0.0
        %2952 = vmatprep.subr.mxu0 0.0
        %2953 = vmatpush2.msra.mxu0 0.0
        %2954 = vmatprep.subr.mxu0 0.0
        %2955 = vmatpush2.msra.mxu0 0.0
        %2956 = vmatprep.subr.mxu0 0.0
        %2957 = vmatpush2.msra.mxu0 0.0
        %2958 = vmatprep.subr.mxu0 0.0
        %2959 = vmatpush2.msra.mxu0 0.0
        %2960 = vmatprep.subr.mxu0 0.0
        %2961 = vmatpush2.msra.mxu0 0.0
        %2962 = vmatprep.subr.mxu0 0.0
        %2963 = vmatpush2.msra.mxu0 0.0
        %2964 = vmatprep.subr.mxu0 0.0
        %2965 = vmatpush2.msra.mxu0 0.0
        %2966 = vmatprep.subr.mxu0 0.0
        %2967 = vmatpush2.msra.mxu0 0.0
        %2968 = vmatprep.subr.mxu0 0.0
        %2969 = vmatpush2.msra.mxu0 0.0
        %2970 = vmatprep.subr.mxu0 0.0
        %2971 = vmatpush2.msra.mxu0 0.0
        %2972 = vmatprep.subr.mxu0 0.0
        %2973 = vmatpush2.msra.mxu0 0.0
        %2974 = vmatprep.subr.mxu0 0.0
        %2975 = vmatpush2.msra.mxu0 0.0
        %2976 = vmatprep.subr.mxu0 0.0
        %2977 = vmatpush2.msra.mxu0 0.0
        %2978 = vmatprep.mubr.f32.mxu0 0.0
        %2979 = vmatmul.mubr.f32.gmra.mxu0 %v2898
        %v2980 = vpop.f32.mrf.mxu0
        %v2981 = vadd.f32 0.0, %v2980
        %v2982 = vpop.f32.mrf.mxu0
        %2983 = vmatprep.mubr.f32.mxu0 0.0
        %2984 = vmatmul.mubr.f32.gmra.mxu0 %v2900
        %v2985 = vpop.f32.mrf.mxu0
        %v2986 = vadd.f32 0.0, %v2985
        %v2987 = vpop.f32.mrf.mxu0
        %2988 = vmatprep.mubr.f32.mxu0 0.0
        %2989 = vmatmul.mubr.f32.gmra.mxu0 %v2902
        %v2990 = vpop.f32.mrf.mxu0
        %v2991 = vadd.f32 0.0, %v2990
        %v2992 = vpop.f32.mrf.mxu0
        %2993 = vmatprep.mubr.f32.mxu0 0.0
        %2994 = vmatmul.mubr.f32.gmra.mxu0 %v2904
        %v2995 = vpop.f32.mrf.mxu0
        %v2996 = vadd.f32 0.0, %v2995
        %v2997 = vpop.f32.mrf.mxu0
        %2998 = vmatprep.mubr.f32.mxu0 0.0
        %2999 = vmatmul.mubr.f32.gmra.mxu0 %v2906
        %v3000 = vpop.f32.mrf.mxu0
        %v3001 = vadd.f32 0.0, %v3000
        %v3002 = vpop.f32.mrf.mxu0
        %3003 = vmatprep.mubr.f32.mxu0 0.0
        %3004 = vmatmul.mubr.f32.gmra.mxu0 %v2908
        %v3005 = vpop.f32.mrf.mxu0
        %v3006 = vadd.f32 0.0, %v3005
        %v3007 = vpop.f32.mrf.mxu0
        %3008 = vmatprep.mubr.f32.mxu0 0.0
        %3009 = vmatmul.mubr.f32.gmra.mxu0 %v2910
        %v3010 = vpop.f32.mrf.mxu0
        %v3011 = vadd.f32 0.0, %v3010
        %v3012 = vpop.f32.mrf.mxu0
        %3013 = vmatprep.mubr.f32.mxu0 0.0
        %3014 = vmatmul.mubr.f32.gmra.mxu0 %v2912
        %v3015 = vpop.f32.mrf.mxu0
        %v3016 = vadd.f32 0.0, %v3015
        %v3017 = vpop.f32.mrf.mxu0
        %3018 = vdwg.mxu0
        %v3019 = vadd.f32 %v2866, %v2981
        %v3020 = vadd.f32 %v2867, %v2986
        %v3021 = vadd.f32 %v2868, %v2991
        %v3022 = vadd.f32 %v2869, %v2996
        %v3023 = vadd.f32 %v2870, %v3001
        %v3024 = vadd.f32 %v2871, %v3006
        %v3025 = vadd.f32 %v2872, %v3011
        %v3026 = vadd.f32 %v2873, %v3016
        %v3027 = vtanh.pop %v3019
        %v3028 = vtanh.pop %v3020
        %v3029 = vtanh.pop %v3021
        %v3030 = vtanh.pop %v3022
        %v3031 = vtanh.pop %v3023
        %v3032 = vtanh.pop %v3024
        %v3033 = vtanh.pop %v3025
        %v3034 = vtanh.pop %v3026
        %v3035 = vxor.u32 %v3019, 2147483648
        %v3036 = vxor.u32 %v3020, 2147483648
        %v3037 = vxor.u32 %v3021, 2147483648
        %v3038 = vxor.u32 %v3022, 2147483648
        %v3039 = vxor.u32 %v3023, 2147483648
        %v3040 = vxor.u32 %v3024, 2147483648
        %v3041 = vxor.u32 %v3025, 2147483648
        %v3042 = vxor.u32 %v3026, 2147483648
        %v3043 = vmul.f32 %v3035, 1.442695
        %v3044 = vpow.pop %v3043
        %v3045 = vmul.f32 %v3036, 1.442695
        %v3046 = vpow.pop %v3045
        %v3047 = vmul.f32 %v3037, 1.442695
        %v3048 = vpow.pop %v3047
        %v3049 = vmul.f32 %v3038, 1.442695
        %v3050 = vpow.pop %v3049
        %v3051 = vmul.f32 %v3039, 1.442695
        %v3052 = vpow.pop %v3051
        %v3053 = vmul.f32 %v3040, 1.442695
        %v3054 = vpow.pop %v3053
        %v3055 = vmul.f32 %v3041, 1.442695
        %v3056 = vpow.pop %v3055
        %v3057 = vmul.f32 %v3042, 1.442695
        %v3058 = vpow.pop %v3057
        %v3059 = vadd.f32 %v3044, 1.0
        %v3060 = vadd.f32 %v3046, 1.0
        %v3061 = vadd.f32 %v3048, 1.0
        %v3062 = vadd.f32 %v3050, 1.0
        %v3063 = vadd.f32 %v3052, 1.0
        %v3064 = vadd.f32 %v3054, 1.0
        %v3065 = vadd.f32 %v3056, 1.0
        %v3066 = vadd.f32 %v3058, 1.0
        %v3067 = vrcp.pop %v3059
        %v3068 = vmul.f32 1.0, %v3067
        %v3069 = vrcp.pop %v3060
        %v3070 = vmul.f32 1.0, %v3069
        %v3071 = vrcp.pop %v3061
        %v3072 = vmul.f32 1.0, %v3071
        %v3073 = vrcp.pop %v3062
        %v3074 = vmul.f32 1.0, %v3073
        %v3075 = vrcp.pop %v3063
        %v3076 = vmul.f32 1.0, %v3075
        %v3077 = vrcp.pop %v3064
        %v3078 = vmul.f32 1.0, %v3077
        %v3079 = vrcp.pop %v3065
        %v3080 = vmul.f32 1.0, %v3079
        %v3081 = vrcp.pop %v3066
        %v3082 = vmul.f32 1.0, %v3081
        %v3083 = vsel %vm1385, %v3027, %v3068
        %v3084 = vsel %vm1385, %v3028, %v3070
        %v3085 = vsel %vm1385, %v3029, %v3072
        %v3086 = vsel %vm1385, %v3030, %v3074
        %v3087 = vsel %vm1385, %v3031, %v3076
        %v3088 = vsel %vm1385, %v3032, %v3078
        %v3089 = vsel %vm1385, %v3033, %v3080
        %v3090 = vsel %vm1385, %v3034, %v3082
        %v3091 = vmul.f32 %v3083, %v2809
        %v3092 = vmul.f32 %v3084, %v2810
        %v3093 = vmul.f32 %v3085, %v2811
        %v3094 = vmul.f32 %v3086, %v2812
        %v3095 = vmul.f32 %v3087, %v2813
        %v3096 = vmul.f32 %v3088, %v2814
        %v3097 = vmul.f32 %v3089, %v2815
        %v3098 = vmul.f32 %v3090, %v2816
        %3107 = vrot.lane.b32.xlu0 %v3083, 64
        %v3108 = vpop.permute.xlu0 %3107
        %3109 = vrot.lane.b32.xlu0 %v3084, 64
        %v3110 = vpop.permute.xlu0 %3109
        %3111 = vrot.lane.b32.xlu0 %v3085, 64
        %v3112 = vpop.permute.xlu0 %3111
        %3113 = vrot.lane.b32.xlu0 %v3086, 64
        %v3114 = vpop.permute.xlu0 %3113
        %3115 = vrot.lane.b32.xlu0 %v3087, 64
        %v3116 = vpop.permute.xlu0 %3115
        %3117 = vrot.lane.b32.xlu0 %v3088, 64
        %v3118 = vpop.permute.xlu0 %3117
        %3119 = vrot.lane.b32.xlu0 %v3089, 64
        %v3120 = vpop.permute.xlu0 %3119
        %3121 = vrot.lane.b32.xlu0 %v3090, 64
        %v3122 = vpop.permute.xlu0 %3121
        %v3131 = vmul.f32 %v3083, %v3108
        %v3132 = vmul.f32 %v3084, %v3110
        %v3133 = vmul.f32 %v3085, %v3112
        %v3134 = vmul.f32 %v3086, %v3114
        %v3135 = vmul.f32 %v3087, %v3116
        %v3136 = vmul.f32 %v3088, %v3118
        %v3137 = vmul.f32 %v3089, %v3120
        %v3138 = vmul.f32 %v3090, %v3122
        %3147 = vrot.lane.b32.xlu0 %v3131, 32
        %v3148 = vpop.permute.xlu0 %3147
        %3149 = vrot.lane.b32.xlu0 %v3132, 32
        %v3150 = vpop.permute.xlu0 %3149
        %3151 = vrot.lane.b32.xlu0 %v3133, 32
        %v3152 = vpop.permute.xlu0 %3151
        %3153 = vrot.lane.b32.xlu0 %v3134, 32
        %v3154 = vpop.permute.xlu0 %3153
        %3155 = vrot.lane.b32.xlu0 %v3135, 32
        %v3156 = vpop.permute.xlu0 %3155
        %3157 = vrot.lane.b32.xlu0 %v3136, 32
        %v3158 = vpop.permute.xlu0 %3157
        %3159 = vrot.lane.b32.xlu0 %v3137, 32
        %v3160 = vpop.permute.xlu0 %3159
        %3161 = vrot.lane.b32.xlu0 %v3138, 32
        %v3162 = vpop.permute.xlu0 %3161
        %v3171 = vadd.f32 %v3091, %v3148
        %v3172 = vadd.f32 %v3092, %v3150
        %v3173 = vadd.f32 %v3093, %v3152
        %v3174 = vadd.f32 %v3094, %v3154
        %v3175 = vadd.f32 %v3095, %v3156
        %v3176 = vadd.f32 %v3096, %v3158
        %v3177 = vadd.f32 %v3097, %v3160
        %v3178 = vadd.f32 %v3098, %v3162
        %v3179 = vtanh.pop %v3171
        %v3180 = vtanh.pop %v3172
        %v3181 = vtanh.pop %v3173
        %v3182 = vtanh.pop %v3174
        %v3183 = vtanh.pop %v3175
        %v3184 = vtanh.pop %v3176
        %v3185 = vtanh.pop %v3177
        %v3186 = vtanh.pop %v3178
        %3195 = vrot.lane.b32.xlu0 %v3179, 64
        %v3196 = vpop.permute.xlu0 %3195
        %3197 = vrot.lane.b32.xlu0 %v3180, 64
        %v3198 = vpop.permute.xlu0 %3197
        %3199 = vrot.lane.b32.xlu0 %v3181, 64
        %v3200 = vpop.permute.xlu0 %3199
        %3201 = vrot.lane.b32.xlu0 %v3182, 64
        %v3202 = vpop.permute.xlu0 %3201
        %3203 = vrot.lane.b32.xlu0 %v3183, 64
        %v3204 = vpop.permute.xlu0 %3203
        %3205 = vrot.lane.b32.xlu0 %v3184, 64
        %v3206 = vpop.permute.xlu0 %3205
        %3207 = vrot.lane.b32.xlu0 %v3185, 64
        %v3208 = vpop.permute.xlu0 %3207
        %3209 = vrot.lane.b32.xlu0 %v3186, 64
        %v3210 = vpop.permute.xlu0 %3209
        %v3219 = vmul.f32 %v3083, %v3196
        %v3220 = vmul.f32 %v3084, %v3198
        %v3221 = vmul.f32 %v3085, %v3200
        %v3222 = vmul.f32 %v3086, %v3202
        %v3223 = vmul.f32 %v3087, %v3204
        %v3224 = vmul.f32 %v3088, %v3206
        %v3225 = vmul.f32 %v3089, %v3208
        %v3226 = vmul.f32 %v3090, %v3210
        %s3227 = scalar_lea.vmem [#allocation4], 320
        %v3228 = vld [vmem:[%s3227] sm:$0xff]
        %v3229 = vld [vmem:[%s3227 + $0x8] sm:$0xff]
        %v3230 = vld [vmem:[%s3227 + $0x10] sm:$0xff]
        %v3231 = vld [vmem:[%s3227 + $0x18] sm:$0xff]
        %v3232 = vld [vmem:[%s3227 + $0x20] sm:$0xff]
        %v3233 = vld [vmem:[%s3227 + $0x28] sm:$0xff]
        %v3234 = vld [vmem:[%s3227 + $0x30] sm:$0xff]
        %v3235 = vld [vmem:[%s3227 + $0x38] sm:$0xff]
        %3244 = vrot.lane.b32.xlu0 %v3219, 32
        %v3245 = vpop.permute.xlu0 %3244
        %3246 = vrot.lane.b32.xlu0 %v3220, 32
        %v3247 = vpop.permute.xlu0 %3246
        %3248 = vrot.lane.b32.xlu0 %v3221, 32
        %v3249 = vpop.permute.xlu0 %3248
        %3250 = vrot.lane.b32.xlu0 %v3222, 32
        %v3251 = vpop.permute.xlu0 %3250
        %3252 = vrot.lane.b32.xlu0 %v3223, 32
        %v3253 = vpop.permute.xlu0 %3252
        %3254 = vrot.lane.b32.xlu0 %v3224, 32
        %v3255 = vpop.permute.xlu0 %3254
        %3256 = vrot.lane.b32.xlu0 %v3225, 32
        %v3257 = vpop.permute.xlu0 %3256
        %3258 = vrot.lane.b32.xlu0 %v3226, 32
        %v3259 = vpop.permute.xlu0 %3258
        %v3260 = vsel %vm735, %v3245, 0
        %v3262 = vsel %vm735, %v3247, 0
        %v3264 = vsel %vm735, %v3249, 0
        %v3266 = vsel %vm735, %v3251, 0
        %v3268 = vsel %vm735, %v3253, 0
        %v3270 = vsel %vm735, %v3255, 0
        %v3272 = vsel %vm735, %v3257, 0
        %v3274 = vsel %vm735, %v3259, 0
        %3276 = vmatprep.subr.mxu0 0.0
        %3277 = vmatpush1.msra.mxu0 0.0
        %3278 = vmatprep.subr.mxu0 0.0
        %3279 = vmatpush1.msra.mxu0 0.0
        %3280 = vmatprep.subr.mxu0 0.0
        %3281 = vmatpush1.msra.mxu0 0.0
        %3282 = vmatprep.subr.mxu0 0.0
        %3283 = vmatpush1.msra.mxu0 0.0
        %3284 = vmatprep.subr.mxu0 0.0
        %3285 = vmatpush1.msra.mxu0 0.0
        %3286 = vmatprep.subr.mxu0 0.0
        %3287 = vmatpush1.msra.mxu0 0.0
        %3288 = vmatprep.subr.mxu0 0.0
        %3289 = vmatpush1.msra.mxu0 0.0
        %3290 = vmatprep.subr.mxu0 0.0
        %3291 = vmatpush1.msra.mxu0 0.0
        %3292 = vmatprep.subr.mxu0 0.0
        %3293 = vmatpush1.msra.mxu0 0.0
        %3294 = vmatprep.subr.mxu0 0.0
        %3295 = vmatpush1.msra.mxu0 0.0
        %3296 = vmatprep.subr.mxu0 0.0
        %3297 = vmatpush1.msra.mxu0 0.0
        %3298 = vmatprep.subr.mxu0 0.0
        %3299 = vmatpush1.msra.mxu0 0.0
        %3300 = vmatprep.subr.mxu0 0.0
        %3301 = vmatpush1.msra.mxu0 %v1380
        %3302 = vmatprep.subr.mxu0 0.0
        %3303 = vmatpush1.msra.mxu0 %v1379
        %3304 = vmatprep.subr.mxu0 0.0
        %3305 = vmatpush1.msra.mxu0 %v1378
        %3306 = vmatprep.subr.mxu0 0.0
        %3307 = vmatpush1.msra.mxu0 %v1377
        %3308 = vmatprep.subr.mxu0 0.0
        %3309 = vmatpush2.msra.mxu0 0.0
        %3310 = vmatprep.subr.mxu0 0.0
        %3311 = vmatpush2.msra.mxu0 0.0
        %3312 = vmatprep.subr.mxu0 0.0
        %3313 = vmatpush2.msra.mxu0 0.0
        %3314 = vmatprep.subr.mxu0 0.0
        %3315 = vmatpush2.msra.mxu0 0.0
        %3316 = vmatprep.subr.mxu0 0.0
        %3317 = vmatpush2.msra.mxu0 0.0
        %3318 = vmatprep.subr.mxu0 0.0
        %3319 = vmatpush2.msra.mxu0 0.0
        %3320 = vmatprep.subr.mxu0 0.0
        %3321 = vmatpush2.msra.mxu0 0.0
        %3322 = vmatprep.subr.mxu0 0.0
        %3323 = vmatpush2.msra.mxu0 0.0
        %3324 = vmatprep.subr.mxu0 0.0
        %3325 = vmatpush2.msra.mxu0 0.0
        %3326 = vmatprep.subr.mxu0 0.0
        %3327 = vmatpush2.msra.mxu0 0.0
        %3328 = vmatprep.subr.mxu0 0.0
        %3329 = vmatpush2.msra.mxu0 0.0
        %3330 = vmatprep.subr.mxu0 0.0
        %3331 = vmatpush2.msra.mxu0 0.0
        %3332 = vmatprep.subr.mxu0 0.0
        %3333 = vmatpush2.msra.mxu0 0.0
        %3334 = vmatprep.subr.mxu0 0.0
        %3335 = vmatpush2.msra.mxu0 0.0
        %3336 = vmatprep.subr.mxu0 0.0
        %3337 = vmatpush2.msra.mxu0 0.0
        %3338 = vmatprep.subr.mxu0 0.0
        %3339 = vmatpush2.msra.mxu0 0.0
        %3340 = vmatprep.mubr.f32.mxu0 0.0
        %3341 = vmatmul.mubr.f32.gmra.mxu0 %v3260
        %v3342 = vpop.f32.mrf.mxu0
        %v3343 = vadd.f32 0.0, %v3342
        %v3344 = vpop.f32.mrf.mxu0
        %3345 = vmatprep.mubr.f32.mxu0 0.0
        %3346 = vmatmul.mubr.f32.gmra.mxu0 %v3262
        %v3347 = vpop.f32.mrf.mxu0
        %v3348 = vadd.f32 0.0, %v3347
        %v3349 = vpop.f32.mrf.mxu0
        %3350 = vmatprep.mubr.f32.mxu0 0.0
        %3351 = vmatmul.mubr.f32.gmra.mxu0 %v3264
        %v3352 = vpop.f32.mrf.mxu0
        %v3353 = vadd.f32 0.0, %v3352
        %v3354 = vpop.f32.mrf.mxu0
        %3355 = vmatprep.mubr.f32.mxu0 0.0
        %3356 = vmatmul.mubr.f32.gmra.mxu0 %v3266
        %v3357 = vpop.f32.mrf.mxu0
        %v3358 = vadd.f32 0.0, %v3357
        %v3359 = vpop.f32.mrf.mxu0
        %3360 = vmatprep.mubr.f32.mxu0 0.0
        %3361 = vmatmul.mubr.f32.gmra.mxu0 %v3268
        %v3362 = vpop.f32.mrf.mxu0
        %v3363 = vadd.f32 0.0, %v3362
        %v3364 = vpop.f32.mrf.mxu0
        %3365 = vmatprep.mubr.f32.mxu0 0.0
        %3366 = vmatmul.mubr.f32.gmra.mxu0 %v3270
        %v3367 = vpop.f32.mrf.mxu0
        %v3368 = vadd.f32 0.0, %v3367
        %v3369 = vpop.f32.mrf.mxu0
        %3370 = vmatprep.mubr.f32.mxu0 0.0
        %3371 = vmatmul.mubr.f32.gmra.mxu0 %v3272
        %v3372 = vpop.f32.mrf.mxu0
        %v3373 = vadd.f32 0.0, %v3372
        %v3374 = vpop.f32.mrf.mxu0
        %3375 = vmatprep.mubr.f32.mxu0 0.0
        %3376 = vmatmul.mubr.f32.gmra.mxu0 %v3274
        %v3377 = vpop.f32.mrf.mxu0
        %v3378 = vadd.f32 0.0, %v3377
        %v3379 = vpop.f32.mrf.mxu0
        %3380 = vdwg.mxu0
        %v3381 = vadd.f32 %v3228, %v3343
        %v3382 = vadd.f32 %v3229, %v3348
        %v3383 = vadd.f32 %v3230, %v3353
        %v3384 = vadd.f32 %v3231, %v3358
        %v3385 = vadd.f32 %v3232, %v3363
        %v3386 = vadd.f32 %v3233, %v3368
        %v3387 = vadd.f32 %v3234, %v3373
        %v3388 = vadd.f32 %v3235, %v3378
        %v3389 = vtanh.pop %v3381
        %v3390 = vtanh.pop %v3382
        %v3391 = vtanh.pop %v3383
        %v3392 = vtanh.pop %v3384
        %v3393 = vtanh.pop %v3385
        %v3394 = vtanh.pop %v3386
        %v3395 = vtanh.pop %v3387
        %v3396 = vtanh.pop %v3388
        %v3397 = vxor.u32 %v3381, 2147483648
        %v3398 = vxor.u32 %v3382, 2147483648
        %v3399 = vxor.u32 %v3383, 2147483648
        %v3400 = vxor.u32 %v3384, 2147483648
        %v3401 = vxor.u32 %v3385, 2147483648
        %v3402 = vxor.u32 %v3386, 2147483648
        %v3403 = vxor.u32 %v3387, 2147483648
        %v3404 = vxor.u32 %v3388, 2147483648
        %v3405 = vmul.f32 %v3397, 1.442695
        %v3406 = vpow.pop %v3405
        %v3407 = vmul.f32 %v3398, 1.442695
        %v3408 = vpow.pop %v3407
        %v3409 = vmul.f32 %v3399, 1.442695
        %v3410 = vpow.pop %v3409
        %v3411 = vmul.f32 %v3400, 1.442695
        %v3412 = vpow.pop %v3411
        %v3413 = vmul.f32 %v3401, 1.442695
        %v3414 = vpow.pop %v3413
        %v3415 = vmul.f32 %v3402, 1.442695
        %v3416 = vpow.pop %v3415
        %v3417 = vmul.f32 %v3403, 1.442695
        %v3418 = vpow.pop %v3417
        %v3419 = vmul.f32 %v3404, 1.442695
        %v3420 = vpow.pop %v3419
        %v3421 = vadd.f32 %v3406, 1.0
        %v3422 = vadd.f32 %v3408, 1.0
        %v3423 = vadd.f32 %v3410, 1.0
        %v3424 = vadd.f32 %v3412, 1.0
        %v3425 = vadd.f32 %v3414, 1.0
        %v3426 = vadd.f32 %v3416, 1.0
        %v3427 = vadd.f32 %v3418, 1.0
        %v3428 = vadd.f32 %v3420, 1.0
        %v3429 = vrcp.pop %v3421
        %v3430 = vmul.f32 1.0, %v3429
        %v3431 = vrcp.pop %v3422
        %v3432 = vmul.f32 1.0, %v3431
        %v3433 = vrcp.pop %v3423
        %v3434 = vmul.f32 1.0, %v3433
        %v3435 = vrcp.pop %v3424
        %v3436 = vmul.f32 1.0, %v3435
        %v3437 = vrcp.pop %v3425
        %v3438 = vmul.f32 1.0, %v3437
        %v3439 = vrcp.pop %v3426
        %v3440 = vmul.f32 1.0, %v3439
        %v3441 = vrcp.pop %v3427
        %v3442 = vmul.f32 1.0, %v3441
        %v3443 = vrcp.pop %v3428
        %v3444 = vmul.f32 1.0, %v3443
        %v3445 = vsel %vm1385, %v3389, %v3430
        %v3446 = vsel %vm1385, %v3390, %v3432
        %v3447 = vsel %vm1385, %v3391, %v3434
        %v3448 = vsel %vm1385, %v3392, %v3436
        %v3449 = vsel %vm1385, %v3393, %v3438
        %v3450 = vsel %vm1385, %v3394, %v3440
        %v3451 = vsel %vm1385, %v3395, %v3442
        %v3452 = vsel %vm1385, %v3396, %v3444
        %v3453 = vmul.f32 %v3445, %v3171
        %v3454 = vmul.f32 %v3446, %v3172
        %v3455 = vmul.f32 %v3447, %v3173
        %v3456 = vmul.f32 %v3448, %v3174
        %v3457 = vmul.f32 %v3449, %v3175
        %v3458 = vmul.f32 %v3450, %v3176
        %v3459 = vmul.f32 %v3451, %v3177
        %v3460 = vmul.f32 %v3452, %v3178
        %3469 = vrot.lane.b32.xlu0 %v3445, 64
        %v3470 = vpop.permute.xlu0 %3469
        %3471 = vrot.lane.b32.xlu0 %v3446, 64
        %v3472 = vpop.permute.xlu0 %3471
        %3473 = vrot.lane.b32.xlu0 %v3447, 64
        %v3474 = vpop.permute.xlu0 %3473
        %3475 = vrot.lane.b32.xlu0 %v3448, 64
        %v3476 = vpop.permute.xlu0 %3475
        %3477 = vrot.lane.b32.xlu0 %v3449, 64
        %v3478 = vpop.permute.xlu0 %3477
        %3479 = vrot.lane.b32.xlu0 %v3450, 64
        %v3480 = vpop.permute.xlu0 %3479
        %3481 = vrot.lane.b32.xlu0 %v3451, 64
        %v3482 = vpop.permute.xlu0 %3481
        %3483 = vrot.lane.b32.xlu0 %v3452, 64
        %v3484 = vpop.permute.xlu0 %3483
        %v3493 = vmul.f32 %v3445, %v3470
        %v3494 = vmul.f32 %v3446, %v3472
        %v3495 = vmul.f32 %v3447, %v3474
        %v3496 = vmul.f32 %v3448, %v3476
        %v3497 = vmul.f32 %v3449, %v3478
        %v3498 = vmul.f32 %v3450, %v3480
        %v3499 = vmul.f32 %v3451, %v3482
        %v3500 = vmul.f32 %v3452, %v3484
        %3509 = vrot.lane.b32.xlu0 %v3493, 32
        %v3510 = vpop.permute.xlu0 %3509
        %3511 = vrot.lane.b32.xlu0 %v3494, 32
        %v3512 = vpop.permute.xlu0 %3511
        %3513 = vrot.lane.b32.xlu0 %v3495, 32
        %v3514 = vpop.permute.xlu0 %3513
        %3515 = vrot.lane.b32.xlu0 %v3496, 32
        %v3516 = vpop.permute.xlu0 %3515
        %3517 = vrot.lane.b32.xlu0 %v3497, 32
        %v3518 = vpop.permute.xlu0 %3517
        %3519 = vrot.lane.b32.xlu0 %v3498, 32
        %v3520 = vpop.permute.xlu0 %3519
        %3521 = vrot.lane.b32.xlu0 %v3499, 32
        %v3522 = vpop.permute.xlu0 %3521
        %3523 = vrot.lane.b32.xlu0 %v3500, 32
        %v3524 = vpop.permute.xlu0 %3523
        %v3533 = vadd.f32 %v3453, %v3510
        %v3534 = vadd.f32 %v3454, %v3512
        %v3535 = vadd.f32 %v3455, %v3514
        %v3536 = vadd.f32 %v3456, %v3516
        %v3537 = vadd.f32 %v3457, %v3518
        %v3538 = vadd.f32 %v3458, %v3520
        %v3539 = vadd.f32 %v3459, %v3522
        %v3540 = vadd.f32 %v3460, %v3524
        %v3541 = vtanh.pop %v3533
        %v3542 = vtanh.pop %v3534
        %v3543 = vtanh.pop %v3535
        %v3544 = vtanh.pop %v3536
        %v3545 = vtanh.pop %v3537
        %v3546 = vtanh.pop %v3538
        %v3547 = vtanh.pop %v3539
        %v3548 = vtanh.pop %v3540
        %3557 = vrot.lane.b32.xlu0 %v3541, 64
        %v3558 = vpop.permute.xlu0 %3557
        %3559 = vrot.lane.b32.xlu0 %v3542, 64
        %v3560 = vpop.permute.xlu0 %3559
        %3561 = vrot.lane.b32.xlu0 %v3543, 64
        %v3562 = vpop.permute.xlu0 %3561
        %3563 = vrot.lane.b32.xlu0 %v3544, 64
        %v3564 = vpop.permute.xlu0 %3563
        %3565 = vrot.lane.b32.xlu0 %v3545, 64
        %v3566 = vpop.permute.xlu0 %3565
        %3567 = vrot.lane.b32.xlu0 %v3546, 64
        %v3568 = vpop.permute.xlu0 %3567
        %3569 = vrot.lane.b32.xlu0 %v3547, 64
        %v3570 = vpop.permute.xlu0 %3569
        %3571 = vrot.lane.b32.xlu0 %v3548, 64
        %v3572 = vpop.permute.xlu0 %3571
        %v3581 = vmul.f32 %v3445, %v3558
        %v3582 = vmul.f32 %v3446, %v3560
        %v3583 = vmul.f32 %v3447, %v3562
        %v3584 = vmul.f32 %v3448, %v3564
        %v3585 = vmul.f32 %v3449, %v3566
        %v3586 = vmul.f32 %v3450, %v3568
        %v3587 = vmul.f32 %v3451, %v3570
        %v3588 = vmul.f32 %v3452, %v3572
        %s3589 = scalar_lea.vmem [#allocation4], 384
        %v3590 = vld [vmem:[%s3589] sm:$0xff]
        %v3591 = vld [vmem:[%s3589 + $0x8] sm:$0xff]
        %v3592 = vld [vmem:[%s3589 + $0x10] sm:$0xff]
        %v3593 = vld [vmem:[%s3589 + $0x18] sm:$0xff]
        %v3594 = vld [vmem:[%s3589 + $0x20] sm:$0xff]
        %v3595 = vld [vmem:[%s3589 + $0x28] sm:$0xff]
        %v3596 = vld [vmem:[%s3589 + $0x30] sm:$0xff]
        %v3597 = vld [vmem:[%s3589 + $0x38] sm:$0xff]
        %3606 = vrot.lane.b32.xlu0 %v3581, 32
        %v3607 = vpop.permute.xlu0 %3606
        %3608 = vrot.lane.b32.xlu0 %v3582, 32
        %v3609 = vpop.permute.xlu0 %3608
        %3610 = vrot.lane.b32.xlu0 %v3583, 32
        %v3611 = vpop.permute.xlu0 %3610
        %3612 = vrot.lane.b32.xlu0 %v3584, 32
        %v3613 = vpop.permute.xlu0 %3612
        %3614 = vrot.lane.b32.xlu0 %v3585, 32
        %v3615 = vpop.permute.xlu0 %3614
        %3616 = vrot.lane.b32.xlu0 %v3586, 32
        %v3617 = vpop.permute.xlu0 %3616
        %3618 = vrot.lane.b32.xlu0 %v3587, 32
        %v3619 = vpop.permute.xlu0 %3618
        %3620 = vrot.lane.b32.xlu0 %v3588, 32
        %v3621 = vpop.permute.xlu0 %3620
        %v3622 = vsel %vm735, %v3607, 0
        %v3624 = vsel %vm735, %v3609, 0
        %v3626 = vsel %vm735, %v3611, 0
        %v3628 = vsel %vm735, %v3613, 0
        %v3630 = vsel %vm735, %v3615, 0
        %v3632 = vsel %vm735, %v3617, 0
        %v3634 = vsel %vm735, %v3619, 0
        %v3636 = vsel %vm735, %v3621, 0
        %3638 = vmatprep.subr.mxu0 0.0
        %3639 = vmatpush1.msra.mxu0 0.0
        %3640 = vmatprep.subr.mxu0 0.0
        %3641 = vmatpush1.msra.mxu0 0.0
        %3642 = vmatprep.subr.mxu0 0.0
        %3643 = vmatpush1.msra.mxu0 0.0
        %3644 = vmatprep.subr.mxu0 0.0
        %3645 = vmatpush1.msra.mxu0 0.0
        %3646 = vmatprep.subr.mxu0 0.0
        %3647 = vmatpush1.msra.mxu0 0.0
        %3648 = vmatprep.subr.mxu0 0.0
        %3649 = vmatpush1.msra.mxu0 0.0
        %3650 = vmatprep.subr.mxu0 0.0
        %3651 = vmatpush1.msra.mxu0 0.0
        %3652 = vmatprep.subr.mxu0 0.0
        %3653 = vmatpush1.msra.mxu0 0.0
        %3654 = vmatprep.subr.mxu0 0.0
        %3655 = vmatpush1.msra.mxu0 0.0
        %3656 = vmatprep.subr.mxu0 0.0
        %3657 = vmatpush1.msra.mxu0 0.0
        %3658 = vmatprep.subr.mxu0 0.0
        %3659 = vmatpush1.msra.mxu0 0.0
        %3660 = vmatprep.subr.mxu0 0.0
        %3661 = vmatpush1.msra.mxu0 0.0
        %3662 = vmatprep.subr.mxu0 0.0
        %3663 = vmatpush1.msra.mxu0 %v1380
        %3664 = vmatprep.subr.mxu0 0.0
        %3665 = vmatpush1.msra.mxu0 %v1379
        %3666 = vmatprep.subr.mxu0 0.0
        %3667 = vmatpush1.msra.mxu0 %v1378
        %3668 = vmatprep.subr.mxu0 0.0
        %3669 = vmatpush1.msra.mxu0 %v1377
        %3670 = vmatprep.subr.mxu0 0.0
        %3671 = vmatpush2.msra.mxu0 0.0
        %3672 = vmatprep.subr.mxu0 0.0
        %3673 = vmatpush2.msra.mxu0 0.0
        %3674 = vmatprep.subr.mxu0 0.0
        %3675 = vmatpush2.msra.mxu0 0.0
        %3676 = vmatprep.subr.mxu0 0.0
        %3677 = vmatpush2.msra.mxu0 0.0
        %3678 = vmatprep.subr.mxu0 0.0
        %3679 = vmatpush2.msra.mxu0 0.0
        %3680 = vmatprep.subr.mxu0 0.0
        %3681 = vmatpush2.msra.mxu0 0.0
        %3682 = vmatprep.subr.mxu0 0.0
        %3683 = vmatpush2.msra.mxu0 0.0
        %3684 = vmatprep.subr.mxu0 0.0
        %3685 = vmatpush2.msra.mxu0 0.0
        %3686 = vmatprep.subr.mxu0 0.0
        %3687 = vmatpush2.msra.mxu0 0.0
        %3688 = vmatprep.subr.mxu0 0.0
        %3689 = vmatpush2.msra.mxu0 0.0
        %3690 = vmatprep.subr.mxu0 0.0
        %3691 = vmatpush2.msra.mxu0 0.0
        %3692 = vmatprep.subr.mxu0 0.0
        %3693 = vmatpush2.msra.mxu0 0.0
        %3694 = vmatprep.subr.mxu0 0.0
        %3695 = vmatpush2.msra.mxu0 0.0
        %3696 = vmatprep.subr.mxu0 0.0
        %3697 = vmatpush2.msra.mxu0 0.0
        %3698 = vmatprep.subr.mxu0 0.0
        %3699 = vmatpush2.msra.mxu0 0.0
        %3700 = vmatprep.subr.mxu0 0.0
        %3701 = vmatpush2.msra.mxu0 0.0
        %3702 = vmatprep.mubr.f32.mxu0 0.0
        %3703 = vmatmul.mubr.f32.gmra.mxu0 %v3622
        %v3704 = vpop.f32.mrf.mxu0
        %v3705 = vadd.f32 0.0, %v3704
        %v3706 = vpop.f32.mrf.mxu0
        %3707 = vmatprep.mubr.f32.mxu0 0.0
        %3708 = vmatmul.mubr.f32.gmra.mxu0 %v3624
        %v3709 = vpop.f32.mrf.mxu0
        %v3710 = vadd.f32 0.0, %v3709
        %v3711 = vpop.f32.mrf.mxu0
        %3712 = vmatprep.mubr.f32.mxu0 0.0
        %3713 = vmatmul.mubr.f32.gmra.mxu0 %v3626
        %v3714 = vpop.f32.mrf.mxu0
        %v3715 = vadd.f32 0.0, %v3714
        %v3716 = vpop.f32.mrf.mxu0
        %3717 = vmatprep.mubr.f32.mxu0 0.0
        %3718 = vmatmul.mubr.f32.gmra.mxu0 %v3628
        %v3719 = vpop.f32.mrf.mxu0
        %v3720 = vadd.f32 0.0, %v3719
        %v3721 = vpop.f32.mrf.mxu0
        %3722 = vmatprep.mubr.f32.mxu0 0.0
        %3723 = vmatmul.mubr.f32.gmra.mxu0 %v3630
        %v3724 = vpop.f32.mrf.mxu0
        %v3725 = vadd.f32 0.0, %v3724
        %v3726 = vpop.f32.mrf.mxu0
        %3727 = vmatprep.mubr.f32.mxu0 0.0
        %3728 = vmatmul.mubr.f32.gmra.mxu0 %v3632
        %v3729 = vpop.f32.mrf.mxu0
        %v3730 = vadd.f32 0.0, %v3729
        %v3731 = vpop.f32.mrf.mxu0
        %3732 = vmatprep.mubr.f32.mxu0 0.0
        %3733 = vmatmul.mubr.f32.gmra.mxu0 %v3634
        %v3734 = vpop.f32.mrf.mxu0
        %v3735 = vadd.f32 0.0, %v3734
        %v3736 = vpop.f32.mrf.mxu0
        %3737 = vmatprep.mubr.f32.mxu0 0.0
        %3738 = vmatmul.mubr.f32.gmra.mxu0 %v3636
        %v3739 = vpop.f32.mrf.mxu0
        %v3740 = vadd.f32 0.0, %v3739
        %v3741 = vpop.f32.mrf.mxu0
        %3742 = vdwg.mxu0
        %v3743 = vadd.f32 %v3590, %v3705
        %v3744 = vadd.f32 %v3591, %v3710
        %v3745 = vadd.f32 %v3592, %v3715
        %v3746 = vadd.f32 %v3593, %v3720
        %v3747 = vadd.f32 %v3594, %v3725
        %v3748 = vadd.f32 %v3595, %v3730
        %v3749 = vadd.f32 %v3596, %v3735
        %v3750 = vadd.f32 %v3597, %v3740
        %v3751 = vtanh.pop %v3743
        %v3752 = vtanh.pop %v3744
        %v3753 = vtanh.pop %v3745
        %v3754 = vtanh.pop %v3746
        %v3755 = vtanh.pop %v3747
        %v3756 = vtanh.pop %v3748
        %v3757 = vtanh.pop %v3749
        %v3758 = vtanh.pop %v3750
        %v3759 = vxor.u32 %v3743, 2147483648
        %v3760 = vxor.u32 %v3744, 2147483648
        %v3761 = vxor.u32 %v3745, 2147483648
        %v3762 = vxor.u32 %v3746, 2147483648
        %v3763 = vxor.u32 %v3747, 2147483648
        %v3764 = vxor.u32 %v3748, 2147483648
        %v3765 = vxor.u32 %v3749, 2147483648
        %v3766 = vxor.u32 %v3750, 2147483648
        %v3767 = vmul.f32 %v3759, 1.442695
        %v3768 = vpow.pop %v3767
        %v3769 = vmul.f32 %v3760, 1.442695
        %v3770 = vpow.pop %v3769
        %v3771 = vmul.f32 %v3761, 1.442695
        %v3772 = vpow.pop %v3771
        %v3773 = vmul.f32 %v3762, 1.442695
        %v3774 = vpow.pop %v3773
        %v3775 = vmul.f32 %v3763, 1.442695
        %v3776 = vpow.pop %v3775
        %v3777 = vmul.f32 %v3764, 1.442695
        %v3778 = vpow.pop %v3777
        %v3779 = vmul.f32 %v3765, 1.442695
        %v3780 = vpow.pop %v3779
        %v3781 = vmul.f32 %v3766, 1.442695
        %v3782 = vpow.pop %v3781
        %v3783 = vadd.f32 %v3768, 1.0
        %v3784 = vadd.f32 %v3770, 1.0
        %v3785 = vadd.f32 %v3772, 1.0
        %v3786 = vadd.f32 %v3774, 1.0
        %v3787 = vadd.f32 %v3776, 1.0
        %v3788 = vadd.f32 %v3778, 1.0
        %v3789 = vadd.f32 %v3780, 1.0
        %v3790 = vadd.f32 %v3782, 1.0
        %v3791 = vrcp.pop %v3783
        %v3792 = vmul.f32 1.0, %v3791
        %v3793 = vrcp.pop %v3784
        %v3794 = vmul.f32 1.0, %v3793
        %v3795 = vrcp.pop %v3785
        %v3796 = vmul.f32 1.0, %v3795
        %v3797 = vrcp.pop %v3786
        %v3798 = vmul.f32 1.0, %v3797
        %v3799 = vrcp.pop %v3787
        %v3800 = vmul.f32 1.0, %v3799
        %v3801 = vrcp.pop %v3788
        %v3802 = vmul.f32 1.0, %v3801
        %v3803 = vrcp.pop %v3789
        %v3804 = vmul.f32 1.0, %v3803
        %v3805 = vrcp.pop %v3790
        %v3806 = vmul.f32 1.0, %v3805
        %v3807 = vsel %vm1385, %v3751, %v3792
        %v3808 = vsel %vm1385, %v3752, %v3794
        %v3809 = vsel %vm1385, %v3753, %v3796
        %v3810 = vsel %vm1385, %v3754, %v3798
        %v3811 = vsel %vm1385, %v3755, %v3800
        %v3812 = vsel %vm1385, %v3756, %v3802
        %v3813 = vsel %vm1385, %v3757, %v3804
        %v3814 = vsel %vm1385, %v3758, %v3806
        %v3815 = vmul.f32 %v3807, %v3533
        %v3816 = vmul.f32 %v3808, %v3534
        %v3817 = vmul.f32 %v3809, %v3535
        %v3818 = vmul.f32 %v3810, %v3536
        %v3819 = vmul.f32 %v3811, %v3537
        %v3820 = vmul.f32 %v3812, %v3538
        %v3821 = vmul.f32 %v3813, %v3539
        %v3822 = vmul.f32 %v3814, %v3540
        %3831 = vrot.lane.b32.xlu0 %v3807, 64
        %v3832 = vpop.permute.xlu0 %3831
        %3833 = vrot.lane.b32.xlu0 %v3808, 64
        %v3834 = vpop.permute.xlu0 %3833
        %3835 = vrot.lane.b32.xlu0 %v3809, 64
        %v3836 = vpop.permute.xlu0 %3835
        %3837 = vrot.lane.b32.xlu0 %v3810, 64
        %v3838 = vpop.permute.xlu0 %3837
        %3839 = vrot.lane.b32.xlu0 %v3811, 64
        %v3840 = vpop.permute.xlu0 %3839
        %3841 = vrot.lane.b32.xlu0 %v3812, 64
        %v3842 = vpop.permute.xlu0 %3841
        %3843 = vrot.lane.b32.xlu0 %v3813, 64
        %v3844 = vpop.permute.xlu0 %3843
        %3845 = vrot.lane.b32.xlu0 %v3814, 64
        %v3846 = vpop.permute.xlu0 %3845
        %v3855 = vmul.f32 %v3807, %v3832
        %v3856 = vmul.f32 %v3808, %v3834
        %v3857 = vmul.f32 %v3809, %v3836
        %v3858 = vmul.f32 %v3810, %v3838
        %v3859 = vmul.f32 %v3811, %v3840
        %v3860 = vmul.f32 %v3812, %v3842
        %v3861 = vmul.f32 %v3813, %v3844
        %v3862 = vmul.f32 %v3814, %v3846
        %3871 = vrot.lane.b32.xlu0 %v3855, 32
        %v3872 = vpop.permute.xlu0 %3871
        %3873 = vrot.lane.b32.xlu0 %v3856, 32
        %v3874 = vpop.permute.xlu0 %3873
        %3875 = vrot.lane.b32.xlu0 %v3857, 32
        %v3876 = vpop.permute.xlu0 %3875
        %3877 = vrot.lane.b32.xlu0 %v3858, 32
        %v3878 = vpop.permute.xlu0 %3877
        %3879 = vrot.lane.b32.xlu0 %v3859, 32
        %v3880 = vpop.permute.xlu0 %3879
        %3881 = vrot.lane.b32.xlu0 %v3860, 32
        %v3882 = vpop.permute.xlu0 %3881
        %3883 = vrot.lane.b32.xlu0 %v3861, 32
        %v3884 = vpop.permute.xlu0 %3883
        %3885 = vrot.lane.b32.xlu0 %v3862, 32
        %v3886 = vpop.permute.xlu0 %3885
        %v3895 = vadd.f32 %v3815, %v3872
        %v3896 = vadd.f32 %v3816, %v3874
        %v3897 = vadd.f32 %v3817, %v3876
        %v3898 = vadd.f32 %v3818, %v3878
        %v3899 = vadd.f32 %v3819, %v3880
        %v3900 = vadd.f32 %v3820, %v3882
        %v3901 = vadd.f32 %v3821, %v3884
        %v3902 = vadd.f32 %v3822, %v3886
        %v3903 = vtanh.pop %v3895
        %v3904 = vtanh.pop %v3896
        %v3905 = vtanh.pop %v3897
        %v3906 = vtanh.pop %v3898
        %v3907 = vtanh.pop %v3899
        %v3908 = vtanh.pop %v3900
        %v3909 = vtanh.pop %v3901
        %v3910 = vtanh.pop %v3902
        %3919 = vrot.lane.b32.xlu0 %v3903, 64
        %v3920 = vpop.permute.xlu0 %3919
        %3921 = vrot.lane.b32.xlu0 %v3904, 64
        %v3922 = vpop.permute.xlu0 %3921
        %3923 = vrot.lane.b32.xlu0 %v3905, 64
        %v3924 = vpop.permute.xlu0 %3923
        %3925 = vrot.lane.b32.xlu0 %v3906, 64
        %v3926 = vpop.permute.xlu0 %3925
        %3927 = vrot.lane.b32.xlu0 %v3907, 64
        %v3928 = vpop.permute.xlu0 %3927
        %3929 = vrot.lane.b32.xlu0 %v3908, 64
        %v3930 = vpop.permute.xlu0 %3929
        %3931 = vrot.lane.b32.xlu0 %v3909, 64
        %v3932 = vpop.permute.xlu0 %3931
        %3933 = vrot.lane.b32.xlu0 %v3910, 64
        %v3934 = vpop.permute.xlu0 %3933
        %v3943 = vmul.f32 %v3807, %v3920
        %v3944 = vmul.f32 %v3808, %v3922
        %v3945 = vmul.f32 %v3809, %v3924
        %v3946 = vmul.f32 %v3810, %v3926
        %v3947 = vmul.f32 %v3811, %v3928
        %v3948 = vmul.f32 %v3812, %v3930
        %v3949 = vmul.f32 %v3813, %v3932
        %v3950 = vmul.f32 %v3814, %v3934
        %s3951 = scalar_lea.vmem [#allocation4], 448
        %v3952 = vld [vmem:[%s3951] sm:$0xff]
        %v3953 = vld [vmem:[%s3951 + $0x8] sm:$0xff]
        %v3954 = vld [vmem:[%s3951 + $0x10] sm:$0xff]
        %v3955 = vld [vmem:[%s3951 + $0x18] sm:$0xff]
        %v3956 = vld [vmem:[%s3951 + $0x20] sm:$0xff]
        %v3957 = vld [vmem:[%s3951 + $0x28] sm:$0xff]
        %v3958 = vld [vmem:[%s3951 + $0x30] sm:$0xff]
        %v3959 = vld [vmem:[%s3951 + $0x38] sm:$0xff]
        %3968 = vrot.lane.b32.xlu0 %v3943, 32
        %v3969 = vpop.permute.xlu0 %3968
        %3970 = vrot.lane.b32.xlu0 %v3944, 32
        %v3971 = vpop.permute.xlu0 %3970
        %3972 = vrot.lane.b32.xlu0 %v3945, 32
        %v3973 = vpop.permute.xlu0 %3972
        %3974 = vrot.lane.b32.xlu0 %v3946, 32
        %v3975 = vpop.permute.xlu0 %3974
        %3976 = vrot.lane.b32.xlu0 %v3947, 32
        %v3977 = vpop.permute.xlu0 %3976
        %3978 = vrot.lane.b32.xlu0 %v3948, 32
        %v3979 = vpop.permute.xlu0 %3978
        %3980 = vrot.lane.b32.xlu0 %v3949, 32
        %v3981 = vpop.permute.xlu0 %3980
        %3982 = vrot.lane.b32.xlu0 %v3950, 32
        %v3983 = vpop.permute.xlu0 %3982
        %v3984 = vsel %vm735, %v3969, 0
        %v3986 = vsel %vm735, %v3971, 0
        %v3988 = vsel %vm735, %v3973, 0
        %v3990 = vsel %vm735, %v3975, 0
        %v3992 = vsel %vm735, %v3977, 0
        %v3994 = vsel %vm735, %v3979, 0
        %v3996 = vsel %vm735, %v3981, 0
        %v3998 = vsel %vm735, %v3983, 0
        %4000 = vmatprep.subr.mxu0 0.0
        %4001 = vmatpush1.msra.mxu0 0.0
        %4002 = vmatprep.subr.mxu0 0.0
        %4003 = vmatpush1.msra.mxu0 0.0
        %4004 = vmatprep.subr.mxu0 0.0
        %4005 = vmatpush1.msra.mxu0 0.0
        %4006 = vmatprep.subr.mxu0 0.0
        %4007 = vmatpush1.msra.mxu0 0.0
        %4008 = vmatprep.subr.mxu0 0.0
        %4009 = vmatpush1.msra.mxu0 0.0
        %4010 = vmatprep.subr.mxu0 0.0
        %4011 = vmatpush1.msra.mxu0 0.0
        %4012 = vmatprep.subr.mxu0 0.0
        %4013 = vmatpush1.msra.mxu0 0.0
        %4014 = vmatprep.subr.mxu0 0.0
        %4015 = vmatpush1.msra.mxu0 0.0
        %4016 = vmatprep.subr.mxu0 0.0
        %4017 = vmatpush1.msra.mxu0 0.0
        %4018 = vmatprep.subr.mxu0 0.0
        %4019 = vmatpush1.msra.mxu0 0.0
        %4020 = vmatprep.subr.mxu0 0.0
        %4021 = vmatpush1.msra.mxu0 0.0
        %4022 = vmatprep.subr.mxu0 0.0
        %4023 = vmatpush1.msra.mxu0 0.0
        %4024 = vmatprep.subr.mxu0 0.0
        %4025 = vmatpush1.msra.mxu0 %v1380
        %4026 = vmatprep.subr.mxu0 0.0
        %4027 = vmatpush1.msra.mxu0 %v1379
        %4028 = vmatprep.subr.mxu0 0.0
        %4029 = vmatpush1.msra.mxu0 %v1378
        %4030 = vmatprep.subr.mxu0 0.0
        %4031 = vmatpush1.msra.mxu0 %v1377
        %4032 = vmatprep.subr.mxu0 0.0
        %4033 = vmatpush2.msra.mxu0 0.0
        %4034 = vmatprep.subr.mxu0 0.0
        %4035 = vmatpush2.msra.mxu0 0.0
        %4036 = vmatprep.subr.mxu0 0.0
        %4037 = vmatpush2.msra.mxu0 0.0
        %4038 = vmatprep.subr.mxu0 0.0
        %4039 = vmatpush2.msra.mxu0 0.0
        %4040 = vmatprep.subr.mxu0 0.0
        %4041 = vmatpush2.msra.mxu0 0.0
        %4042 = vmatprep.subr.mxu0 0.0
        %4043 = vmatpush2.msra.mxu0 0.0
        %4044 = vmatprep.subr.mxu0 0.0
        %4045 = vmatpush2.msra.mxu0 0.0
        %4046 = vmatprep.subr.mxu0 0.0
        %4047 = vmatpush2.msra.mxu0 0.0
        %4048 = vmatprep.subr.mxu0 0.0
        %4049 = vmatpush2.msra.mxu0 0.0
        %4050 = vmatprep.subr.mxu0 0.0
        %4051 = vmatpush2.msra.mxu0 0.0
        %4052 = vmatprep.subr.mxu0 0.0
        %4053 = vmatpush2.msra.mxu0 0.0
        %4054 = vmatprep.subr.mxu0 0.0
        %4055 = vmatpush2.msra.mxu0 0.0
        %4056 = vmatprep.subr.mxu0 0.0
        %4057 = vmatpush2.msra.mxu0 0.0
        %4058 = vmatprep.subr.mxu0 0.0
        %4059 = vmatpush2.msra.mxu0 0.0
        %4060 = vmatprep.subr.mxu0 0.0
        %4061 = vmatpush2.msra.mxu0 0.0
        %4062 = vmatprep.subr.mxu0 0.0
        %4063 = vmatpush2.msra.mxu0 0.0
        %4064 = vmatprep.mubr.f32.mxu0 0.0
        %4065 = vmatmul.mubr.f32.gmra.mxu0 %v3984
        %v4066 = vpop.f32.mrf.mxu0
        %v4067 = vadd.f32 0.0, %v4066
        %v4068 = vpop.f32.mrf.mxu0
        %4069 = vmatprep.mubr.f32.mxu0 0.0
        %4070 = vmatmul.mubr.f32.gmra.mxu0 %v3986
        %v4071 = vpop.f32.mrf.mxu0
        %v4072 = vadd.f32 0.0, %v4071
        %v4073 = vpop.f32.mrf.mxu0
        %4074 = vmatprep.mubr.f32.mxu0 0.0
        %4075 = vmatmul.mubr.f32.gmra.mxu0 %v3988
        %v4076 = vpop.f32.mrf.mxu0
        %v4077 = vadd.f32 0.0, %v4076
        %v4078 = vpop.f32.mrf.mxu0
        %4079 = vmatprep.mubr.f32.mxu0 0.0
        %4080 = vmatmul.mubr.f32.gmra.mxu0 %v3990
        %v4081 = vpop.f32.mrf.mxu0
        %v4082 = vadd.f32 0.0, %v4081
        %v4083 = vpop.f32.mrf.mxu0
        %4084 = vmatprep.mubr.f32.mxu0 0.0
        %4085 = vmatmul.mubr.f32.gmra.mxu0 %v3992
        %v4086 = vpop.f32.mrf.mxu0
        %v4087 = vadd.f32 0.0, %v4086
        %v4088 = vpop.f32.mrf.mxu0
        %4089 = vmatprep.mubr.f32.mxu0 0.0
        %4090 = vmatmul.mubr.f32.gmra.mxu0 %v3994
        %v4091 = vpop.f32.mrf.mxu0
        %v4092 = vadd.f32 0.0, %v4091
        %v4093 = vpop.f32.mrf.mxu0
        %4094 = vmatprep.mubr.f32.mxu0 0.0
        %4095 = vmatmul.mubr.f32.gmra.mxu0 %v3996
        %v4096 = vpop.f32.mrf.mxu0
        %v4097 = vadd.f32 0.0, %v4096
        %v4098 = vpop.f32.mrf.mxu0
        %4099 = vmatprep.mubr.f32.mxu0 0.0
        %4100 = vmatmul.mubr.f32.gmra.mxu0 %v3998
        %v4101 = vpop.f32.mrf.mxu0
        %v4102 = vadd.f32 0.0, %v4101
        %v4103 = vpop.f32.mrf.mxu0
        %4104 = vdwg.mxu0
        %v4105 = vadd.f32 %v3952, %v4067
        %v4106 = vadd.f32 %v3953, %v4072
        %v4107 = vadd.f32 %v3954, %v4077
        %v4108 = vadd.f32 %v3955, %v4082
        %v4109 = vadd.f32 %v3956, %v4087
        %v4110 = vadd.f32 %v3957, %v4092
        %v4111 = vadd.f32 %v3958, %v4097
        %v4112 = vadd.f32 %v3959, %v4102
        %v4113 = vtanh.pop %v4105
        %v4114 = vtanh.pop %v4106
        %v4115 = vtanh.pop %v4107
        %v4116 = vtanh.pop %v4108
        %v4117 = vtanh.pop %v4109
        %v4118 = vtanh.pop %v4110
        %v4119 = vtanh.pop %v4111
        %v4120 = vtanh.pop %v4112
        %v4121 = vxor.u32 %v4105, 2147483648
        %v4122 = vxor.u32 %v4106, 2147483648
        %v4123 = vxor.u32 %v4107, 2147483648
        %v4124 = vxor.u32 %v4108, 2147483648
        %v4125 = vxor.u32 %v4109, 2147483648
        %v4126 = vxor.u32 %v4110, 2147483648
        %v4127 = vxor.u32 %v4111, 2147483648
        %v4128 = vxor.u32 %v4112, 2147483648
        %v4129 = vmul.f32 %v4121, 1.442695
        %v4130 = vpow.pop %v4129
        %v4131 = vmul.f32 %v4122, 1.442695
        %v4132 = vpow.pop %v4131
        %v4133 = vmul.f32 %v4123, 1.442695
        %v4134 = vpow.pop %v4133
        %v4135 = vmul.f32 %v4124, 1.442695
        %v4136 = vpow.pop %v4135
        %v4137 = vmul.f32 %v4125, 1.442695
        %v4138 = vpow.pop %v4137
        %v4139 = vmul.f32 %v4126, 1.442695
        %v4140 = vpow.pop %v4139
        %v4141 = vmul.f32 %v4127, 1.442695
        %v4142 = vpow.pop %v4141
        %v4143 = vmul.f32 %v4128, 1.442695
        %v4144 = vpow.pop %v4143
        %v4145 = vadd.f32 %v4130, 1.0
        %v4146 = vadd.f32 %v4132, 1.0
        %v4147 = vadd.f32 %v4134, 1.0
        %v4148 = vadd.f32 %v4136, 1.0
        %v4149 = vadd.f32 %v4138, 1.0
        %v4150 = vadd.f32 %v4140, 1.0
        %v4151 = vadd.f32 %v4142, 1.0
        %v4152 = vadd.f32 %v4144, 1.0
        %v4153 = vrcp.pop %v4145
        %v4154 = vmul.f32 1.0, %v4153
        %v4155 = vrcp.pop %v4146
        %v4156 = vmul.f32 1.0, %v4155
        %v4157 = vrcp.pop %v4147
        %v4158 = vmul.f32 1.0, %v4157
        %v4159 = vrcp.pop %v4148
        %v4160 = vmul.f32 1.0, %v4159
        %v4161 = vrcp.pop %v4149
        %v4162 = vmul.f32 1.0, %v4161
        %v4163 = vrcp.pop %v4150
        %v4164 = vmul.f32 1.0, %v4163
        %v4165 = vrcp.pop %v4151
        %v4166 = vmul.f32 1.0, %v4165
        %v4167 = vrcp.pop %v4152
        %v4168 = vmul.f32 1.0, %v4167
        %v4169 = vsel %vm1385, %v4113, %v4154
        %v4170 = vsel %vm1385, %v4114, %v4156
        %v4171 = vsel %vm1385, %v4115, %v4158
        %v4172 = vsel %vm1385, %v4116, %v4160
        %v4173 = vsel %vm1385, %v4117, %v4162
        %v4174 = vsel %vm1385, %v4118, %v4164
        %v4175 = vsel %vm1385, %v4119, %v4166
        %v4176 = vsel %vm1385, %v4120, %v4168
        %v4177 = vmul.f32 %v4169, %v3895
        %v4178 = vmul.f32 %v4170, %v3896
        %v4179 = vmul.f32 %v4171, %v3897
        %v4180 = vmul.f32 %v4172, %v3898
        %v4181 = vmul.f32 %v4173, %v3899
        %v4182 = vmul.f32 %v4174, %v3900
        %v4183 = vmul.f32 %v4175, %v3901
        %v4184 = vmul.f32 %v4176, %v3902
        %4193 = vrot.lane.b32.xlu0 %v4169, 64
        %v4194 = vpop.permute.xlu0 %4193
        %4195 = vrot.lane.b32.xlu0 %v4170, 64
        %v4196 = vpop.permute.xlu0 %4195
        %4197 = vrot.lane.b32.xlu0 %v4171, 64
        %v4198 = vpop.permute.xlu0 %4197
        %4199 = vrot.lane.b32.xlu0 %v4172, 64
        %v4200 = vpop.permute.xlu0 %4199
        %4201 = vrot.lane.b32.xlu0 %v4173, 64
        %v4202 = vpop.permute.xlu0 %4201
        %4203 = vrot.lane.b32.xlu0 %v4174, 64
        %v4204 = vpop.permute.xlu0 %4203
        %4205 = vrot.lane.b32.xlu0 %v4175, 64
        %v4206 = vpop.permute.xlu0 %4205
        %4207 = vrot.lane.b32.xlu0 %v4176, 64
        %v4208 = vpop.permute.xlu0 %4207
        %v4217 = vmul.f32 %v4169, %v4194
        %v4218 = vmul.f32 %v4170, %v4196
        %v4219 = vmul.f32 %v4171, %v4198
        %v4220 = vmul.f32 %v4172, %v4200
        %v4221 = vmul.f32 %v4173, %v4202
        %v4222 = vmul.f32 %v4174, %v4204
        %v4223 = vmul.f32 %v4175, %v4206
        %v4224 = vmul.f32 %v4176, %v4208
        %4233 = vrot.lane.b32.xlu0 %v4217, 32
        %v4234 = vpop.permute.xlu0 %4233
        %4235 = vrot.lane.b32.xlu0 %v4218, 32
        %v4236 = vpop.permute.xlu0 %4235
        %4237 = vrot.lane.b32.xlu0 %v4219, 32
        %v4238 = vpop.permute.xlu0 %4237
        %4239 = vrot.lane.b32.xlu0 %v4220, 32
        %v4240 = vpop.permute.xlu0 %4239
        %4241 = vrot.lane.b32.xlu0 %v4221, 32
        %v4242 = vpop.permute.xlu0 %4241
        %4243 = vrot.lane.b32.xlu0 %v4222, 32
        %v4244 = vpop.permute.xlu0 %4243
        %4245 = vrot.lane.b32.xlu0 %v4223, 32
        %v4246 = vpop.permute.xlu0 %4245
        %4247 = vrot.lane.b32.xlu0 %v4224, 32
        %v4248 = vpop.permute.xlu0 %4247
        %v4257 = vadd.f32 %v4177, %v4234
        %v4258 = vadd.f32 %v4178, %v4236
        %v4259 = vadd.f32 %v4179, %v4238
        %v4260 = vadd.f32 %v4180, %v4240
        %v4261 = vadd.f32 %v4181, %v4242
        %v4262 = vadd.f32 %v4182, %v4244
        %v4263 = vadd.f32 %v4183, %v4246
        %v4264 = vadd.f32 %v4184, %v4248
        %v4265 = vtanh.pop %v4257
        %v4266 = vtanh.pop %v4258
        %v4267 = vtanh.pop %v4259
        %v4268 = vtanh.pop %v4260
        %v4269 = vtanh.pop %v4261
        %v4270 = vtanh.pop %v4262
        %v4271 = vtanh.pop %v4263
        %v4272 = vtanh.pop %v4264
        %4281 = vrot.lane.b32.xlu0 %v4265, 64
        %v4282 = vpop.permute.xlu0 %4281
        %4283 = vrot.lane.b32.xlu0 %v4266, 64
        %v4284 = vpop.permute.xlu0 %4283
        %4285 = vrot.lane.b32.xlu0 %v4267, 64
        %v4286 = vpop.permute.xlu0 %4285
        %4287 = vrot.lane.b32.xlu0 %v4268, 64
        %v4288 = vpop.permute.xlu0 %4287
        %4289 = vrot.lane.b32.xlu0 %v4269, 64
        %v4290 = vpop.permute.xlu0 %4289
        %4291 = vrot.lane.b32.xlu0 %v4270, 64
        %v4292 = vpop.permute.xlu0 %4291
        %4293 = vrot.lane.b32.xlu0 %v4271, 64
        %v4294 = vpop.permute.xlu0 %4293
        %4295 = vrot.lane.b32.xlu0 %v4272, 64
        %v4296 = vpop.permute.xlu0 %4295
        %v4305 = vmul.f32 %v4169, %v4282
        %v4306 = vmul.f32 %v4170, %v4284
        %v4307 = vmul.f32 %v4171, %v4286
        %v4308 = vmul.f32 %v4172, %v4288
        %v4309 = vmul.f32 %v4173, %v4290
        %v4310 = vmul.f32 %v4174, %v4292
        %v4311 = vmul.f32 %v4175, %v4294
        %v4312 = vmul.f32 %v4176, %v4296
        %4321 = vrot.lane.b32.xlu0 %v4305, 32
        %v4322 = vpop.permute.xlu0 %4321
        %4323 = vrot.lane.b32.xlu0 %v4306, 32
        %v4324 = vpop.permute.xlu0 %4323
        %4325 = vrot.lane.b32.xlu0 %v4307, 32
        %v4326 = vpop.permute.xlu0 %4325
        %4327 = vrot.lane.b32.xlu0 %v4308, 32
        %v4328 = vpop.permute.xlu0 %4327
        %4329 = vrot.lane.b32.xlu0 %v4309, 32
        %v4330 = vpop.permute.xlu0 %4329
        %4331 = vrot.lane.b32.xlu0 %v4310, 32
        %v4332 = vpop.permute.xlu0 %4331
        %4333 = vrot.lane.b32.xlu0 %v4311, 32
        %v4334 = vpop.permute.xlu0 %4333
        %4335 = vrot.lane.b32.xlu0 %v4312, 32
        %v4336 = vpop.permute.xlu0 %4335
        %4345 = vst.msk [vmem:[#allocation2] sm:$0xff] %vm735, %v4322
        %4346 = vst.msk [vmem:[#allocation2 + $0x8] sm:$0xff] %vm735, %v4324
        %4347 = vst.msk [vmem:[#allocation2 + $0x10] sm:$0xff] %vm735, %v4326
        %4348 = vst.msk [vmem:[#allocation2 + $0x18] sm:$0xff] %vm735, %v4328
        %4349 = vst.msk [vmem:[#allocation2 + $0x20] sm:$0xff] %vm735, %v4330
        %4350 = vst.msk [vmem:[#allocation2 + $0x28] sm:$0xff] %vm735, %v4332
        %4351 = vst.msk [vmem:[#allocation2 + $0x30] sm:$0xff] %vm735, %v4334
        %4352 = vst.msk [vmem:[#allocation2 + $0x38] sm:$0xff] %vm735, %v4336
        %4361 = vrot.lane.b32.xlu0 %v4257, 96
        %v4362 = vpop.permute.xlu0 %4361
        %4363 = vrot.lane.b32.xlu0 %v4258, 96
        %v4364 = vpop.permute.xlu0 %4363
        %4365 = vrot.lane.b32.xlu0 %v4259, 96
        %v4366 = vpop.permute.xlu0 %4365
        %4367 = vrot.lane.b32.xlu0 %v4260, 96
        %v4368 = vpop.permute.xlu0 %4367
        %4369 = vrot.lane.b32.xlu0 %v4261, 96
        %v4370 = vpop.permute.xlu0 %4369
        %4371 = vrot.lane.b32.xlu0 %v4262, 96
        %v4372 = vpop.permute.xlu0 %4371
        %4373 = vrot.lane.b32.xlu0 %v4263, 96
        %v4374 = vpop.permute.xlu0 %4373
        %4375 = vrot.lane.b32.xlu0 %v4264, 96
        %v4376 = vpop.permute.xlu0 %4375
        %4385 = vst.msk [vmem:[#allocation3] sm:$0xff] %vm735, %v4362
        %4386 = vst.msk [vmem:[#allocation3 + $0x8] sm:$0xff] %vm735, %v4364
        %4387 = vst.msk [vmem:[#allocation3 + $0x10] sm:$0xff] %vm735, %v4366
        %4388 = vst.msk [vmem:[#allocation3 + $0x18] sm:$0xff] %vm735, %v4368
        %4389 = vst.msk [vmem:[#allocation3 + $0x20] sm:$0xff] %vm735, %v4370
        %4390 = vst.msk [vmem:[#allocation3 + $0x28] sm:$0xff] %vm735, %v4372
        %4391 = vst.msk [vmem:[#allocation3 + $0x30] sm:$0xff] %vm735, %v4374
        %4392 = vst.msk [vmem:[#allocation3 + $0x38] sm:$0xff] %vm735, %v4376
        // Predicated region
        $region99: #{tpu_custom_call.1} parent=89 // pred_check
          %p4393 = pneg %p639
        $region100: #{tpu_custom_call.1} parent=89 // pred_check_branch
          %4395 = sbr.rel (%p4393) target = $region102
        $region101: #{tpu_custom_call.1} parent=89 // pred_region
          %s4396 = scalar_lea.vmem %s603, 448 [#allocation5]
          %v4397 = vld [vmem:[%s4396] sm:$0xff]
          %v4398 = vld [vmem:[%s4396 + $0x8] sm:$0xff]
          %v4399 = vld [vmem:[%s4396 + $0x10] sm:$0xff]
          %v4400 = vld [vmem:[%s4396 + $0x18] sm:$0xff]
          %v4401 = vld [vmem:[%s4396 + $0x20] sm:$0xff]
          %v4402 = vld [vmem:[%s4396 + $0x28] sm:$0xff]
          %v4403 = vld [vmem:[%s4396 + $0x30] sm:$0xff]
          %v4404 = vld [vmem:[%s4396 + $0x38] sm:$0xff]
          %v4405 = vld [vmem:[%s4] sm:$0xff]
          %v4406 = vld [vmem:[%s4 + $0x8] sm:$0xff]
          %v4407 = vld [vmem:[%s4 + $0x10] sm:$0xff]
          %v4408 = vld [vmem:[%s4 + $0x18] sm:$0xff]
          %v4409 = vld [vmem:[%s5] sm:$0x1]
          %v4411 = vlaneseq
          %v4412 = vshrl.u32 %v4411, 7
          %v4413 = vsub.s32 0, %v4412
          %v4414 = vrot.slane %v4409, %v4413
          %v4417 = vsel %vm735, %v4397, 0
          %v4420 = vsel %vm735, %v4398, 0
          %v4423 = vsel %vm735, %v4399, 0
          %v4426 = vsel %vm735, %v4400, 0
          %v4429 = vsel %vm735, %v4401, 0
          %v4432 = vsel %vm735, %v4402, 0
          %v4435 = vsel %vm735, %v4403, 0
          %v4438 = vsel %vm735, %v4404, 0
          %4440 = vmatprep.subr.mxu0 0.0
          %4441 = vmatpush1.msra.mxu0 0.0
          %4442 = vmatprep.subr.mxu0 0.0
          %4443 = vmatpush1.msra.mxu0 0.0
          %4444 = vmatprep.subr.mxu0 0.0
          %4445 = vmatpush1.msra.mxu0 0.0
          %4446 = vmatprep.subr.mxu0 0.0
          %4447 = vmatpush1.msra.mxu0 0.0
          %4448 = vmatprep.subr.mxu0 0.0
          %4449 = vmatpush1.msra.mxu0 0.0
          %4450 = vmatprep.subr.mxu0 0.0
          %4451 = vmatpush1.msra.mxu0 0.0
          %4452 = vmatprep.subr.mxu0 0.0
          %4453 = vmatpush1.msra.mxu0 0.0
          %4454 = vmatprep.subr.mxu0 0.0
          %4455 = vmatpush1.msra.mxu0 0.0
          %4456 = vmatprep.subr.mxu0 0.0
          %4457 = vmatpush1.msra.mxu0 0.0
          %4458 = vmatprep.subr.mxu0 0.0
          %4459 = vmatpush1.msra.mxu0 0.0
          %4460 = vmatprep.subr.mxu0 0.0
          %4461 = vmatpush1.msra.mxu0 0.0
          %4462 = vmatprep.subr.mxu0 0.0
          %4463 = vmatpush1.msra.mxu0 0.0
          %4464 = vmatprep.subr.mxu0 0.0
          %4465 = vmatpush1.msra.mxu0 %v4408
          %4466 = vmatprep.subr.mxu0 0.0
          %4467 = vmatpush1.msra.mxu0 %v4407
          %4468 = vmatprep.subr.mxu0 0.0
          %4469 = vmatpush1.msra.mxu0 %v4406
          %4470 = vmatprep.subr.mxu0 0.0
          %4471 = vmatpush1.msra.mxu0 %v4405
          %4472 = vmatprep.subr.mxu0 0.0
          %4473 = vmatpush2.msra.mxu0 0.0
          %4474 = vmatprep.subr.mxu0 0.0
          %4475 = vmatpush2.msra.mxu0 0.0
          %4476 = vmatprep.subr.mxu0 0.0
          %4477 = vmatpush2.msra.mxu0 0.0
          %4478 = vmatprep.subr.mxu0 0.0
          %4479 = vmatpush2.msra.mxu0 0.0
          %4480 = vmatprep.subr.mxu0 0.0
          %4481 = vmatpush2.msra.mxu0 0.0
          %4482 = vmatprep.subr.mxu0 0.0
          %4483 = vmatpush2.msra.mxu0 0.0
          %4484 = vmatprep.subr.mxu0 0.0
          %4485 = vmatpush2.msra.mxu0 0.0
          %4486 = vmatprep.subr.mxu0 0.0
          %4487 = vmatpush2.msra.mxu0 0.0
          %4488 = vmatprep.subr.mxu0 0.0
          %4489 = vmatpush2.msra.mxu0 0.0
          %4490 = vmatprep.subr.mxu0 0.0
          %4491 = vmatpush2.msra.mxu0 0.0
          %4492 = vmatprep.subr.mxu0 0.0
          %4493 = vmatpush2.msra.mxu0 0.0
          %4494 = vmatprep.subr.mxu0 0.0
          %4495 = vmatpush2.msra.mxu0 0.0
          %4496 = vmatprep.subr.mxu0 0.0
          %4497 = vmatpush2.msra.mxu0 0.0
          %4498 = vmatprep.subr.mxu0 0.0
          %4499 = vmatpush2.msra.mxu0 0.0
          %4500 = vmatprep.subr.mxu0 0.0
          %4501 = vmatpush2.msra.mxu0 0.0
          %4502 = vmatprep.subr.mxu0 0.0
          %4503 = vmatpush2.msra.mxu0 0.0
          %4504 = vmatprep.mubr.f32.mxu0 0.0
          %4505 = vmatmul.mubr.f32.gmra.mxu0 %v4417
          %v4506 = vpop.f32.mrf.mxu0
          %v4507 = vadd.f32 %v4414, %v4506
          %v4508 = vpop.f32.mrf.mxu0
          %4509 = vmatprep.mubr.f32.mxu0 0.0
          %4510 = vmatmul.mubr.f32.gmra.mxu0 %v4420
          %v4511 = vpop.f32.mrf.mxu0
          %v4512 = vadd.f32 %v4414, %v4511
          %v4513 = vpop.f32.mrf.mxu0
          %4514 = vmatprep.mubr.f32.mxu0 0.0
          %4515 = vmatmul.mubr.f32.gmra.mxu0 %v4423
          %v4516 = vpop.f32.mrf.mxu0
          %v4517 = vadd.f32 %v4414, %v4516
          %v4518 = vpop.f32.mrf.mxu0
          %4519 = vmatprep.mubr.f32.mxu0 0.0
          %4520 = vmatmul.mubr.f32.gmra.mxu0 %v4426
          %v4521 = vpop.f32.mrf.mxu0
          %v4522 = vadd.f32 %v4414, %v4521
          %v4523 = vpop.f32.mrf.mxu0
          %4524 = vmatprep.mubr.f32.mxu0 0.0
          %4525 = vmatmul.mubr.f32.gmra.mxu0 %v4429
          %v4526 = vpop.f32.mrf.mxu0
          %v4527 = vadd.f32 %v4414, %v4526
          %v4528 = vpop.f32.mrf.mxu0
          %4529 = vmatprep.mubr.f32.mxu0 0.0
          %4530 = vmatmul.mubr.f32.gmra.mxu0 %v4432
          %v4531 = vpop.f32.mrf.mxu0
          %v4532 = vadd.f32 %v4414, %v4531
          %v4533 = vpop.f32.mrf.mxu0
          %4534 = vmatprep.mubr.f32.mxu0 0.0
          %4535 = vmatmul.mubr.f32.gmra.mxu0 %v4435
          %v4536 = vpop.f32.mrf.mxu0
          %v4537 = vadd.f32 %v4414, %v4536
          %v4538 = vpop.f32.mrf.mxu0
          %4539 = vmatprep.mubr.f32.mxu0 0.0
          %4540 = vmatmul.mubr.f32.gmra.mxu0 %v4438
          %v4541 = vpop.f32.mrf.mxu0
          %v4542 = vadd.f32 %v4414, %v4541
          %v4543 = vpop.f32.mrf.mxu0
          %4544 = vdwg.mxu0
          %v4545 = vtanh.pop %v4507
          %v4546 = vtanh.pop %v4512
          %v4547 = vtanh.pop %v4517
          %v4548 = vtanh.pop %v4522
          %v4549 = vtanh.pop %v4527
          %v4550 = vtanh.pop %v4532
          %v4551 = vtanh.pop %v4537
          %v4552 = vtanh.pop %v4542
          %v4553 = vxor.u32 %v4507, 2147483648
          %v4554 = vxor.u32 %v4512, 2147483648
          %v4555 = vxor.u32 %v4517, 2147483648
          %v4556 = vxor.u32 %v4522, 2147483648
          %v4557 = vxor.u32 %v4527, 2147483648
          %v4558 = vxor.u32 %v4532, 2147483648
          %v4559 = vxor.u32 %v4537, 2147483648
          %v4560 = vxor.u32 %v4542, 2147483648
          %v4561 = vmul.f32 %v4553, 1.442695
          %v4562 = vpow.pop %v4561
          %v4563 = vmul.f32 %v4554, 1.442695
          %v4564 = vpow.pop %v4563
          %v4565 = vmul.f32 %v4555, 1.442695
          %v4566 = vpow.pop %v4565
          %v4567 = vmul.f32 %v4556, 1.442695
          %v4568 = vpow.pop %v4567
          %v4569 = vmul.f32 %v4557, 1.442695
          %v4570 = vpow.pop %v4569
          %v4571 = vmul.f32 %v4558, 1.442695
          %v4572 = vpow.pop %v4571
          %v4573 = vmul.f32 %v4559, 1.442695
          %v4574 = vpow.pop %v4573
          %v4575 = vmul.f32 %v4560, 1.442695
          %v4576 = vpow.pop %v4575
          %v4577 = vadd.f32 %v4562, 1.0
          %v4578 = vadd.f32 %v4564, 1.0
          %v4579 = vadd.f32 %v4566, 1.0
          %v4580 = vadd.f32 %v4568, 1.0
          %v4581 = vadd.f32 %v4570, 1.0
          %v4582 = vadd.f32 %v4572, 1.0
          %v4583 = vadd.f32 %v4574, 1.0
          %v4584 = vadd.f32 %v4576, 1.0
          %v4585 = vrcp.pop %v4577
          %v4586 = vmul.f32 1.0, %v4585
          %v4587 = vrcp.pop %v4578
          %v4588 = vmul.f32 1.0, %v4587
          %v4589 = vrcp.pop %v4579
          %v4590 = vmul.f32 1.0, %v4589
          %v4591 = vrcp.pop %v4580
          %v4592 = vmul.f32 1.0, %v4591
          %v4593 = vrcp.pop %v4581
          %v4594 = vmul.f32 1.0, %v4593
          %v4595 = vrcp.pop %v4582
          %v4596 = vmul.f32 1.0, %v4595
          %v4597 = vrcp.pop %v4583
          %v4598 = vmul.f32 1.0, %v4597
          %v4599 = vrcp.pop %v4584
          %v4600 = vmul.f32 1.0, %v4599
          %v4601 = vsel %vm1385, %v4545, %v4586
          %v4602 = vsel %vm1385, %v4546, %v4588
          %v4603 = vsel %vm1385, %v4547, %v4590
          %v4604 = vsel %vm1385, %v4548, %v4592
          %v4605 = vsel %vm1385, %v4549, %v4594
          %v4606 = vsel %vm1385, %v4550, %v4596
          %v4607 = vsel %vm1385, %v4551, %v4598
          %v4608 = vsel %vm1385, %v4552, %v4600
          %4617 = vrot.lane.b32.xlu0 %v4601, 64
          %v4618 = vpop.permute.xlu0 %4617
          %4619 = vrot.lane.b32.xlu0 %v4602, 64
          %v4620 = vpop.permute.xlu0 %4619
          %4621 = vrot.lane.b32.xlu0 %v4603, 64
          %v4622 = vpop.permute.xlu0 %4621
          %4623 = vrot.lane.b32.xlu0 %v4604, 64
          %v4624 = vpop.permute.xlu0 %4623
          %4625 = vrot.lane.b32.xlu0 %v4605, 64
          %v4626 = vpop.permute.xlu0 %4625
          %4627 = vrot.lane.b32.xlu0 %v4606, 64
          %v4628 = vpop.permute.xlu0 %4627
          %4629 = vrot.lane.b32.xlu0 %v4607, 64
          %v4630 = vpop.permute.xlu0 %4629
          %4631 = vrot.lane.b32.xlu0 %v4608, 64
          %v4632 = vpop.permute.xlu0 %4631
          %v4641 = vmul.f32 %v4601, %v4618
          %v4642 = vmul.f32 %v4602, %v4620
          %v4643 = vmul.f32 %v4603, %v4622
          %v4644 = vmul.f32 %v4604, %v4624
          %v4645 = vmul.f32 %v4605, %v4626
          %v4646 = vmul.f32 %v4606, %v4628
          %v4647 = vmul.f32 %v4607, %v4630
          %v4648 = vmul.f32 %v4608, %v4632
          %v4649 = vtanh.pop %v4641
          %v4650 = vtanh.pop %v4642
          %v4651 = vtanh.pop %v4643
          %v4652 = vtanh.pop %v4644
          %v4653 = vtanh.pop %v4645
          %v4654 = vtanh.pop %v4646
          %v4655 = vtanh.pop %v4647
          %v4656 = vtanh.pop %v4648
          %4665 = vrot.lane.b32.xlu0 %v4649, 96
          %v4666 = vpop.permute.xlu0 %4665
          %4667 = vrot.lane.b32.xlu0 %v4650, 96
          %v4668 = vpop.permute.xlu0 %4667
          %4669 = vrot.lane.b32.xlu0 %v4651, 96
          %v4670 = vpop.permute.xlu0 %4669
          %4671 = vrot.lane.b32.xlu0 %v4652, 96
          %v4672 = vpop.permute.xlu0 %4671
          %4673 = vrot.lane.b32.xlu0 %v4653, 96
          %v4674 = vpop.permute.xlu0 %4673
          %4675 = vrot.lane.b32.xlu0 %v4654, 96
          %v4676 = vpop.permute.xlu0 %4675
          %4677 = vrot.lane.b32.xlu0 %v4655, 96
          %v4678 = vpop.permute.xlu0 %4677
          %4679 = vrot.lane.b32.xlu0 %v4656, 96
          %v4680 = vpop.permute.xlu0 %4679
          %v4689 = vmul.f32 %v4601, %v4666
          %v4690 = vmul.f32 %v4602, %v4668
          %v4691 = vmul.f32 %v4603, %v4670
          %v4692 = vmul.f32 %v4604, %v4672
          %v4693 = vmul.f32 %v4605, %v4674
          %v4694 = vmul.f32 %v4606, %v4676
          %v4695 = vmul.f32 %v4607, %v4678
          %v4696 = vmul.f32 %v4608, %v4680
          %v4697 = vld [vmem:[%s6] sm:$0xff]
          %v4698 = vld [vmem:[%s6 + $0x8] sm:$0xff]
          %v4699 = vld [vmem:[%s6 + $0x10] sm:$0xff]
          %v4700 = vld [vmem:[%s6 + $0x18] sm:$0xff]
          %v4701 = vld [vmem:[%s7] sm:$0xff]
          %v4702 = vld [vmem:[%s7 + $0x8] sm:$0xff]
          %v4703 = vld [vmem:[%s7 + $0x10] sm:$0xff]
          %v4704 = vld [vmem:[%s7 + $0x18] sm:$0xff]
          %4713 = vrot.lane.b32.xlu0 %v4689, 32
          %v4714 = vpop.permute.xlu0 %4713
          %4715 = vrot.lane.b32.xlu0 %v4690, 32
          %v4716 = vpop.permute.xlu0 %4715
          %4717 = vrot.lane.b32.xlu0 %v4691, 32
          %v4718 = vpop.permute.xlu0 %4717
          %4719 = vrot.lane.b32.xlu0 %v4692, 32
          %v4720 = vpop.permute.xlu0 %4719
          %4721 = vrot.lane.b32.xlu0 %v4693, 32
          %v4722 = vpop.permute.xlu0 %4721
          %4723 = vrot.lane.b32.xlu0 %v4694, 32
          %v4724 = vpop.permute.xlu0 %4723
          %4725 = vrot.lane.b32.xlu0 %v4695, 32
          %v4726 = vpop.permute.xlu0 %4725
          %4727 = vrot.lane.b32.xlu0 %v4696, 32
          %v4728 = vpop.permute.xlu0 %4727
          %v4729 = vsel %vm735, %v4714, 0
          %v4731 = vsel %vm735, %v4716, 0
          %v4733 = vsel %vm735, %v4718, 0
          %v4735 = vsel %vm735, %v4720, 0
          %v4737 = vsel %vm735, %v4722, 0
          %v4739 = vsel %vm735, %v4724, 0
          %v4741 = vsel %vm735, %v4726, 0
          %v4743 = vsel %vm735, %v4728, 0
          %4745 = vmatprep.subr.mxu0 0.0
          %4746 = vmatpush1.msra.mxu0 0.0
          %4747 = vmatprep.subr.mxu0 0.0
          %4748 = vmatpush1.msra.mxu0 0.0
          %4749 = vmatprep.subr.mxu0 0.0
          %4750 = vmatpush1.msra.mxu0 0.0
          %4751 = vmatprep.subr.mxu0 0.0
          %4752 = vmatpush1.msra.mxu0 0.0
          %4753 = vmatprep.subr.mxu0 0.0
          %4754 = vmatpush1.msra.mxu0 0.0
          %4755 = vmatprep.subr.mxu0 0.0
          %4756 = vmatpush1.msra.mxu0 0.0
          %4757 = vmatprep.subr.mxu0 0.0
          %4758 = vmatpush1.msra.mxu0 0.0
          %4759 = vmatprep.subr.mxu0 0.0
          %4760 = vmatpush1.msra.mxu0 0.0
          %4761 = vmatprep.subr.mxu0 0.0
          %4762 = vmatpush1.msra.mxu0 0.0
          %4763 = vmatprep.subr.mxu0 0.0
          %4764 = vmatpush1.msra.mxu0 0.0
          %4765 = vmatprep.subr.mxu0 0.0
          %4766 = vmatpush1.msra.mxu0 0.0
          %4767 = vmatprep.subr.mxu0 0.0
          %4768 = vmatpush1.msra.mxu0 0.0
          %4769 = vmatprep.subr.mxu0 0.0
          %4770 = vmatpush1.msra.mxu0 %v4704
          %4771 = vmatprep.subr.mxu0 0.0
          %4772 = vmatpush1.msra.mxu0 %v4703
          %4773 = vmatprep.subr.mxu0 0.0
          %4774 = vmatpush1.msra.mxu0 %v4702
          %4775 = vmatprep.subr.mxu0 0.0
          %4776 = vmatpush1.msra.mxu0 %v4701
          %4777 = vmatprep.subr.mxu0 0.0
          %4778 = vmatpush2.msra.mxu0 0.0
          %4779 = vmatprep.subr.mxu0 0.0
          %4780 = vmatpush2.msra.mxu0 0.0
          %4781 = vmatprep.subr.mxu0 0.0
          %4782 = vmatpush2.msra.mxu0 0.0
          %4783 = vmatprep.subr.mxu0 0.0
          %4784 = vmatpush2.msra.mxu0 0.0
          %4785 = vmatprep.subr.mxu0 0.0
          %4786 = vmatpush2.msra.mxu0 0.0
          %4787 = vmatprep.subr.mxu0 0.0
          %4788 = vmatpush2.msra.mxu0 0.0
          %4789 = vmatprep.subr.mxu0 0.0
          %4790 = vmatpush2.msra.mxu0 0.0
          %4791 = vmatprep.subr.mxu0 0.0
          %4792 = vmatpush2.msra.mxu0 0.0
          %4793 = vmatprep.subr.mxu0 0.0
          %4794 = vmatpush2.msra.mxu0 0.0
          %4795 = vmatprep.subr.mxu0 0.0
          %4796 = vmatpush2.msra.mxu0 0.0
          %4797 = vmatprep.subr.mxu0 0.0
          %4798 = vmatpush2.msra.mxu0 0.0
          %4799 = vmatprep.subr.mxu0 0.0
          %4800 = vmatpush2.msra.mxu0 0.0
          %4801 = vmatprep.subr.mxu0 0.0
          %4802 = vmatpush2.msra.mxu0 0.0
          %4803 = vmatprep.subr.mxu0 0.0
          %4804 = vmatpush2.msra.mxu0 0.0
          %4805 = vmatprep.subr.mxu0 0.0
          %4806 = vmatpush2.msra.mxu0 0.0
          %4807 = vmatprep.subr.mxu0 0.0
          %4808 = vmatpush2.msra.mxu0 0.0
          %4809 = vmatprep.mubr.f32.mxu0 0.0
          %4810 = vmatmul.mubr.f32.gmra.mxu0 %v4729
          %v4811 = vpop.f32.mrf.mxu0
          %v4812 = vadd.f32 0.0, %v4811
          %v4813 = vpop.f32.mrf.mxu0
          %4814 = vmatprep.mubr.f32.mxu0 0.0
          %4815 = vmatmul.mubr.f32.gmra.mxu0 %v4731
          %v4816 = vpop.f32.mrf.mxu0
          %v4817 = vadd.f32 0.0, %v4816
          %v4818 = vpop.f32.mrf.mxu0
          %4819 = vmatprep.mubr.f32.mxu0 0.0
          %4820 = vmatmul.mubr.f32.gmra.mxu0 %v4733
          %v4821 = vpop.f32.mrf.mxu0
          %v4822 = vadd.f32 0.0, %v4821
          %v4823 = vpop.f32.mrf.mxu0
          %4824 = vmatprep.mubr.f32.mxu0 0.0
          %4825 = vmatmul.mubr.f32.gmra.mxu0 %v4735
          %v4826 = vpop.f32.mrf.mxu0
          %v4827 = vadd.f32 0.0, %v4826
          %v4828 = vpop.f32.mrf.mxu0
          %4829 = vmatprep.mubr.f32.mxu0 0.0
          %4830 = vmatmul.mubr.f32.gmra.mxu0 %v4737
          %v4831 = vpop.f32.mrf.mxu0
          %v4832 = vadd.f32 0.0, %v4831
          %v4833 = vpop.f32.mrf.mxu0
          %4834 = vmatprep.mubr.f32.mxu0 0.0
          %4835 = vmatmul.mubr.f32.gmra.mxu0 %v4739
          %v4836 = vpop.f32.mrf.mxu0
          %v4837 = vadd.f32 0.0, %v4836
          %v4838 = vpop.f32.mrf.mxu0
          %4839 = vmatprep.mubr.f32.mxu0 0.0
          %4840 = vmatmul.mubr.f32.gmra.mxu0 %v4741
          %v4841 = vpop.f32.mrf.mxu0
          %v4842 = vadd.f32 0.0, %v4841
          %v4843 = vpop.f32.mrf.mxu0
          %4844 = vmatprep.mubr.f32.mxu0 0.0
          %4845 = vmatmul.mubr.f32.gmra.mxu0 %v4743
          %v4846 = vpop.f32.mrf.mxu0
          %v4847 = vadd.f32 0.0, %v4846
          %v4848 = vpop.f32.mrf.mxu0
          %4849 = vdwg.mxu0
          %v4850 = vsel %vm735, %v4322, 0
          %v4852 = vsel %vm735, %v4324, 0
          %v4854 = vsel %vm735, %v4326, 0
          %v4856 = vsel %vm735, %v4328, 0
          %v4858 = vsel %vm735, %v4330, 0
          %v4860 = vsel %vm735, %v4332, 0
          %v4862 = vsel %vm735, %v4334, 0
          %v4864 = vsel %vm735, %v4336, 0
          %4866 = vmatprep.subr.mxu0 0.0
          %4867 = vmatpush1.msra.mxu0 0.0
          %4868 = vmatprep.subr.mxu0 0.0
          %4869 = vmatpush1.msra.mxu0 0.0
          %4870 = vmatprep.subr.mxu0 0.0
          %4871 = vmatpush1.msra.mxu0 0.0
          %4872 = vmatprep.subr.mxu0 0.0
          %4873 = vmatpush1.msra.mxu0 0.0
          %4874 = vmatprep.subr.mxu0 0.0
          %4875 = vmatpush1.msra.mxu0 0.0
          %4876 = vmatprep.subr.mxu0 0.0
          %4877 = vmatpush1.msra.mxu0 0.0
          %4878 = vmatprep.subr.mxu0 0.0
          %4879 = vmatpush1.msra.mxu0 0.0
          %4880 = vmatprep.subr.mxu0 0.0
          %4881 = vmatpush1.msra.mxu0 0.0
          %4882 = vmatprep.subr.mxu0 0.0
          %4883 = vmatpush1.msra.mxu0 0.0
          %4884 = vmatprep.subr.mxu0 0.0
          %4885 = vmatpush1.msra.mxu0 0.0
          %4886 = vmatprep.subr.mxu0 0.0
          %4887 = vmatpush1.msra.mxu0 0.0
          %4888 = vmatprep.subr.mxu0 0.0
          %4889 = vmatpush1.msra.mxu0 0.0
          %4890 = vmatprep.subr.mxu0 0.0
          %4891 = vmatpush1.msra.mxu0 %v4700
          %4892 = vmatprep.subr.mxu0 0.0
          %4893 = vmatpush1.msra.mxu0 %v4699
          %4894 = vmatprep.subr.mxu0 0.0
          %4895 = vmatpush1.msra.mxu0 %v4698
          %4896 = vmatprep.subr.mxu0 0.0
          %4897 = vmatpush1.msra.mxu0 %v4697
          %4898 = vmatprep.subr.mxu0 0.0
          %4899 = vmatpush2.msra.mxu0 0.0
          %4900 = vmatprep.subr.mxu0 0.0
          %4901 = vmatpush2.msra.mxu0 0.0
          %4902 = vmatprep.subr.mxu0 0.0
          %4903 = vmatpush2.msra.mxu0 0.0
          %4904 = vmatprep.subr.mxu0 0.0
          %4905 = vmatpush2.msra.mxu0 0.0
          %4906 = vmatprep.subr.mxu0 0.0
          %4907 = vmatpush2.msra.mxu0 0.0
          %4908 = vmatprep.subr.mxu0 0.0
          %4909 = vmatpush2.msra.mxu0 0.0
          %4910 = vmatprep.subr.mxu0 0.0
          %4911 = vmatpush2.msra.mxu0 0.0
          %4912 = vmatprep.subr.mxu0 0.0
          %4913 = vmatpush2.msra.mxu0 0.0
          %4914 = vmatprep.subr.mxu0 0.0
          %4915 = vmatpush2.msra.mxu0 0.0
          %4916 = vmatprep.subr.mxu0 0.0
          %4917 = vmatpush2.msra.mxu0 0.0
          %4918 = vmatprep.subr.mxu0 0.0
          %4919 = vmatpush2.msra.mxu0 0.0
          %4920 = vmatprep.subr.mxu0 0.0
          %4921 = vmatpush2.msra.mxu0 0.0
          %4922 = vmatprep.subr.mxu0 0.0
          %4923 = vmatpush2.msra.mxu0 0.0
          %4924 = vmatprep.subr.mxu0 0.0
          %4925 = vmatpush2.msra.mxu0 0.0
          %4926 = vmatprep.subr.mxu0 0.0
          %4927 = vmatpush2.msra.mxu0 0.0
          %4928 = vmatprep.subr.mxu0 0.0
          %4929 = vmatpush2.msra.mxu0 0.0
          %4930 = vmatprep.mubr.f32.mxu0 0.0
          %4931 = vmatmul.mubr.f32.gmra.mxu0 %v4850
          %v4932 = vpop.f32.mrf.mxu0
          %v4933 = vadd.f32 %v4812, %v4932
          %v4934 = vpop.f32.mrf.mxu0
          %4935 = vmatprep.mubr.f32.mxu0 0.0
          %4936 = vmatmul.mubr.f32.gmra.mxu0 %v4852
          %v4937 = vpop.f32.mrf.mxu0
          %v4938 = vadd.f32 %v4817, %v4937
          %v4939 = vpop.f32.mrf.mxu0
          %4940 = vmatprep.mubr.f32.mxu0 0.0
          %4941 = vmatmul.mubr.f32.gmra.mxu0 %v4854
          %v4942 = vpop.f32.mrf.mxu0
          %v4943 = vadd.f32 %v4822, %v4942
          %v4944 = vpop.f32.mrf.mxu0
          %4945 = vmatprep.mubr.f32.mxu0 0.0
          %4946 = vmatmul.mubr.f32.gmra.mxu0 %v4856
          %v4947 = vpop.f32.mrf.mxu0
          %v4948 = vadd.f32 %v4827, %v4947
          %v4949 = vpop.f32.mrf.mxu0
          %4950 = vmatprep.mubr.f32.mxu0 0.0
          %4951 = vmatmul.mubr.f32.gmra.mxu0 %v4858
          %v4952 = vpop.f32.mrf.mxu0
          %v4953 = vadd.f32 %v4832, %v4952
          %v4954 = vpop.f32.mrf.mxu0
          %4955 = vmatprep.mubr.f32.mxu0 0.0
          %4956 = vmatmul.mubr.f32.gmra.mxu0 %v4860
          %v4957 = vpop.f32.mrf.mxu0
          %v4958 = vadd.f32 %v4837, %v4957
          %v4959 = vpop.f32.mrf.mxu0
          %4960 = vmatprep.mubr.f32.mxu0 0.0
          %4961 = vmatmul.mubr.f32.gmra.mxu0 %v4862
          %v4962 = vpop.f32.mrf.mxu0
          %v4963 = vadd.f32 %v4842, %v4962
          %v4964 = vpop.f32.mrf.mxu0
          %4965 = vmatprep.mubr.f32.mxu0 0.0
          %4966 = vmatmul.mubr.f32.gmra.mxu0 %v4864
          %v4967 = vpop.f32.mrf.mxu0
          %v4968 = vadd.f32 %v4847, %v4967
          %v4969 = vpop.f32.mrf.mxu0
          %4970 = vdwg.mxu0
          %v4971 = vld [vmem:[%s8] sm:$0x1]
          %v4973 = vlaneseq
          %v4974 = vshrl.u32 %v4973, 7
          %v4975 = vsub.s32 0, %v4974
          %v4976 = vrot.slane %v4971, %v4975
          %v4978 = vadd.f32 %v4933, %v4976
          %v4979 = vadd.f32 %v4938, %v4976
          %v4980 = vadd.f32 %v4943, %v4976
          %v4981 = vadd.f32 %v4948, %v4976
          %v4982 = vadd.f32 %v4953, %v4976
          %v4983 = vadd.f32 %v4958, %v4976
          %v4984 = vadd.f32 %v4963, %v4976
          %v4985 = vadd.f32 %v4968, %v4976
          %4986 = vst [vmem:[%s635] sm:$0xff] %v4978
          %4987 = vst [vmem:[%s635 + $0x8] sm:$0xff] %v4979
          %4988 = vst [vmem:[%s635 + $0x10] sm:$0xff] %v4980
          %4989 = vst [vmem:[%s635 + $0x18] sm:$0xff] %v4981
          %4990 = vst [vmem:[%s635 + $0x20] sm:$0xff] %v4982
          %4991 = vst [vmem:[%s635 + $0x28] sm:$0xff] %v4983
          %4992 = vst [vmem:[%s635 + $0x30] sm:$0xff] %v4984
          %4993 = vst [vmem:[%s635 + $0x38] sm:$0xff] %v4985
        $region102: #{tpu_custom_call.1} parent=89 // pred_fallthru
          _
        %s4994 = sand.u32 %s239, 1
        %s4995 = scalar_lea.sflag [#allocation7], %s4994
        %s4996 = sand.u32 %s239, 1
        %s4997 = smul.addr %s4996, 64
        %s4998 = scalar_lea.vmem [#allocation6], %s4997
        // Predicated region
        $region103: #{tpu_custom_call.1} parent=89 // pred_check
          %p4999 = pneg %p249
        $region104: #{tpu_custom_call.1} parent=89 // pred_check_branch
          %5001 = sbr.rel (%p4999) target = $region106
        $region105: #{tpu_custom_call.1} parent=89 // pred_region
          %s5002 = smul.u32 8, %s27
          %s5004 = ssub.s32 1024, 1024
          %5005 = vsyncadd %s4995, %s5004
          %s5006 = smul.addr %s5002, 128
          %s5007 = scalar_lea.hbm %s9, %s5006
          %s5008 = sshll.u32 %s4998, 4
          %s5009 = int_to_ptr.vmem [resolvable:$true] %s5008
          %5014 = dma.vmem_to_hbm [thread:$0]  %s5009, 1024, %s5007, %s4995, 128, 128, 8
        $region106: #{tpu_custom_call.1} parent=89 // pred_fallthru
          _
      $region90: #{tpu_custom_call.1} parent=5 // pred_fallthru
        _
      %p5015 = scmp.le.s32.totalorder 2, %s18
      // Predicated region
      $region107: #{tpu_custom_call.1} parent=5 // pred_check
        %p5016 = pneg %p5015
      $region108: #{tpu_custom_call.1} parent=5 // pred_check_branch
        %5018 = sbr.rel (%p5016) target = $region110
      $region109: #{tpu_custom_call.1} parent=5 // pred_region
        %s5019 = ssub.s32 %s18, 2
        // Predicated region
        $region111: #{tpu_custom_call.1} parent=109 // pred_check
          %p5020 = pneg %p255
        $region112: #{tpu_custom_call.1} parent=109 // pred_check_branch
          %5022 = sbr.rel (%p5020) target = $region114
        $region113: #{tpu_custom_call.1} parent=109 // pred_region
          %s5023 = sand.u32 %s240, 1
          %s5024 = scalar_lea.sflag [#allocation7], %s5023
          %s5025 = sand.u32 %s240, 1
          %s5026 = smul.addr %s5025, 64
          %s5027 = scalar_lea.vmem [#allocation6], %s5026
          %5028 = dma.done %s5024, 1024
        $region114: #{tpu_custom_call.1} parent=109 // pred_fallthru
          _
      $region110: #{tpu_custom_call.1} parent=5 // pred_fallthru
        _
    $region6: #{tpu_custom_call.1} parent=1 // loop_footer
      %s22 = sadd.s32 1, %s18
    $region7: #{tpu_custom_call.1} parent=1 // loop_footer_branch
      %17 = sbr.rel target = $region3
    $region8: #{tpu_custom_call.1} parent=1 // loop_exit
      _
    %5029 = vsyncpa [#allocation7], 1
    %s5030 = scalar_lea.sflag [#allocation7], 1
    %5031 = vsyncpa %s5030, 1

// kernel: tpu_custom_call.1
$region0: #{tpu_custom_call.1}
  #allocation0 [shape = 'u32[]', space=smem, size = 0x4, offset = 0x4, fixed_abs, tag = 'smem constant byte address 0x4 - core index']
  #allocation1 [shape = 'u32[144,128]{1,0:T(1,128)}', space=vmem, size = 0x12000, scoped, tag = 'internal scratch']
  #allocation2 [shape = 'f32[64,32]{1,0:T(8,128)}', space=vmem, size = 0x8000, scoped, tag = 'scratch operand']
  #allocation3 [shape = 'f32[64,32]{1,0:T(8,128)}', space=vmem, size = 0x8000, scoped, tag = 'scratch operand']
  #allocation4 [shape = 'f32[512,128]{1,0:T(8,128)}', space=vmem, size = 0x40000, scoped, tag = 'scratch operand']
  %s0 = inlined_call_operand.vmem [shape: f32[8,128,32], index: 0, kind: input, shape index: {}]
  %s1 = inlined_call_operand.vmem [shape: f32[32,128], index: 1, kind: input, shape index: {}]
  %s2 = inlined_call_operand.vmem [shape: f32[32,128], index: 2, kind: input, shape index: {}]
  %s3 = inlined_call_operand.vmem [shape: f32[1,128], index: 3, kind: input, shape index: {}]
  %s4 = inlined_call_operand.vmem [shape: f32[32,128], index: 4, kind: input, shape index: {}]
  %s5 = inlined_call_operand.vmem [shape: f32[1,128], index: 5, kind: input, shape index: {}]
  %s6 = inlined_call_operand.vmem [shape: f32[32,128], index: 6, kind: input, shape index: {}]
  %s7 = inlined_call_operand.vmem [shape: f32[32,128], index: 7, kind: input, shape index: {}]
  %s8 = inlined_call_operand.vmem [shape: f32[1,128], index: 8, kind: input, shape index: {}]
  %s9 = inlined_call_operand.hbm [shape: f32[128,128], index: 9, kind: output, shape index: {}]
  %s10 = sld [smem:[#allocation0]]
  $region115: #{tpu_custom_call.1} parent=0
    _
  %s12 = ssub.s32 1, %s10
  %s13 = scalar_select 0, %s12, %s10
  $region1: #{tpu_custom_call.1} parent=0
    #allocation5 [shape = 'u8[524288]{0}', space=vmem, size = 0x80000, scoped, tag = 'input window, operand 0']
    #allocation6 [shape = 'u8[65536]{0}', space=vmem, size = 0x10000, scoped, tag = 'output window, operand 0']
    #allocation7 [shape = 's32[2]{0}', space=sflag, size = 0x8, scoped, tag = 'scoped memory for tpu_custom_call.1']
    %14 = vsyncpa [#allocation7], 0
    %s15 = scalar_lea.sflag [#allocation7], 1
    %16 = vsyncpa %s15, 0
    loop: start=0, step=1, limit=4
    $region2: #{tpu_custom_call.1} parent=1 // loop_pre_header
      _
    $region3: #{tpu_custom_call.1} parent=1 // loop_header
      %s18 = sphi 0, %s22
      %p19 = scmp.ge.s32.totalorder %s18, 4
      %s25 = sphi 0, %s37
      %s26 = sphi 0, %s33
      %s27 = sphi 0, %s25
      %s28 = sphi 0, %s26
      %s29 = sphi 0, %s27
      %s30 = sphi 0, %s28
      %s42 = sphi 0, %s44
      %s45 = sphi 0, %s42
      %s46 = sphi 0, %s45
      %s62 = sphi 0, %s46
      %s66 = sphi 0, %s66
      %s68 = sphi 0, %s66
      %s69 = sphi 0, %s68
      %s83 = sphi 0, %s69
      %s87 = sphi 0, %s87
      %s89 = sphi 0, %s87
      %s90 = sphi 0, %s89
      %s104 = sphi 0, %s90
      %s108 = sphi 0, %s108
      %s110 = sphi 0, %s108
      %s111 = sphi 0, %s110
      %s125 = sphi 0, %s111
      %s129 = sphi 0, %s129
      %s131 = sphi 0, %s129
      %s132 = sphi 0, %s131
      %s146 = sphi 0, %s132
      %s150 = sphi 0, %s150
      %s152 = sphi 0, %s150
      %s153 = sphi 0, %s152
      %s167 = sphi 0, %s153
      %s171 = sphi 0, %s171
      %s173 = sphi 0, %s171
      %s174 = sphi 0, %s173
      %s188 = sphi 0, %s174
      %s192 = sphi 0, %s192
      %s194 = sphi 0, %s192
      %s195 = sphi 0, %s194
      %s209 = sphi 0, %s195
      %s213 = sphi 0, %s213
      %s215 = sphi 0, %s213
      %s216 = sphi 0, %s215
      %s230 = sphi 0, %s216
      %s236 = sphi 0, %s238
      %s239 = sphi 0, %s236
      %s240 = sphi 0, %s239
      %s256 = sphi 0, %s240
    $region4: #{tpu_custom_call.1} parent=1 // loop_header_branch
      %21 = sbr.rel (%p19) target = $region8
    $region5: #{tpu_custom_call.1} parent=1 // loop_body
      %s23 = ssub.s32 %s18, 1
      %s24 = ssub.s32 %s18, 2
      %s31 = sadd.s32 1, %s26
      %p32 = scmp.ge.s32.totalorder %s31, 1
      %s33 = scalar_select %p32, 0, %s31
      %s34 = sadd.s32 1, %s25
      %s35 = scalar_select %p32, %s34, %s25
      %p36 = scmp.ge.s32.totalorder %s35, 2
      %s37 = scalar_select %p36, 0, %s35
      %s38 = ssub.s32 %s26, %s33
      %s39 = ssub.s32 %s25, %s37
      %s40 = sor.u32 %s38, %s39
      %p41 = scmp.eq.s32.totalorder %s40, 0
      %s43 = sadd.s32 %s42, 1
      %s44 = scalar_select %p41, %s42, %s43
      %p47 = pneg %p41
      %p48 = scmp.eq.s32.totalorder %s18, 1
      %p49 = por %p47, %p48
      %p50 = scmp.ne.s32.totalorder %s42, %s45
      %p51 = scmp.eq.s32.totalorder %s18, 0
      %p52 = por %p50, %p51
      %p53 = scmp.ne.s32.totalorder %s42, %s45
      %p54 = scmp.eq.s32.totalorder %s23, 1
      %p55 = por %p53, %p54
      %p56 = scmp.ne.s32.totalorder %s45, %s46
      %p57 = scmp.eq.s32.totalorder %s23, 0
      %p58 = por %p56, %p57
      %p59 = scmp.ne.s32.totalorder %s45, %s46
      %p60 = scmp.eq.s32.totalorder %s24, 1
      %p61 = por %p59, %p60
      %p63 = scmp.ne.s32.totalorder %s46, %s62
      %p64 = scmp.eq.s32.totalorder %s24, 0
      %p65 = por %p63, %p64
      %s67 = sadd.s32 %s66, 1
      %p70 = scmp.eq.s32.totalorder %s18, 1
      %p71 = scmp.ne.s32.totalorder %s66, %s68
      %p72 = scmp.eq.s32.totalorder %s18, 0
      %p73 = por %p71, %p72
      %p74 = scmp.ne.s32.totalorder %s66, %s68
      %p75 = scmp.eq.s32.totalorder %s23, 1
      %p76 = por %p74, %p75
      %p77 = scmp.ne.s32.totalorder %s68, %s69
      %p78 = scmp.eq.s32.totalorder %s23, 0
      %p79 = por %p77, %p78
      %p80 = scmp.ne.s32.totalorder %s68, %s69
      %p81 = scmp.eq.s32.totalorder %s24, 1
      %p82 = por %p80, %p81
      %p84 = scmp.ne.s32.totalorder %s69, %s83
      %p85 = scmp.eq.s32.totalorder %s24, 0
      %p86 = por %p84, %p85
      %s88 = sadd.s32 %s87, 1
      %p91 = scmp.eq.s32.totalorder %s18, 1
      %p92 = scmp.ne.s32.totalorder %s87, %s89
      %p93 = scmp.eq.s32.totalorder %s18, 0
      %p94 = por %p92, %p93
      %p95 = scmp.ne.s32.totalorder %s87, %s89
      %p96 = scmp.eq.s32.totalorder %s23, 1
      %p97 = por %p95, %p96
      %p98 = scmp.ne.s32.totalorder %s89, %s90
      %p99 = scmp.eq.s32.totalorder %s23, 0
      %p100 = por %p98, %p99
      %p101 = scmp.ne.s32.totalorder %s89, %s90
      %p102 = scmp.eq.s32.totalorder %s24, 1
      %p103 = por %p101, %p102
      %p105 = scmp.ne.s32.totalorder %s90, %s104
      %p106 = scmp.eq.s32.totalorder %s24, 0
      %p107 = por %p105, %p106
      %s109 = sadd.s32 %s108, 1
      %p112 = scmp.eq.s32.totalorder %s18, 1
      %p113 = scmp.ne.s32.totalorder %s108, %s110
      %p114 = scmp.eq.s32.totalorder %s18, 0
      %p115 = por %p113, %p114
      %p116 = scmp.ne.s32.totalorder %s108, %s110
      %p117 = scmp.eq.s32.totalorder %s23, 1
      %p118 = por %p116, %p117
      %p119 = scmp.ne.s32.totalorder %s110, %s111
      %p120 = scmp.eq.s32.totalorder %s23, 0
      %p121 = por %p119, %p120
      %p122 = scmp.ne.s32.totalorder %s110, %s111
      %p123 = scmp.eq.s32.totalorder %s24, 1
      %p124 = por %p122, %p123
      %p126 = scmp.ne.s32.totalorder %s111, %s125
      %p127 = scmp.eq.s32.totalorder %s24, 0
      %p128 = por %p126, %p127
      %s130 = sadd.s32 %s129, 1
      %p133 = scmp.eq.s32.totalorder %s18, 1
      %p134 = scmp.ne.s32.totalorder %s129, %s131
      %p135 = scmp.eq.s32.totalorder %s18, 0
      %p136 = por %p134, %p135
      %p137 = scmp.ne.s32.totalorder %s129, %s131
      %p138 = scmp.eq.s32.totalorder %s23, 1
      %p139 = por %p137, %p138
      %p140 = scmp.ne.s32.totalorder %s131, %s132
      %p141 = scmp.eq.s32.totalorder %s23, 0
      %p142 = por %p140, %p141
      %p143 = scmp.ne.s32.totalorder %s131, %s132
      %p144 = scmp.eq.s32.totalorder %s24, 1
      %p145 = por %p143, %p144
      %p147 = scmp.ne.s32.totalorder %s132, %s146
      %p148 = scmp.eq.s32.totalorder %s24, 0
      %p149 = por %p147, %p148
      %s151 = sadd.s32 %s150, 1
      %p154 = scmp.eq.s32.totalorder %s18, 1
      %p155 = scmp.ne.s32.totalorder %s150, %s152
      %p156 = scmp.eq.s32.totalorder %s18, 0
      %p157 = por %p155, %p156
      %p158 = scmp.ne.s32.totalorder %s150, %s152
      %p159 = scmp.eq.s32.totalorder %s23, 1
      %p160 = por %p158, %p159
      %p161 = scmp.ne.s32.totalorder %s152, %s153
      %p162 = scmp.eq.s32.totalorder %s23, 0
      %p163 = por %p161, %p162
      %p164 = scmp.ne.s32.totalorder %s152, %s153
      %p165 = scmp.eq.s32.totalorder %s24, 1
      %p166 = por %p164, %p165
      %p168 = scmp.ne.s32.totalorder %s153, %s167
      %p169 = scmp.eq.s32.totalorder %s24, 0
      %p170 = por %p168, %p169
      %s172 = sadd.s32 %s171, 1
      %p175 = scmp.eq.s32.totalorder %s18, 1
      %p176 = scmp.ne.s32.totalorder %s171, %s173
      %p177 = scmp.eq.s32.totalorder %s18, 0
      %p178 = por %p176, %p177
      %p179 = scmp.ne.s32.totalorder %s171, %s173
      %p180 = scmp.eq.s32.totalorder %s23, 1
      %p181 = por %p179, %p180
      %p182 = scmp.ne.s32.totalorder %s173, %s174
      %p183 = scmp.eq.s32.totalorder %s23, 0
      %p184 = por %p182, %p183
      %p185 = scmp.ne.s32.totalorder %s173, %s174
      %p186 = scmp.eq.s32.totalorder %s24, 1
      %p187 = por %p185, %p186
      %p189 = scmp.ne.s32.totalorder %s174, %s188
      %p190 = scmp.eq.s32.totalorder %s24, 0
      %p191 = por %p189, %p190
      %s193 = sadd.s32 %s192, 1
      %p196 = scmp.eq.s32.totalorder %s18, 1
      %p197 = scmp.ne.s32.totalorder %s192, %s194
      %p198 = scmp.eq.s32.totalorder %s18, 0
      %p199 = por %p197, %p198
      %p200 = scmp.ne.s32.totalorder %s192, %s194
      %p201 = scmp.eq.s32.totalorder %s23, 1
      %p202 = por %p200, %p201
      %p203 = scmp.ne.s32.totalorder %s194, %s195
      %p204 = scmp.eq.s32.totalorder %s23, 0
      %p205 = por %p203, %p204
      %p206 = scmp.ne.s32.totalorder %s194, %s195
      %p207 = scmp.eq.s32.totalorder %s24, 1
      %p208 = por %p206, %p207
      %p210 = scmp.ne.s32.totalorder %s195, %s209
      %p211 = scmp.eq.s32.totalorder %s24, 0
      %p212 = por %p210, %p211
      %s214 = sadd.s32 %s213, 1
      %p217 = scmp.eq.s32.totalorder %s18, 1
      %p218 = scmp.ne.s32.totalorder %s213, %s215
      %p219 = scmp.eq.s32.totalorder %s18, 0
      %p220 = por %p218, %p219
      %p221 = scmp.ne.s32.totalorder %s213, %s215
      %p222 = scmp.eq.s32.totalorder %s23, 1
      %p223 = por %p221, %p222
      %p224 = scmp.ne.s32.totalorder %s215, %s216
      %p225 = scmp.eq.s32.totalorder %s23, 0
      %p226 = por %p224, %p225
      %p227 = scmp.ne.s32.totalorder %s215, %s216
      %p228 = scmp.eq.s32.totalorder %s24, 1
      %p229 = por %p227, %p228
      %p231 = scmp.ne.s32.totalorder %s216, %s230
      %p232 = scmp.eq.s32.totalorder %s24, 0
      %p233 = por %p231, %p232
      %s234 = ssub.s32 %s25, %s37
      %p235 = scmp.eq.s32.totalorder %s234, 0
      %s237 = sadd.s32 %s236, 1
      %s238 = scalar_select %p235, %s236, %s237
      %p241 = pneg %p235
      %p242 = scmp.eq.s32.totalorder %s18, 1
      %p243 = por %p241, %p242
      %p244 = scmp.ne.s32.totalorder %s236, %s239
      %p245 = scmp.eq.s32.totalorder %s18, 0
      %p246 = por %p244, %p245
      %p247 = scmp.ne.s32.totalorder %s236, %s239
      %p248 = scmp.eq.s32.totalorder %s23, 1
      %p249 = por %p247, %p248
      %p250 = scmp.ne.s32.totalorder %s239, %s240
      %p251 = scmp.eq.s32.totalorder %s23, 0
      %p252 = por %p250, %p251
      %p253 = scmp.ne.s32.totalorder %s239, %s240
      %p254 = scmp.eq.s32.totalorder %s24, 1
      %p255 = por %p253, %p254
      %p257 = scmp.ne.s32.totalorder %s240, %s256
      %p258 = scmp.eq.s32.totalorder %s24, 0
      %p259 = por %p257, %p258
      %p260 = scmp.le.s32.totalorder 1, %s18
      %p261 = scmp.lt.s32.totalorder %s18, 3
      %p262 = pnand %p260, %p261
      %p263 = pneg %p262
      // Predicated region
      $region9: #{tpu_custom_call.1} parent=5 // pred_check
        _
      $region10: #{tpu_custom_call.1} parent=5 // pred_check_branch
        %265 = sbr.rel (%p262) target = $region12
      $region11: #{tpu_custom_call.1} parent=5 // pred_region
        %s266 = ssub.s32 %s18, 1
        // Predicated region
        $region13: #{tpu_custom_call.1} parent=11 // pred_check
          %p267 = pneg %p79
        $region14: #{tpu_custom_call.1} parent=11 // pred_check_branch
          %269 = sbr.rel (%p267) target = $region16
        $region15: #{tpu_custom_call.1} parent=11 // pred_region
          _
        $region16: #{tpu_custom_call.1} parent=11 // pred_fallthru
          _
        // Predicated region
        $region17: #{tpu_custom_call.1} parent=11 // pred_check
          %p270 = pneg %p100
        $region18: #{tpu_custom_call.1} parent=11 // pred_check_branch
          %272 = sbr.rel (%p270) target = $region20
        $region19: #{tpu_custom_call.1} parent=11 // pred_region
          _
        $region20: #{tpu_custom_call.1} parent=11 // pred_fallthru
          _
        // Predicated region
        $region21: #{tpu_custom_call.1} parent=11 // pred_check
          %p273 = pneg %p121
        $region22: #{tpu_custom_call.1} parent=11 // pred_check_branch
          %275 = sbr.rel (%p273) target = $region24
        $region23: #{tpu_custom_call.1} parent=11 // pred_region
          _
        $region24: #{tpu_custom_call.1} parent=11 // pred_fallthru
          _
        // Predicated region
        $region25: #{tpu_custom_call.1} parent=11 // pred_check
          %p276 = pneg %p142
        $region26: #{tpu_custom_call.1} parent=11 // pred_check_branch
          %278 = sbr.rel (%p276) target = $region28
        $region27: #{tpu_custom_call.1} parent=11 // pred_region
          _
        $region28: #{tpu_custom_call.1} parent=11 // pred_fallthru
          _
        // Predicated region
        $region29: #{tpu_custom_call.1} parent=11 // pred_check
          %p279 = pneg %p163
        $region30: #{tpu_custom_call.1} parent=11 // pred_check_branch
          %281 = sbr.rel (%p279) target = $region32
        $region31: #{tpu_custom_call.1} parent=11 // pred_region
          _
        $region32: #{tpu_custom_call.1} parent=11 // pred_fallthru
          _
        // Predicated region
        $region33: #{tpu_custom_call.1} parent=11 // pred_check
          %p282 = pneg %p184
        $region34: #{tpu_custom_call.1} parent=11 // pred_check_branch
          %284 = sbr.rel (%p282) target = $region36
        $region35: #{tpu_custom_call.1} parent=11 // pred_region
          _
        $region36: #{tpu_custom_call.1} parent=11 // pred_fallthru
          _
        // Predicated region
        $region37: #{tpu_custom_call.1} parent=11 // pred_check
          %p285 = pneg %p205
        $region38: #{tpu_custom_call.1} parent=11 // pred_check_branch
          %287 = sbr.rel (%p285) target = $region40
        $region39: #{tpu_custom_call.1} parent=11 // pred_region
          _
        $region40: #{tpu_custom_call.1} parent=11 // pred_fallthru
          _
        // Predicated region
        $region41: #{tpu_custom_call.1} parent=11 // pred_check
          %p288 = pneg %p226
        $region42: #{tpu_custom_call.1} parent=11 // pred_check_branch
          %290 = sbr.rel (%p288) target = $region44
        $region43: #{tpu_custom_call.1} parent=11 // pred_region
          _
        $region44: #{tpu_custom_call.1} parent=11 // pred_fallthru
          _
      $region12: #{tpu_custom_call.1} parent=5 // pred_fallthru
        _
      %p291 = scmp.lt.s32.totalorder %s18, 2
      // Predicated region
      $region45: #{tpu_custom_call.1} parent=5 // pred_check
        %p292 = pneg %p291
      $region46: #{tpu_custom_call.1} parent=5 // pred_check_branch
        %294 = sbr.rel (%p292) target = $region48
      $region47: #{tpu_custom_call.1} parent=5 // pred_region
        // Predicated region
        $region49: #{tpu_custom_call.1} parent=47 // pred_check
          %p295 = pneg %p52
        $region50: #{tpu_custom_call.1} parent=47 // pred_check_branch
          %297 = sbr.rel (%p295) target = $region52
        $region51: #{tpu_custom_call.1} parent=47 // pred_region
          %s298 = sand.u32 %s42, 1
          %s299 = sand.u32 %s42, 1
          %s300 = smul.addr %s299, 512
          %s301 = scalar_lea.vmem [#allocation5], %s300
          %s302 = smul.u32 8, %s26
          %s303 = smul.u32 8, %s25
          %s304 = smul.addr %s302, 16
          %s305 = sadd.s32 %s303, %s304
          %s306 = smul.addr %s305, 8
          %s307 = scalar_lea.vmem %s0, %s306
          // Predicated region
          $region53: #{tpu_custom_call.1} parent=51 // pred_check
            _
          $region54: #{tpu_custom_call.1} parent=51 // pred_check_branch
            %309 = sbr.rel (0) target = $region56
          $region55: #{tpu_custom_call.1} parent=51 // pred_region
            // Predicated region
            $region57: #{tpu_custom_call.1} parent=55 // pred_check
              _
            $region58: #{tpu_custom_call.1} parent=55 // pred_check_branch
              %311 = sbr.rel (0) target = $region60
            $region59: #{tpu_custom_call.1} parent=55 // pred_region
              // Predicated region
              $region72: #{tpu_custom_call.1} parent=59 // pred_check
                _
              $region73: #{tpu_custom_call.1} parent=59 // pred_check_branch
                %453 = sbr.rel (0) target = $region75
              $region74: #{tpu_custom_call.1} parent=59 // pred_region
                loop: start=0, step=1, limit=1
                $region76: #{tpu_custom_call.1} parent=74 // loop_pre_header
                  _
                $region77: #{tpu_custom_call.1} parent=74 // loop_header
                  %s455 = sphi 0, %s459
                  %p456 = scmp.ge.s32.totalorder %s455, 1
                  %s460 = sphi %s307, %s307
                  %s461 = sphi %s301, %s301
                $region78: #{tpu_custom_call.1} parent=74 // loop_header_branch
                  %458 = sbr.rel (%p456) target = $region82
                $region79: #{tpu_custom_call.1} parent=74 // loop_body
                  %v462 = vld [vmem:[%s460] sm:$0xff]
                  %463 = vst [vmem:[%s461] sm:$0xff] %v462
                  %v464 = vld [vmem:[%s460 + $0x8] sm:$0xff]
                  %465 = vst [vmem:[%s461 + $0x8] sm:$0xff] %v464
                  %v466 = vld [vmem:[%s460 + $0x10] sm:$0xff]
                  %467 = vst [vmem:[%s461 + $0x10] sm:$0xff] %v466
                  %v468 = vld [vmem:[%s460 + $0x18] sm:$0xff]
                  %469 = vst [vmem:[%s461 + $0x18] sm:$0xff] %v468
                  %v470 = vld [vmem:[%s460 + $0x20] sm:$0xff]
                  %471 = vst [vmem:[%s461 + $0x20] sm:$0xff] %v470
                  %v472 = vld [vmem:[%s460 + $0x28] sm:$0xff]
                  %473 = vst [vmem:[%s461 + $0x28] sm:$0xff] %v472
                  %v474 = vld [vmem:[%s460 + $0x30] sm:$0xff]
                  %475 = vst [vmem:[%s461 + $0x30] sm:$0xff] %v474
                  %v476 = vld [vmem:[%s460 + $0x38] sm:$0xff]
                  %477 = vst [vmem:[%s461 + $0x38] sm:$0xff] %v476
                  %v478 = vld [vmem:[%s460 + $0x80] sm:$0xff]
                  %479 = vst [vmem:[%s461 + $0x40] sm:$0xff] %v478
                  %v480 = vld [vmem:[%s460 + $0x88] sm:$0xff]
                  %481 = vst [vmem:[%s461 + $0x48] sm:$0xff] %v480
                  %v482 = vld [vmem:[%s460 + $0x90] sm:$0xff]
                  %483 = vst [vmem:[%s461 + $0x50] sm:$0xff] %v482
                  %v484 = vld [vmem:[%s460 + $0x98] sm:$0xff]
                  %485 = vst [vmem:[%s461 + $0x58] sm:$0xff] %v484
                  %v486 = vld [vmem:[%s460 + $0xa0] sm:$0xff]
                  %487 = vst [vmem:[%s461 + $0x60] sm:$0xff] %v486
                  %v488 = vld [vmem:[%s460 + $0xa8] sm:$0xff]
                  %489 = vst [vmem:[%s461 + $0x68] sm:$0xff] %v488
                  %v490 = vld [vmem:[%s460 + $0xb0] sm:$0xff]
                  %491 = vst [vmem:[%s461 + $0x70] sm:$0xff] %v490
                  %v492 = vld [vmem:[%s460 + $0xb8] sm:$0xff]
                  %493 = vst [vmem:[%s461 + $0x78] sm:$0xff] %v492
                  %v494 = vld [vmem:[%s460 + $0x100] sm:$0xff]
                  %495 = vst [vmem:[%s461 + $0x80] sm:$0xff] %v494
                  %v496 = vld [vmem:[%s460 + $0x108] sm:$0xff]
                  %497 = vst [vmem:[%s461 + $0x88] sm:$0xff] %v496
                  %v498 = vld [vmem:[%s460 + $0x110] sm:$0xff]
                  %499 = vst [vmem:[%s461 + $0x90] sm:$0xff] %v498
                  %v500 = vld [vmem:[%s460 + $0x118] sm:$0xff]
                  %501 = vst [vmem:[%s461 + $0x98] sm:$0xff] %v500
                  %v502 = vld [vmem:[%s460 + $0x120] sm:$0xff]
                  %503 = vst [vmem:[%s461 + $0xa0] sm:$0xff] %v502
                  %v504 = vld [vmem:[%s460 + $0x128] sm:$0xff]
                  %505 = vst [vmem:[%s461 + $0xa8] sm:$0xff] %v504
                  %v506 = vld [vmem:[%s460 + $0x130] sm:$0xff]
                  %507 = vst [vmem:[%s461 + $0xb0] sm:$0xff] %v506
                  %v508 = vld [vmem:[%s460 + $0x138] sm:$0xff]
                  %509 = vst [vmem:[%s461 + $0xb8] sm:$0xff] %v508
                  %v510 = vld [vmem:[%s460 + $0x180] sm:$0xff]
                  %511 = vst [vmem:[%s461 + $0xc0] sm:$0xff] %v510
                  %v512 = vld [vmem:[%s460 + $0x188] sm:$0xff]
                  %513 = vst [vmem:[%s461 + $0xc8] sm:$0xff] %v512
                  %v514 = vld [vmem:[%s460 + $0x190] sm:$0xff]
                  %515 = vst [vmem:[%s461 + $0xd0] sm:$0xff] %v514
                  %v516 = vld [vmem:[%s460 + $0x198] sm:$0xff]
                  %517 = vst [vmem:[%s461 + $0xd8] sm:$0xff] %v516
                  %v518 = vld [vmem:[%s460 + $0x1a0] sm:$0xff]
                  %519 = vst [vmem:[%s461 + $0xe0] sm:$0xff] %v518
                  %v520 = vld [vmem:[%s460 + $0x1a8] sm:$0xff]
                  %521 = vst [vmem:[%s461 + $0xe8] sm:$0xff] %v520
                  %v522 = vld [vmem:[%s460 + $0x1b0] sm:$0xff]
                  %523 = vst [vmem:[%s461 + $0xf0] sm:$0xff] %v522
                  %v524 = vld [vmem:[%s460 + $0x1b8] sm:$0xff]
                  %525 = vst [vmem:[%s461 + $0xf8] sm:$0xff] %v524
                  %v526 = vld [vmem:[%s460 + $0x200] sm:$0xff]
                  %527 = vst [vmem:[%s461 + $0x100] sm:$0xff] %v526
                  %v528 = vld [vmem:[%s460 + $0x208] sm:$0xff]
                  %529 = vst [vmem:[%s461 + $0x108] sm:$0xff] %v528
                  %v530 = vld [vmem:[%s460 + $0x210] sm:$0xff]
                  %531 = vst [vmem:[%s461 + $0x110] sm:$0xff] %v530
                  %v532 = vld [vmem:[%s460 + $0x218] sm:$0xff]
                  %533 = vst [vmem:[%s461 + $0x118] sm:$0xff] %v532
                  %v534 = vld [vmem:[%s460 + $0x220] sm:$0xff]
                  %535 = vst [vmem:[%s461 + $0x120] sm:$0xff] %v534
                  %v536 = vld [vmem:[%s460 + $0x228] sm:$0xff]
                  %537 = vst [vmem:[%s461 + $0x128] sm:$0xff] %v536
                  %v538 = vld [vmem:[%s460 + $0x230] sm:$0xff]
                  %539 = vst [vmem:[%s461 + $0x130] sm:$0xff] %v538
                  %v540 = vld [vmem:[%s460 + $0x238] sm:$0xff]
                  %541 = vst [vmem:[%s461 + $0x138] sm:$0xff] %v540
                  %v542 = vld [vmem:[%s460 + $0x280] sm:$0xff]
                  %543 = vst [vmem:[%s461 + $0x140] sm:$0xff] %v542
                  %v544 = vld [vmem:[%s460 + $0x288] sm:$0xff]
                  %545 = vst [vmem:[%s461 + $0x148] sm:$0xff] %v544
                  %v546 = vld [vmem:[%s460 + $0x290] sm:$0xff]
                  %547 = vst [vmem:[%s461 + $0x150] sm:$0xff] %v546
                  %v548 = vld [vmem:[%s460 + $0x298] sm:$0xff]
                  %549 = vst [vmem:[%s461 + $0x158] sm:$0xff] %v548
                  %v550 = vld [vmem:[%s460 + $0x2a0] sm:$0xff]
                  %551 = vst [vmem:[%s461 + $0x160] sm:$0xff] %v550
                  %v552 = vld [vmem:[%s460 + $0x2a8] sm:$0xff]
                  %553 = vst [vmem:[%s461 + $0x168] sm:$0xff] %v552
                  %v554 = vld [vmem:[%s460 + $0x2b0] sm:$0xff]
                  %555 = vst [vmem:[%s461 + $0x170] sm:$0xff] %v554
                  %v556 = vld [vmem:[%s460 + $0x2b8] sm:$0xff]
                  %557 = vst [vmem:[%s461 + $0x178] sm:$0xff] %v556
                  %v558 = vld [vmem:[%s460 + $0x300] sm:$0xff]
                  %559 = vst [vmem:[%s461 + $0x180] sm:$0xff] %v558
                  %v560 = vld [vmem:[%s460 + $0x308] sm:$0xff]
                  %561 = vst [vmem:[%s461 + $0x188] sm:$0xff] %v560
                  %v562 = vld [vmem:[%s460 + $0x310] sm:$0xff]
                  %563 = vst [vmem:[%s461 + $0x190] sm:$0xff] %v562
                  %v564 = vld [vmem:[%s460 + $0x318] sm:$0xff]
                  %565 = vst [vmem:[%s461 + $0x198] sm:$0xff] %v564
                  %v566 = vld [vmem:[%s460 + $0x320] sm:$0xff]
                  %567 = vst [vmem:[%s461 + $0x1a0] sm:$0xff] %v566
                  %v568 = vld [vmem:[%s460 + $0x328] sm:$0xff]
                  %569 = vst [vmem:[%s461 + $0x1a8] sm:$0xff] %v568
                  %v570 = vld [vmem:[%s460 + $0x330] sm:$0xff]
                  %571 = vst [vmem:[%s461 + $0x1b0] sm:$0xff] %v570
                  %v572 = vld [vmem:[%s460 + $0x338] sm:$0xff]
                  %573 = vst [vmem:[%s461 + $0x1b8] sm:$0xff] %v572
                  %v574 = vld [vmem:[%s460 + $0x380] sm:$0xff]
                  %575 = vst [vmem:[%s461 + $0x1c0] sm:$0xff] %v574
                  %v576 = vld [vmem:[%s460 + $0x388] sm:$0xff]
                  %577 = vst [vmem:[%s461 + $0x1c8] sm:$0xff] %v576
                  %v578 = vld [vmem:[%s460 + $0x390] sm:$0xff]
                  %579 = vst [vmem:[%s461 + $0x1d0] sm:$0xff] %v578
                  %v580 = vld [vmem:[%s460 + $0x398] sm:$0xff]
                  %581 = vst [vmem:[%s461 + $0x1d8] sm:$0xff] %v580
                  %v582 = vld [vmem:[%s460 + $0x3a0] sm:$0xff]
                  %583 = vst [vmem:[%s461 + $0x1e0] sm:$0xff] %v582
                  %v584 = vld [vmem:[%s460 + $0x3a8] sm:$0xff]
                  %585 = vst [vmem:[%s461 + $0x1e8] sm:$0xff] %v584
                  %v586 = vld [vmem:[%s460 + $0x3b0] sm:$0xff]
                  %587 = vst [vmem:[%s461 + $0x1f0] sm:$0xff] %v586
                  %v588 = vld [vmem:[%s460 + $0x3b8] sm:$0xff]
                  %589 = vst [vmem:[%s461 + $0x1f8] sm:$0xff] %v588
                $region80: #{tpu_custom_call.1} parent=74 // loop_footer
                  %s459 = sadd.s32 1, %s455
                $region81: #{tpu_custom_call.1} parent=74 // loop_footer_branch
                  %454 = sbr.rel target = $region77
                $region82: #{tpu_custom_call.1} parent=74 // loop_exit
                  _
              $region75: #{tpu_custom_call.1} parent=59 // pred_fallthru
                _
              // Predicated region
              $region83: #{tpu_custom_call.1} parent=59 // pred_check
                _
              $region84: #{tpu_custom_call.1} parent=59 // pred_check_branch
                %591 = sbr.rel target = $region86
              $region85: #{tpu_custom_call.1} parent=59 // pred_region
                _
              $region86: #{tpu_custom_call.1} parent=59 // pred_fallthru
                _
            $region60: #{tpu_custom_call.1} parent=55 // pred_fallthru
              _
            // Predicated region
            $region61: #{tpu_custom_call.1} parent=55 // pred_check
              _
            $region62: #{tpu_custom_call.1} parent=55 // pred_check_branch
              %313 = sbr.rel target = $region64
            $region63: #{tpu_custom_call.1} parent=55 // pred_region
              %s315 = ssub.s32 256, 1
              loop: start=0, step=1, limit=1
              $region65: #{tpu_custom_call.1} parent=63 // loop_pre_header
                _
              $region66: #{tpu_custom_call.1} parent=63 // loop_header
                %s317 = sphi 0, %s321
                %p318 = scmp.ge.s32.totalorder %s317, 1
                %s322 = sphi %s307, %s307
                %s323 = sphi %s301, %s301
              $region67: #{tpu_custom_call.1} parent=63 // loop_header_branch
                %320 = sbr.rel (%p318) target = $region71
              $region68: #{tpu_custom_call.1} parent=63 // loop_body
                %v324 = vld [vmem:[%s322] sm:%s315]
                %325 = vst [vmem:[%s323] sm:%s315] %v324
                %v326 = vld [vmem:[%s322 + $0x8] sm:%s315]
                %327 = vst [vmem:[%s323 + $0x8] sm:%s315] %v326
                %v328 = vld [vmem:[%s322 + $0x10] sm:%s315]
                %329 = vst [vmem:[%s323 + $0x10] sm:%s315] %v328
                %v330 = vld [vmem:[%s322 + $0x18] sm:%s315]
                %331 = vst [vmem:[%s323 + $0x18] sm:%s315] %v330
                %v332 = vld [vmem:[%s322 + $0x20] sm:%s315]
                %333 = vst [vmem:[%s323 + $0x20] sm:%s315] %v332
                %v334 = vld [vmem:[%s322 + $0x28] sm:%s315]
                %335 = vst [vmem:[%s323 + $0x28] sm:%s315] %v334
                %v336 = vld [vmem:[%s322 + $0x30] sm:%s315]
                %337 = vst [vmem:[%s323 + $0x30] sm:%s315] %v336
                %v338 = vld [vmem:[%s322 + $0x38] sm:%s315]
                %339 = vst [vmem:[%s323 + $0x38] sm:%s315] %v338
                %v340 = vld [vmem:[%s322 + $0x80] sm:%s315]
                %341 = vst [vmem:[%s323 + $0x40] sm:%s315] %v340
                %v342 = vld [vmem:[%s322 + $0x88] sm:%s315]
                %343 = vst [vmem:[%s323 + $0x48] sm:%s315] %v342
                %v344 = vld [vmem:[%s322 + $0x90] sm:%s315]
                %345 = vst [vmem:[%s323 + $0x50] sm:%s315] %v344
                %v346 = vld [vmem:[%s322 + $0x98] sm:%s315]
                %347 = vst [vmem:[%s323 + $0x58] sm:%s315] %v346
                %v348 = vld [vmem:[%s322 + $0xa0] sm:%s315]
                %349 = vst [vmem:[%s323 + $0x60] sm:%s315] %v348
                %v350 = vld [vmem:[%s322 + $0xa8] sm:%s315]
                %351 = vst [vmem:[%s323 + $0x68] sm:%s315] %v350
                %v352 = vld [vmem:[%s322 + $0xb0] sm:%s315]
                %353 = vst [vmem:[%s323 + $0x70] sm:%s315] %v352
                %v354 = vld [vmem:[%s322 + $0xb8] sm:%s315]
                %355 = vst [vmem:[%s323 + $0x78] sm:%s315] %v354
                %v356 = vld [vmem:[%s322 + $0x100] sm:%s315]
                %357 = vst [vmem:[%s323 + $0x80] sm:%s315] %v356
                %v358 = vld [vmem:[%s322 + $0x108] sm:%s315]
                %359 = vst [vmem:[%s323 + $0x88] sm:%s315] %v358
                %v360 = vld [vmem:[%s322 + $0x110] sm:%s315]
                %361 = vst [vmem:[%s323 + $0x90] sm:%s315] %v360
                %v362 = vld [vmem:[%s322 + $0x118] sm:%s315]
                %363 = vst [vmem:[%s323 + $0x98] sm:%s315] %v362
                %v364 = vld [vmem:[%s322 + $0x120] sm:%s315]
                %365 = vst [vmem:[%s323 + $0xa0] sm:%s315] %v364
                %v366 = vld [vmem:[%s322 + $0x128] sm:%s315]
                %367 = vst [vmem:[%s323 + $0xa8] sm:%s315] %v366
                %v368 = vld [vmem:[%s322 + $0x130] sm:%s315]
                %369 = vst [vmem:[%s323 + $0xb0] sm:%s315] %v368
                %v370 = vld [vmem:[%s322 + $0x138] sm:%s315]
                %371 = vst [vmem:[%s323 + $0xb8] sm:%s315] %v370
                %v372 = vld [vmem:[%s322 + $0x180] sm:%s315]
                %373 = vst [vmem:[%s323 + $0xc0] sm:%s315] %v372
                %v374 = vld [vmem:[%s322 + $0x188] sm:%s315]
                %375 = vst [vmem:[%s323 + $0xc8] sm:%s315] %v374
                %v376 = vld [vmem:[%s322 + $0x190] sm:%s315]
                %377 = vst [vmem:[%s323 + $0xd0] sm:%s315] %v376
                %v378 = vld [vmem:[%s322 + $0x198] sm:%s315]
                %379 = vst [vmem:[%s323 + $0xd8] sm:%s315] %v378
                %v380 = vld [vmem:[%s322 + $0x1a0] sm:%s315]
                %381 = vst [vmem:[%s323 + $0xe0] sm:%s315] %v380
                %v382 = vld [vmem:[%s322 + $0x1a8] sm:%s315]
                %383 = vst [vmem:[%s323 + $0xe8] sm:%s315] %v382
                %v384 = vld [vmem:[%s322 + $0x1b0] sm:%s315]
                %385 = vst [vmem:[%s323 + $0xf0] sm:%s315] %v384
                %v386 = vld [vmem:[%s322 + $0x1b8] sm:%s315]
                %387 = vst [vmem:[%s323 + $0xf8] sm:%s315] %v386
                %v388 = vld [vmem:[%s322 + $0x200] sm:%s315]
                %389 = vst [vmem:[%s323 + $0x100] sm:%s315] %v388
                %v390 = vld [vmem:[%s322 + $0x208] sm:%s315]
                %391 = vst [vmem:[%s323 + $0x108] sm:%s315] %v390
                %v392 = vld [vmem:[%s322 + $0x210] sm:%s315]
                %393 = vst [vmem:[%s323 + $0x110] sm:%s315] %v392
                %v394 = vld [vmem:[%s322 + $0x218] sm:%s315]
                %395 = vst [vmem:[%s323 + $0x118] sm:%s315] %v394
                %v396 = vld [vmem:[%s322 + $0x220] sm:%s315]
                %397 = vst [vmem:[%s323 + $0x120] sm:%s315] %v396
                %v398 = vld [vmem:[%s322 + $0x228] sm:%s315]
                %399 = vst [vmem:[%s323 + $0x128] sm:%s315] %v398
                %v400 = vld [vmem:[%s322 + $0x230] sm:%s315]
                %401 = vst [vmem:[%s323 + $0x130] sm:%s315] %v400
                %v402 = vld [vmem:[%s322 + $0x238] sm:%s315]
                %403 = vst [vmem:[%s323 + $0x138] sm:%s315] %v402
                %v404 = vld [vmem:[%s322 + $0x280] sm:%s315]
                %405 = vst [vmem:[%s323 + $0x140] sm:%s315] %v404
                %v406 = vld [vmem:[%s322 + $0x288] sm:%s315]
                %407 = vst [vmem:[%s323 + $0x148] sm:%s315] %v406
                %v408 = vld [vmem:[%s322 + $0x290] sm:%s315]
                %409 = vst [vmem:[%s323 + $0x150] sm:%s315] %v408
                %v410 = vld [vmem:[%s322 + $0x298] sm:%s315]
                %411 = vst [vmem:[%s323 + $0x158] sm:%s315] %v410
                %v412 = vld [vmem:[%s322 + $0x2a0] sm:%s315]
                %413 = vst [vmem:[%s323 + $0x160] sm:%s315] %v412
                %v414 = vld [vmem:[%s322 + $0x2a8] sm:%s315]
                %415 = vst [vmem:[%s323 + $0x168] sm:%s315] %v414
                %v416 = vld [vmem:[%s322 + $0x2b0] sm:%s315]
                %417 = vst [vmem:[%s323 + $0x170] sm:%s315] %v416
                %v418 = vld [vmem:[%s322 + $0x2b8] sm:%s315]
                %419 = vst [vmem:[%s323 + $0x178] sm:%s315] %v418
                %v420 = vld [vmem:[%s322 + $0x300] sm:%s315]
                %421 = vst [vmem:[%s323 + $0x180] sm:%s315] %v420
                %v422 = vld [vmem:[%s322 + $0x308] sm:%s315]
                %423 = vst [vmem:[%s323 + $0x188] sm:%s315] %v422
                %v424 = vld [vmem:[%s322 + $0x310] sm:%s315]
                %425 = vst [vmem:[%s323 + $0x190] sm:%s315] %v424
                %v426 = vld [vmem:[%s322 + $0x318] sm:%s315]
                %427 = vst [vmem:[%s323 + $0x198] sm:%s315] %v426
                %v428 = vld [vmem:[%s322 + $0x320] sm:%s315]
                %429 = vst [vmem:[%s323 + $0x1a0] sm:%s315] %v428
                %v430 = vld [vmem:[%s322 + $0x328] sm:%s315]
                %431 = vst [vmem:[%s323 + $0x1a8] sm:%s315] %v430
                %v432 = vld [vmem:[%s322 + $0x330] sm:%s315]
                %433 = vst [vmem:[%s323 + $0x1b0] sm:%s315] %v432
                %v434 = vld [vmem:[%s322 + $0x338] sm:%s315]
                %435 = vst [vmem:[%s323 + $0x1b8] sm:%s315] %v434
                %v436 = vld [vmem:[%s322 + $0x380] sm:%s315]
                %437 = vst [vmem:[%s323 + $0x1c0] sm:%s315] %v436
                %v438 = vld [vmem:[%s322 + $0x388] sm:%s315]
                %439 = vst [vmem:[%s323 + $0x1c8] sm:%s315] %v438
                %v440 = vld [vmem:[%s322 + $0x390] sm:%s315]
                %441 = vst [vmem:[%s323 + $0x1d0] sm:%s315] %v440
                %v442 = vld [vmem:[%s322 + $0x398] sm:%s315]
                %443 = vst [vmem:[%s323 + $0x1d8] sm:%s315] %v442
                %v444 = vld [vmem:[%s322 + $0x3a0] sm:%s315]
                %445 = vst [vmem:[%s323 + $0x1e0] sm:%s315] %v444
                %v446 = vld [vmem:[%s322 + $0x3a8] sm:%s315]
                %447 = vst [vmem:[%s323 + $0x1e8] sm:%s315] %v446
                %v448 = vld [vmem:[%s322 + $0x3b0] sm:%s315]
                %449 = vst [vmem:[%s323 + $0x1f0] sm:%s315] %v448
                %v450 = vld [vmem:[%s322 + $0x3b8] sm:%s315]
                %451 = vst [vmem:[%s323 + $0x1f8] sm:%s315] %v450
              $region69: #{tpu_custom_call.1} parent=63 // loop_footer
                %s321 = sadd.s32 1, %s317
              $region70: #{tpu_custom_call.1} parent=63 // loop_footer_branch
                %316 = sbr.rel target = $region66
              $region71: #{tpu_custom_call.1} parent=63 // loop_exit
                _
            $region64: #{tpu_custom_call.1} parent=55 // pred_fallthru
              _
          $region56: #{tpu_custom_call.1} parent=51 // pred_fallthru
            _
          %592 = vnop
        $region52: #{tpu_custom_call.1} parent=47 // pred_fallthru
          _
      $region48: #{tpu_custom_call.1} parent=5 // pred_fallthru
        _
      %p593 = scmp.le.s32.totalorder 1, %s18
      %p594 = scmp.lt.s32.totalorder %s18, 3
      %p595 = pnand %p593, %p594
      %p596 = pneg %p595
      // Predicated region
      $region87: #{tpu_custom_call.1} parent=5 // pred_check
        _
      $region88: #{tpu_custom_call.1} parent=5 // pred_check_branch
        %598 = sbr.rel (%p595) target = $region90
      $region89: #{tpu_custom_call.1} parent=5 // pred_region
        %s599 = ssub.s32 %s18, 1
        %s600 = sand.u32 %s45, 1
        %s601 = sand.u32 %s45, 1
        %s602 = smul.addr %s601, 512
        %s603 = scalar_lea.vmem [#allocation5], %s602
        // Predicated region
        $region91: #{tpu_custom_call.1} parent=89 // pred_check
          %p604 = pneg %p58
        $region92: #{tpu_custom_call.1} parent=89 // pred_check_branch
          %606 = sbr.rel (%p604) target = $region94
        $region93: #{tpu_custom_call.1} parent=89 // pred_region
          _
        $region94: #{tpu_custom_call.1} parent=89 // pred_fallthru
          _
        %s607 = sand.u32 %s45, 1
        %s608 = sand.u32 %s45, 1
        %s609 = smul.addr %s608, 512
        %s610 = scalar_lea.vmem [#allocation5], %s609
        %p611 = pneg %p58
        %p612 = pneg %p55
        %p613 = pneg %p79
        %p614 = pneg %p76
        %p615 = pneg %p100
        %p616 = pneg %p97
        %p617 = pneg %p121
        %p618 = pneg %p118
        %p619 = pneg %p142
        %p620 = pneg %p139
        %p621 = pneg %p163
        %p622 = pneg %p160
        %p623 = pneg %p184
        %p624 = pneg %p181
        %p625 = pneg %p205
        %p626 = pneg %p202
        %p627 = pneg %p226
        %p628 = pneg %p223
        %p629 = pneg %p252
        %p630 = pneg %p249
        %s631 = sand.u32 %s239, 1
        %s632 = scalar_lea.sflag [#allocation7], %s631
        %s633 = sand.u32 %s239, 1
        %s634 = smul.addr %s633, 64
        %s635 = scalar_lea.vmem [#allocation6], %s634
        %s636 = smul.u32 8, %s28
        %s637 = smul.u32 8, %s27
        %s638 = smul.u32 8, %s27
        %p639 = scmp.eq.s32.totalorder %s28, 0
        // Predicated region
        $region95: #{tpu_custom_call.1} parent=89 // pred_check
          %p640 = pneg %p639
        $region96: #{tpu_custom_call.1} parent=89 // pred_check_branch
          %642 = sbr.rel (%p640) target = $region98
        $region97: #{tpu_custom_call.1} parent=89 // pred_region
          %vm643 = vcmask 261120
          %644 = vst.msk [vmem:[#allocation2] sm:$0xff] %vm643, 0.0
          %645 = vst.msk [vmem:[#allocation2 + $0x8] sm:$0xff] %vm643, 0.0
          %646 = vst.msk [vmem:[#allocation2 + $0x10] sm:$0xff] %vm643, 0.0
          %647 = vst.msk [vmem:[#allocation2 + $0x18] sm:$0xff] %vm643, 0.0
          %648 = vst.msk [vmem:[#allocation2 + $0x20] sm:$0xff] %vm643, 0.0
          %649 = vst.msk [vmem:[#allocation2 + $0x28] sm:$0xff] %vm643, 0.0
          %650 = vst.msk [vmem:[#allocation2 + $0x30] sm:$0xff] %vm643, 0.0
          %651 = vst.msk [vmem:[#allocation2 + $0x38] sm:$0xff] %vm643, 0.0
          %652 = vst.msk [vmem:[#allocation3] sm:$0xff] %vm643, 0.0
          %653 = vst.msk [vmem:[#allocation3 + $0x8] sm:$0xff] %vm643, 0.0
          %654 = vst.msk [vmem:[#allocation3 + $0x10] sm:$0xff] %vm643, 0.0
          %655 = vst.msk [vmem:[#allocation3 + $0x18] sm:$0xff] %vm643, 0.0
          %656 = vst.msk [vmem:[#allocation3 + $0x20] sm:$0xff] %vm643, 0.0
          %657 = vst.msk [vmem:[#allocation3 + $0x28] sm:$0xff] %vm643, 0.0
          %658 = vst.msk [vmem:[#allocation3 + $0x30] sm:$0xff] %vm643, 0.0
          %659 = vst.msk [vmem:[#allocation3 + $0x38] sm:$0xff] %vm643, 0.0
        $region98: #{tpu_custom_call.1} parent=89 // pred_fallthru
          _
        %v660 = vld [vmem:[%s603] sm:$0xff]
        %v661 = vld [vmem:[%s603 + $0x8] sm:$0xff]
        %v662 = vld [vmem:[%s603 + $0x10] sm:$0xff]
        %v663 = vld [vmem:[%s603 + $0x18] sm:$0xff]
        %v664 = vld [vmem:[%s603 + $0x20] sm:$0xff]
        %v665 = vld [vmem:[%s603 + $0x28] sm:$0xff]
        %v666 = vld [vmem:[%s603 + $0x30] sm:$0xff]
        %v667 = vld [vmem:[%s603 + $0x38] sm:$0xff]
        %v668 = vld [vmem:[%s603 + $0x40] sm:$0xff]
        %v669 = vld [vmem:[%s603 + $0x48] sm:$0xff]
        %v670 = vld [vmem:[%s603 + $0x50] sm:$0xff]
        %v671 = vld [vmem:[%s603 + $0x58] sm:$0xff]
        %v672 = vld [vmem:[%s603 + $0x60] sm:$0xff]
        %v673 = vld [vmem:[%s603 + $0x68] sm:$0xff]
        %v674 = vld [vmem:[%s603 + $0x70] sm:$0xff]
        %v675 = vld [vmem:[%s603 + $0x78] sm:$0xff]
        %v676 = vld [vmem:[%s603 + $0x80] sm:$0xff]
        %v677 = vld [vmem:[%s603 + $0x88] sm:$0xff]
        %v678 = vld [vmem:[%s603 + $0x90] sm:$0xff]
        %v679 = vld [vmem:[%s603 + $0x98] sm:$0xff]
        %v680 = vld [vmem:[%s603 + $0xa0] sm:$0xff]
        %v681 = vld [vmem:[%s603 + $0xa8] sm:$0xff]
        %v682 = vld [vmem:[%s603 + $0xb0] sm:$0xff]
        %v683 = vld [vmem:[%s603 + $0xb8] sm:$0xff]
        %v684 = vld [vmem:[%s603 + $0xc0] sm:$0xff]
        %v685 = vld [vmem:[%s603 + $0xc8] sm:$0xff]
        %v686 = vld [vmem:[%s603 + $0xd0] sm:$0xff]
        %v687 = vld [vmem:[%s603 + $0xd8] sm:$0xff]
        %v688 = vld [vmem:[%s603 + $0xe0] sm:$0xff]
        %v689 = vld [vmem:[%s603 + $0xe8] sm:$0xff]
        %v690 = vld [vmem:[%s603 + $0xf0] sm:$0xff]
        %v691 = vld [vmem:[%s603 + $0xf8] sm:$0xff]
        %v692 = vld [vmem:[%s603 + $0x100] sm:$0xff]
        %v693 = vld [vmem:[%s603 + $0x108] sm:$0xff]
        %v694 = vld [vmem:[%s603 + $0x110] sm:$0xff]
        %v695 = vld [vmem:[%s603 + $0x118] sm:$0xff]
        %v696 = vld [vmem:[%s603 + $0x120] sm:$0xff]
        %v697 = vld [vmem:[%s603 + $0x128] sm:$0xff]
        %v698 = vld [vmem:[%s603 + $0x130] sm:$0xff]
        %v699 = vld [vmem:[%s603 + $0x138] sm:$0xff]
        %v700 = vld [vmem:[%s603 + $0x140] sm:$0xff]
        %v701 = vld [vmem:[%s603 + $0x148] sm:$0xff]
        %v702 = vld [vmem:[%s603 + $0x150] sm:$0xff]
        %v703 = vld [vmem:[%s603 + $0x158] sm:$0xff]
        %v704 = vld [vmem:[%s603 + $0x160] sm:$0xff]
        %v705 = vld [vmem:[%s603 + $0x168] sm:$0xff]
        %v706 = vld [vmem:[%s603 + $0x170] sm:$0xff]
        %v707 = vld [vmem:[%s603 + $0x178] sm:$0xff]
        %v708 = vld [vmem:[%s603 + $0x180] sm:$0xff]
        %v709 = vld [vmem:[%s603 + $0x188] sm:$0xff]
        %v710 = vld [vmem:[%s603 + $0x190] sm:$0xff]
        %v711 = vld [vmem:[%s603 + $0x198] sm:$0xff]
        %v712 = vld [vmem:[%s603 + $0x1a0] sm:$0xff]
        %v713 = vld [vmem:[%s603 + $0x1a8] sm:$0xff]
        %v714 = vld [vmem:[%s603 + $0x1b0] sm:$0xff]
        %v715 = vld [vmem:[%s603 + $0x1b8] sm:$0xff]
        %v716 = vld [vmem:[%s603 + $0x1c0] sm:$0xff]
        %v717 = vld [vmem:[%s603 + $0x1c8] sm:$0xff]
        %v718 = vld [vmem:[%s603 + $0x1d0] sm:$0xff]
        %v719 = vld [vmem:[%s603 + $0x1d8] sm:$0xff]
        %v720 = vld [vmem:[%s603 + $0x1e0] sm:$0xff]
        %v721 = vld [vmem:[%s603 + $0x1e8] sm:$0xff]
        %v722 = vld [vmem:[%s603 + $0x1f0] sm:$0xff]
        %v723 = vld [vmem:[%s603 + $0x1f8] sm:$0xff]
        %v724 = vld [vmem:[%s1] sm:$0xff]
        %v725 = vld [vmem:[%s1 + $0x8] sm:$0xff]
        %v726 = vld [vmem:[%s1 + $0x10] sm:$0xff]
        %v727 = vld [vmem:[%s1 + $0x18] sm:$0xff]
        %v728 = vld [vmem:[%s3] sm:$0x1]
        %v730 = vlaneseq
        %v731 = vshrl.u32 %v730, 7
        %v732 = vsub.s32 0, %v731
        %v733 = vrot.slane %v728, %v732
        %vm735 = vcmask 261120
        %v737 = vsel %vm735, %v660, 0
        %v740 = vsel %vm735, %v661, 0
        %v743 = vsel %vm735, %v662, 0
        %v746 = vsel %vm735, %v663, 0
        %v749 = vsel %vm735, %v664, 0
        %v752 = vsel %vm735, %v665, 0
        %v755 = vsel %vm735, %v666, 0
        %v758 = vsel %vm735, %v667, 0
        %v761 = vsel %vm735, %v668, 0
        %v764 = vsel %vm735, %v669, 0
        %v767 = vsel %vm735, %v670, 0
        %v770 = vsel %vm735, %v671, 0
        %v773 = vsel %vm735, %v672, 0
        %v776 = vsel %vm735, %v673, 0
        %v779 = vsel %vm735, %v674, 0
        %v782 = vsel %vm735, %v675, 0
        %v785 = vsel %vm735, %v676, 0
        %v788 = vsel %vm735, %v677, 0
        %v791 = vsel %vm735, %v678, 0
        %v794 = vsel %vm735, %v679, 0
        %v797 = vsel %vm735, %v680, 0
        %v800 = vsel %vm735, %v681, 0
        %v803 = vsel %vm735, %v682, 0
        %v806 = vsel %vm735, %v683, 0
        %v809 = vsel %vm735, %v684, 0
        %v812 = vsel %vm735, %v685, 0
        %v815 = vsel %vm735, %v686, 0
        %v818 = vsel %vm735, %v687, 0
        %v821 = vsel %vm735, %v688, 0
        %v824 = vsel %vm735, %v689, 0
        %v827 = vsel %vm735, %v690, 0
        %v830 = vsel %vm735, %v691, 0
        %v833 = vsel %vm735, %v692, 0
        %v836 = vsel %vm735, %v693, 0
        %v839 = vsel %vm735, %v694, 0
        %v842 = vsel %vm735, %v695, 0
        %v845 = vsel %vm735, %v696, 0
        %v848 = vsel %vm735, %v697, 0
        %v851 = vsel %vm735, %v698, 0
        %v854 = vsel %vm735, %v699, 0
        %v857 = vsel %vm735, %v700, 0
        %v860 = vsel %vm735, %v701, 0
        %v863 = vsel %vm735, %v702, 0
        %v866 = vsel %vm735, %v703, 0
        %v869 = vsel %vm735, %v704, 0
        %v872 = vsel %vm735, %v705, 0
        %v875 = vsel %vm735, %v706, 0
        %v878 = vsel %vm735, %v707, 0
        %v881 = vsel %vm735, %v708, 0
        %v884 = vsel %vm735, %v709, 0
        %v887 = vsel %vm735, %v710, 0
        %v890 = vsel %vm735, %v711, 0
        %v893 = vsel %vm735, %v712, 0
        %v896 = vsel %vm735, %v713, 0
        %v899 = vsel %vm735, %v714, 0
        %v902 = vsel %vm735, %v715, 0
        %v905 = vsel %vm735, %v716, 0
        %v908 = vsel %vm735, %v717, 0
        %v911 = vsel %vm735, %v718, 0
        %v914 = vsel %vm735, %v719, 0
        %v917 = vsel %vm735, %v720, 0
        %v920 = vsel %vm735, %v721, 0
        %v923 = vsel %vm735, %v722, 0
        %v926 = vsel %vm735, %v723, 0
        %928 = vmatprep.subr.mxu0 0.0
        %929 = vmatpush1.msra.mxu0 0.0
        %930 = vmatprep.subr.mxu0 0.0
        %931 = vmatpush1.msra.mxu0 0.0
        %932 = vmatprep.subr.mxu0 0.0
        %933 = vmatpush1.msra.mxu0 0.0
        %934 = vmatprep.subr.mxu0 0.0
        %935 = vmatpush1.msra.mxu0 0.0
        %936 = vmatprep.subr.mxu0 0.0
        %937 = vmatpush1.msra.mxu0 0.0
        %938 = vmatprep.subr.mxu0 0.0
        %939 = vmatpush1.msra.mxu0 0.0
        %940 = vmatprep.subr.mxu0 0.0
        %941 = vmatpush1.msra.mxu0 0.0
        %942 = vmatprep.subr.mxu0 0.0
        %943 = vmatpush1.msra.mxu0 0.0
        %944 = vmatprep.subr.mxu0 0.0
        %945 = vmatpush1.msra.mxu0 0.0
        %946 = vmatprep.subr.mxu0 0.0
        %947 = vmatpush1.msra.mxu0 0.0
        %948 = vmatprep.subr.mxu0 0.0
        %949 = vmatpush1.msra.mxu0 0.0
        %950 = vmatprep.subr.mxu0 0.0
        %951 = vmatpush1.msra.mxu0 0.0
        %952 = vmatprep.subr.mxu0 0.0
        %953 = vmatpush1.msra.mxu0 %v727
        %954 = vmatprep.subr.mxu0 0.0
        %955 = vmatpush1.msra.mxu0 %v726
        %956 = vmatprep.subr.mxu0 0.0
        %957 = vmatpush1.msra.mxu0 %v725
        %958 = vmatprep.subr.mxu0 0.0
        %959 = vmatpush1.msra.mxu0 %v724
        %960 = vmatprep.subr.mxu0 0.0
        %961 = vmatpush2.msra.mxu0 0.0
        %962 = vmatprep.subr.mxu0 0.0
        %963 = vmatpush2.msra.mxu0 0.0
        %964 = vmatprep.subr.mxu0 0.0
        %965 = vmatpush2.msra.mxu0 0.0
        %966 = vmatprep.subr.mxu0 0.0
        %967 = vmatpush2.msra.mxu0 0.0
        %968 = vmatprep.subr.mxu0 0.0
        %969 = vmatpush2.msra.mxu0 0.0
        %970 = vmatprep.subr.mxu0 0.0
        %971 = vmatpush2.msra.mxu0 0.0
        %972 = vmatprep.subr.mxu0 0.0
        %973 = vmatpush2.msra.mxu0 0.0
        %974 = vmatprep.subr.mxu0 0.0
        %975 = vmatpush2.msra.mxu0 0.0
        %976 = vmatprep.subr.mxu0 0.0
        %977 = vmatpush2.msra.mxu0 0.0
        %978 = vmatprep.subr.mxu0 0.0
        %979 = vmatpush2.msra.mxu0 0.0
        %980 = vmatprep.subr.mxu0 0.0
        %981 = vmatpush2.msra.mxu0 0.0
        %982 = vmatprep.subr.mxu0 0.0
        %983 = vmatpush2.msra.mxu0 0.0
        %984 = vmatprep.subr.mxu0 0.0
        %985 = vmatpush2.msra.mxu0 0.0
        %986 = vmatprep.subr.mxu0 0.0
        %987 = vmatpush2.msra.mxu0 0.0
        %988 = vmatprep.subr.mxu0 0.0
        %989 = vmatpush2.msra.mxu0 0.0
        %990 = vmatprep.subr.mxu0 0.0
        %991 = vmatpush2.msra.mxu0 0.0
        %992 = vmatprep.mubr.f32.mxu0 0.0
        %993 = vmatmul.mubr.f32.gmra.mxu0 %v737
        %v994 = vpop.f32.mrf.mxu0
        %v995 = vadd.f32 %v733, %v994
        %v996 = vpop.f32.mrf.mxu0
        %997 = vmatprep.mubr.f32.mxu0 0.0
        %998 = vmatmul.mubr.f32.gmra.mxu0 %v740
        %v999 = vpop.f32.mrf.mxu0
        %v1000 = vadd.f32 %v733, %v999
        %v1001 = vpop.f32.mrf.mxu0
        %1002 = vmatprep.mubr.f32.mxu0 0.0
        %1003 = vmatmul.mubr.f32.gmra.mxu0 %v743
        %v1004 = vpop.f32.mrf.mxu0
        %v1005 = vadd.f32 %v733, %v1004
        %v1006 = vpop.f32.mrf.mxu0
        %1007 = vmatprep.mubr.f32.mxu0 0.0
        %1008 = vmatmul.mubr.f32.gmra.mxu0 %v746
        %v1009 = vpop.f32.mrf.mxu0
        %v1010 = vadd.f32 %v733, %v1009
        %v1011 = vpop.f32.mrf.mxu0
        %1012 = vmatprep.mubr.f32.mxu0 0.0
        %1013 = vmatmul.mubr.f32.gmra.mxu0 %v749
        %v1014 = vpop.f32.mrf.mxu0
        %v1015 = vadd.f32 %v733, %v1014
        %v1016 = vpop.f32.mrf.mxu0
        %1017 = vmatprep.mubr.f32.mxu0 0.0
        %1018 = vmatmul.mubr.f32.gmra.mxu0 %v752
        %v1019 = vpop.f32.mrf.mxu0
        %v1020 = vadd.f32 %v733, %v1019
        %v1021 = vpop.f32.mrf.mxu0
        %1022 = vmatprep.mubr.f32.mxu0 0.0
        %1023 = vmatmul.mubr.f32.gmra.mxu0 %v755
        %v1024 = vpop.f32.mrf.mxu0
        %v1025 = vadd.f32 %v733, %v1024
        %v1026 = vpop.f32.mrf.mxu0
        %1027 = vmatprep.mubr.f32.mxu0 0.0
        %1028 = vmatmul.mubr.f32.gmra.mxu0 %v758
        %v1029 = vpop.f32.mrf.mxu0
        %v1030 = vadd.f32 %v733, %v1029
        %v1031 = vpop.f32.mrf.mxu0
        %1032 = vmatprep.mubr.f32.mxu0 0.0
        %1033 = vmatmul.mubr.f32.gmra.mxu0 %v761
        %v1034 = vpop.f32.mrf.mxu0
        %v1035 = vadd.f32 %v733, %v1034
        %v1036 = vpop.f32.mrf.mxu0
        %1037 = vmatprep.mubr.f32.mxu0 0.0
        %1038 = vmatmul.mubr.f32.gmra.mxu0 %v764
        %v1039 = vpop.f32.mrf.mxu0
        %v1040 = vadd.f32 %v733, %v1039
        %v1041 = vpop.f32.mrf.mxu0
        %1042 = vmatprep.mubr.f32.mxu0 0.0
        %1043 = vmatmul.mubr.f32.gmra.mxu0 %v767
        %v1044 = vpop.f32.mrf.mxu0
        %v1045 = vadd.f32 %v733, %v1044
        %v1046 = vpop.f32.mrf.mxu0
        %1047 = vmatprep.mubr.f32.mxu0 0.0
        %1048 = vmatmul.mubr.f32.gmra.mxu0 %v770
        %v1049 = vpop.f32.mrf.mxu0
        %v1050 = vadd.f32 %v733, %v1049
        %v1051 = vpop.f32.mrf.mxu0
        %1052 = vmatprep.mubr.f32.mxu0 0.0
        %1053 = vmatmul.mubr.f32.gmra.mxu0 %v773
        %v1054 = vpop.f32.mrf.mxu0
        %v1055 = vadd.f32 %v733, %v1054
        %v1056 = vpop.f32.mrf.mxu0
        %1057 = vmatprep.mubr.f32.mxu0 0.0
        %1058 = vmatmul.mubr.f32.gmra.mxu0 %v776
        %v1059 = vpop.f32.mrf.mxu0
        %v1060 = vadd.f32 %v733, %v1059
        %v1061 = vpop.f32.mrf.mxu0
        %1062 = vmatprep.mubr.f32.mxu0 0.0
        %1063 = vmatmul.mubr.f32.gmra.mxu0 %v779
        %v1064 = vpop.f32.mrf.mxu0
        %v1065 = vadd.f32 %v733, %v1064
        %v1066 = vpop.f32.mrf.mxu0
        %1067 = vmatprep.mubr.f32.mxu0 0.0
        %1068 = vmatmul.mubr.f32.gmra.mxu0 %v782
        %v1069 = vpop.f32.mrf.mxu0
        %v1070 = vadd.f32 %v733, %v1069
        %v1071 = vpop.f32.mrf.mxu0
        %1072 = vmatprep.mubr.f32.mxu0 0.0
        %1073 = vmatmul.mubr.f32.gmra.mxu0 %v785
        %v1074 = vpop.f32.mrf.mxu0
        %v1075 = vadd.f32 %v733, %v1074
        %v1076 = vpop.f32.mrf.mxu0
        %1077 = vmatprep.mubr.f32.mxu0 0.0
        %1078 = vmatmul.mubr.f32.gmra.mxu0 %v788
        %v1079 = vpop.f32.mrf.mxu0
        %v1080 = vadd.f32 %v733, %v1079
        %v1081 = vpop.f32.mrf.mxu0
        %1082 = vmatprep.mubr.f32.mxu0 0.0
        %1083 = vmatmul.mubr.f32.gmra.mxu0 %v791
        %v1084 = vpop.f32.mrf.mxu0
        %v1085 = vadd.f32 %v733, %v1084
        %v1086 = vpop.f32.mrf.mxu0
        %1087 = vmatprep.mubr.f32.mxu0 0.0
        %1088 = vmatmul.mubr.f32.gmra.mxu0 %v794
        %v1089 = vpop.f32.mrf.mxu0
        %v1090 = vadd.f32 %v733, %v1089
        %v1091 = vpop.f32.mrf.mxu0
        %1092 = vmatprep.mubr.f32.mxu0 0.0
        %1093 = vmatmul.mubr.f32.gmra.mxu0 %v797
        %v1094 = vpop.f32.mrf.mxu0
        %v1095 = vadd.f32 %v733, %v1094
        %v1096 = vpop.f32.mrf.mxu0
        %1097 = vmatprep.mubr.f32.mxu0 0.0
        %1098 = vmatmul.mubr.f32.gmra.mxu0 %v800
        %v1099 = vpop.f32.mrf.mxu0
        %v1100 = vadd.f32 %v733, %v1099
        %v1101 = vpop.f32.mrf.mxu0
        %1102 = vmatprep.mubr.f32.mxu0 0.0
        %1103 = vmatmul.mubr.f32.gmra.mxu0 %v803
        %v1104 = vpop.f32.mrf.mxu0
        %v1105 = vadd.f32 %v733, %v1104
        %v1106 = vpop.f32.mrf.mxu0
        %1107 = vmatprep.mubr.f32.mxu0 0.0
        %1108 = vmatmul.mubr.f32.gmra.mxu0 %v806
        %v1109 = vpop.f32.mrf.mxu0
        %v1110 = vadd.f32 %v733, %v1109
        %v1111 = vpop.f32.mrf.mxu0
        %1112 = vmatprep.mubr.f32.mxu0 0.0
        %1113 = vmatmul.mubr.f32.gmra.mxu0 %v809
        %v1114 = vpop.f32.mrf.mxu0
        %v1115 = vadd.f32 %v733, %v1114
        %v1116 = vpop.f32.mrf.mxu0
        %1117 = vmatprep.mubr.f32.mxu0 0.0
        %1118 = vmatmul.mubr.f32.gmra.mxu0 %v812
        %v1119 = vpop.f32.mrf.mxu0
        %v1120 = vadd.f32 %v733, %v1119
        %v1121 = vpop.f32.mrf.mxu0
        %1122 = vmatprep.mubr.f32.mxu0 0.0
        %1123 = vmatmul.mubr.f32.gmra.mxu0 %v815
        %v1124 = vpop.f32.mrf.mxu0
        %v1125 = vadd.f32 %v733, %v1124
        %v1126 = vpop.f32.mrf.mxu0
        %1127 = vmatprep.mubr.f32.mxu0 0.0
        %1128 = vmatmul.mubr.f32.gmra.mxu0 %v818
        %v1129 = vpop.f32.mrf.mxu0
        %v1130 = vadd.f32 %v733, %v1129
        %v1131 = vpop.f32.mrf.mxu0
        %1132 = vmatprep.mubr.f32.mxu0 0.0
        %1133 = vmatmul.mubr.f32.gmra.mxu0 %v821
        %v1134 = vpop.f32.mrf.mxu0
        %v1135 = vadd.f32 %v733, %v1134
        %v1136 = vpop.f32.mrf.mxu0
        %1137 = vmatprep.mubr.f32.mxu0 0.0
        %1138 = vmatmul.mubr.f32.gmra.mxu0 %v824
        %v1139 = vpop.f32.mrf.mxu0
        %v1140 = vadd.f32 %v733, %v1139
        %v1141 = vpop.f32.mrf.mxu0
        %1142 = vmatprep.mubr.f32.mxu0 0.0
        %1143 = vmatmul.mubr.f32.gmra.mxu0 %v827
        %v1144 = vpop.f32.mrf.mxu0
        %v1145 = vadd.f32 %v733, %v1144
        %v1146 = vpop.f32.mrf.mxu0
        %1147 = vmatprep.mubr.f32.mxu0 0.0
        %1148 = vmatmul.mubr.f32.gmra.mxu0 %v830
        %v1149 = vpop.f32.mrf.mxu0
        %v1150 = vadd.f32 %v733, %v1149
        %v1151 = vpop.f32.mrf.mxu0
        %1152 = vmatprep.mubr.f32.mxu0 0.0
        %1153 = vmatmul.mubr.f32.gmra.mxu0 %v833
        %v1154 = vpop.f32.mrf.mxu0
        %v1155 = vadd.f32 %v733, %v1154
        %v1156 = vpop.f32.mrf.mxu0
        %1157 = vmatprep.mubr.f32.mxu0 0.0
        %1158 = vmatmul.mubr.f32.gmra.mxu0 %v836
        %v1159 = vpop.f32.mrf.mxu0
        %v1160 = vadd.f32 %v733, %v1159
        %v1161 = vpop.f32.mrf.mxu0
        %1162 = vmatprep.mubr.f32.mxu0 0.0
        %1163 = vmatmul.mubr.f32.gmra.mxu0 %v839
        %v1164 = vpop.f32.mrf.mxu0
        %v1165 = vadd.f32 %v733, %v1164
        %v1166 = vpop.f32.mrf.mxu0
        %1167 = vmatprep.mubr.f32.mxu0 0.0
        %1168 = vmatmul.mubr.f32.gmra.mxu0 %v842
        %v1169 = vpop.f32.mrf.mxu0
        %v1170 = vadd.f32 %v733, %v1169
        %v1171 = vpop.f32.mrf.mxu0
        %1172 = vmatprep.mubr.f32.mxu0 0.0
        %1173 = vmatmul.mubr.f32.gmra.mxu0 %v845
        %v1174 = vpop.f32.mrf.mxu0
        %v1175 = vadd.f32 %v733, %v1174
        %v1176 = vpop.f32.mrf.mxu0
        %1177 = vmatprep.mubr.f32.mxu0 0.0
        %1178 = vmatmul.mubr.f32.gmra.mxu0 %v848
        %v1179 = vpop.f32.mrf.mxu0
        %v1180 = vadd.f32 %v733, %v1179
        %v1181 = vpop.f32.mrf.mxu0
        %1182 = vmatprep.mubr.f32.mxu0 0.0
        %1183 = vmatmul.mubr.f32.gmra.mxu0 %v851
        %v1184 = vpop.f32.mrf.mxu0
        %v1185 = vadd.f32 %v733, %v1184
        %v1186 = vpop.f32.mrf.mxu0
        %1187 = vmatprep.mubr.f32.mxu0 0.0
        %1188 = vmatmul.mubr.f32.gmra.mxu0 %v854
        %v1189 = vpop.f32.mrf.mxu0
        %v1190 = vadd.f32 %v733, %v1189
        %v1191 = vpop.f32.mrf.mxu0
        %1192 = vmatprep.mubr.f32.mxu0 0.0
        %1193 = vmatmul.mubr.f32.gmra.mxu0 %v857
        %v1194 = vpop.f32.mrf.mxu0
        %v1195 = vadd.f32 %v733, %v1194
        %v1196 = vpop.f32.mrf.mxu0
        %1197 = vmatprep.mubr.f32.mxu0 0.0
        %1198 = vmatmul.mubr.f32.gmra.mxu0 %v860
        %v1199 = vpop.f32.mrf.mxu0
        %v1200 = vadd.f32 %v733, %v1199
        %v1201 = vpop.f32.mrf.mxu0
        %1202 = vmatprep.mubr.f32.mxu0 0.0
        %1203 = vmatmul.mubr.f32.gmra.mxu0 %v863
        %v1204 = vpop.f32.mrf.mxu0
        %v1205 = vadd.f32 %v733, %v1204
        %v1206 = vpop.f32.mrf.mxu0
        %1207 = vmatprep.mubr.f32.mxu0 0.0
        %1208 = vmatmul.mubr.f32.gmra.mxu0 %v866
        %v1209 = vpop.f32.mrf.mxu0
        %v1210 = vadd.f32 %v733, %v1209
        %v1211 = vpop.f32.mrf.mxu0
        %1212 = vmatprep.mubr.f32.mxu0 0.0
        %1213 = vmatmul.mubr.f32.gmra.mxu0 %v869
        %v1214 = vpop.f32.mrf.mxu0
        %v1215 = vadd.f32 %v733, %v1214
        %v1216 = vpop.f32.mrf.mxu0
        %1217 = vmatprep.mubr.f32.mxu0 0.0
        %1218 = vmatmul.mubr.f32.gmra.mxu0 %v872
        %v1219 = vpop.f32.mrf.mxu0
        %v1220 = vadd.f32 %v733, %v1219
        %v1221 = vpop.f32.mrf.mxu0
        %1222 = vmatprep.mubr.f32.mxu0 0.0
        %1223 = vmatmul.mubr.f32.gmra.mxu0 %v875
        %v1224 = vpop.f32.mrf.mxu0
        %v1225 = vadd.f32 %v733, %v1224
        %v1226 = vpop.f32.mrf.mxu0
        %1227 = vmatprep.mubr.f32.mxu0 0.0
        %1228 = vmatmul.mubr.f32.gmra.mxu0 %v878
        %v1229 = vpop.f32.mrf.mxu0
        %v1230 = vadd.f32 %v733, %v1229
        %v1231 = vpop.f32.mrf.mxu0
        %1232 = vmatprep.mubr.f32.mxu0 0.0
        %1233 = vmatmul.mubr.f32.gmra.mxu0 %v881
        %v1234 = vpop.f32.mrf.mxu0
        %v1235 = vadd.f32 %v733, %v1234
        %v1236 = vpop.f32.mrf.mxu0
        %1237 = vmatprep.mubr.f32.mxu0 0.0
        %1238 = vmatmul.mubr.f32.gmra.mxu0 %v884
        %v1239 = vpop.f32.mrf.mxu0
        %v1240 = vadd.f32 %v733, %v1239
        %v1241 = vpop.f32.mrf.mxu0
        %1242 = vmatprep.mubr.f32.mxu0 0.0
        %1243 = vmatmul.mubr.f32.gmra.mxu0 %v887
        %v1244 = vpop.f32.mrf.mxu0
        %v1245 = vadd.f32 %v733, %v1244
        %v1246 = vpop.f32.mrf.mxu0
        %1247 = vmatprep.mubr.f32.mxu0 0.0
        %1248 = vmatmul.mubr.f32.gmra.mxu0 %v890
        %v1249 = vpop.f32.mrf.mxu0
        %v1250 = vadd.f32 %v733, %v1249
        %v1251 = vpop.f32.mrf.mxu0
        %1252 = vmatprep.mubr.f32.mxu0 0.0
        %1253 = vmatmul.mubr.f32.gmra.mxu0 %v893
        %v1254 = vpop.f32.mrf.mxu0
        %v1255 = vadd.f32 %v733, %v1254
        %v1256 = vpop.f32.mrf.mxu0
        %1257 = vmatprep.mubr.f32.mxu0 0.0
        %1258 = vmatmul.mubr.f32.gmra.mxu0 %v896
        %v1259 = vpop.f32.mrf.mxu0
        %v1260 = vadd.f32 %v733, %v1259
        %v1261 = vpop.f32.mrf.mxu0
        %1262 = vmatprep.mubr.f32.mxu0 0.0
        %1263 = vmatmul.mubr.f32.gmra.mxu0 %v899
        %v1264 = vpop.f32.mrf.mxu0
        %v1265 = vadd.f32 %v733, %v1264
        %v1266 = vpop.f32.mrf.mxu0
        %1267 = vmatprep.mubr.f32.mxu0 0.0
        %1268 = vmatmul.mubr.f32.gmra.mxu0 %v902
        %v1269 = vpop.f32.mrf.mxu0
        %v1270 = vadd.f32 %v733, %v1269
        %v1271 = vpop.f32.mrf.mxu0
        %1272 = vmatprep.mubr.f32.mxu0 0.0
        %1273 = vmatmul.mubr.f32.gmra.mxu0 %v905
        %v1274 = vpop.f32.mrf.mxu0
        %v1275 = vadd.f32 %v733, %v1274
        %v1276 = vpop.f32.mrf.mxu0
        %1277 = vmatprep.mubr.f32.mxu0 0.0
        %1278 = vmatmul.mubr.f32.gmra.mxu0 %v908
        %v1279 = vpop.f32.mrf.mxu0
        %v1280 = vadd.f32 %v733, %v1279
        %v1281 = vpop.f32.mrf.mxu0
        %1282 = vmatprep.mubr.f32.mxu0 0.0
        %1283 = vmatmul.mubr.f32.gmra.mxu0 %v911
        %v1284 = vpop.f32.mrf.mxu0
        %v1285 = vadd.f32 %v733, %v1284
        %v1286 = vpop.f32.mrf.mxu0
        %1287 = vmatprep.mubr.f32.mxu0 0.0
        %1288 = vmatmul.mubr.f32.gmra.mxu0 %v914
        %v1289 = vpop.f32.mrf.mxu0
        %v1290 = vadd.f32 %v733, %v1289
        %v1291 = vpop.f32.mrf.mxu0
        %1292 = vmatprep.mubr.f32.mxu0 0.0
        %1293 = vmatmul.mubr.f32.gmra.mxu0 %v917
        %v1294 = vpop.f32.mrf.mxu0
        %v1295 = vadd.f32 %v733, %v1294
        %v1296 = vpop.f32.mrf.mxu0
        %1297 = vmatprep.mubr.f32.mxu0 0.0
        %1298 = vmatmul.mubr.f32.gmra.mxu0 %v920
        %v1299 = vpop.f32.mrf.mxu0
        %v1300 = vadd.f32 %v733, %v1299
        %v1301 = vpop.f32.mrf.mxu0
        %1302 = vmatprep.mubr.f32.mxu0 0.0
        %1303 = vmatmul.mubr.f32.gmra.mxu0 %v923
        %v1304 = vpop.f32.mrf.mxu0
        %v1305 = vadd.f32 %v733, %v1304
        %v1306 = vpop.f32.mrf.mxu0
        %1307 = vmatprep.mubr.f32.mxu0 0.0
        %1308 = vmatmul.mubr.f32.gmra.mxu0 %v926
        %v1309 = vpop.f32.mrf.mxu0
        %v1310 = vadd.f32 %v733, %v1309
        %v1311 = vpop.f32.mrf.mxu0
        %1312 = vdwg.mxu0
        %1313 = vst [vmem:[#allocation4] sm:$0xff] %v995
        %1314 = vst [vmem:[#allocation4 + $0x8] sm:$0xff] %v1000
        %1315 = vst [vmem:[#allocation4 + $0x10] sm:$0xff] %v1005
        %1316 = vst [vmem:[#allocation4 + $0x18] sm:$0xff] %v1010
        %1317 = vst [vmem:[#allocation4 + $0x20] sm:$0xff] %v1015
        %1318 = vst [vmem:[#allocation4 + $0x28] sm:$0xff] %v1020
        %1319 = vst [vmem:[#allocation4 + $0x30] sm:$0xff] %v1025
        %1320 = vst [vmem:[#allocation4 + $0x38] sm:$0xff] %v1030
        %1321 = vst [vmem:[#allocation4 + $0x40] sm:$0xff] %v1035
        %1322 = vst [vmem:[#allocation4 + $0x48] sm:$0xff] %v1040
        %1323 = vst [vmem:[#allocation4 + $0x50] sm:$0xff] %v1045
        %1324 = vst [vmem:[#allocation4 + $0x58] sm:$0xff] %v1050
        %1325 = vst [vmem:[#allocation4 + $0x60] sm:$0xff] %v1055
        %1326 = vst [vmem:[#allocation4 + $0x68] sm:$0xff] %v1060
        %1327 = vst [vmem:[#allocation4 + $0x70] sm:$0xff] %v1065
        %1328 = vst [vmem:[#allocation4 + $0x78] sm:$0xff] %v1070
        %1329 = vst [vmem:[#allocation4 + $0x80] sm:$0xff] %v1075
        %1330 = vst [vmem:[#allocation4 + $0x88] sm:$0xff] %v1080
        %1331 = vst [vmem:[#allocation4 + $0x90] sm:$0xff] %v1085
        %1332 = vst [vmem:[#allocation4 + $0x98] sm:$0xff] %v1090
        %1333 = vst [vmem:[#allocation4 + $0xa0] sm:$0xff] %v1095
        %1334 = vst [vmem:[#allocation4 + $0xa8] sm:$0xff] %v1100
        %1335 = vst [vmem:[#allocation4 + $0xb0] sm:$0xff] %v1105
        %1336 = vst [vmem:[#allocation4 + $0xb8] sm:$0xff] %v1110
        %1337 = vst [vmem:[#allocation4 + $0xc0] sm:$0xff] %v1115
        %1338 = vst [vmem:[#allocation4 + $0xc8] sm:$0xff] %v1120
        %1339 = vst [vmem:[#allocation4 + $0xd0] sm:$0xff] %v1125
        %1340 = vst [vmem:[#allocation4 + $0xd8] sm:$0xff] %v1130
        %1341 = vst [vmem:[#allocation4 + $0xe0] sm:$0xff] %v1135
        %1342 = vst [vmem:[#allocation4 + $0xe8] sm:$0xff] %v1140
        %1343 = vst [vmem:[#allocation4 + $0xf0] sm:$0xff] %v1145
        %1344 = vst [vmem:[#allocation4 + $0xf8] sm:$0xff] %v1150
        %1345 = vst [vmem:[#allocation4 + $0x100] sm:$0xff] %v1155
        %1346 = vst [vmem:[#allocation4 + $0x108] sm:$0xff] %v1160
        %1347 = vst [vmem:[#allocation4 + $0x110] sm:$0xff] %v1165
        %1348 = vst [vmem:[#allocation4 + $0x118] sm:$0xff] %v1170
        %1349 = vst [vmem:[#allocation4 + $0x120] sm:$0xff] %v1175
        %1350 = vst [vmem:[#allocation4 + $0x128] sm:$0xff] %v1180
        %1351 = vst [vmem:[#allocation4 + $0x130] sm:$0xff] %v1185
        %1352 = vst [vmem:[#allocation4 + $0x138] sm:$0xff] %v1190
        %1353 = vst [vmem:[#allocation4 + $0x140] sm:$0xff] %v1195
        %1354 = vst [vmem:[#allocation4 + $0x148] sm:$0xff] %v1200
        %1355 = vst [vmem:[#allocation4 + $0x150] sm:$0xff] %v1205
        %1356 = vst [vmem:[#allocation4 + $0x158] sm:$0xff] %v1210
        %1357 = vst [vmem:[#allocation4 + $0x160] sm:$0xff] %v1215
        %1358 = vst [vmem:[#allocation4 + $0x168] sm:$0xff] %v1220
        %1359 = vst [vmem:[#allocation4 + $0x170] sm:$0xff] %v1225
        %1360 = vst [vmem:[#allocation4 + $0x178] sm:$0xff] %v1230
        %1361 = vst [vmem:[#allocation4 + $0x180] sm:$0xff] %v1235
        %1362 = vst [vmem:[#allocation4 + $0x188] sm:$0xff] %v1240
        %1363 = vst [vmem:[#allocation4 + $0x190] sm:$0xff] %v1245
        %1364 = vst [vmem:[#allocation4 + $0x198] sm:$0xff] %v1250
        %1365 = vst [vmem:[#allocation4 + $0x1a0] sm:$0xff] %v1255
        %1366 = vst [vmem:[#allocation4 + $0x1a8] sm:$0xff] %v1260
        %1367 = vst [vmem:[#allocation4 + $0x1b0] sm:$0xff] %v1265
        %1368 = vst [vmem:[#allocation4 + $0x1b8] sm:$0xff] %v1270
        %1369 = vst [vmem:[#allocation4 + $0x1c0] sm:$0xff] %v1275
        %1370 = vst [vmem:[#allocation4 + $0x1c8] sm:$0xff] %v1280
        %1371 = vst [vmem:[#allocation4 + $0x1d0] sm:$0xff] %v1285
        %1372 = vst [vmem:[#allocation4 + $0x1d8] sm:$0xff] %v1290
        %1373 = vst [vmem:[#allocation4 + $0x1e0] sm:$0xff] %v1295
        %1374 = vst [vmem:[#allocation4 + $0x1e8] sm:$0xff] %v1300
        %1375 = vst [vmem:[#allocation4 + $0x1f0] sm:$0xff] %v1305
        %1376 = vst [vmem:[#allocation4 + $0x1f8] sm:$0xff] %v1310
        %v1377 = vld [vmem:[%s2] sm:$0xff]
        %v1378 = vld [vmem:[%s2 + $0x8] sm:$0xff]
        %v1379 = vld [vmem:[%s2 + $0x10] sm:$0xff]
        %v1380 = vld [vmem:[%s2 + $0x18] sm:$0xff]
        %v1381 = vlaneseq
        %v1382 = vand.u32 %v1381, 127
        %vm1383 = vcmp.ge.s32.totalorder %v1382, 64
        %vm1384 = vcmp.lt.s32.totalorder %v1382, 96
        %vm1385 = vmand %vm1383, %vm1384
        %v1386 = vld [vmem:[#allocation2] sm:$0xff]
        %v1387 = vld [vmem:[#allocation2 + $0x8] sm:$0xff]
        %v1388 = vld [vmem:[#allocation2 + $0x10] sm:$0xff]
        %v1389 = vld [vmem:[#allocation2 + $0x18] sm:$0xff]
        %v1390 = vld [vmem:[#allocation2 + $0x20] sm:$0xff]
        %v1391 = vld [vmem:[#allocation2 + $0x28] sm:$0xff]
        %v1392 = vld [vmem:[#allocation2 + $0x30] sm:$0xff]
        %v1393 = vld [vmem:[#allocation2 + $0x38] sm:$0xff]
        %v1394 = vld [vmem:[#allocation3] sm:$0xff]
        %v1395 = vld [vmem:[#allocation3 + $0x8] sm:$0xff]
        %v1396 = vld [vmem:[#allocation3 + $0x10] sm:$0xff]
        %v1397 = vld [vmem:[#allocation3 + $0x18] sm:$0xff]
        %v1398 = vld [vmem:[#allocation3 + $0x20] sm:$0xff]
        %v1399 = vld [vmem:[#allocation3 + $0x28] sm:$0xff]
        %v1400 = vld [vmem:[#allocation3 + $0x30] sm:$0xff]
        %v1401 = vld [vmem:[#allocation3 + $0x38] sm:$0xff]
        %v1402 = vld [vmem:[#allocation4] sm:$0xff]
        %v1403 = vld [vmem:[#allocation4 + $0x8] sm:$0xff]
        %v1404 = vld [vmem:[#allocation4 + $0x10] sm:$0xff]
        %v1405 = vld [vmem:[#allocation4 + $0x18] sm:$0xff]
        %v1406 = vld [vmem:[#allocation4 + $0x20] sm:$0xff]
        %v1407 = vld [vmem:[#allocation4 + $0x28] sm:$0xff]
        %v1408 = vld [vmem:[#allocation4 + $0x30] sm:$0xff]
        %v1409 = vld [vmem:[#allocation4 + $0x38] sm:$0xff]
        %v1411 = vsel %vm735, %v1386, 0
        %v1414 = vsel %vm735, %v1387, 0
        %v1417 = vsel %vm735, %v1388, 0
        %v1420 = vsel %vm735, %v1389, 0
        %v1423 = vsel %vm735, %v1390, 0
        %v1426 = vsel %vm735, %v1391, 0
        %v1429 = vsel %vm735, %v1392, 0
        %v1432 = vsel %vm735, %v1393, 0
        %1434 = vmatprep.subr.mxu0 0.0
        %1435 = vmatpush1.msra.mxu0 0.0
        %1436 = vmatprep.subr.mxu0 0.0
        %1437 = vmatpush1.msra.mxu0 0.0
        %1438 = vmatprep.subr.mxu0 0.0
        %1439 = vmatpush1.msra.mxu0 0.0
        %1440 = vmatprep.subr.mxu0 0.0
        %1441 = vmatpush1.msra.mxu0 0.0
        %1442 = vmatprep.subr.mxu0 0.0
        %1443 = vmatpush1.msra.mxu0 0.0
        %1444 = vmatprep.subr.mxu0 0.0
        %1445 = vmatpush1.msra.mxu0 0.0
        %1446 = vmatprep.subr.mxu0 0.0
        %1447 = vmatpush1.msra.mxu0 0.0
        %1448 = vmatprep.subr.mxu0 0.0
        %1449 = vmatpush1.msra.mxu0 0.0
        %1450 = vmatprep.subr.mxu0 0.0
        %1451 = vmatpush1.msra.mxu0 0.0
        %1452 = vmatprep.subr.mxu0 0.0
        %1453 = vmatpush1.msra.mxu0 0.0
        %1454 = vmatprep.subr.mxu0 0.0
        %1455 = vmatpush1.msra.mxu0 0.0
        %1456 = vmatprep.subr.mxu0 0.0
        %1457 = vmatpush1.msra.mxu0 0.0
        %1458 = vmatprep.subr.mxu0 0.0
        %1459 = vmatpush1.msra.mxu0 %v1380
        %1460 = vmatprep.subr.mxu0 0.0
        %1461 = vmatpush1.msra.mxu0 %v1379
        %1462 = vmatprep.subr.mxu0 0.0
        %1463 = vmatpush1.msra.mxu0 %v1378
        %1464 = vmatprep.subr.mxu0 0.0
        %1465 = vmatpush1.msra.mxu0 %v1377
        %1466 = vmatprep.subr.mxu0 0.0
        %1467 = vmatpush2.msra.mxu0 0.0
        %1468 = vmatprep.subr.mxu0 0.0
        %1469 = vmatpush2.msra.mxu0 0.0
        %1470 = vmatprep.subr.mxu0 0.0
        %1471 = vmatpush2.msra.mxu0 0.0
        %1472 = vmatprep.subr.mxu0 0.0
        %1473 = vmatpush2.msra.mxu0 0.0
        %1474 = vmatprep.subr.mxu0 0.0
        %1475 = vmatpush2.msra.mxu0 0.0
        %1476 = vmatprep.subr.mxu0 0.0
        %1477 = vmatpush2.msra.mxu0 0.0
        %1478 = vmatprep.subr.mxu0 0.0
        %1479 = vmatpush2.msra.mxu0 0.0
        %1480 = vmatprep.subr.mxu0 0.0
        %1481 = vmatpush2.msra.mxu0 0.0
        %1482 = vmatprep.subr.mxu0 0.0
        %1483 = vmatpush2.msra.mxu0 0.0
        %1484 = vmatprep.subr.mxu0 0.0
        %1485 = vmatpush2.msra.mxu0 0.0
        %1486 = vmatprep.subr.mxu0 0.0
        %1487 = vmatpush2.msra.mxu0 0.0
        %1488 = vmatprep.subr.mxu0 0.0
        %1489 = vmatpush2.msra.mxu0 0.0
        %1490 = vmatprep.subr.mxu0 0.0
        %1491 = vmatpush2.msra.mxu0 0.0
        %1492 = vmatprep.subr.mxu0 0.0
        %1493 = vmatpush2.msra.mxu0 0.0
        %1494 = vmatprep.subr.mxu0 0.0
        %1495 = vmatpush2.msra.mxu0 0.0
        %1496 = vmatprep.subr.mxu0 0.0
        %1497 = vmatpush2.msra.mxu0 0.0
        %1498 = vmatprep.mubr.f32.mxu0 0.0
        %1499 = vmatmul.mubr.f32.gmra.mxu0 %v1411
        %v1500 = vpop.f32.mrf.mxu0
        %v1501 = vadd.f32 0.0, %v1500
        %v1502 = vpop.f32.mrf.mxu0
        %1503 = vmatprep.mubr.f32.mxu0 0.0
        %1504 = vmatmul.mubr.f32.gmra.mxu0 %v1414
        %v1505 = vpop.f32.mrf.mxu0
        %v1506 = vadd.f32 0.0, %v1505
        %v1507 = vpop.f32.mrf.mxu0
        %1508 = vmatprep.mubr.f32.mxu0 0.0
        %1509 = vmatmul.mubr.f32.gmra.mxu0 %v1417
        %v1510 = vpop.f32.mrf.mxu0
        %v1511 = vadd.f32 0.0, %v1510
        %v1512 = vpop.f32.mrf.mxu0
        %1513 = vmatprep.mubr.f32.mxu0 0.0
        %1514 = vmatmul.mubr.f32.gmra.mxu0 %v1420
        %v1515 = vpop.f32.mrf.mxu0
        %v1516 = vadd.f32 0.0, %v1515
        %v1517 = vpop.f32.mrf.mxu0
        %1518 = vmatprep.mubr.f32.mxu0 0.0
        %1519 = vmatmul.mubr.f32.gmra.mxu0 %v1423
        %v1520 = vpop.f32.mrf.mxu0
        %v1521 = vadd.f32 0.0, %v1520
        %v1522 = vpop.f32.mrf.mxu0
        %1523 = vmatprep.mubr.f32.mxu0 0.0
        %1524 = vmatmul.mubr.f32.gmra.mxu0 %v1426
        %v1525 = vpop.f32.mrf.mxu0
        %v1526 = vadd.f32 0.0, %v1525
        %v1527 = vpop.f32.mrf.mxu0
        %1528 = vmatprep.mubr.f32.mxu0 0.0
        %1529 = vmatmul.mubr.f32.gmra.mxu0 %v1429
        %v1530 = vpop.f32.mrf.mxu0
        %v1531 = vadd.f32 0.0, %v1530
        %v1532 = vpop.f32.mrf.mxu0
        %1533 = vmatprep.mubr.f32.mxu0 0.0
        %1534 = vmatmul.mubr.f32.gmra.mxu0 %v1432
        %v1535 = vpop.f32.mrf.mxu0
        %v1536 = vadd.f32 0.0, %v1535
        %v1537 = vpop.f32.mrf.mxu0
        %1538 = vdwg.mxu0
        %v1539 = vadd.f32 %v1402, %v1501
        %v1540 = vadd.f32 %v1403, %v1506
        %v1541 = vadd.f32 %v1404, %v1511
        %v1542 = vadd.f32 %v1405, %v1516
        %v1543 = vadd.f32 %v1406, %v1521
        %v1544 = vadd.f32 %v1407, %v1526
        %v1545 = vadd.f32 %v1408, %v1531
        %v1546 = vadd.f32 %v1409, %v1536
        %v1547 = vtanh.pop %v1539
        %v1548 = vtanh.pop %v1540
        %v1549 = vtanh.pop %v1541
        %v1550 = vtanh.pop %v1542
        %v1551 = vtanh.pop %v1543
        %v1552 = vtanh.pop %v1544
        %v1553 = vtanh.pop %v1545
        %v1554 = vtanh.pop %v1546
        %v1555 = vxor.u32 %v1539, 2147483648
        %v1556 = vxor.u32 %v1540, 2147483648
        %v1557 = vxor.u32 %v1541, 2147483648
        %v1558 = vxor.u32 %v1542, 2147483648
        %v1559 = vxor.u32 %v1543, 2147483648
        %v1560 = vxor.u32 %v1544, 2147483648
        %v1561 = vxor.u32 %v1545, 2147483648
        %v1562 = vxor.u32 %v1546, 2147483648
        %v1563 = vmul.f32 %v1555, 1.442695
        %v1564 = vpow.pop %v1563
        %v1565 = vmul.f32 %v1556, 1.442695
        %v1566 = vpow.pop %v1565
        %v1567 = vmul.f32 %v1557, 1.442695
        %v1568 = vpow.pop %v1567
        %v1569 = vmul.f32 %v1558, 1.442695
        %v1570 = vpow.pop %v1569
        %v1571 = vmul.f32 %v1559, 1.442695
        %v1572 = vpow.pop %v1571
        %v1573 = vmul.f32 %v1560, 1.442695
        %v1574 = vpow.pop %v1573
        %v1575 = vmul.f32 %v1561, 1.442695
        %v1576 = vpow.pop %v1575
        %v1577 = vmul.f32 %v1562, 1.442695
        %v1578 = vpow.pop %v1577
        %v1579 = vadd.f32 %v1564, 1.0
        %v1580 = vadd.f32 %v1566, 1.0
        %v1581 = vadd.f32 %v1568, 1.0
        %v1582 = vadd.f32 %v1570, 1.0
        %v1583 = vadd.f32 %v1572, 1.0
        %v1584 = vadd.f32 %v1574, 1.0
        %v1585 = vadd.f32 %v1576, 1.0
        %v1586 = vadd.f32 %v1578, 1.0
        %v1587 = vrcp.pop %v1579
        %v1588 = vmul.f32 1.0, %v1587
        %v1589 = vrcp.pop %v1580
        %v1590 = vmul.f32 1.0, %v1589
        %v1591 = vrcp.pop %v1581
        %v1592 = vmul.f32 1.0, %v1591
        %v1593 = vrcp.pop %v1582
        %v1594 = vmul.f32 1.0, %v1593
        %v1595 = vrcp.pop %v1583
        %v1596 = vmul.f32 1.0, %v1595
        %v1597 = vrcp.pop %v1584
        %v1598 = vmul.f32 1.0, %v1597
        %v1599 = vrcp.pop %v1585
        %v1600 = vmul.f32 1.0, %v1599
        %v1601 = vrcp.pop %v1586
        %v1602 = vmul.f32 1.0, %v1601
        %v1603 = vsel %vm1385, %v1547, %v1588
        %v1604 = vsel %vm1385, %v1548, %v1590
        %v1605 = vsel %vm1385, %v1549, %v1592
        %v1606 = vsel %vm1385, %v1550, %v1594
        %v1607 = vsel %vm1385, %v1551, %v1596
        %v1608 = vsel %vm1385, %v1552, %v1598
        %v1609 = vsel %vm1385, %v1553, %v1600
        %v1610 = vsel %vm1385, %v1554, %v1602
        %1619 = vrot.lane.b32.xlu0 %v1394, 32
        %v1620 = vpop.permute.xlu0 %1619
        %1621 = vrot.lane.b32.xlu0 %v1395, 32
        %v1622 = vpop.permute.xlu0 %1621
        %1623 = vrot.lane.b32.xlu0 %v1396, 32
        %v1624 = vpop.permute.xlu0 %1623
        %1625 = vrot.lane.b32.xlu0 %v1397, 32
        %v1626 = vpop.permute.xlu0 %1625
        %1627 = vrot.lane.b32.xlu0 %v1398, 32
        %v1628 = vpop.permute.xlu0 %1627
        %1629 = vrot.lane.b32.xlu0 %v1399, 32
        %v1630 = vpop.permute.xlu0 %1629
        %1631 = vrot.lane.b32.xlu0 %v1400, 32
        %v1632 = vpop.permute.xlu0 %1631
        %1633 = vrot.lane.b32.xlu0 %v1401, 32
        %v1634 = vpop.permute.xlu0 %1633
        %v1643 = vmul.f32 %v1603, %v1620
        %v1644 = vmul.f32 %v1604, %v1622
        %v1645 = vmul.f32 %v1605, %v1624
        %v1646 = vmul.f32 %v1606, %v1626
        %v1647 = vmul.f32 %v1607, %v1628
        %v1648 = vmul.f32 %v1608, %v1630
        %v1649 = vmul.f32 %v1609, %v1632
        %v1650 = vmul.f32 %v1610, %v1634
        %1659 = vrot.lane.b32.xlu0 %v1603, 64
        %v1660 = vpop.permute.xlu0 %1659
        %1661 = vrot.lane.b32.xlu0 %v1604, 64
        %v1662 = vpop.permute.xlu0 %1661
        %1663 = vrot.lane.b32.xlu0 %v1605, 64
        %v1664 = vpop.permute.xlu0 %1663
        %1665 = vrot.lane.b32.xlu0 %v1606, 64
        %v1666 = vpop.permute.xlu0 %1665
        %1667 = vrot.lane.b32.xlu0 %v1607, 64
        %v1668 = vpop.permute.xlu0 %1667
        %1669 = vrot.lane.b32.xlu0 %v1608, 64
        %v1670 = vpop.permute.xlu0 %1669
        %1671 = vrot.lane.b32.xlu0 %v1609, 64
        %v1672 = vpop.permute.xlu0 %1671
        %1673 = vrot.lane.b32.xlu0 %v1610, 64
        %v1674 = vpop.permute.xlu0 %1673
        %v1683 = vmul.f32 %v1603, %v1660
        %v1684 = vmul.f32 %v1604, %v1662
        %v1685 = vmul.f32 %v1605, %v1664
        %v1686 = vmul.f32 %v1606, %v1666
        %v1687 = vmul.f32 %v1607, %v1668
        %v1688 = vmul.f32 %v1608, %v1670
        %v1689 = vmul.f32 %v1609, %v1672
        %v1690 = vmul.f32 %v1610, %v1674
        %1699 = vrot.lane.b32.xlu0 %v1683, 32
        %v1700 = vpop.permute.xlu0 %1699
        %1701 = vrot.lane.b32.xlu0 %v1684, 32
        %v1702 = vpop.permute.xlu0 %1701
        %1703 = vrot.lane.b32.xlu0 %v1685, 32
        %v1704 = vpop.permute.xlu0 %1703
        %1705 = vrot.lane.b32.xlu0 %v1686, 32
        %v1706 = vpop.permute.xlu0 %1705
        %1707 = vrot.lane.b32.xlu0 %v1687, 32
        %v1708 = vpop.permute.xlu0 %1707
        %1709 = vrot.lane.b32.xlu0 %v1688, 32
        %v1710 = vpop.permute.xlu0 %1709
        %1711 = vrot.lane.b32.xlu0 %v1689, 32
        %v1712 = vpop.permute.xlu0 %1711
        %1713 = vrot.lane.b32.xlu0 %v1690, 32
        %v1714 = vpop.permute.xlu0 %1713
        %v1723 = vadd.f32 %v1643, %v1700
        %v1724 = vadd.f32 %v1644, %v1702
        %v1725 = vadd.f32 %v1645, %v1704
        %v1726 = vadd.f32 %v1646, %v1706
        %v1727 = vadd.f32 %v1647, %v1708
        %v1728 = vadd.f32 %v1648, %v1710
        %v1729 = vadd.f32 %v1649, %v1712
        %v1730 = vadd.f32 %v1650, %v1714
        %v1731 = vtanh.pop %v1723
        %v1732 = vtanh.pop %v1724
        %v1733 = vtanh.pop %v1725
        %v1734 = vtanh.pop %v1726
        %v1735 = vtanh.pop %v1727
        %v1736 = vtanh.pop %v1728
        %v1737 = vtanh.pop %v1729
        %v1738 = vtanh.pop %v1730
        %1747 = vrot.lane.b32.xlu0 %v1731, 64
        %v1748 = vpop.permute.xlu0 %1747
        %1749 = vrot.lane.b32.xlu0 %v1732, 64
        %v1750 = vpop.permute.xlu0 %1749
        %1751 = vrot.lane.b32.xlu0 %v1733, 64
        %v1752 = vpop.permute.xlu0 %1751
        %1753 = vrot.lane.b32.xlu0 %v1734, 64
        %v1754 = vpop.permute.xlu0 %1753
        %1755 = vrot.lane.b32.xlu0 %v1735, 64
        %v1756 = vpop.permute.xlu0 %1755
        %1757 = vrot.lane.b32.xlu0 %v1736, 64
        %v1758 = vpop.permute.xlu0 %1757
        %1759 = vrot.lane.b32.xlu0 %v1737, 64
        %v1760 = vpop.permute.xlu0 %1759
        %1761 = vrot.lane.b32.xlu0 %v1738, 64
        %v1762 = vpop.permute.xlu0 %1761
        %v1771 = vmul.f32 %v1603, %v1748
        %v1772 = vmul.f32 %v1604, %v1750
        %v1773 = vmul.f32 %v1605, %v1752
        %v1774 = vmul.f32 %v1606, %v1754
        %v1775 = vmul.f32 %v1607, %v1756
        %v1776 = vmul.f32 %v1608, %v1758
        %v1777 = vmul.f32 %v1609, %v1760
        %v1778 = vmul.f32 %v1610, %v1762
        %s1779 = scalar_lea.vmem [#allocation4], 64
        %v1780 = vld [vmem:[%s1779] sm:$0xff]
        %v1781 = vld [vmem:[%s1779 + $0x8] sm:$0xff]
        %v1782 = vld [vmem:[%s1779 + $0x10] sm:$0xff]
        %v1783 = vld [vmem:[%s1779 + $0x18] sm:$0xff]
        %v1784 = vld [vmem:[%s1779 + $0x20] sm:$0xff]
        %v1785 = vld [vmem:[%s1779 + $0x28] sm:$0xff]
        %v1786 = vld [vmem:[%s1779 + $0x30] sm:$0xff]
        %v1787 = vld [vmem:[%s1779 + $0x38] sm:$0xff]
        %1796 = vrot.lane.b32.xlu0 %v1771, 32
        %v1797 = vpop.permute.xlu0 %1796
        %1798 = vrot.lane.b32.xlu0 %v1772, 32
        %v1799 = vpop.permute.xlu0 %1798
        %1800 = vrot.lane.b32.xlu0 %v1773, 32
        %v1801 = vpop.permute.xlu0 %1800
        %1802 = vrot.lane.b32.xlu0 %v1774, 32
        %v1803 = vpop.permute.xlu0 %1802
        %1804 = vrot.lane.b32.xlu0 %v1775, 32
        %v1805 = vpop.permute.xlu0 %1804
        %1806 = vrot.lane.b32.xlu0 %v1776, 32
        %v1807 = vpop.permute.xlu0 %1806
        %1808 = vrot.lane.b32.xlu0 %v1777, 32
        %v1809 = vpop.permute.xlu0 %1808
        %1810 = vrot.lane.b32.xlu0 %v1778, 32
        %v1811 = vpop.permute.xlu0 %1810
        %v1812 = vsel %vm735, %v1797, 0
        %v1814 = vsel %vm735, %v1799, 0
        %v1816 = vsel %vm735, %v1801, 0
        %v1818 = vsel %vm735, %v1803, 0
        %v1820 = vsel %vm735, %v1805, 0
        %v1822 = vsel %vm735, %v1807, 0
        %v1824 = vsel %vm735, %v1809, 0
        %v1826 = vsel %vm735, %v1811, 0
        %1828 = vmatprep.subr.mxu0 0.0
        %1829 = vmatpush1.msra.mxu0 0.0
        %1830 = vmatprep.subr.mxu0 0.0
        %1831 = vmatpush1.msra.mxu0 0.0
        %1832 = vmatprep.subr.mxu0 0.0
        %1833 = vmatpush1.msra.mxu0 0.0
        %1834 = vmatprep.subr.mxu0 0.0
        %1835 = vmatpush1.msra.mxu0 0.0
        %1836 = vmatprep.subr.mxu0 0.0
        %1837 = vmatpush1.msra.mxu0 0.0
        %1838 = vmatprep.subr.mxu0 0.0
        %1839 = vmatpush1.msra.mxu0 0.0
        %1840 = vmatprep.subr.mxu0 0.0
        %1841 = vmatpush1.msra.mxu0 0.0
        %1842 = vmatprep.subr.mxu0 0.0
        %1843 = vmatpush1.msra.mxu0 0.0
        %1844 = vmatprep.subr.mxu0 0.0
        %1845 = vmatpush1.msra.mxu0 0.0
        %1846 = vmatprep.subr.mxu0 0.0
        %1847 = vmatpush1.msra.mxu0 0.0
        %1848 = vmatprep.subr.mxu0 0.0
        %1849 = vmatpush1.msra.mxu0 0.0
        %1850 = vmatprep.subr.mxu0 0.0
        %1851 = vmatpush1.msra.mxu0 0.0
        %1852 = vmatprep.subr.mxu0 0.0
        %1853 = vmatpush1.msra.mxu0 %v1380
        %1854 = vmatprep.subr.mxu0 0.0
        %1855 = vmatpush1.msra.mxu0 %v1379
        %1856 = vmatprep.subr.mxu0 0.0
        %1857 = vmatpush1.msra.mxu0 %v1378
        %1858 = vmatprep.subr.mxu0 0.0
        %1859 = vmatpush1.msra.mxu0 %v1377
        %1860 = vmatprep.subr.mxu0 0.0
        %1861 = vmatpush2.msra.mxu0 0.0
        %1862 = vmatprep.subr.mxu0 0.0
        %1863 = vmatpush2.msra.mxu0 0.0
        %1864 = vmatprep.subr.mxu0 0.0
        %1865 = vmatpush2.msra.mxu0 0.0
        %1866 = vmatprep.subr.mxu0 0.0
        %1867 = vmatpush2.msra.mxu0 0.0
        %1868 = vmatprep.subr.mxu0 0.0
        %1869 = vmatpush2.msra.mxu0 0.0
        %1870 = vmatprep.subr.mxu0 0.0
        %1871 = vmatpush2.msra.mxu0 0.0
        %1872 = vmatprep.subr.mxu0 0.0
        %1873 = vmatpush2.msra.mxu0 0.0
        %1874 = vmatprep.subr.mxu0 0.0
        %1875 = vmatpush2.msra.mxu0 0.0
        %1876 = vmatprep.subr.mxu0 0.0
        %1877 = vmatpush2.msra.mxu0 0.0
        %1878 = vmatprep.subr.mxu0 0.0
        %1879 = vmatpush2.msra.mxu0 0.0
        %1880 = vmatprep.subr.mxu0 0.0
        %1881 = vmatpush2.msra.mxu0 0.0
        %1882 = vmatprep.subr.mxu0 0.0
        %1883 = vmatpush2.msra.mxu0 0.0
        %1884 = vmatprep.subr.mxu0 0.0
        %1885 = vmatpush2.msra.mxu0 0.0
        %1886 = vmatprep.subr.mxu0 0.0
        %1887 = vmatpush2.msra.mxu0 0.0
        %1888 = vmatprep.subr.mxu0 0.0
        %1889 = vmatpush2.msra.mxu0 0.0
        %1890 = vmatprep.subr.mxu0 0.0
        %1891 = vmatpush2.msra.mxu0 0.0
        %1892 = vmatprep.mubr.f32.mxu0 0.0
        %1893 = vmatmul.mubr.f32.gmra.mxu0 %v1812
        %v1894 = vpop.f32.mrf.mxu0
        %v1895 = vadd.f32 0.0, %v1894
        %v1896 = vpop.f32.mrf.mxu0
        %1897 = vmatprep.mubr.f32.mxu0 0.0
        %1898 = vmatmul.mubr.f32.gmra.mxu0 %v1814
        %v1899 = vpop.f32.mrf.mxu0
        %v1900 = vadd.f32 0.0, %v1899
        %v1901 = vpop.f32.mrf.mxu0
        %1902 = vmatprep.mubr.f32.mxu0 0.0
        %1903 = vmatmul.mubr.f32.gmra.mxu0 %v1816
        %v1904 = vpop.f32.mrf.mxu0
        %v1905 = vadd.f32 0.0, %v1904
        %v1906 = vpop.f32.mrf.mxu0
        %1907 = vmatprep.mubr.f32.mxu0 0.0
        %1908 = vmatmul.mubr.f32.gmra.mxu0 %v1818
        %v1909 = vpop.f32.mrf.mxu0
        %v1910 = vadd.f32 0.0, %v1909
        %v1911 = vpop.f32.mrf.mxu0
        %1912 = vmatprep.mubr.f32.mxu0 0.0
        %1913 = vmatmul.mubr.f32.gmra.mxu0 %v1820
        %v1914 = vpop.f32.mrf.mxu0
        %v1915 = vadd.f32 0.0, %v1914
        %v1916 = vpop.f32.mrf.mxu0
        %1917 = vmatprep.mubr.f32.mxu0 0.0
        %1918 = vmatmul.mubr.f32.gmra.mxu0 %v1822
        %v1919 = vpop.f32.mrf.mxu0
        %v1920 = vadd.f32 0.0, %v1919
        %v1921 = vpop.f32.mrf.mxu0
        %1922 = vmatprep.mubr.f32.mxu0 0.0
        %1923 = vmatmul.mubr.f32.gmra.mxu0 %v1824
        %v1924 = vpop.f32.mrf.mxu0
        %v1925 = vadd.f32 0.0, %v1924
        %v1926 = vpop.f32.mrf.mxu0
        %1927 = vmatprep.mubr.f32.mxu0 0.0
        %1928 = vmatmul.mubr.f32.gmra.mxu0 %v1826
        %v1929 = vpop.f32.mrf.mxu0
        %v1930 = vadd.f32 0.0, %v1929
        %v1931 = vpop.f32.mrf.mxu0
        %1932 = vdwg.mxu0
        %v1933 = vadd.f32 %v1780, %v1895
        %v1934 = vadd.f32 %v1781, %v1900
        %v1935 = vadd.f32 %v1782, %v1905
        %v1936 = vadd.f32 %v1783, %v1910
        %v1937 = vadd.f32 %v1784, %v1915
        %v1938 = vadd.f32 %v1785, %v1920
        %v1939 = vadd.f32 %v1786, %v1925
        %v1940 = vadd.f32 %v1787, %v1930
        %v1941 = vtanh.pop %v1933
        %v1942 = vtanh.pop %v1934
        %v1943 = vtanh.pop %v1935
        %v1944 = vtanh.pop %v1936
        %v1945 = vtanh.pop %v1937
        %v1946 = vtanh.pop %v1938
        %v1947 = vtanh.pop %v1939
        %v1948 = vtanh.pop %v1940
        %v1949 = vxor.u32 %v1933, 2147483648
        %v1950 = vxor.u32 %v1934, 2147483648
        %v1951 = vxor.u32 %v1935, 2147483648
        %v1952 = vxor.u32 %v1936, 2147483648
        %v1953 = vxor.u32 %v1937, 2147483648
        %v1954 = vxor.u32 %v1938, 2147483648
        %v1955 = vxor.u32 %v1939, 2147483648
        %v1956 = vxor.u32 %v1940, 2147483648
        %v1957 = vmul.f32 %v1949, 1.442695
        %v1958 = vpow.pop %v1957
        %v1959 = vmul.f32 %v1950, 1.442695
        %v1960 = vpow.pop %v1959
        %v1961 = vmul.f32 %v1951, 1.442695
        %v1962 = vpow.pop %v1961
        %v1963 = vmul.f32 %v1952, 1.442695
        %v1964 = vpow.pop %v1963
        %v1965 = vmul.f32 %v1953, 1.442695
        %v1966 = vpow.pop %v1965
        %v1967 = vmul.f32 %v1954, 1.442695
        %v1968 = vpow.pop %v1967
        %v1969 = vmul.f32 %v1955, 1.442695
        %v1970 = vpow.pop %v1969
        %v1971 = vmul.f32 %v1956, 1.442695
        %v1972 = vpow.pop %v1971
        %v1973 = vadd.f32 %v1958, 1.0
        %v1974 = vadd.f32 %v1960, 1.0
        %v1975 = vadd.f32 %v1962, 1.0
        %v1976 = vadd.f32 %v1964, 1.0
        %v1977 = vadd.f32 %v1966, 1.0
        %v1978 = vadd.f32 %v1968, 1.0
        %v1979 = vadd.f32 %v1970, 1.0
        %v1980 = vadd.f32 %v1972, 1.0
        %v1981 = vrcp.pop %v1973
        %v1982 = vmul.f32 1.0, %v1981
        %v1983 = vrcp.pop %v1974
        %v1984 = vmul.f32 1.0, %v1983
        %v1985 = vrcp.pop %v1975
        %v1986 = vmul.f32 1.0, %v1985
        %v1987 = vrcp.pop %v1976
        %v1988 = vmul.f32 1.0, %v1987
        %v1989 = vrcp.pop %v1977
        %v1990 = vmul.f32 1.0, %v1989
        %v1991 = vrcp.pop %v1978
        %v1992 = vmul.f32 1.0, %v1991
        %v1993 = vrcp.pop %v1979
        %v1994 = vmul.f32 1.0, %v1993
        %v1995 = vrcp.pop %v1980
        %v1996 = vmul.f32 1.0, %v1995
        %v1997 = vsel %vm1385, %v1941, %v1982
        %v1998 = vsel %vm1385, %v1942, %v1984
        %v1999 = vsel %vm1385, %v1943, %v1986
        %v2000 = vsel %vm1385, %v1944, %v1988
        %v2001 = vsel %vm1385, %v1945, %v1990
        %v2002 = vsel %vm1385, %v1946, %v1992
        %v2003 = vsel %vm1385, %v1947, %v1994
        %v2004 = vsel %vm1385, %v1948, %v1996
        %v2005 = vmul.f32 %v1997, %v1723
        %v2006 = vmul.f32 %v1998, %v1724
        %v2007 = vmul.f32 %v1999, %v1725
        %v2008 = vmul.f32 %v2000, %v1726
        %v2009 = vmul.f32 %v2001, %v1727
        %v2010 = vmul.f32 %v2002, %v1728
        %v2011 = vmul.f32 %v2003, %v1729
        %v2012 = vmul.f32 %v2004, %v1730
        %2021 = vrot.lane.b32.xlu0 %v1997, 64
        %v2022 = vpop.permute.xlu0 %2021
        %2023 = vrot.lane.b32.xlu0 %v1998, 64
        %v2024 = vpop.permute.xlu0 %2023
        %2025 = vrot.lane.b32.xlu0 %v1999, 64
        %v2026 = vpop.permute.xlu0 %2025
        %2027 = vrot.lane.b32.xlu0 %v2000, 64
        %v2028 = vpop.permute.xlu0 %2027
        %2029 = vrot.lane.b32.xlu0 %v2001, 64
        %v2030 = vpop.permute.xlu0 %2029
        %2031 = vrot.lane.b32.xlu0 %v2002, 64
        %v2032 = vpop.permute.xlu0 %2031
        %2033 = vrot.lane.b32.xlu0 %v2003, 64
        %v2034 = vpop.permute.xlu0 %2033
        %2035 = vrot.lane.b32.xlu0 %v2004, 64
        %v2036 = vpop.permute.xlu0 %2035
        %v2045 = vmul.f32 %v1997, %v2022
        %v2046 = vmul.f32 %v1998, %v2024
        %v2047 = vmul.f32 %v1999, %v2026
        %v2048 = vmul.f32 %v2000, %v2028
        %v2049 = vmul.f32 %v2001, %v2030
        %v2050 = vmul.f32 %v2002, %v2032
        %v2051 = vmul.f32 %v2003, %v2034
        %v2052 = vmul.f32 %v2004, %v2036
        %2061 = vrot.lane.b32.xlu0 %v2045, 32
        %v2062 = vpop.permute.xlu0 %2061
        %2063 = vrot.lane.b32.xlu0 %v2046, 32
        %v2064 = vpop.permute.xlu0 %2063
        %2065 = vrot.lane.b32.xlu0 %v2047, 32
        %v2066 = vpop.permute.xlu0 %2065
        %2067 = vrot.lane.b32.xlu0 %v2048, 32
        %v2068 = vpop.permute.xlu0 %2067
        %2069 = vrot.lane.b32.xlu0 %v2049, 32
        %v2070 = vpop.permute.xlu0 %2069
        %2071 = vrot.lane.b32.xlu0 %v2050, 32
        %v2072 = vpop.permute.xlu0 %2071
        %2073 = vrot.lane.b32.xlu0 %v2051, 32
        %v2074 = vpop.permute.xlu0 %2073
        %2075 = vrot.lane.b32.xlu0 %v2052, 32
        %v2076 = vpop.permute.xlu0 %2075
        %v2085 = vadd.f32 %v2005, %v2062
        %v2086 = vadd.f32 %v2006, %v2064
        %v2087 = vadd.f32 %v2007, %v2066
        %v2088 = vadd.f32 %v2008, %v2068
        %v2089 = vadd.f32 %v2009, %v2070
        %v2090 = vadd.f32 %v2010, %v2072
        %v2091 = vadd.f32 %v2011, %v2074
        %v2092 = vadd.f32 %v2012, %v2076
        %v2093 = vtanh.pop %v2085
        %v2094 = vtanh.pop %v2086
        %v2095 = vtanh.pop %v2087
        %v2096 = vtanh.pop %v2088
        %v2097 = vtanh.pop %v2089
        %v2098 = vtanh.pop %v2090
        %v2099 = vtanh.pop %v2091
        %v2100 = vtanh.pop %v2092
        %2109 = vrot.lane.b32.xlu0 %v2093, 64
        %v2110 = vpop.permute.xlu0 %2109
        %2111 = vrot.lane.b32.xlu0 %v2094, 64
        %v2112 = vpop.permute.xlu0 %2111
        %2113 = vrot.lane.b32.xlu0 %v2095, 64
        %v2114 = vpop.permute.xlu0 %2113
        %2115 = vrot.lane.b32.xlu0 %v2096, 64
        %v2116 = vpop.permute.xlu0 %2115
        %2117 = vrot.lane.b32.xlu0 %v2097, 64
        %v2118 = vpop.permute.xlu0 %2117
        %2119 = vrot.lane.b32.xlu0 %v2098, 64
        %v2120 = vpop.permute.xlu0 %2119
        %2121 = vrot.lane.b32.xlu0 %v2099, 64
        %v2122 = vpop.permute.xlu0 %2121
        %2123 = vrot.lane.b32.xlu0 %v2100, 64
        %v2124 = vpop.permute.xlu0 %2123
        %v2133 = vmul.f32 %v1997, %v2110
        %v2134 = vmul.f32 %v1998, %v2112
        %v2135 = vmul.f32 %v1999, %v2114
        %v2136 = vmul.f32 %v2000, %v2116
        %v2137 = vmul.f32 %v2001, %v2118
        %v2138 = vmul.f32 %v2002, %v2120
        %v2139 = vmul.f32 %v2003, %v2122
        %v2140 = vmul.f32 %v2004, %v2124
        %s2141 = scalar_lea.vmem [#allocation4], 128
        %v2142 = vld [vmem:[%s2141] sm:$0xff]
        %v2143 = vld [vmem:[%s2141 + $0x8] sm:$0xff]
        %v2144 = vld [vmem:[%s2141 + $0x10] sm:$0xff]
        %v2145 = vld [vmem:[%s2141 + $0x18] sm:$0xff]
        %v2146 = vld [vmem:[%s2141 + $0x20] sm:$0xff]
        %v2147 = vld [vmem:[%s2141 + $0x28] sm:$0xff]
        %v2148 = vld [vmem:[%s2141 + $0x30] sm:$0xff]
        %v2149 = vld [vmem:[%s2141 + $0x38] sm:$0xff]
        %2158 = vrot.lane.b32.xlu0 %v2133, 32
        %v2159 = vpop.permute.xlu0 %2158
        %2160 = vrot.lane.b32.xlu0 %v2134, 32
        %v2161 = vpop.permute.xlu0 %2160
        %2162 = vrot.lane.b32.xlu0 %v2135, 32
        %v2163 = vpop.permute.xlu0 %2162
        %2164 = vrot.lane.b32.xlu0 %v2136, 32
        %v2165 = vpop.permute.xlu0 %2164
        %2166 = vrot.lane.b32.xlu0 %v2137, 32
        %v2167 = vpop.permute.xlu0 %2166
        %2168 = vrot.lane.b32.xlu0 %v2138, 32
        %v2169 = vpop.permute.xlu0 %2168
        %2170 = vrot.lane.b32.xlu0 %v2139, 32
        %v2171 = vpop.permute.xlu0 %2170
        %2172 = vrot.lane.b32.xlu0 %v2140, 32
        %v2173 = vpop.permute.xlu0 %2172
        %v2174 = vsel %vm735, %v2159, 0
        %v2176 = vsel %vm735, %v2161, 0
        %v2178 = vsel %vm735, %v2163, 0
        %v2180 = vsel %vm735, %v2165, 0
        %v2182 = vsel %vm735, %v2167, 0
        %v2184 = vsel %vm735, %v2169, 0
        %v2186 = vsel %vm735, %v2171, 0
        %v2188 = vsel %vm735, %v2173, 0
        %2190 = vmatprep.subr.mxu0 0.0
        %2191 = vmatpush1.msra.mxu0 0.0
        %2192 = vmatprep.subr.mxu0 0.0
        %2193 = vmatpush1.msra.mxu0 0.0
        %2194 = vmatprep.subr.mxu0 0.0
        %2195 = vmatpush1.msra.mxu0 0.0
        %2196 = vmatprep.subr.mxu0 0.0
        %2197 = vmatpush1.msra.mxu0 0.0
        %2198 = vmatprep.subr.mxu0 0.0
        %2199 = vmatpush1.msra.mxu0 0.0
        %2200 = vmatprep.subr.mxu0 0.0
        %2201 = vmatpush1.msra.mxu0 0.0
        %2202 = vmatprep.subr.mxu0 0.0
        %2203 = vmatpush1.msra.mxu0 0.0
        %2204 = vmatprep.subr.mxu0 0.0
        %2205 = vmatpush1.msra.mxu0 0.0
        %2206 = vmatprep.subr.mxu0 0.0
        %2207 = vmatpush1.msra.mxu0 0.0
        %2208 = vmatprep.subr.mxu0 0.0
        %2209 = vmatpush1.msra.mxu0 0.0
        %2210 = vmatprep.subr.mxu0 0.0
        %2211 = vmatpush1.msra.mxu0 0.0
        %2212 = vmatprep.subr.mxu0 0.0
        %2213 = vmatpush1.msra.mxu0 0.0
        %2214 = vmatprep.subr.mxu0 0.0
        %2215 = vmatpush1.msra.mxu0 %v1380
        %2216 = vmatprep.subr.mxu0 0.0
        %2217 = vmatpush1.msra.mxu0 %v1379
        %2218 = vmatprep.subr.mxu0 0.0
        %2219 = vmatpush1.msra.mxu0 %v1378
        %2220 = vmatprep.subr.mxu0 0.0
        %2221 = vmatpush1.msra.mxu0 %v1377
        %2222 = vmatprep.subr.mxu0 0.0
        %2223 = vmatpush2.msra.mxu0 0.0
        %2224 = vmatprep.subr.mxu0 0.0
        %2225 = vmatpush2.msra.mxu0 0.0
        %2226 = vmatprep.subr.mxu0 0.0
        %2227 = vmatpush2.msra.mxu0 0.0
        %2228 = vmatprep.subr.mxu0 0.0
        %2229 = vmatpush2.msra.mxu0 0.0
        %2230 = vmatprep.subr.mxu0 0.0
        %2231 = vmatpush2.msra.mxu0 0.0
        %2232 = vmatprep.subr.mxu0 0.0
        %2233 = vmatpush2.msra.mxu0 0.0
        %2234 = vmatprep.subr.mxu0 0.0
        %2235 = vmatpush2.msra.mxu0 0.0
        %2236 = vmatprep.subr.mxu0 0.0
        %2237 = vmatpush2.msra.mxu0 0.0
        %2238 = vmatprep.subr.mxu0 0.0
        %2239 = vmatpush2.msra.mxu0 0.0
        %2240 = vmatprep.subr.mxu0 0.0
        %2241 = vmatpush2.msra.mxu0 0.0
        %2242 = vmatprep.subr.mxu0 0.0
        %2243 = vmatpush2.msra.mxu0 0.0
        %2244 = vmatprep.subr.mxu0 0.0
        %2245 = vmatpush2.msra.mxu0 0.0
        %2246 = vmatprep.subr.mxu0 0.0
        %2247 = vmatpush2.msra.mxu0 0.0
        %2248 = vmatprep.subr.mxu0 0.0
        %2249 = vmatpush2.msra.mxu0 0.0
        %2250 = vmatprep.subr.mxu0 0.0
        %2251 = vmatpush2.msra.mxu0 0.0
        %2252 = vmatprep.subr.mxu0 0.0
        %2253 = vmatpush2.msra.mxu0 0.0
        %2254 = vmatprep.mubr.f32.mxu0 0.0
        %2255 = vmatmul.mubr.f32.gmra.mxu0 %v2174
        %v2256 = vpop.f32.mrf.mxu0
        %v2257 = vadd.f32 0.0, %v2256
        %v2258 = vpop.f32.mrf.mxu0
        %2259 = vmatprep.mubr.f32.mxu0 0.0
        %2260 = vmatmul.mubr.f32.gmra.mxu0 %v2176
        %v2261 = vpop.f32.mrf.mxu0
        %v2262 = vadd.f32 0.0, %v2261
        %v2263 = vpop.f32.mrf.mxu0
        %2264 = vmatprep.mubr.f32.mxu0 0.0
        %2265 = vmatmul.mubr.f32.gmra.mxu0 %v2178
        %v2266 = vpop.f32.mrf.mxu0
        %v2267 = vadd.f32 0.0, %v2266
        %v2268 = vpop.f32.mrf.mxu0
        %2269 = vmatprep.mubr.f32.mxu0 0.0
        %2270 = vmatmul.mubr.f32.gmra.mxu0 %v2180
        %v2271 = vpop.f32.mrf.mxu0
        %v2272 = vadd.f32 0.0, %v2271
        %v2273 = vpop.f32.mrf.mxu0
        %2274 = vmatprep.mubr.f32.mxu0 0.0
        %2275 = vmatmul.mubr.f32.gmra.mxu0 %v2182
        %v2276 = vpop.f32.mrf.mxu0
        %v2277 = vadd.f32 0.0, %v2276
        %v2278 = vpop.f32.mrf.mxu0
        %2279 = vmatprep.mubr.f32.mxu0 0.0
        %2280 = vmatmul.mubr.f32.gmra.mxu0 %v2184
        %v2281 = vpop.f32.mrf.mxu0
        %v2282 = vadd.f32 0.0, %v2281
        %v2283 = vpop.f32.mrf.mxu0
        %2284 = vmatprep.mubr.f32.mxu0 0.0
        %2285 = vmatmul.mubr.f32.gmra.mxu0 %v2186
        %v2286 = vpop.f32.mrf.mxu0
        %v2287 = vadd.f32 0.0, %v2286
        %v2288 = vpop.f32.mrf.mxu0
        %2289 = vmatprep.mubr.f32.mxu0 0.0
        %2290 = vmatmul.mubr.f32.gmra.mxu0 %v2188
        %v2291 = vpop.f32.mrf.mxu0
        %v2292 = vadd.f32 0.0, %v2291
        %v2293 = vpop.f32.mrf.mxu0
        %2294 = vdwg.mxu0
        %v2295 = vadd.f32 %v2142, %v2257
        %v2296 = vadd.f32 %v2143, %v2262
        %v2297 = vadd.f32 %v2144, %v2267
        %v2298 = vadd.f32 %v2145, %v2272
        %v2299 = vadd.f32 %v2146, %v2277
        %v2300 = vadd.f32 %v2147, %v2282
        %v2301 = vadd.f32 %v2148, %v2287
        %v2302 = vadd.f32 %v2149, %v2292
        %v2303 = vtanh.pop %v2295
        %v2304 = vtanh.pop %v2296
        %v2305 = vtanh.pop %v2297
        %v2306 = vtanh.pop %v2298
        %v2307 = vtanh.pop %v2299
        %v2308 = vtanh.pop %v2300
        %v2309 = vtanh.pop %v2301
        %v2310 = vtanh.pop %v2302
        %v2311 = vxor.u32 %v2295, 2147483648
        %v2312 = vxor.u32 %v2296, 2147483648
        %v2313 = vxor.u32 %v2297, 2147483648
        %v2314 = vxor.u32 %v2298, 2147483648
        %v2315 = vxor.u32 %v2299, 2147483648
        %v2316 = vxor.u32 %v2300, 2147483648
        %v2317 = vxor.u32 %v2301, 2147483648
        %v2318 = vxor.u32 %v2302, 2147483648
        %v2319 = vmul.f32 %v2311, 1.442695
        %v2320 = vpow.pop %v2319
        %v2321 = vmul.f32 %v2312, 1.442695
        %v2322 = vpow.pop %v2321
        %v2323 = vmul.f32 %v2313, 1.442695
        %v2324 = vpow.pop %v2323
        %v2325 = vmul.f32 %v2314, 1.442695
        %v2326 = vpow.pop %v2325
        %v2327 = vmul.f32 %v2315, 1.442695
        %v2328 = vpow.pop %v2327
        %v2329 = vmul.f32 %v2316, 1.442695
        %v2330 = vpow.pop %v2329
        %v2331 = vmul.f32 %v2317, 1.442695
        %v2332 = vpow.pop %v2331
        %v2333 = vmul.f32 %v2318, 1.442695
        %v2334 = vpow.pop %v2333
        %v2335 = vadd.f32 %v2320, 1.0
        %v2336 = vadd.f32 %v2322, 1.0
        %v2337 = vadd.f32 %v2324, 1.0
        %v2338 = vadd.f32 %v2326, 1.0
        %v2339 = vadd.f32 %v2328, 1.0
        %v2340 = vadd.f32 %v2330, 1.0
        %v2341 = vadd.f32 %v2332, 1.0
        %v2342 = vadd.f32 %v2334, 1.0
        %v2343 = vrcp.pop %v2335
        %v2344 = vmul.f32 1.0, %v2343
        %v2345 = vrcp.pop %v2336
        %v2346 = vmul.f32 1.0, %v2345
        %v2347 = vrcp.pop %v2337
        %v2348 = vmul.f32 1.0, %v2347
        %v2349 = vrcp.pop %v2338
        %v2350 = vmul.f32 1.0, %v2349
        %v2351 = vrcp.pop %v2339
        %v2352 = vmul.f32 1.0, %v2351
        %v2353 = vrcp.pop %v2340
        %v2354 = vmul.f32 1.0, %v2353
        %v2355 = vrcp.pop %v2341
        %v2356 = vmul.f32 1.0, %v2355
        %v2357 = vrcp.pop %v2342
        %v2358 = vmul.f32 1.0, %v2357
        %v2359 = vsel %vm1385, %v2303, %v2344
        %v2360 = vsel %vm1385, %v2304, %v2346
        %v2361 = vsel %vm1385, %v2305, %v2348
        %v2362 = vsel %vm1385, %v2306, %v2350
        %v2363 = vsel %vm1385, %v2307, %v2352
        %v2364 = vsel %vm1385, %v2308, %v2354
        %v2365 = vsel %vm1385, %v2309, %v2356
        %v2366 = vsel %vm1385, %v2310, %v2358
        %v2367 = vmul.f32 %v2359, %v2085
        %v2368 = vmul.f32 %v2360, %v2086
        %v2369 = vmul.f32 %v2361, %v2087
        %v2370 = vmul.f32 %v2362, %v2088
        %v2371 = vmul.f32 %v2363, %v2089
        %v2372 = vmul.f32 %v2364, %v2090
        %v2373 = vmul.f32 %v2365, %v2091
        %v2374 = vmul.f32 %v2366, %v2092
        %2383 = vrot.lane.b32.xlu0 %v2359, 64
        %v2384 = vpop.permute.xlu0 %2383
        %2385 = vrot.lane.b32.xlu0 %v2360, 64
        %v2386 = vpop.permute.xlu0 %2385
        %2387 = vrot.lane.b32.xlu0 %v2361, 64
        %v2388 = vpop.permute.xlu0 %2387
        %2389 = vrot.lane.b32.xlu0 %v2362, 64
        %v2390 = vpop.permute.xlu0 %2389
        %2391 = vrot.lane.b32.xlu0 %v2363, 64
        %v2392 = vpop.permute.xlu0 %2391
        %2393 = vrot.lane.b32.xlu0 %v2364, 64
        %v2394 = vpop.permute.xlu0 %2393
        %2395 = vrot.lane.b32.xlu0 %v2365, 64
        %v2396 = vpop.permute.xlu0 %2395
        %2397 = vrot.lane.b32.xlu0 %v2366, 64
        %v2398 = vpop.permute.xlu0 %2397
        %v2407 = vmul.f32 %v2359, %v2384
        %v2408 = vmul.f32 %v2360, %v2386
        %v2409 = vmul.f32 %v2361, %v2388
        %v2410 = vmul.f32 %v2362, %v2390
        %v2411 = vmul.f32 %v2363, %v2392
        %v2412 = vmul.f32 %v2364, %v2394
        %v2413 = vmul.f32 %v2365, %v2396
        %v2414 = vmul.f32 %v2366, %v2398
        %2423 = vrot.lane.b32.xlu0 %v2407, 32
        %v2424 = vpop.permute.xlu0 %2423
        %2425 = vrot.lane.b32.xlu0 %v2408, 32
        %v2426 = vpop.permute.xlu0 %2425
        %2427 = vrot.lane.b32.xlu0 %v2409, 32
        %v2428 = vpop.permute.xlu0 %2427
        %2429 = vrot.lane.b32.xlu0 %v2410, 32
        %v2430 = vpop.permute.xlu0 %2429
        %2431 = vrot.lane.b32.xlu0 %v2411, 32
        %v2432 = vpop.permute.xlu0 %2431
        %2433 = vrot.lane.b32.xlu0 %v2412, 32
        %v2434 = vpop.permute.xlu0 %2433
        %2435 = vrot.lane.b32.xlu0 %v2413, 32
        %v2436 = vpop.permute.xlu0 %2435
        %2437 = vrot.lane.b32.xlu0 %v2414, 32
        %v2438 = vpop.permute.xlu0 %2437
        %v2447 = vadd.f32 %v2367, %v2424
        %v2448 = vadd.f32 %v2368, %v2426
        %v2449 = vadd.f32 %v2369, %v2428
        %v2450 = vadd.f32 %v2370, %v2430
        %v2451 = vadd.f32 %v2371, %v2432
        %v2452 = vadd.f32 %v2372, %v2434
        %v2453 = vadd.f32 %v2373, %v2436
        %v2454 = vadd.f32 %v2374, %v2438
        %v2455 = vtanh.pop %v2447
        %v2456 = vtanh.pop %v2448
        %v2457 = vtanh.pop %v2449
        %v2458 = vtanh.pop %v2450
        %v2459 = vtanh.pop %v2451
        %v2460 = vtanh.pop %v2452
        %v2461 = vtanh.pop %v2453
        %v2462 = vtanh.pop %v2454
        %2471 = vrot.lane.b32.xlu0 %v2455, 64
        %v2472 = vpop.permute.xlu0 %2471
        %2473 = vrot.lane.b32.xlu0 %v2456, 64
        %v2474 = vpop.permute.xlu0 %2473
        %2475 = vrot.lane.b32.xlu0 %v2457, 64
        %v2476 = vpop.permute.xlu0 %2475
        %2477 = vrot.lane.b32.xlu0 %v2458, 64
        %v2478 = vpop.permute.xlu0 %2477
        %2479 = vrot.lane.b32.xlu0 %v2459, 64
        %v2480 = vpop.permute.xlu0 %2479
        %2481 = vrot.lane.b32.xlu0 %v2460, 64
        %v2482 = vpop.permute.xlu0 %2481
        %2483 = vrot.lane.b32.xlu0 %v2461, 64
        %v2484 = vpop.permute.xlu0 %2483
        %2485 = vrot.lane.b32.xlu0 %v2462, 64
        %v2486 = vpop.permute.xlu0 %2485
        %v2495 = vmul.f32 %v2359, %v2472
        %v2496 = vmul.f32 %v2360, %v2474
        %v2497 = vmul.f32 %v2361, %v2476
        %v2498 = vmul.f32 %v2362, %v2478
        %v2499 = vmul.f32 %v2363, %v2480
        %v2500 = vmul.f32 %v2364, %v2482
        %v2501 = vmul.f32 %v2365, %v2484
        %v2502 = vmul.f32 %v2366, %v2486
        %s2503 = scalar_lea.vmem [#allocation4], 192
        %v2504 = vld [vmem:[%s2503] sm:$0xff]
        %v2505 = vld [vmem:[%s2503 + $0x8] sm:$0xff]
        %v2506 = vld [vmem:[%s2503 + $0x10] sm:$0xff]
        %v2507 = vld [vmem:[%s2503 + $0x18] sm:$0xff]
        %v2508 = vld [vmem:[%s2503 + $0x20] sm:$0xff]
        %v2509 = vld [vmem:[%s2503 + $0x28] sm:$0xff]
        %v2510 = vld [vmem:[%s2503 + $0x30] sm:$0xff]
        %v2511 = vld [vmem:[%s2503 + $0x38] sm:$0xff]
        %2520 = vrot.lane.b32.xlu0 %v2495, 32
        %v2521 = vpop.permute.xlu0 %2520
        %2522 = vrot.lane.b32.xlu0 %v2496, 32
        %v2523 = vpop.permute.xlu0 %2522
        %2524 = vrot.lane.b32.xlu0 %v2497, 32
        %v2525 = vpop.permute.xlu0 %2524
        %2526 = vrot.lane.b32.xlu0 %v2498, 32
        %v2527 = vpop.permute.xlu0 %2526
        %2528 = vrot.lane.b32.xlu0 %v2499, 32
        %v2529 = vpop.permute.xlu0 %2528
        %2530 = vrot.lane.b32.xlu0 %v2500, 32
        %v2531 = vpop.permute.xlu0 %2530
        %2532 = vrot.lane.b32.xlu0 %v2501, 32
        %v2533 = vpop.permute.xlu0 %2532
        %2534 = vrot.lane.b32.xlu0 %v2502, 32
        %v2535 = vpop.permute.xlu0 %2534
        %v2536 = vsel %vm735, %v2521, 0
        %v2538 = vsel %vm735, %v2523, 0
        %v2540 = vsel %vm735, %v2525, 0
        %v2542 = vsel %vm735, %v2527, 0
        %v2544 = vsel %vm735, %v2529, 0
        %v2546 = vsel %vm735, %v2531, 0
        %v2548 = vsel %vm735, %v2533, 0
        %v2550 = vsel %vm735, %v2535, 0
        %2552 = vmatprep.subr.mxu0 0.0
        %2553 = vmatpush1.msra.mxu0 0.0
        %2554 = vmatprep.subr.mxu0 0.0
        %2555 = vmatpush1.msra.mxu0 0.0
        %2556 = vmatprep.subr.mxu0 0.0
        %2557 = vmatpush1.msra.mxu0 0.0
        %2558 = vmatprep.subr.mxu0 0.0
        %2559 = vmatpush1.msra.mxu0 0.0
        %2560 = vmatprep.subr.mxu0 0.0
        %2561 = vmatpush1.msra.mxu0 0.0
        %2562 = vmatprep.subr.mxu0 0.0
        %2563 = vmatpush1.msra.mxu0 0.0
        %2564 = vmatprep.subr.mxu0 0.0
        %2565 = vmatpush1.msra.mxu0 0.0
        %2566 = vmatprep.subr.mxu0 0.0
        %2567 = vmatpush1.msra.mxu0 0.0
        %2568 = vmatprep.subr.mxu0 0.0
        %2569 = vmatpush1.msra.mxu0 0.0
        %2570 = vmatprep.subr.mxu0 0.0
        %2571 = vmatpush1.msra.mxu0 0.0
        %2572 = vmatprep.subr.mxu0 0.0
        %2573 = vmatpush1.msra.mxu0 0.0
        %2574 = vmatprep.subr.mxu0 0.0
        %2575 = vmatpush1.msra.mxu0 0.0
        %2576 = vmatprep.subr.mxu0 0.0
        %2577 = vmatpush1.msra.mxu0 %v1380
        %2578 = vmatprep.subr.mxu0 0.0
        %2579 = vmatpush1.msra.mxu0 %v1379
        %2580 = vmatprep.subr.mxu0 0.0
        %2581 = vmatpush1.msra.mxu0 %v1378
        %2582 = vmatprep.subr.mxu0 0.0
        %2583 = vmatpush1.msra.mxu0 %v1377
        %2584 = vmatprep.subr.mxu0 0.0
        %2585 = vmatpush2.msra.mxu0 0.0
        %2586 = vmatprep.subr.mxu0 0.0
        %2587 = vmatpush2.msra.mxu0 0.0
        %2588 = vmatprep.subr.mxu0 0.0
        %2589 = vmatpush2.msra.mxu0 0.0
        %2590 = vmatprep.subr.mxu0 0.0
        %2591 = vmatpush2.msra.mxu0 0.0
        %2592 = vmatprep.subr.mxu0 0.0
        %2593 = vmatpush2.msra.mxu0 0.0
        %2594 = vmatprep.subr.mxu0 0.0
        %2595 = vmatpush2.msra.mxu0 0.0
        %2596 = vmatprep.subr.mxu0 0.0
        %2597 = vmatpush2.msra.mxu0 0.0
        %2598 = vmatprep.subr.mxu0 0.0
        %2599 = vmatpush2.msra.mxu0 0.0
        %2600 = vmatprep.subr.mxu0 0.0
        %2601 = vmatpush2.msra.mxu0 0.0
        %2602 = vmatprep.subr.mxu0 0.0
        %2603 = vmatpush2.msra.mxu0 0.0
        %2604 = vmatprep.subr.mxu0 0.0
        %2605 = vmatpush2.msra.mxu0 0.0
        %2606 = vmatprep.subr.mxu0 0.0
        %2607 = vmatpush2.msra.mxu0 0.0
        %2608 = vmatprep.subr.mxu0 0.0
        %2609 = vmatpush2.msra.mxu0 0.0
        %2610 = vmatprep.subr.mxu0 0.0
        %2611 = vmatpush2.msra.mxu0 0.0
        %2612 = vmatprep.subr.mxu0 0.0
        %2613 = vmatpush2.msra.mxu0 0.0
        %2614 = vmatprep.subr.mxu0 0.0
        %2615 = vmatpush2.msra.mxu0 0.0
        %2616 = vmatprep.mubr.f32.mxu0 0.0
        %2617 = vmatmul.mubr.f32.gmra.mxu0 %v2536
        %v2618 = vpop.f32.mrf.mxu0
        %v2619 = vadd.f32 0.0, %v2618
        %v2620 = vpop.f32.mrf.mxu0
        %2621 = vmatprep.mubr.f32.mxu0 0.0
        %2622 = vmatmul.mubr.f32.gmra.mxu0 %v2538
        %v2623 = vpop.f32.mrf.mxu0
        %v2624 = vadd.f32 0.0, %v2623
        %v2625 = vpop.f32.mrf.mxu0
        %2626 = vmatprep.mubr.f32.mxu0 0.0
        %2627 = vmatmul.mubr.f32.gmra.mxu0 %v2540
        %v2628 = vpop.f32.mrf.mxu0
        %v2629 = vadd.f32 0.0, %v2628
        %v2630 = vpop.f32.mrf.mxu0
        %2631 = vmatprep.mubr.f32.mxu0 0.0
        %2632 = vmatmul.mubr.f32.gmra.mxu0 %v2542
        %v2633 = vpop.f32.mrf.mxu0
        %v2634 = vadd.f32 0.0, %v2633
        %v2635 = vpop.f32.mrf.mxu0
        %2636 = vmatprep.mubr.f32.mxu0 0.0
        %2637 = vmatmul.mubr.f32.gmra.mxu0 %v2544
        %v2638 = vpop.f32.mrf.mxu0
        %v2639 = vadd.f32 0.0, %v2638
        %v2640 = vpop.f32.mrf.mxu0
        %2641 = vmatprep.mubr.f32.mxu0 0.0
        %2642 = vmatmul.mubr.f32.gmra.mxu0 %v2546
        %v2643 = vpop.f32.mrf.mxu0
        %v2644 = vadd.f32 0.0, %v2643
        %v2645 = vpop.f32.mrf.mxu0
        %2646 = vmatprep.mubr.f32.mxu0 0.0
        %2647 = vmatmul.mubr.f32.gmra.mxu0 %v2548
        %v2648 = vpop.f32.mrf.mxu0
        %v2649 = vadd.f32 0.0, %v2648
        %v2650 = vpop.f32.mrf.mxu0
        %2651 = vmatprep.mubr.f32.mxu0 0.0
        %2652 = vmatmul.mubr.f32.gmra.mxu0 %v2550
        %v2653 = vpop.f32.mrf.mxu0
        %v2654 = vadd.f32 0.0, %v2653
        %v2655 = vpop.f32.mrf.mxu0
        %2656 = vdwg.mxu0
        %v2657 = vadd.f32 %v2504, %v2619
        %v2658 = vadd.f32 %v2505, %v2624
        %v2659 = vadd.f32 %v2506, %v2629
        %v2660 = vadd.f32 %v2507, %v2634
        %v2661 = vadd.f32 %v2508, %v2639
        %v2662 = vadd.f32 %v2509, %v2644
        %v2663 = vadd.f32 %v2510, %v2649
        %v2664 = vadd.f32 %v2511, %v2654
        %v2665 = vtanh.pop %v2657
        %v2666 = vtanh.pop %v2658
        %v2667 = vtanh.pop %v2659
        %v2668 = vtanh.pop %v2660
        %v2669 = vtanh.pop %v2661
        %v2670 = vtanh.pop %v2662
        %v2671 = vtanh.pop %v2663
        %v2672 = vtanh.pop %v2664
        %v2673 = vxor.u32 %v2657, 2147483648
        %v2674 = vxor.u32 %v2658, 2147483648
        %v2675 = vxor.u32 %v2659, 2147483648
        %v2676 = vxor.u32 %v2660, 2147483648
        %v2677 = vxor.u32 %v2661, 2147483648
        %v2678 = vxor.u32 %v2662, 2147483648
        %v2679 = vxor.u32 %v2663, 2147483648
        %v2680 = vxor.u32 %v2664, 2147483648
        %v2681 = vmul.f32 %v2673, 1.442695
        %v2682 = vpow.pop %v2681
        %v2683 = vmul.f32 %v2674, 1.442695
        %v2684 = vpow.pop %v2683
        %v2685 = vmul.f32 %v2675, 1.442695
        %v2686 = vpow.pop %v2685
        %v2687 = vmul.f32 %v2676, 1.442695
        %v2688 = vpow.pop %v2687
        %v2689 = vmul.f32 %v2677, 1.442695
        %v2690 = vpow.pop %v2689
        %v2691 = vmul.f32 %v2678, 1.442695
        %v2692 = vpow.pop %v2691
        %v2693 = vmul.f32 %v2679, 1.442695
        %v2694 = vpow.pop %v2693
        %v2695 = vmul.f32 %v2680, 1.442695
        %v2696 = vpow.pop %v2695
        %v2697 = vadd.f32 %v2682, 1.0
        %v2698 = vadd.f32 %v2684, 1.0
        %v2699 = vadd.f32 %v2686, 1.0
        %v2700 = vadd.f32 %v2688, 1.0
        %v2701 = vadd.f32 %v2690, 1.0
        %v2702 = vadd.f32 %v2692, 1.0
        %v2703 = vadd.f32 %v2694, 1.0
        %v2704 = vadd.f32 %v2696, 1.0
        %v2705 = vrcp.pop %v2697
        %v2706 = vmul.f32 1.0, %v2705
        %v2707 = vrcp.pop %v2698
        %v2708 = vmul.f32 1.0, %v2707
        %v2709 = vrcp.pop %v2699
        %v2710 = vmul.f32 1.0, %v2709
        %v2711 = vrcp.pop %v2700
        %v2712 = vmul.f32 1.0, %v2711
        %v2713 = vrcp.pop %v2701
        %v2714 = vmul.f32 1.0, %v2713
        %v2715 = vrcp.pop %v2702
        %v2716 = vmul.f32 1.0, %v2715
        %v2717 = vrcp.pop %v2703
        %v2718 = vmul.f32 1.0, %v2717
        %v2719 = vrcp.pop %v2704
        %v2720 = vmul.f32 1.0, %v2719
        %v2721 = vsel %vm1385, %v2665, %v2706
        %v2722 = vsel %vm1385, %v2666, %v2708
        %v2723 = vsel %vm1385, %v2667, %v2710
        %v2724 = vsel %vm1385, %v2668, %v2712
        %v2725 = vsel %vm1385, %v2669, %v2714
        %v2726 = vsel %vm1385, %v2670, %v2716
        %v2727 = vsel %vm1385, %v2671, %v2718
        %v2728 = vsel %vm1385, %v2672, %v2720
        %v2729 = vmul.f32 %v2721, %v2447
        %v2730 = vmul.f32 %v2722, %v2448
        %v2731 = vmul.f32 %v2723, %v2449
        %v2732 = vmul.f32 %v2724, %v2450
        %v2733 = vmul.f32 %v2725, %v2451
        %v2734 = vmul.f32 %v2726, %v2452
        %v2735 = vmul.f32 %v2727, %v2453
        %v2736 = vmul.f32 %v2728, %v2454
        %2745 = vrot.lane.b32.xlu0 %v2721, 64
        %v2746 = vpop.permute.xlu0 %2745
        %2747 = vrot.lane.b32.xlu0 %v2722, 64
        %v2748 = vpop.permute.xlu0 %2747
        %2749 = vrot.lane.b32.xlu0 %v2723, 64
        %v2750 = vpop.permute.xlu0 %2749
        %2751 = vrot.lane.b32.xlu0 %v2724, 64
        %v2752 = vpop.permute.xlu0 %2751
        %2753 = vrot.lane.b32.xlu0 %v2725, 64
        %v2754 = vpop.permute.xlu0 %2753
        %2755 = vrot.lane.b32.xlu0 %v2726, 64
        %v2756 = vpop.permute.xlu0 %2755
        %2757 = vrot.lane.b32.xlu0 %v2727, 64
        %v2758 = vpop.permute.xlu0 %2757
        %2759 = vrot.lane.b32.xlu0 %v2728, 64
        %v2760 = vpop.permute.xlu0 %2759
        %v2769 = vmul.f32 %v2721, %v2746
        %v2770 = vmul.f32 %v2722, %v2748
        %v2771 = vmul.f32 %v2723, %v2750
        %v2772 = vmul.f32 %v2724, %v2752
        %v2773 = vmul.f32 %v2725, %v2754
        %v2774 = vmul.f32 %v2726, %v2756
        %v2775 = vmul.f32 %v2727, %v2758
        %v2776 = vmul.f32 %v2728, %v2760
        %2785 = vrot.lane.b32.xlu0 %v2769, 32
        %v2786 = vpop.permute.xlu0 %2785
        %2787 = vrot.lane.b32.xlu0 %v2770, 32
        %v2788 = vpop.permute.xlu0 %2787
        %2789 = vrot.lane.b32.xlu0 %v2771, 32
        %v2790 = vpop.permute.xlu0 %2789
        %2791 = vrot.lane.b32.xlu0 %v2772, 32
        %v2792 = vpop.permute.xlu0 %2791
        %2793 = vrot.lane.b32.xlu0 %v2773, 32
        %v2794 = vpop.permute.xlu0 %2793
        %2795 = vrot.lane.b32.xlu0 %v2774, 32
        %v2796 = vpop.permute.xlu0 %2795
        %2797 = vrot.lane.b32.xlu0 %v2775, 32
        %v2798 = vpop.permute.xlu0 %2797
        %2799 = vrot.lane.b32.xlu0 %v2776, 32
        %v2800 = vpop.permute.xlu0 %2799
        %v2809 = vadd.f32 %v2729, %v2786
        %v2810 = vadd.f32 %v2730, %v2788
        %v2811 = vadd.f32 %v2731, %v2790
        %v2812 = vadd.f32 %v2732, %v2792
        %v2813 = vadd.f32 %v2733, %v2794
        %v2814 = vadd.f32 %v2734, %v2796
        %v2815 = vadd.f32 %v2735, %v2798
        %v2816 = vadd.f32 %v2736, %v2800
        %v2817 = vtanh.pop %v2809
        %v2818 = vtanh.pop %v2810
        %v2819 = vtanh.pop %v2811
        %v2820 = vtanh.pop %v2812
        %v2821 = vtanh.pop %v2813
        %v2822 = vtanh.pop %v2814
        %v2823 = vtanh.pop %v2815
        %v2824 = vtanh.pop %v2816
        %2833 = vrot.lane.b32.xlu0 %v2817, 64
        %v2834 = vpop.permute.xlu0 %2833
        %2835 = vrot.lane.b32.xlu0 %v2818, 64
        %v2836 = vpop.permute.xlu0 %2835
        %2837 = vrot.lane.b32.xlu0 %v2819, 64
        %v2838 = vpop.permute.xlu0 %2837
        %2839 = vrot.lane.b32.xlu0 %v2820, 64
        %v2840 = vpop.permute.xlu0 %2839
        %2841 = vrot.lane.b32.xlu0 %v2821, 64
        %v2842 = vpop.permute.xlu0 %2841
        %2843 = vrot.lane.b32.xlu0 %v2822, 64
        %v2844 = vpop.permute.xlu0 %2843
        %2845 = vrot.lane.b32.xlu0 %v2823, 64
        %v2846 = vpop.permute.xlu0 %2845
        %2847 = vrot.lane.b32.xlu0 %v2824, 64
        %v2848 = vpop.permute.xlu0 %2847
        %v2857 = vmul.f32 %v2721, %v2834
        %v2858 = vmul.f32 %v2722, %v2836
        %v2859 = vmul.f32 %v2723, %v2838
        %v2860 = vmul.f32 %v2724, %v2840
        %v2861 = vmul.f32 %v2725, %v2842
        %v2862 = vmul.f32 %v2726, %v2844
        %v2863 = vmul.f32 %v2727, %v2846
        %v2864 = vmul.f32 %v2728, %v2848
        %s2865 = scalar_lea.vmem [#allocation4], 256
        %v2866 = vld [vmem:[%s2865] sm:$0xff]
        %v2867 = vld [vmem:[%s2865 + $0x8] sm:$0xff]
        %v2868 = vld [vmem:[%s2865 + $0x10] sm:$0xff]
        %v2869 = vld [vmem:[%s2865 + $0x18] sm:$0xff]
        %v2870 = vld [vmem:[%s2865 + $0x20] sm:$0xff]
        %v2871 = vld [vmem:[%s2865 + $0x28] sm:$0xff]
        %v2872 = vld [vmem:[%s2865 + $0x30] sm:$0xff]
        %v2873 = vld [vmem:[%s2865 + $0x38] sm:$0xff]
        %2882 = vrot.lane.b32.xlu0 %v2857, 32
        %v2883 = vpop.permute.xlu0 %2882
        %2884 = vrot.lane.b32.xlu0 %v2858, 32
        %v2885 = vpop.permute.xlu0 %2884
        %2886 = vrot.lane.b32.xlu0 %v2859, 32
        %v2887 = vpop.permute.xlu0 %2886
        %2888 = vrot.lane.b32.xlu0 %v2860, 32
        %v2889 = vpop.permute.xlu0 %2888
        %2890 = vrot.lane.b32.xlu0 %v2861, 32
        %v2891 = vpop.permute.xlu0 %2890
        %2892 = vrot.lane.b32.xlu0 %v2862, 32
        %v2893 = vpop.permute.xlu0 %2892
        %2894 = vrot.lane.b32.xlu0 %v2863, 32
        %v2895 = vpop.permute.xlu0 %2894
        %2896 = vrot.lane.b32.xlu0 %v2864, 32
        %v2897 = vpop.permute.xlu0 %2896
        %v2898 = vsel %vm735, %v2883, 0
        %v2900 = vsel %vm735, %v2885, 0
        %v2902 = vsel %vm735, %v2887, 0
        %v2904 = vsel %vm735, %v2889, 0
        %v2906 = vsel %vm735, %v2891, 0
        %v2908 = vsel %vm735, %v2893, 0
        %v2910 = vsel %vm735, %v2895, 0
        %v2912 = vsel %vm735, %v2897, 0
        %2914 = vmatprep.subr.mxu0 0.0
        %2915 = vmatpush1.msra.mxu0 0.0
        %2916 = vmatprep.subr.mxu0 0.0
        %2917 = vmatpush1.msra.mxu0 0.0
        %2918 = vmatprep.subr.mxu0 0.0
        %2919 = vmatpush1.msra.mxu0 0.0
        %2920 = vmatprep.subr.mxu0 0.0
        %2921 = vmatpush1.msra.mxu0 0.0
        %2922 = vmatprep.subr.mxu0 0.0
        %2923 = vmatpush1.msra.mxu0 0.0
        %2924 = vmatprep.subr.mxu0 0.0
        %2925 = vmatpush1.msra.mxu0 0.0
        %2926 = vmatprep.subr.mxu0 0.0
        %2927 = vmatpush1.msra.mxu0 0.0
        %2928 = vmatprep.subr.mxu0 0.0
        %2929 = vmatpush1.msra.mxu0 0.0
        %2930 = vmatprep.subr.mxu0 0.0
        %2931 = vmatpush1.msra.mxu0 0.0
        %2932 = vmatprep.subr.mxu0 0.0
        %2933 = vmatpush1.msra.mxu0 0.0
        %2934 = vmatprep.subr.mxu0 0.0
        %2935 = vmatpush1.msra.mxu0 0.0
        %2936 = vmatprep.subr.mxu0 0.0
        %2937 = vmatpush1.msra.mxu0 0.0
        %2938 = vmatprep.subr.mxu0 0.0
        %2939 = vmatpush1.msra.mxu0 %v1380
        %2940 = vmatprep.subr.mxu0 0.0
        %2941 = vmatpush1.msra.mxu0 %v1379
        %2942 = vmatprep.subr.mxu0 0.0
        %2943 = vmatpush1.msra.mxu0 %v1378
        %2944 = vmatprep.subr.mxu0 0.0
        %2945 = vmatpush1.msra.mxu0 %v1377
        %2946 = vmatprep.subr.mxu0 0.0
        %2947 = vmatpush2.msra.mxu0 0.0
        %2948 = vmatprep.subr.mxu0 0.0
        %2949 = vmatpush2.msra.mxu0 0.0
        %2950 = vmatprep.subr.mxu0 0.0
        %2951 = vmatpush2.msra.mxu0 0.0
        %2952 = vmatprep.subr.mxu0 0.0
        %2953 = vmatpush2.msra.mxu0 0.0
        %2954 = vmatprep.subr.mxu0 0.0
        %2955 = vmatpush2.msra.mxu0 0.0
        %2956 = vmatprep.subr.mxu0 0.0
        %2957 = vmatpush2.msra.mxu0 0.0
        %2958 = vmatprep.subr.mxu0 0.0
        %2959 = vmatpush2.msra.mxu0 0.0
        %2960 = vmatprep.subr.mxu0 0.0
        %2961 = vmatpush2.msra.mxu0 0.0
        %2962 = vmatprep.subr.mxu0 0.0
        %2963 = vmatpush2.msra.mxu0 0.0
        %2964 = vmatprep.subr.mxu0 0.0
        %2965 = vmatpush2.msra.mxu0 0.0
        %2966 = vmatprep.subr.mxu0 0.0
        %2967 = vmatpush2.msra.mxu0 0.0
        %2968 = vmatprep.subr.mxu0 0.0
        %2969 = vmatpush2.msra.mxu0 0.0
        %2970 = vmatprep.subr.mxu0 0.0
        %2971 = vmatpush2.msra.mxu0 0.0
        %2972 = vmatprep.subr.mxu0 0.0
        %2973 = vmatpush2.msra.mxu0 0.0
        %2974 = vmatprep.subr.mxu0 0.0
        %2975 = vmatpush2.msra.mxu0 0.0
        %2976 = vmatprep.subr.mxu0 0.0
        %2977 = vmatpush2.msra.mxu0 0.0
        %2978 = vmatprep.mubr.f32.mxu0 0.0
        %2979 = vmatmul.mubr.f32.gmra.mxu0 %v2898
        %v2980 = vpop.f32.mrf.mxu0
        %v2981 = vadd.f32 0.0, %v2980
        %v2982 = vpop.f32.mrf.mxu0
        %2983 = vmatprep.mubr.f32.mxu0 0.0
        %2984 = vmatmul.mubr.f32.gmra.mxu0 %v2900
        %v2985 = vpop.f32.mrf.mxu0
        %v2986 = vadd.f32 0.0, %v2985
        %v2987 = vpop.f32.mrf.mxu0
        %2988 = vmatprep.mubr.f32.mxu0 0.0
        %2989 = vmatmul.mubr.f32.gmra.mxu0 %v2902
        %v2990 = vpop.f32.mrf.mxu0
        %v2991 = vadd.f32 0.0, %v2990
        %v2992 = vpop.f32.mrf.mxu0
        %2993 = vmatprep.mubr.f32.mxu0 0.0
        %2994 = vmatmul.mubr.f32.gmra.mxu0 %v2904
        %v2995 = vpop.f32.mrf.mxu0
        %v2996 = vadd.f32 0.0, %v2995
        %v2997 = vpop.f32.mrf.mxu0
        %2998 = vmatprep.mubr.f32.mxu0 0.0
        %2999 = vmatmul.mubr.f32.gmra.mxu0 %v2906
        %v3000 = vpop.f32.mrf.mxu0
        %v3001 = vadd.f32 0.0, %v3000
        %v3002 = vpop.f32.mrf.mxu0
        %3003 = vmatprep.mubr.f32.mxu0 0.0
        %3004 = vmatmul.mubr.f32.gmra.mxu0 %v2908
        %v3005 = vpop.f32.mrf.mxu0
        %v3006 = vadd.f32 0.0, %v3005
        %v3007 = vpop.f32.mrf.mxu0
        %3008 = vmatprep.mubr.f32.mxu0 0.0
        %3009 = vmatmul.mubr.f32.gmra.mxu0 %v2910
        %v3010 = vpop.f32.mrf.mxu0
        %v3011 = vadd.f32 0.0, %v3010
        %v3012 = vpop.f32.mrf.mxu0
        %3013 = vmatprep.mubr.f32.mxu0 0.0
        %3014 = vmatmul.mubr.f32.gmra.mxu0 %v2912
        %v3015 = vpop.f32.mrf.mxu0
        %v3016 = vadd.f32 0.0, %v3015
        %v3017 = vpop.f32.mrf.mxu0
        %3018 = vdwg.mxu0
        %v3019 = vadd.f32 %v2866, %v2981
        %v3020 = vadd.f32 %v2867, %v2986
        %v3021 = vadd.f32 %v2868, %v2991
        %v3022 = vadd.f32 %v2869, %v2996
        %v3023 = vadd.f32 %v2870, %v3001
        %v3024 = vadd.f32 %v2871, %v3006
        %v3025 = vadd.f32 %v2872, %v3011
        %v3026 = vadd.f32 %v2873, %v3016
        %v3027 = vtanh.pop %v3019
        %v3028 = vtanh.pop %v3020
        %v3029 = vtanh.pop %v3021
        %v3030 = vtanh.pop %v3022
        %v3031 = vtanh.pop %v3023
        %v3032 = vtanh.pop %v3024
        %v3033 = vtanh.pop %v3025
        %v3034 = vtanh.pop %v3026
        %v3035 = vxor.u32 %v3019, 2147483648
        %v3036 = vxor.u32 %v3020, 2147483648
        %v3037 = vxor.u32 %v3021, 2147483648
        %v3038 = vxor.u32 %v3022, 2147483648
        %v3039 = vxor.u32 %v3023, 2147483648
        %v3040 = vxor.u32 %v3024, 2147483648
        %v3041 = vxor.u32 %v3025, 2147483648
        %v3042 = vxor.u32 %v3026, 2147483648
        %v3043 = vmul.f32 %v3035, 1.442695
        %v3044 = vpow.pop %v3043
        %v3045 = vmul.f32 %v3036, 1.442695
        %v3046 = vpow.pop %v3045
        %v3047 = vmul.f32 %v3037, 1.442695
        %v3048 = vpow.pop %v3047
        %v3049 = vmul.f32 %v3038, 1.442695
        %v3050 = vpow.pop %v3049
        %v3051 = vmul.f32 %v3039, 1.442695
        %v3052 = vpow.pop %v3051
        %v3053 = vmul.f32 %v3040, 1.442695
        %v3054 = vpow.pop %v3053
        %v3055 = vmul.f32 %v3041, 1.442695
        %v3056 = vpow.pop %v3055
        %v3057 = vmul.f32 %v3042, 1.442695
        %v3058 = vpow.pop %v3057
        %v3059 = vadd.f32 %v3044, 1.0
        %v3060 = vadd.f32 %v3046, 1.0
        %v3061 = vadd.f32 %v3048, 1.0
        %v3062 = vadd.f32 %v3050, 1.0
        %v3063 = vadd.f32 %v3052, 1.0
        %v3064 = vadd.f32 %v3054, 1.0
        %v3065 = vadd.f32 %v3056, 1.0
        %v3066 = vadd.f32 %v3058, 1.0
        %v3067 = vrcp.pop %v3059
        %v3068 = vmul.f32 1.0, %v3067
        %v3069 = vrcp.pop %v3060
        %v3070 = vmul.f32 1.0, %v3069
        %v3071 = vrcp.pop %v3061
        %v3072 = vmul.f32 1.0, %v3071
        %v3073 = vrcp.pop %v3062
        %v3074 = vmul.f32 1.0, %v3073
        %v3075 = vrcp.pop %v3063
        %v3076 = vmul.f32 1.0, %v3075
        %v3077 = vrcp.pop %v3064
        %v3078 = vmul.f32 1.0, %v3077
        %v3079 = vrcp.pop %v3065
        %v3080 = vmul.f32 1.0, %v3079
        %v3081 = vrcp.pop %v3066
        %v3082 = vmul.f32 1.0, %v3081
        %v3083 = vsel %vm1385, %v3027, %v3068
        %v3084 = vsel %vm1385, %v3028, %v3070
        %v3085 = vsel %vm1385, %v3029, %v3072
        %v3086 = vsel %vm1385, %v3030, %v3074
        %v3087 = vsel %vm1385, %v3031, %v3076
        %v3088 = vsel %vm1385, %v3032, %v3078
        %v3089 = vsel %vm1385, %v3033, %v3080
        %v3090 = vsel %vm1385, %v3034, %v3082
        %v3091 = vmul.f32 %v3083, %v2809
        %v3092 = vmul.f32 %v3084, %v2810
        %v3093 = vmul.f32 %v3085, %v2811
        %v3094 = vmul.f32 %v3086, %v2812
        %v3095 = vmul.f32 %v3087, %v2813
        %v3096 = vmul.f32 %v3088, %v2814
        %v3097 = vmul.f32 %v3089, %v2815
        %v3098 = vmul.f32 %v3090, %v2816
        %3107 = vrot.lane.b32.xlu0 %v3083, 64
        %v3108 = vpop.permute.xlu0 %3107
        %3109 = vrot.lane.b32.xlu0 %v3084, 64
        %v3110 = vpop.permute.xlu0 %3109
        %3111 = vrot.lane.b32.xlu0 %v3085, 64
        %v3112 = vpop.permute.xlu0 %3111
        %3113 = vrot.lane.b32.xlu0 %v3086, 64
        %v3114 = vpop.permute.xlu0 %3113
        %3115 = vrot.lane.b32.xlu0 %v3087, 64
        %v3116 = vpop.permute.xlu0 %3115
        %3117 = vrot.lane.b32.xlu0 %v3088, 64
        %v3118 = vpop.permute.xlu0 %3117
        %3119 = vrot.lane.b32.xlu0 %v3089, 64
        %v3120 = vpop.permute.xlu0 %3119
        %3121 = vrot.lane.b32.xlu0 %v3090, 64
        %v3122 = vpop.permute.xlu0 %3121
        %v3131 = vmul.f32 %v3083, %v3108
        %v3132 = vmul.f32 %v3084, %v3110
        %v3133 = vmul.f32 %v3085, %v3112
        %v3134 = vmul.f32 %v3086, %v3114
        %v3135 = vmul.f32 %v3087, %v3116
        %v3136 = vmul.f32 %v3088, %v3118
        %v3137 = vmul.f32 %v3089, %v3120
        %v3138 = vmul.f32 %v3090, %v3122
        %3147 = vrot.lane.b32.xlu0 %v3131, 32
        %v3148 = vpop.permute.xlu0 %3147
        %3149 = vrot.lane.b32.xlu0 %v3132, 32
        %v3150 = vpop.permute.xlu0 %3149
        %3151 = vrot.lane.b32.xlu0 %v3133, 32
        %v3152 = vpop.permute.xlu0 %3151
        %3153 = vrot.lane.b32.xlu0 %v3134, 32
        %v3154 = vpop.permute.xlu0 %3153
        %3155 = vrot.lane.b32.xlu0 %v3135, 32
        %v3156 = vpop.permute.xlu0 %3155
        %3157 = vrot.lane.b32.xlu0 %v3136, 32
        %v3158 = vpop.permute.xlu0 %3157
        %3159 = vrot.lane.b32.xlu0 %v3137, 32
        %v3160 = vpop.permute.xlu0 %3159
        %3161 = vrot.lane.b32.xlu0 %v3138, 32
        %v3162 = vpop.permute.xlu0 %3161
        %v3171 = vadd.f32 %v3091, %v3148
        %v3172 = vadd.f32 %v3092, %v3150
        %v3173 = vadd.f32 %v3093, %v3152
        %v3174 = vadd.f32 %v3094, %v3154
        %v3175 = vadd.f32 %v3095, %v3156
        %v3176 = vadd.f32 %v3096, %v3158
        %v3177 = vadd.f32 %v3097, %v3160
        %v3178 = vadd.f32 %v3098, %v3162
        %v3179 = vtanh.pop %v3171
        %v3180 = vtanh.pop %v3172
        %v3181 = vtanh.pop %v3173
        %v3182 = vtanh.pop %v3174
        %v3183 = vtanh.pop %v3175
        %v3184 = vtanh.pop %v3176
        %v3185 = vtanh.pop %v3177
        %v3186 = vtanh.pop %v3178
        %3195 = vrot.lane.b32.xlu0 %v3179, 64
        %v3196 = vpop.permute.xlu0 %3195
        %3197 = vrot.lane.b32.xlu0 %v3180, 64
        %v3198 = vpop.permute.xlu0 %3197
        %3199 = vrot.lane.b32.xlu0 %v3181, 64
        %v3200 = vpop.permute.xlu0 %3199
        %3201 = vrot.lane.b32.xlu0 %v3182, 64
        %v3202 = vpop.permute.xlu0 %3201
        %3203 = vrot.lane.b32.xlu0 %v3183, 64
        %v3204 = vpop.permute.xlu0 %3203
        %3205 = vrot.lane.b32.xlu0 %v3184, 64
        %v3206 = vpop.permute.xlu0 %3205
        %3207 = vrot.lane.b32.xlu0 %v3185, 64
        %v3208 = vpop.permute.xlu0 %3207
        %3209 = vrot.lane.b32.xlu0 %v3186, 64
        %v3210 = vpop.permute.xlu0 %3209
        %v3219 = vmul.f32 %v3083, %v3196
        %v3220 = vmul.f32 %v3084, %v3198
        %v3221 = vmul.f32 %v3085, %v3200
        %v3222 = vmul.f32 %v3086, %v3202
        %v3223 = vmul.f32 %v3087, %v3204
        %v3224 = vmul.f32 %v3088, %v3206
        %v3225 = vmul.f32 %v3089, %v3208
        %v3226 = vmul.f32 %v3090, %v3210
        %s3227 = scalar_lea.vmem [#allocation4], 320
        %v3228 = vld [vmem:[%s3227] sm:$0xff]
        %v3229 = vld [vmem:[%s3227 + $0x8] sm:$0xff]
        %v3230 = vld [vmem:[%s3227 + $0x10] sm:$0xff]
        %v3231 = vld [vmem:[%s3227 + $0x18] sm:$0xff]
        %v3232 = vld [vmem:[%s3227 + $0x20] sm:$0xff]
        %v3233 = vld [vmem:[%s3227 + $0x28] sm:$0xff]
        %v3234 = vld [vmem:[%s3227 + $0x30] sm:$0xff]
        %v3235 = vld [vmem:[%s3227 + $0x38] sm:$0xff]
        %3244 = vrot.lane.b32.xlu0 %v3219, 32
        %v3245 = vpop.permute.xlu0 %3244
        %3246 = vrot.lane.b32.xlu0 %v3220, 32
        %v3247 = vpop.permute.xlu0 %3246
        %3248 = vrot.lane.b32.xlu0 %v3221, 32
        %v3249 = vpop.permute.xlu0 %3248
        %3250 = vrot.lane.b32.xlu0 %v3222, 32
        %v3251 = vpop.permute.xlu0 %3250
        %3252 = vrot.lane.b32.xlu0 %v3223, 32
        %v3253 = vpop.permute.xlu0 %3252
        %3254 = vrot.lane.b32.xlu0 %v3224, 32
        %v3255 = vpop.permute.xlu0 %3254
        %3256 = vrot.lane.b32.xlu0 %v3225, 32
        %v3257 = vpop.permute.xlu0 %3256
        %3258 = vrot.lane.b32.xlu0 %v3226, 32
        %v3259 = vpop.permute.xlu0 %3258
        %v3260 = vsel %vm735, %v3245, 0
        %v3262 = vsel %vm735, %v3247, 0
        %v3264 = vsel %vm735, %v3249, 0
        %v3266 = vsel %vm735, %v3251, 0
        %v3268 = vsel %vm735, %v3253, 0
        %v3270 = vsel %vm735, %v3255, 0
        %v3272 = vsel %vm735, %v3257, 0
        %v3274 = vsel %vm735, %v3259, 0
        %3276 = vmatprep.subr.mxu0 0.0
        %3277 = vmatpush1.msra.mxu0 0.0
        %3278 = vmatprep.subr.mxu0 0.0
        %3279 = vmatpush1.msra.mxu0 0.0
        %3280 = vmatprep.subr.mxu0 0.0
        %3281 = vmatpush1.msra.mxu0 0.0
        %3282 = vmatprep.subr.mxu0 0.0
        %3283 = vmatpush1.msra.mxu0 0.0
        %3284 = vmatprep.subr.mxu0 0.0
        %3285 = vmatpush1.msra.mxu0 0.0
        %3286 = vmatprep.subr.mxu0 0.0
        %3287 = vmatpush1.msra.mxu0 0.0
        %3288 = vmatprep.subr.mxu0 0.0
        %3289 = vmatpush1.msra.mxu0 0.0
        %3290 = vmatprep.subr.mxu0 0.0
        %3291 = vmatpush1.msra.mxu0 0.0
        %3292 = vmatprep.subr.mxu0 0.0
        %3293 = vmatpush1.msra.mxu0 0.0
        %3294 = vmatprep.subr.mxu0 0.0
        %3295 = vmatpush1.msra.mxu0 0.0
        %3296 = vmatprep.subr.mxu0 0.0
        %3297 = vmatpush1.msra.mxu0 0.0
        %3298 = vmatprep.subr.mxu0 0.0
        %3299 = vmatpush1.msra.mxu0 0.0
        %3300 = vmatprep.subr.mxu0 0.0
        %3301 = vmatpush1.msra.mxu0 %v1380
        %3302 = vmatprep.subr.mxu0 0.0
        %3303 = vmatpush1.msra.mxu0 %v1379
        %3304 = vmatprep.subr.mxu0 0.0
        %3305 = vmatpush1.msra.mxu0 %v1378
        %3306 = vmatprep.subr.mxu0 0.0
        %3307 = vmatpush1.msra.mxu0 %v1377
        %3308 = vmatprep.subr.mxu0 0.0
        %3309 = vmatpush2.msra.mxu0 0.0
        %3310 = vmatprep.subr.mxu0 0.0
        %3311 = vmatpush2.msra.mxu0 0.0
        %3312 = vmatprep.subr.mxu0 0.0
        %3313 = vmatpush2.msra.mxu0 0.0
        %3314 = vmatprep.subr.mxu0 0.0
        %3315 = vmatpush2.msra.mxu0 0.0
        %3316 = vmatprep.subr.mxu0 0.0
        %3317 = vmatpush2.msra.mxu0 0.0
        %3318 = vmatprep.subr.mxu0 0.0
        %3319 = vmatpush2.msra.mxu0 0.0
        %3320 = vmatprep.subr.mxu0 0.0
        %3321 = vmatpush2.msra.mxu0 0.0
        %3322 = vmatprep.subr.mxu0 0.0
        %3323 = vmatpush2.msra.mxu0 0.0
        %3324 = vmatprep.subr.mxu0 0.0
        %3325 = vmatpush2.msra.mxu0 0.0
        %3326 = vmatprep.subr.mxu0 0.0
        %3327 = vmatpush2.msra.mxu0 0.0
        %3328 = vmatprep.subr.mxu0 0.0
        %3329 = vmatpush2.msra.mxu0 0.0
        %3330 = vmatprep.subr.mxu0 0.0
        %3331 = vmatpush2.msra.mxu0 0.0
        %3332 = vmatprep.subr.mxu0 0.0
        %3333 = vmatpush2.msra.mxu0 0.0
        %3334 = vmatprep.subr.mxu0 0.0
        %3335 = vmatpush2.msra.mxu0 0.0
        %3336 = vmatprep.subr.mxu0 0.0
        %3337 = vmatpush2.msra.mxu0 0.0
        %3338 = vmatprep.subr.mxu0 0.0
        %3339 = vmatpush2.msra.mxu0 0.0
        %3340 = vmatprep.mubr.f32.mxu0 0.0
        %3341 = vmatmul.mubr.f32.gmra.mxu0 %v3260
        %v3342 = vpop.f32.mrf.mxu0
        %v3343 = vadd.f32 0.0, %v3342
        %v3344 = vpop.f32.mrf.mxu0
        %3345 = vmatprep.mubr.f32.mxu0 0.0
        %3346 = vmatmul.mubr.f32.gmra.mxu0 %v3262
        %v3347 = vpop.f32.mrf.mxu0
        %v3348 = vadd.f32 0.0, %v3347
        %v3349 = vpop.f32.mrf.mxu0
        %3350 = vmatprep.mubr.f32.mxu0 0.0
        %3351 = vmatmul.mubr.f32.gmra.mxu0 %v3264
        %v3352 = vpop.f32.mrf.mxu0
        %v3353 = vadd.f32 0.0, %v3352
        %v3354 = vpop.f32.mrf.mxu0
        %3355 = vmatprep.mubr.f32.mxu0 0.0
        %3356 = vmatmul.mubr.f32.gmra.mxu0 %v3266
        %v3357 = vpop.f32.mrf.mxu0
        %v3358 = vadd.f32 0.0, %v3357
        %v3359 = vpop.f32.mrf.mxu0
        %3360 = vmatprep.mubr.f32.mxu0 0.0
        %3361 = vmatmul.mubr.f32.gmra.mxu0 %v3268
        %v3362 = vpop.f32.mrf.mxu0
        %v3363 = vadd.f32 0.0, %v3362
        %v3364 = vpop.f32.mrf.mxu0
        %3365 = vmatprep.mubr.f32.mxu0 0.0
        %3366 = vmatmul.mubr.f32.gmra.mxu0 %v3270
        %v3367 = vpop.f32.mrf.mxu0
        %v3368 = vadd.f32 0.0, %v3367
        %v3369 = vpop.f32.mrf.mxu0
        %3370 = vmatprep.mubr.f32.mxu0 0.0
        %3371 = vmatmul.mubr.f32.gmra.mxu0 %v3272
        %v3372 = vpop.f32.mrf.mxu0
        %v3373 = vadd.f32 0.0, %v3372
        %v3374 = vpop.f32.mrf.mxu0
        %3375 = vmatprep.mubr.f32.mxu0 0.0
        %3376 = vmatmul.mubr.f32.gmra.mxu0 %v3274
        %v3377 = vpop.f32.mrf.mxu0
        %v3378 = vadd.f32 0.0, %v3377
        %v3379 = vpop.f32.mrf.mxu0
        %3380 = vdwg.mxu0
        %v3381 = vadd.f32 %v3228, %v3343
        %v3382 = vadd.f32 %v3229, %v3348
        %v3383 = vadd.f32 %v3230, %v3353
        %v3384 = vadd.f32 %v3231, %v3358
        %v3385 = vadd.f32 %v3232, %v3363
        %v3386 = vadd.f32 %v3233, %v3368
        %v3387 = vadd.f32 %v3234, %v3373
        %v3388 = vadd.f32 %v3235, %v3378
        %v3389 = vtanh.pop %v3381
        %v3390 = vtanh.pop %v3382
        %v3391 = vtanh.pop %v3383
        %v3392 = vtanh.pop %v3384
        %v3393 = vtanh.pop %v3385
        %v3394 = vtanh.pop %v3386
        %v3395 = vtanh.pop %v3387
        %v3396 = vtanh.pop %v3388
        %v3397 = vxor.u32 %v3381, 2147483648
        %v3398 = vxor.u32 %v3382, 2147483648
        %v3399 = vxor.u32 %v3383, 2147483648
        %v3400 = vxor.u32 %v3384, 2147483648
        %v3401 = vxor.u32 %v3385, 2147483648
        %v3402 = vxor.u32 %v3386, 2147483648
        %v3403 = vxor.u32 %v3387, 2147483648
        %v3404 = vxor.u32 %v3388, 2147483648
        %v3405 = vmul.f32 %v3397, 1.442695
        %v3406 = vpow.pop %v3405
        %v3407 = vmul.f32 %v3398, 1.442695
        %v3408 = vpow.pop %v3407
        %v3409 = vmul.f32 %v3399, 1.442695
        %v3410 = vpow.pop %v3409
        %v3411 = vmul.f32 %v3400, 1.442695
        %v3412 = vpow.pop %v3411
        %v3413 = vmul.f32 %v3401, 1.442695
        %v3414 = vpow.pop %v3413
        %v3415 = vmul.f32 %v3402, 1.442695
        %v3416 = vpow.pop %v3415
        %v3417 = vmul.f32 %v3403, 1.442695
        %v3418 = vpow.pop %v3417
        %v3419 = vmul.f32 %v3404, 1.442695
        %v3420 = vpow.pop %v3419
        %v3421 = vadd.f32 %v3406, 1.0
        %v3422 = vadd.f32 %v3408, 1.0
        %v3423 = vadd.f32 %v3410, 1.0
        %v3424 = vadd.f32 %v3412, 1.0
        %v3425 = vadd.f32 %v3414, 1.0
        %v3426 = vadd.f32 %v3416, 1.0
        %v3427 = vadd.f32 %v3418, 1.0
        %v3428 = vadd.f32 %v3420, 1.0
        %v3429 = vrcp.pop %v3421
        %v3430 = vmul.f32 1.0, %v3429
        %v3431 = vrcp.pop %v3422
        %v3432 = vmul.f32 1.0, %v3431
        %v3433 = vrcp.pop %v3423
        %v3434 = vmul.f32 1.0, %v3433
        %v3435 = vrcp.pop %v3424
        %v3436 = vmul.f32 1.0, %v3435
        %v3437 = vrcp.pop %v3425
        %v3438 = vmul.f32 1.0, %v3437
        %v3439 = vrcp.pop %v3426
        %v3440 = vmul.f32 1.0, %v3439
        %v3441 = vrcp.pop %v3427
        %v3442 = vmul.f32 1.0, %v3441
        %v3443 = vrcp.pop %v3428
        %v3444 = vmul.f32 1.0, %v3443
        %v3445 = vsel %vm1385, %v3389, %v3430
        %v3446 = vsel %vm1385, %v3390, %v3432
        %v3447 = vsel %vm1385, %v3391, %v3434
        %v3448 = vsel %vm1385, %v3392, %v3436
        %v3449 = vsel %vm1385, %v3393, %v3438
        %v3450 = vsel %vm1385, %v3394, %v3440
        %v3451 = vsel %vm1385, %v3395, %v3442
        %v3452 = vsel %vm1385, %v3396, %v3444
        %v3453 = vmul.f32 %v3445, %v3171
        %v3454 = vmul.f32 %v3446, %v3172
        %v3455 = vmul.f32 %v3447, %v3173
        %v3456 = vmul.f32 %v3448, %v3174
        %v3457 = vmul.f32 %v3449, %v3175
        %v3458 = vmul.f32 %v3450, %v3176
        %v3459 = vmul.f32 %v3451, %v3177
        %v3460 = vmul.f32 %v3452, %v3178
        %3469 = vrot.lane.b32.xlu0 %v3445, 64
        %v3470 = vpop.permute.xlu0 %3469
        %3471 = vrot.lane.b32.xlu0 %v3446, 64
        %v3472 = vpop.permute.xlu0 %3471
        %3473 = vrot.lane.b32.xlu0 %v3447, 64
        %v3474 = vpop.permute.xlu0 %3473
        %3475 = vrot.lane.b32.xlu0 %v3448, 64
        %v3476 = vpop.permute.xlu0 %3475
        %3477 = vrot.lane.b32.xlu0 %v3449, 64
        %v3478 = vpop.permute.xlu0 %3477
        %3479 = vrot.lane.b32.xlu0 %v3450, 64
        %v3480 = vpop.permute.xlu0 %3479
        %3481 = vrot.lane.b32.xlu0 %v3451, 64
        %v3482 = vpop.permute.xlu0 %3481
        %3483 = vrot.lane.b32.xlu0 %v3452, 64
        %v3484 = vpop.permute.xlu0 %3483
        %v3493 = vmul.f32 %v3445, %v3470
        %v3494 = vmul.f32 %v3446, %v3472
        %v3495 = vmul.f32 %v3447, %v3474
        %v3496 = vmul.f32 %v3448, %v3476
        %v3497 = vmul.f32 %v3449, %v3478
        %v3498 = vmul.f32 %v3450, %v3480
        %v3499 = vmul.f32 %v3451, %v3482
        %v3500 = vmul.f32 %v3452, %v3484
        %3509 = vrot.lane.b32.xlu0 %v3493, 32
        %v3510 = vpop.permute.xlu0 %3509
        %3511 = vrot.lane.b32.xlu0 %v3494, 32
        %v3512 = vpop.permute.xlu0 %3511
        %3513 = vrot.lane.b32.xlu0 %v3495, 32
        %v3514 = vpop.permute.xlu0 %3513
        %3515 = vrot.lane.b32.xlu0 %v3496, 32
        %v3516 = vpop.permute.xlu0 %3515
        %3517 = vrot.lane.b32.xlu0 %v3497, 32
        %v3518 = vpop.permute.xlu0 %3517
        %3519 = vrot.lane.b32.xlu0 %v3498, 32
        %v3520 = vpop.permute.xlu0 %3519
        %3521 = vrot.lane.b32.xlu0 %v3499, 32
        %v3522 = vpop.permute.xlu0 %3521
        %3523 = vrot.lane.b32.xlu0 %v3500, 32
        %v3524 = vpop.permute.xlu0 %3523
        %v3533 = vadd.f32 %v3453, %v3510
        %v3534 = vadd.f32 %v3454, %v3512
        %v3535 = vadd.f32 %v3455, %v3514
        %v3536 = vadd.f32 %v3456, %v3516
        %v3537 = vadd.f32 %v3457, %v3518
        %v3538 = vadd.f32 %v3458, %v3520
        %v3539 = vadd.f32 %v3459, %v3522
        %v3540 = vadd.f32 %v3460, %v3524
        %v3541 = vtanh.pop %v3533
        %v3542 = vtanh.pop %v3534
        %v3543 = vtanh.pop %v3535
        %v3544 = vtanh.pop %v3536
        %v3545 = vtanh.pop %v3537
        %v3546 = vtanh.pop %v3538
        %v3547 = vtanh.pop %v3539
        %v3548 = vtanh.pop %v3540
        %3557 = vrot.lane.b32.xlu0 %v3541, 64
        %v3558 = vpop.permute.xlu0 %3557
        %3559 = vrot.lane.b32.xlu0 %v3542, 64
        %v3560 = vpop.permute.xlu0 %3559
        %3561 = vrot.lane.b32.xlu0 %v3543, 64
        %v3562 = vpop.permute.xlu0 %3561
        %3563 = vrot.lane.b32.xlu0 %v3544, 64
        %v3564 = vpop.permute.xlu0 %3563
        %3565 = vrot.lane.b32.xlu0 %v3545, 64
        %v3566 = vpop.permute.xlu0 %3565
        %3567 = vrot.lane.b32.xlu0 %v3546, 64
        %v3568 = vpop.permute.xlu0 %3567
        %3569 = vrot.lane.b32.xlu0 %v3547, 64
        %v3570 = vpop.permute.xlu0 %3569
        %3571 = vrot.lane.b32.xlu0 %v3548, 64
        %v3572 = vpop.permute.xlu0 %3571
        %v3581 = vmul.f32 %v3445, %v3558
        %v3582 = vmul.f32 %v3446, %v3560
        %v3583 = vmul.f32 %v3447, %v3562
        %v3584 = vmul.f32 %v3448, %v3564
        %v3585 = vmul.f32 %v3449, %v3566
        %v3586 = vmul.f32 %v3450, %v3568
        %v3587 = vmul.f32 %v3451, %v3570
        %v3588 = vmul.f32 %v3452, %v3572
        %s3589 = scalar_lea.vmem [#allocation4], 384
        %v3590 = vld [vmem:[%s3589] sm:$0xff]
        %v3591 = vld [vmem:[%s3589 + $0x8] sm:$0xff]
        %v3592 = vld [vmem:[%s3589 + $0x10] sm:$0xff]
        %v3593 = vld [vmem:[%s3589 + $0x18] sm:$0xff]
        %v3594 = vld [vmem:[%s3589 + $0x20] sm:$0xff]
        %v3595 = vld [vmem:[%s3589 + $0x28] sm:$0xff]
        %v3596 = vld [vmem:[%s3589 + $0x30] sm:$0xff]
        %v3597 = vld [vmem:[%s3589 + $0x38] sm:$0xff]
        %3606 = vrot.lane.b32.xlu0 %v3581, 32
        %v3607 = vpop.permute.xlu0 %3606
        %3608 = vrot.lane.b32.xlu0 %v3582, 32
        %v3609 = vpop.permute.xlu0 %3608
        %3610 = vrot.lane.b32.xlu0 %v3583, 32
        %v3611 = vpop.permute.xlu0 %3610
        %3612 = vrot.lane.b32.xlu0 %v3584, 32
        %v3613 = vpop.permute.xlu0 %3612
        %3614 = vrot.lane.b32.xlu0 %v3585, 32
        %v3615 = vpop.permute.xlu0 %3614
        %3616 = vrot.lane.b32.xlu0 %v3586, 32
        %v3617 = vpop.permute.xlu0 %3616
        %3618 = vrot.lane.b32.xlu0 %v3587, 32
        %v3619 = vpop.permute.xlu0 %3618
        %3620 = vrot.lane.b32.xlu0 %v3588, 32
        %v3621 = vpop.permute.xlu0 %3620
        %v3622 = vsel %vm735, %v3607, 0
        %v3624 = vsel %vm735, %v3609, 0
        %v3626 = vsel %vm735, %v3611, 0
        %v3628 = vsel %vm735, %v3613, 0
        %v3630 = vsel %vm735, %v3615, 0
        %v3632 = vsel %vm735, %v3617, 0
        %v3634 = vsel %vm735, %v3619, 0
        %v3636 = vsel %vm735, %v3621, 0
        %3638 = vmatprep.subr.mxu0 0.0
        %3639 = vmatpush1.msra.mxu0 0.0
        %3640 = vmatprep.subr.mxu0 0.0
        %3641 = vmatpush1.msra.mxu0 0.0
        %3642 = vmatprep.subr.mxu0 0.0
        %3643 = vmatpush1.msra.mxu0 0.0
        %3644 = vmatprep.subr.mxu0 0.0
        %3645 = vmatpush1.msra.mxu0 0.0
        %3646 = vmatprep.subr.mxu0 0.0
        %3647 = vmatpush1.msra.mxu0 0.0
        %3648 = vmatprep.subr.mxu0 0.0
        %3649 = vmatpush1.msra.mxu0 0.0
        %3650 = vmatprep.subr.mxu0 0.0
        %3651 = vmatpush1.msra.mxu0 0.0
        %3652 = vmatprep.subr.mxu0 0.0
        %3653 = vmatpush1.msra.mxu0 0.0
        %3654 = vmatprep.subr.mxu0 0.0
        %3655 = vmatpush1.msra.mxu0 0.0
        %3656 = vmatprep.subr.mxu0 0.0
        %3657 = vmatpush1.msra.mxu0 0.0
        %3658 = vmatprep.subr.mxu0 0.0
        %3659 = vmatpush1.msra.mxu0 0.0
        %3660 = vmatprep.subr.mxu0 0.0
        %3661 = vmatpush1.msra.mxu0 0.0
        %3662 = vmatprep.subr.mxu0 0.0
        %3663 = vmatpush1.msra.mxu0 %v1380
        %3664 = vmatprep.subr.mxu0 0.0
        %3665 = vmatpush1.msra.mxu0 %v1379
        %3666 = vmatprep.subr.mxu0 0.0
        %3667 = vmatpush1.msra.mxu0 %v1378
        %3668 = vmatprep.subr.mxu0 0.0
        %3669 = vmatpush1.msra.mxu0 %v1377
        %3670 = vmatprep.subr.mxu0 0.0
        %3671 = vmatpush2.msra.mxu0 0.0
        %3672 = vmatprep.subr.mxu0 0.0
        %3673 = vmatpush2.msra.mxu0 0.0
        %3674 = vmatprep.subr.mxu0 0.0
        %3675 = vmatpush2.msra.mxu0 0.0
        %3676 = vmatprep.subr.mxu0 0.0
        %3677 = vmatpush2.msra.mxu0 0.0
        %3678 = vmatprep.subr.mxu0 0.0
        %3679 = vmatpush2.msra.mxu0 0.0
        %3680 = vmatprep.subr.mxu0 0.0
        %3681 = vmatpush2.msra.mxu0 0.0
        %3682 = vmatprep.subr.mxu0 0.0
        %3683 = vmatpush2.msra.mxu0 0.0
        %3684 = vmatprep.subr.mxu0 0.0
        %3685 = vmatpush2.msra.mxu0 0.0
        %3686 = vmatprep.subr.mxu0 0.0
        %3687 = vmatpush2.msra.mxu0 0.0
        %3688 = vmatprep.subr.mxu0 0.0
        %3689 = vmatpush2.msra.mxu0 0.0
        %3690 = vmatprep.subr.mxu0 0.0
        %3691 = vmatpush2.msra.mxu0 0.0
        %3692 = vmatprep.subr.mxu0 0.0
        %3693 = vmatpush2.msra.mxu0 0.0
        %3694 = vmatprep.subr.mxu0 0.0
        %3695 = vmatpush2.msra.mxu0 0.0
        %3696 = vmatprep.subr.mxu0 0.0
        %3697 = vmatpush2.msra.mxu0 0.0
        %3698 = vmatprep.subr.mxu0 0.0
        %3699 = vmatpush2.msra.mxu0 0.0
        %3700 = vmatprep.subr.mxu0 0.0
        %3701 = vmatpush2.msra.mxu0 0.0
        %3702 = vmatprep.mubr.f32.mxu0 0.0
        %3703 = vmatmul.mubr.f32.gmra.mxu0 %v3622
        %v3704 = vpop.f32.mrf.mxu0
        %v3705 = vadd.f32 0.0, %v3704
        %v3706 = vpop.f32.mrf.mxu0
        %3707 = vmatprep.mubr.f32.mxu0 0.0
        %3708 = vmatmul.mubr.f32.gmra.mxu0 %v3624
        %v3709 = vpop.f32.mrf.mxu0
        %v3710 = vadd.f32 0.0, %v3709
        %v3711 = vpop.f32.mrf.mxu0
        %3712 = vmatprep.mubr.f32.mxu0 0.0
        %3713 = vmatmul.mubr.f32.gmra.mxu0 %v3626
        %v3714 = vpop.f32.mrf.mxu0
        %v3715 = vadd.f32 0.0, %v3714
        %v3716 = vpop.f32.mrf.mxu0
        %3717 = vmatprep.mubr.f32.mxu0 0.0
        %3718 = vmatmul.mubr.f32.gmra.mxu0 %v3628
        %v3719 = vpop.f32.mrf.mxu0
        %v3720 = vadd.f32 0.0, %v3719
        %v3721 = vpop.f32.mrf.mxu0
        %3722 = vmatprep.mubr.f32.mxu0 0.0
        %3723 = vmatmul.mubr.f32.gmra.mxu0 %v3630
        %v3724 = vpop.f32.mrf.mxu0
        %v3725 = vadd.f32 0.0, %v3724
        %v3726 = vpop.f32.mrf.mxu0
        %3727 = vmatprep.mubr.f32.mxu0 0.0
        %3728 = vmatmul.mubr.f32.gmra.mxu0 %v3632
        %v3729 = vpop.f32.mrf.mxu0
        %v3730 = vadd.f32 0.0, %v3729
        %v3731 = vpop.f32.mrf.mxu0
        %3732 = vmatprep.mubr.f32.mxu0 0.0
        %3733 = vmatmul.mubr.f32.gmra.mxu0 %v3634
        %v3734 = vpop.f32.mrf.mxu0
        %v3735 = vadd.f32 0.0, %v3734
        %v3736 = vpop.f32.mrf.mxu0
        %3737 = vmatprep.mubr.f32.mxu0 0.0
        %3738 = vmatmul.mubr.f32.gmra.mxu0 %v3636
        %v3739 = vpop.f32.mrf.mxu0
        %v3740 = vadd.f32 0.0, %v3739
        %v3741 = vpop.f32.mrf.mxu0
        %3742 = vdwg.mxu0
        %v3743 = vadd.f32 %v3590, %v3705
        %v3744 = vadd.f32 %v3591, %v3710
        %v3745 = vadd.f32 %v3592, %v3715
        %v3746 = vadd.f32 %v3593, %v3720
        %v3747 = vadd.f32 %v3594, %v3725
        %v3748 = vadd.f32 %v3595, %v3730
        %v3749 = vadd.f32 %v3596, %v3735
        %v3750 = vadd.f32 %v3597, %v3740
        %v3751 = vtanh.pop %v3743
        %v3752 = vtanh.pop %v3744
        %v3753 = vtanh.pop %v3745
        %v3754 = vtanh.pop %v3746
        %v3755 = vtanh.pop %v3747
        %v3756 = vtanh.pop %v3748
        %v3757 = vtanh.pop %v3749
        %v3758 = vtanh.pop %v3750
        %v3759 = vxor.u32 %v3743, 2147483648
        %v3760 = vxor.u32 %v3744, 2147483648
        %v3761 = vxor.u32 %v3745, 2147483648
        %v3762 = vxor.u32 %v3746, 2147483648
        %v3763 = vxor.u32 %v3747, 2147483648
        %v3764 = vxor.u32 %v3748, 2147483648
        %v3765 = vxor.u32 %v3749, 2147483648
        %v3766 = vxor.u32 %v3750, 2147483648
        %v3767 = vmul.f32 %v3759, 1.442695
        %v3768 = vpow.pop %v3767
        %v3769 = vmul.f32 %v3760, 1.442695
        %v3770 = vpow.pop %v3769
        %v3771 = vmul.f32 %v3761, 1.442695
        %v3772 = vpow.pop %v3771
        %v3773 = vmul.f32 %v3762, 1.442695
        %v3774 = vpow.pop %v3773
        %v3775 = vmul.f32 %v3763, 1.442695
        %v3776 = vpow.pop %v3775
        %v3777 = vmul.f32 %v3764, 1.442695
        %v3778 = vpow.pop %v3777
        %v3779 = vmul.f32 %v3765, 1.442695
        %v3780 = vpow.pop %v3779
        %v3781 = vmul.f32 %v3766, 1.442695
        %v3782 = vpow.pop %v3781
        %v3783 = vadd.f32 %v3768, 1.0
        %v3784 = vadd.f32 %v3770, 1.0
        %v3785 = vadd.f32 %v3772, 1.0
        %v3786 = vadd.f32 %v3774, 1.0
        %v3787 = vadd.f32 %v3776, 1.0
        %v3788 = vadd.f32 %v3778, 1.0
        %v3789 = vadd.f32 %v3780, 1.0
        %v3790 = vadd.f32 %v3782, 1.0
        %v3791 = vrcp.pop %v3783
        %v3792 = vmul.f32 1.0, %v3791
        %v3793 = vrcp.pop %v3784
        %v3794 = vmul.f32 1.0, %v3793
        %v3795 = vrcp.pop %v3785
        %v3796 = vmul.f32 1.0, %v3795
        %v3797 = vrcp.pop %v3786
        %v3798 = vmul.f32 1.0, %v3797
        %v3799 = vrcp.pop %v3787
        %v3800 = vmul.f32 1.0, %v3799
        %v3801 = vrcp.pop %v3788
        %v3802 = vmul.f32 1.0, %v3801
        %v3803 = vrcp.pop %v3789
        %v3804 = vmul.f32 1.0, %v3803
        %v3805 = vrcp.pop %v3790
        %v3806 = vmul.f32 1.0, %v3805
        %v3807 = vsel %vm1385, %v3751, %v3792
        %v3808 = vsel %vm1385, %v3752, %v3794
        %v3809 = vsel %vm1385, %v3753, %v3796
        %v3810 = vsel %vm1385, %v3754, %v3798
        %v3811 = vsel %vm1385, %v3755, %v3800
        %v3812 = vsel %vm1385, %v3756, %v3802
        %v3813 = vsel %vm1385, %v3757, %v3804
        %v3814 = vsel %vm1385, %v3758, %v3806
        %v3815 = vmul.f32 %v3807, %v3533
        %v3816 = vmul.f32 %v3808, %v3534
        %v3817 = vmul.f32 %v3809, %v3535
        %v3818 = vmul.f32 %v3810, %v3536
        %v3819 = vmul.f32 %v3811, %v3537
        %v3820 = vmul.f32 %v3812, %v3538
        %v3821 = vmul.f32 %v3813, %v3539
        %v3822 = vmul.f32 %v3814, %v3540
        %3831 = vrot.lane.b32.xlu0 %v3807, 64
        %v3832 = vpop.permute.xlu0 %3831
        %3833 = vrot.lane.b32.xlu0 %v3808, 64
        %v3834 = vpop.permute.xlu0 %3833
        %3835 = vrot.lane.b32.xlu0 %v3809, 64
        %v3836 = vpop.permute.xlu0 %3835
        %3837 = vrot.lane.b32.xlu0 %v3810, 64
        %v3838 = vpop.permute.xlu0 %3837
        %3839 = vrot.lane.b32.xlu0 %v3811, 64
        %v3840 = vpop.permute.xlu0 %3839
        %3841 = vrot.lane.b32.xlu0 %v3812, 64
        %v3842 = vpop.permute.xlu0 %3841
        %3843 = vrot.lane.b32.xlu0 %v3813, 64
        %v3844 = vpop.permute.xlu0 %3843
        %3845 = vrot.lane.b32.xlu0 %v3814, 64
        %v3846 = vpop.permute.xlu0 %3845
        %v3855 = vmul.f32 %v3807, %v3832
        %v3856 = vmul.f32 %v3808, %v3834
        %v3857 = vmul.f32 %v3809, %v3836
        %v3858 = vmul.f32 %v3810, %v3838
        %v3859 = vmul.f32 %v3811, %v3840
        %v3860 = vmul.f32 %v3812, %v3842
        %v3861 = vmul.f32 %v3813, %v3844
        %v3862 = vmul.f32 %v3814, %v3846
        %3871 = vrot.lane.b32.xlu0 %v3855, 32
        %v3872 = vpop.permute.xlu0 %3871
        %3873 = vrot.lane.b32.xlu0 %v3856, 32
        %v3874 = vpop.permute.xlu0 %3873
        %3875 = vrot.lane.b32.xlu0 %v3857, 32
        %v3876 = vpop.permute.xlu0 %3875
        %3877 = vrot.lane.b32.xlu0 %v3858, 32
        %v3878 = vpop.permute.xlu0 %3877
        %3879 = vrot.lane.b32.xlu0 %v3859, 32
        %v3880 = vpop.permute.xlu0 %3879
        %3881 = vrot.lane.b32.xlu0 %v3860, 32
        %v3882 = vpop.permute.xlu0 %3881
        %3883 = vrot.lane.b32.xlu0 %v3861, 32
        %v3884 = vpop.permute.xlu0 %3883
        %3885 = vrot.lane.b32.xlu0 %v3862, 32
        %v3886 = vpop.permute.xlu0 %3885
        %v3895 = vadd.f32 %v3815, %v3872
        %v3896 = vadd.f32 %v3816, %v3874
        %v3897 = vadd.f32 %v3817, %v3876
        %v3898 = vadd.f32 %v3818, %v3878
        %v3899 = vadd.f32 %v3819, %v3880
        %v3900 = vadd.f32 %v3820, %v3882
        %v3901 = vadd.f32 %v3821, %v3884
        %v3902 = vadd.f32 %v3822, %v3886
        %v3903 = vtanh.pop %v3895
        %v3904 = vtanh.pop %v3896
        %v3905 = vtanh.pop %v3897
        %v3906 = vtanh.pop %v3898
        %v3907 = vtanh.pop %v3899
        %v3908 = vtanh.pop %v3900
        %v3909 = vtanh.pop %v3901
        %v3910 = vtanh.pop %v3902
        %3919 = vrot.lane.b32.xlu0 %v3903, 64
        %v3920 = vpop.permute.xlu0 %3919
        %3921 = vrot.lane.b32.xlu0 %v3904, 64
        %v3922 = vpop.permute.xlu0 %3921
        %3923 = vrot.lane.b32.xlu0 %v3905, 64
        %v3924 = vpop.permute.xlu0 %3923
        %3925 = vrot.lane.b32.xlu0 %v3906, 64
        %v3926 = vpop.permute.xlu0 %3925
        %3927 = vrot.lane.b32.xlu0 %v3907, 64
        %v3928 = vpop.permute.xlu0 %3927
        %3929 = vrot.lane.b32.xlu0 %v3908, 64
        %v3930 = vpop.permute.xlu0 %3929
        %3931 = vrot.lane.b32.xlu0 %v3909, 64
        %v3932 = vpop.permute.xlu0 %3931
        %3933 = vrot.lane.b32.xlu0 %v3910, 64
        %v3934 = vpop.permute.xlu0 %3933
        %v3943 = vmul.f32 %v3807, %v3920
        %v3944 = vmul.f32 %v3808, %v3922
        %v3945 = vmul.f32 %v3809, %v3924
        %v3946 = vmul.f32 %v3810, %v3926
        %v3947 = vmul.f32 %v3811, %v3928
        %v3948 = vmul.f32 %v3812, %v3930
        %v3949 = vmul.f32 %v3813, %v3932
        %v3950 = vmul.f32 %v3814, %v3934
        %s3951 = scalar_lea.vmem [#allocation4], 448
        %v3952 = vld [vmem:[%s3951] sm:$0xff]
        %v3953 = vld [vmem:[%s3951 + $0x8] sm:$0xff]
        %v3954 = vld [vmem:[%s3951 + $0x10] sm:$0xff]
        %v3955 = vld [vmem:[%s3951 + $0x18] sm:$0xff]
        %v3956 = vld [vmem:[%s3951 + $0x20] sm:$0xff]
        %v3957 = vld [vmem:[%s3951 + $0x28] sm:$0xff]
        %v3958 = vld [vmem:[%s3951 + $0x30] sm:$0xff]
        %v3959 = vld [vmem:[%s3951 + $0x38] sm:$0xff]
        %3968 = vrot.lane.b32.xlu0 %v3943, 32
        %v3969 = vpop.permute.xlu0 %3968
        %3970 = vrot.lane.b32.xlu0 %v3944, 32
        %v3971 = vpop.permute.xlu0 %3970
        %3972 = vrot.lane.b32.xlu0 %v3945, 32
        %v3973 = vpop.permute.xlu0 %3972
        %3974 = vrot.lane.b32.xlu0 %v3946, 32
        %v3975 = vpop.permute.xlu0 %3974
        %3976 = vrot.lane.b32.xlu0 %v3947, 32
        %v3977 = vpop.permute.xlu0 %3976
        %3978 = vrot.lane.b32.xlu0 %v3948, 32
        %v3979 = vpop.permute.xlu0 %3978
        %3980 = vrot.lane.b32.xlu0 %v3949, 32
        %v3981 = vpop.permute.xlu0 %3980
        %3982 = vrot.lane.b32.xlu0 %v3950, 32
        %v3983 = vpop.permute.xlu0 %3982
        %v3984 = vsel %vm735, %v3969, 0
        %v3986 = vsel %vm735, %v3971, 0
        %v3988 = vsel %vm735, %v3973, 0
        %v3990 = vsel %vm735, %v3975, 0
        %v3992 = vsel %vm735, %v3977, 0
        %v3994 = vsel %vm735, %v3979, 0
        %v3996 = vsel %vm735, %v3981, 0
        %v3998 = vsel %vm735, %v3983, 0
        %4000 = vmatprep.subr.mxu0 0.0
        %4001 = vmatpush1.msra.mxu0 0.0
        %4002 = vmatprep.subr.mxu0 0.0
        %4003 = vmatpush1.msra.mxu0 0.0
        %4004 = vmatprep.subr.mxu0 0.0
        %4005 = vmatpush1.msra.mxu0 0.0
        %4006 = vmatprep.subr.mxu0 0.0
        %4007 = vmatpush1.msra.mxu0 0.0
        %4008 = vmatprep.subr.mxu0 0.0
        %4009 = vmatpush1.msra.mxu0 0.0
        %4010 = vmatprep.subr.mxu0 0.0
        %4011 = vmatpush1.msra.mxu0 0.0
        %4012 = vmatprep.subr.mxu0 0.0
        %4013 = vmatpush1.msra.mxu0 0.0
        %4014 = vmatprep.subr.mxu0 0.0
        %4015 = vmatpush1.msra.mxu0 0.0
        %4016 = vmatprep.subr.mxu0 0.0
        %4017 = vmatpush1.msra.mxu0 0.0
        %4018 = vmatprep.subr.mxu0 0.0
        %4019 = vmatpush1.msra.mxu0 0.0
        %4020 = vmatprep.subr.mxu0 0.0
        %4021 = vmatpush1.msra.mxu0 0.0
        %4022 = vmatprep.subr.mxu0 0.0
        %4023 = vmatpush1.msra.mxu0 0.0
        %4024 = vmatprep.subr.mxu0 0.0
        %4025 = vmatpush1.msra.mxu0 %v1380
        %4026 = vmatprep.subr.mxu0 0.0
        %4027 = vmatpush1.msra.mxu0 %v1379
        %4028 = vmatprep.subr.mxu0 0.0
        %4029 = vmatpush1.msra.mxu0 %v1378
        %4030 = vmatprep.subr.mxu0 0.0
        %4031 = vmatpush1.msra.mxu0 %v1377
        %4032 = vmatprep.subr.mxu0 0.0
        %4033 = vmatpush2.msra.mxu0 0.0
        %4034 = vmatprep.subr.mxu0 0.0
        %4035 = vmatpush2.msra.mxu0 0.0
        %4036 = vmatprep.subr.mxu0 0.0
        %4037 = vmatpush2.msra.mxu0 0.0
        %4038 = vmatprep.subr.mxu0 0.0
        %4039 = vmatpush2.msra.mxu0 0.0
        %4040 = vmatprep.subr.mxu0 0.0
        %4041 = vmatpush2.msra.mxu0 0.0
        %4042 = vmatprep.subr.mxu0 0.0
        %4043 = vmatpush2.msra.mxu0 0.0
        %4044 = vmatprep.subr.mxu0 0.0
        %4045 = vmatpush2.msra.mxu0 0.0
        %4046 = vmatprep.subr.mxu0 0.0
        %4047 = vmatpush2.msra.mxu0 0.0
        %4048 = vmatprep.subr.mxu0 0.0
        %4049 = vmatpush2.msra.mxu0 0.0
        %4050 = vmatprep.subr.mxu0 0.0
        %4051 = vmatpush2.msra.mxu0 0.0
        %4052 = vmatprep.subr.mxu0 0.0
        %4053 = vmatpush2.msra.mxu0 0.0
        %4054 = vmatprep.subr.mxu0 0.0
        %4055 = vmatpush2.msra.mxu0 0.0
        %4056 = vmatprep.subr.mxu0 0.0
        %4057 = vmatpush2.msra.mxu0 0.0
        %4058 = vmatprep.subr.mxu0 0.0
        %4059 = vmatpush2.msra.mxu0 0.0
        %4060 = vmatprep.subr.mxu0 0.0
        %4061 = vmatpush2.msra.mxu0 0.0
        %4062 = vmatprep.subr.mxu0 0.0
        %4063 = vmatpush2.msra.mxu0 0.0
        %4064 = vmatprep.mubr.f32.mxu0 0.0
        %4065 = vmatmul.mubr.f32.gmra.mxu0 %v3984
        %v4066 = vpop.f32.mrf.mxu0
        %v4067 = vadd.f32 0.0, %v4066
        %v4068 = vpop.f32.mrf.mxu0
        %4069 = vmatprep.mubr.f32.mxu0 0.0
        %4070 = vmatmul.mubr.f32.gmra.mxu0 %v3986
        %v4071 = vpop.f32.mrf.mxu0
        %v4072 = vadd.f32 0.0, %v4071
        %v4073 = vpop.f32.mrf.mxu0
        %4074 = vmatprep.mubr.f32.mxu0 0.0
        %4075 = vmatmul.mubr.f32.gmra.mxu0 %v3988
        %v4076 = vpop.f32.mrf.mxu0
        %v4077 = vadd.f32 0.0, %v4076
        %v4078 = vpop.f32.mrf.mxu0
        %4079 = vmatprep.mubr.f32.mxu0 0.0
        %4080 = vmatmul.mubr.f32.gmra.mxu0 %v3990
        %v4081 = vpop.f32.mrf.mxu0
        %v4082 = vadd.f32 0.0, %v4081
        %v4083 = vpop.f32.mrf.mxu0
        %4084 = vmatprep.mubr.f32.mxu0 0.0
        %4085 = vmatmul.mubr.f32.gmra.mxu0 %v3992
        %v4086 = vpop.f32.mrf.mxu0
        %v4087 = vadd.f32 0.0, %v4086
        %v4088 = vpop.f32.mrf.mxu0
        %4089 = vmatprep.mubr.f32.mxu0 0.0
        %4090 = vmatmul.mubr.f32.gmra.mxu0 %v3994
        %v4091 = vpop.f32.mrf.mxu0
        %v4092 = vadd.f32 0.0, %v4091
        %v4093 = vpop.f32.mrf.mxu0
        %4094 = vmatprep.mubr.f32.mxu0 0.0
        %4095 = vmatmul.mubr.f32.gmra.mxu0 %v3996
        %v4096 = vpop.f32.mrf.mxu0
        %v4097 = vadd.f32 0.0, %v4096
        %v4098 = vpop.f32.mrf.mxu0
        %4099 = vmatprep.mubr.f32.mxu0 0.0
        %4100 = vmatmul.mubr.f32.gmra.mxu0 %v3998
        %v4101 = vpop.f32.mrf.mxu0
        %v4102 = vadd.f32 0.0, %v4101
        %v4103 = vpop.f32.mrf.mxu0
        %4104 = vdwg.mxu0
        %v4105 = vadd.f32 %v3952, %v4067
        %v4106 = vadd.f32 %v3953, %v4072
        %v4107 = vadd.f32 %v3954, %v4077
        %v4108 = vadd.f32 %v3955, %v4082
        %v4109 = vadd.f32 %v3956, %v4087
        %v4110 = vadd.f32 %v3957, %v4092
        %v4111 = vadd.f32 %v3958, %v4097
        %v4112 = vadd.f32 %v3959, %v4102
        %v4113 = vtanh.pop %v4105
        %v4114 = vtanh.pop %v4106
        %v4115 = vtanh.pop %v4107
        %v4116 = vtanh.pop %v4108
        %v4117 = vtanh.pop %v4109
        %v4118 = vtanh.pop %v4110
        %v4119 = vtanh.pop %v4111
        %v4120 = vtanh.pop %v4112
        %v4121 = vxor.u32 %v4105, 2147483648
        %v4122 = vxor.u32 %v4106, 2147483648
        %v4123 = vxor.u32 %v4107, 2147483648
        %v4124 = vxor.u32 %v4108, 2147483648
        %v4125 = vxor.u32 %v4109, 2147483648
        %v4126 = vxor.u32 %v4110, 2147483648
        %v4127 = vxor.u32 %v4111, 2147483648
        %v4128 = vxor.u32 %v4112, 2147483648
        %v4129 = vmul.f32 %v4121, 1.442695
        %v4130 = vpow.pop %v4129
        %v4131 = vmul.f32 %v4122, 1.442695
        %v4132 = vpow.pop %v4131
        %v4133 = vmul.f32 %v4123, 1.442695
        %v4134 = vpow.pop %v4133
        %v4135 = vmul.f32 %v4124, 1.442695
        %v4136 = vpow.pop %v4135
        %v4137 = vmul.f32 %v4125, 1.442695
        %v4138 = vpow.pop %v4137
        %v4139 = vmul.f32 %v4126, 1.442695
        %v4140 = vpow.pop %v4139
        %v4141 = vmul.f32 %v4127, 1.442695
        %v4142 = vpow.pop %v4141
        %v4143 = vmul.f32 %v4128, 1.442695
        %v4144 = vpow.pop %v4143
        %v4145 = vadd.f32 %v4130, 1.0
        %v4146 = vadd.f32 %v4132, 1.0
        %v4147 = vadd.f32 %v4134, 1.0
        %v4148 = vadd.f32 %v4136, 1.0
        %v4149 = vadd.f32 %v4138, 1.0
        %v4150 = vadd.f32 %v4140, 1.0
        %v4151 = vadd.f32 %v4142, 1.0
        %v4152 = vadd.f32 %v4144, 1.0
        %v4153 = vrcp.pop %v4145
        %v4154 = vmul.f32 1.0, %v4153
        %v4155 = vrcp.pop %v4146
        %v4156 = vmul.f32 1.0, %v4155
        %v4157 = vrcp.pop %v4147
        %v4158 = vmul.f32 1.0, %v4157
        %v4159 = vrcp.pop %v4148
        %v4160 = vmul.f32 1.0, %v4159
        %v4161 = vrcp.pop %v4149
        %v4162 = vmul.f32 1.0, %v4161
        %v4163 = vrcp.pop %v4150
        %v4164 = vmul.f32 1.0, %v4163
        %v4165 = vrcp.pop %v4151
        %v4166 = vmul.f32 1.0, %v4165
        %v4167 = vrcp.pop %v4152
        %v4168 = vmul.f32 1.0, %v4167
        %v4169 = vsel %vm1385, %v4113, %v4154
        %v4170 = vsel %vm1385, %v4114, %v4156
        %v4171 = vsel %vm1385, %v4115, %v4158
        %v4172 = vsel %vm1385, %v4116, %v4160
        %v4173 = vsel %vm1385, %v4117, %v4162
        %v4174 = vsel %vm1385, %v4118, %v4164
        %v4175 = vsel %vm1385, %v4119, %v4166
        %v4176 = vsel %vm1385, %v4120, %v4168
        %v4177 = vmul.f32 %v4169, %v3895
        %v4178 = vmul.f32 %v4170, %v3896
        %v4179 = vmul.f32 %v4171, %v3897
        %v4180 = vmul.f32 %v4172, %v3898
        %v4181 = vmul.f32 %v4173, %v3899
        %v4182 = vmul.f32 %v4174, %v3900
        %v4183 = vmul.f32 %v4175, %v3901
        %v4184 = vmul.f32 %v4176, %v3902
        %4193 = vrot.lane.b32.xlu0 %v4169, 64
        %v4194 = vpop.permute.xlu0 %4193
        %4195 = vrot.lane.b32.xlu0 %v4170, 64
        %v4196 = vpop.permute.xlu0 %4195
        %4197 = vrot.lane.b32.xlu0 %v4171, 64
        %v4198 = vpop.permute.xlu0 %4197
        %4199 = vrot.lane.b32.xlu0 %v4172, 64
        %v4200 = vpop.permute.xlu0 %4199
        %4201 = vrot.lane.b32.xlu0 %v4173, 64
        %v4202 = vpop.permute.xlu0 %4201
        %4203 = vrot.lane.b32.xlu0 %v4174, 64
        %v4204 = vpop.permute.xlu0 %4203
        %4205 = vrot.lane.b32.xlu0 %v4175, 64
        %v4206 = vpop.permute.xlu0 %4205
        %4207 = vrot.lane.b32.xlu0 %v4176, 64
        %v4208 = vpop.permute.xlu0 %4207
        %v4217 = vmul.f32 %v4169, %v4194
        %v4218 = vmul.f32 %v4170, %v4196
        %v4219 = vmul.f32 %v4171, %v4198
        %v4220 = vmul.f32 %v4172, %v4200
        %v4221 = vmul.f32 %v4173, %v4202
        %v4222 = vmul.f32 %v4174, %v4204
        %v4223 = vmul.f32 %v4175, %v4206
        %v4224 = vmul.f32 %v4176, %v4208
        %4233 = vrot.lane.b32.xlu0 %v4217, 32
        %v4234 = vpop.permute.xlu0 %4233
        %4235 = vrot.lane.b32.xlu0 %v4218, 32
        %v4236 = vpop.permute.xlu0 %4235
        %4237 = vrot.lane.b32.xlu0 %v4219, 32
        %v4238 = vpop.permute.xlu0 %4237
        %4239 = vrot.lane.b32.xlu0 %v4220, 32
        %v4240 = vpop.permute.xlu0 %4239
        %4241 = vrot.lane.b32.xlu0 %v4221, 32
        %v4242 = vpop.permute.xlu0 %4241
        %4243 = vrot.lane.b32.xlu0 %v4222, 32
        %v4244 = vpop.permute.xlu0 %4243
        %4245 = vrot.lane.b32.xlu0 %v4223, 32
        %v4246 = vpop.permute.xlu0 %4245
        %4247 = vrot.lane.b32.xlu0 %v4224, 32
        %v4248 = vpop.permute.xlu0 %4247
        %v4257 = vadd.f32 %v4177, %v4234
        %v4258 = vadd.f32 %v4178, %v4236
        %v4259 = vadd.f32 %v4179, %v4238
        %v4260 = vadd.f32 %v4180, %v4240
        %v4261 = vadd.f32 %v4181, %v4242
        %v4262 = vadd.f32 %v4182, %v4244
        %v4263 = vadd.f32 %v4183, %v4246
        %v4264 = vadd.f32 %v4184, %v4248
        %v4265 = vtanh.pop %v4257
        %v4266 = vtanh.pop %v4258
        %v4267 = vtanh.pop %v4259
        %v4268 = vtanh.pop %v4260
        %v4269 = vtanh.pop %v4261
        %v4270 = vtanh.pop %v4262
        %v4271 = vtanh.pop %v4263
        %v4272 = vtanh.pop %v4264
        %4281 = vrot.lane.b32.xlu0 %v4265, 64
        %v4282 = vpop.permute.xlu0 %4281
        %4283 = vrot.lane.b32.xlu0 %v4266, 64
        %v4284 = vpop.permute.xlu0 %4283
        %4285 = vrot.lane.b32.xlu0 %v4267, 64
        %v4286 = vpop.permute.xlu0 %4285
        %4287 = vrot.lane.b32.xlu0 %v4268, 64
        %v4288 = vpop.permute.xlu0 %4287
        %4289 = vrot.lane.b32.xlu0 %v4269, 64
        %v4290 = vpop.permute.xlu0 %4289
        %4291 = vrot.lane.b32.xlu0 %v4270, 64
        %v4292 = vpop.permute.xlu0 %4291
        %4293 = vrot.lane.b32.xlu0 %v4271, 64
        %v4294 = vpop.permute.xlu0 %4293
        %4295 = vrot.lane.b32.xlu0 %v4272, 64
        %v4296 = vpop.permute.xlu0 %4295
        %v4305 = vmul.f32 %v4169, %v4282
        %v4306 = vmul.f32 %v4170, %v4284
        %v4307 = vmul.f32 %v4171, %v4286
        %v4308 = vmul.f32 %v4172, %v4288
        %v4309 = vmul.f32 %v4173, %v4290
        %v4310 = vmul.f32 %v4174, %v4292
        %v4311 = vmul.f32 %v4175, %v4294
        %v4312 = vmul.f32 %v4176, %v4296
        %4321 = vrot.lane.b32.xlu0 %v4305, 32
        %v4322 = vpop.permute.xlu0 %4321
        %4323 = vrot.lane.b32.xlu0 %v4306, 32
        %v4324 = vpop.permute.xlu0 %4323
        %4325 = vrot.lane.b32.xlu0 %v4307, 32
        %v4326 = vpop.permute.xlu0 %4325
        %4327 = vrot.lane.b32.xlu0 %v4308, 32
        %v4328 = vpop.permute.xlu0 %4327
        %4329 = vrot.lane.b32.xlu0 %v4309, 32
        %v4330 = vpop.permute.xlu0 %4329
        %4331 = vrot.lane.b32.xlu0 %v4310, 32
        %v4332 = vpop.permute.xlu0 %4331
        %4333 = vrot.lane.b32.xlu0 %v4311, 32
        %v4334 = vpop.permute.xlu0 %4333
        %4335 = vrot.lane.b32.xlu0 %v4312, 32
        %v4336 = vpop.permute.xlu0 %4335
        %4345 = vst.msk [vmem:[#allocation2] sm:$0xff] %vm735, %v4322
        %4346 = vst.msk [vmem:[#allocation2 + $0x8] sm:$0xff] %vm735, %v4324
        %4347 = vst.msk [vmem:[#allocation2 + $0x10] sm:$0xff] %vm735, %v4326
        %4348 = vst.msk [vmem:[#allocation2 + $0x18] sm:$0xff] %vm735, %v4328
        %4349 = vst.msk [vmem:[#allocation2 + $0x20] sm:$0xff] %vm735, %v4330
        %4350 = vst.msk [vmem:[#allocation2 + $0x28] sm:$0xff] %vm735, %v4332
        %4351 = vst.msk [vmem:[#allocation2 + $0x30] sm:$0xff] %vm735, %v4334
        %4352 = vst.msk [vmem:[#allocation2 + $0x38] sm:$0xff] %vm735, %v4336
        %4361 = vrot.lane.b32.xlu0 %v4257, 96
        %v4362 = vpop.permute.xlu0 %4361
        %4363 = vrot.lane.b32.xlu0 %v4258, 96
        %v4364 = vpop.permute.xlu0 %4363
        %4365 = vrot.lane.b32.xlu0 %v4259, 96
        %v4366 = vpop.permute.xlu0 %4365
        %4367 = vrot.lane.b32.xlu0 %v4260, 96
        %v4368 = vpop.permute.xlu0 %4367
        %4369 = vrot.lane.b32.xlu0 %v4261, 96
        %v4370 = vpop.permute.xlu0 %4369
        %4371 = vrot.lane.b32.xlu0 %v4262, 96
        %v4372 = vpop.permute.xlu0 %4371
        %4373 = vrot.lane.b32.xlu0 %v4263, 96
        %v4374 = vpop.permute.xlu0 %4373
        %4375 = vrot.lane.b32.xlu0 %v4264, 96
        %v4376 = vpop.permute.xlu0 %4375
        %4385 = vst.msk [vmem:[#allocation3] sm:$0xff] %vm735, %v4362
        %4386 = vst.msk [vmem:[#allocation3 + $0x8] sm:$0xff] %vm735, %v4364
        %4387 = vst.msk [vmem:[#allocation3 + $0x10] sm:$0xff] %vm735, %v4366
        %4388 = vst.msk [vmem:[#allocation3 + $0x18] sm:$0xff] %vm735, %v4368
        %4389 = vst.msk [vmem:[#allocation3 + $0x20] sm:$0xff] %vm735, %v4370
        %4390 = vst.msk [vmem:[#allocation3 + $0x28] sm:$0xff] %vm735, %v4372
        %4391 = vst.msk [vmem:[#allocation3 + $0x30] sm:$0xff] %vm735, %v4374
        %4392 = vst.msk [vmem:[#allocation3 + $0x38] sm:$0xff] %vm735, %v4376
        // Predicated region
        $region99: #{tpu_custom_call.1} parent=89 // pred_check
          %p4393 = pneg %p639
        $region100: #{tpu_custom_call.1} parent=89 // pred_check_branch
          %4395 = sbr.rel (%p4393) target = $region102
        $region101: #{tpu_custom_call.1} parent=89 // pred_region
          %s4396 = scalar_lea.vmem %s603, 448 [#allocation5]
          %v4397 = vld [vmem:[%s4396] sm:$0xff]
          %v4398 = vld [vmem:[%s4396 + $0x8] sm:$0xff]
          %v4399 = vld [vmem:[%s4396 + $0x10] sm:$0xff]
          %v4400 = vld [vmem:[%s4396 + $0x18] sm:$0xff]
          %v4401 = vld [vmem:[%s4396 + $0x20] sm:$0xff]
          %v4402 = vld [vmem:[%s4396 + $0x28] sm:$0xff]
          %v4403 = vld [vmem:[%s4396 + $0x30] sm:$0xff]
          %v4404 = vld [vmem:[%s4396 + $0x38] sm:$0xff]
          %v4405 = vld [vmem:[%s4] sm:$0xff]
          %v4406 = vld [vmem:[%s4 + $0x8] sm:$0xff]
          %v4407 = vld [vmem:[%s4 + $0x10] sm:$0xff]
          %v4408 = vld [vmem:[%s4 + $0x18] sm:$0xff]
          %v4409 = vld [vmem:[%s5] sm:$0x1]
          %v4411 = vlaneseq
          %v4412 = vshrl.u32 %v4411, 7
          %v4413 = vsub.s32 0, %v4412
          %v4414 = vrot.slane %v4409, %v4413
          %v4417 = vsel %vm735, %v4397, 0
          %v4420 = vsel %vm735, %v4398, 0
          %v4423 = vsel %vm735, %v4399, 0
          %v4426 = vsel %vm735, %v4400, 0
          %v4429 = vsel %vm735, %v4401, 0
          %v4432 = vsel %vm735, %v4402, 0
          %v4435 = vsel %vm735, %v4403, 0
          %v4438 = vsel %vm735, %v4404, 0
          %4440 = vmatprep.subr.mxu0 0.0
          %4441 = vmatpush1.msra.mxu0 0.0
          %4442 = vmatprep.subr.mxu0 0.0
          %4443 = vmatpush1.msra.mxu0 0.0
          %4444 = vmatprep.subr.mxu0 0.0
          %4445 = vmatpush1.msra.mxu0 0.0
          %4446 = vmatprep.subr.mxu0 0.0
          %4447 = vmatpush1.msra.mxu0 0.0
          %4448 = vmatprep.subr.mxu0 0.0
          %4449 = vmatpush1.msra.mxu0 0.0
          %4450 = vmatprep.subr.mxu0 0.0
          %4451 = vmatpush1.msra.mxu0 0.0
          %4452 = vmatprep.subr.mxu0 0.0
          %4453 = vmatpush1.msra.mxu0 0.0
          %4454 = vmatprep.subr.mxu0 0.0
          %4455 = vmatpush1.msra.mxu0 0.0
          %4456 = vmatprep.subr.mxu0 0.0
          %4457 = vmatpush1.msra.mxu0 0.0
          %4458 = vmatprep.subr.mxu0 0.0
          %4459 = vmatpush1.msra.mxu0 0.0
          %4460 = vmatprep.subr.mxu0 0.0
          %4461 = vmatpush1.msra.mxu0 0.0
          %4462 = vmatprep.subr.mxu0 0.0
          %4463 = vmatpush1.msra.mxu0 0.0
          %4464 = vmatprep.subr.mxu0 0.0
          %4465 = vmatpush1.msra.mxu0 %v4408
          %4466 = vmatprep.subr.mxu0 0.0
          %4467 = vmatpush1.msra.mxu0 %v4407
          %4468 = vmatprep.subr.mxu0 0.0
          %4469 = vmatpush1.msra.mxu0 %v4406
          %4470 = vmatprep.subr.mxu0 0.0
          %4471 = vmatpush1.msra.mxu0 %v4405
          %4472 = vmatprep.subr.mxu0 0.0
          %4473 = vmatpush2.msra.mxu0 0.0
          %4474 = vmatprep.subr.mxu0 0.0
          %4475 = vmatpush2.msra.mxu0 0.0
          %4476 = vmatprep.subr.mxu0 0.0
          %4477 = vmatpush2.msra.mxu0 0.0
          %4478 = vmatprep.subr.mxu0 0.0
          %4479 = vmatpush2.msra.mxu0 0.0
          %4480 = vmatprep.subr.mxu0 0.0
          %4481 = vmatpush2.msra.mxu0 0.0
          %4482 = vmatprep.subr.mxu0 0.0
          %4483 = vmatpush2.msra.mxu0 0.0
          %4484 = vmatprep.subr.mxu0 0.0
          %4485 = vmatpush2.msra.mxu0 0.0
          %4486 = vmatprep.subr.mxu0 0.0
          %4487 = vmatpush2.msra.mxu0 0.0
          %4488 = vmatprep.subr.mxu0 0.0
          %4489 = vmatpush2.msra.mxu0 0.0
          %4490 = vmatprep.subr.mxu0 0.0
          %4491 = vmatpush2.msra.mxu0 0.0
          %4492 = vmatprep.subr.mxu0 0.0
          %4493 = vmatpush2.msra.mxu0 0.0
          %4494 = vmatprep.subr.mxu0 0.0
          %4495 = vmatpush2.msra.mxu0 0.0
          %4496 = vmatprep.subr.mxu0 0.0
          %4497 = vmatpush2.msra.mxu0 0.0
          %4498 = vmatprep.subr.mxu0 0.0
          %4499 = vmatpush2.msra.mxu0 0.0
          %4500 = vmatprep.subr.mxu0 0.0
          %4501 = vmatpush2.msra.mxu0 0.0
          %4502 = vmatprep.subr.mxu0 0.0
          %4503 = vmatpush2.msra.mxu0 0.0
          %4504 = vmatprep.mubr.f32.mxu0 0.0
          %4505 = vmatmul.mubr.f32.gmra.mxu0 %v4417
          %v4506 = vpop.f32.mrf.mxu0
          %v4507 = vadd.f32 %v4414, %v4506
          %v4508 = vpop.f32.mrf.mxu0
          %4509 = vmatprep.mubr.f32.mxu0 0.0
          %4510 = vmatmul.mubr.f32.gmra.mxu0 %v4420
          %v4511 = vpop.f32.mrf.mxu0
          %v4512 = vadd.f32 %v4414, %v4511
          %v4513 = vpop.f32.mrf.mxu0
          %4514 = vmatprep.mubr.f32.mxu0 0.0
          %4515 = vmatmul.mubr.f32.gmra.mxu0 %v4423
          %v4516 = vpop.f32.mrf.mxu0
          %v4517 = vadd.f32 %v4414, %v4516
          %v4518 = vpop.f32.mrf.mxu0
          %4519 = vmatprep.mubr.f32.mxu0 0.0
          %4520 = vmatmul.mubr.f32.gmra.mxu0 %v4426
          %v4521 = vpop.f32.mrf.mxu0
          %v4522 = vadd.f32 %v4414, %v4521
          %v4523 = vpop.f32.mrf.mxu0
          %4524 = vmatprep.mubr.f32.mxu0 0.0
          %4525 = vmatmul.mubr.f32.gmra.mxu0 %v4429
          %v4526 = vpop.f32.mrf.mxu0
          %v4527 = vadd.f32 %v4414, %v4526
          %v4528 = vpop.f32.mrf.mxu0
          %4529 = vmatprep.mubr.f32.mxu0 0.0
          %4530 = vmatmul.mubr.f32.gmra.mxu0 %v4432
          %v4531 = vpop.f32.mrf.mxu0
          %v4532 = vadd.f32 %v4414, %v4531
          %v4533 = vpop.f32.mrf.mxu0
          %4534 = vmatprep.mubr.f32.mxu0 0.0
          %4535 = vmatmul.mubr.f32.gmra.mxu0 %v4435
          %v4536 = vpop.f32.mrf.mxu0
          %v4537 = vadd.f32 %v4414, %v4536
          %v4538 = vpop.f32.mrf.mxu0
          %4539 = vmatprep.mubr.f32.mxu0 0.0
          %4540 = vmatmul.mubr.f32.gmra.mxu0 %v4438
          %v4541 = vpop.f32.mrf.mxu0
          %v4542 = vadd.f32 %v4414, %v4541
          %v4543 = vpop.f32.mrf.mxu0
          %4544 = vdwg.mxu0
          %v4545 = vtanh.pop %v4507
          %v4546 = vtanh.pop %v4512
          %v4547 = vtanh.pop %v4517
          %v4548 = vtanh.pop %v4522
          %v4549 = vtanh.pop %v4527
          %v4550 = vtanh.pop %v4532
          %v4551 = vtanh.pop %v4537
          %v4552 = vtanh.pop %v4542
          %v4553 = vxor.u32 %v4507, 2147483648
          %v4554 = vxor.u32 %v4512, 2147483648
          %v4555 = vxor.u32 %v4517, 2147483648
          %v4556 = vxor.u32 %v4522, 2147483648
          %v4557 = vxor.u32 %v4527, 2147483648
          %v4558 = vxor.u32 %v4532, 2147483648
          %v4559 = vxor.u32 %v4537, 2147483648
          %v4560 = vxor.u32 %v4542, 2147483648
          %v4561 = vmul.f32 %v4553, 1.442695
          %v4562 = vpow.pop %v4561
          %v4563 = vmul.f32 %v4554, 1.442695
          %v4564 = vpow.pop %v4563
          %v4565 = vmul.f32 %v4555, 1.442695
          %v4566 = vpow.pop %v4565
          %v4567 = vmul.f32 %v4556, 1.442695
          %v4568 = vpow.pop %v4567
          %v4569 = vmul.f32 %v4557, 1.442695
          %v4570 = vpow.pop %v4569
          %v4571 = vmul.f32 %v4558, 1.442695
          %v4572 = vpow.pop %v4571
          %v4573 = vmul.f32 %v4559, 1.442695
          %v4574 = vpow.pop %v4573
          %v4575 = vmul.f32 %v4560, 1.442695
          %v4576 = vpow.pop %v4575
          %v4577 = vadd.f32 %v4562, 1.0
          %v4578 = vadd.f32 %v4564, 1.0
          %v4579 = vadd.f32 %v4566, 1.0
          %v4580 = vadd.f32 %v4568, 1.0
          %v4581 = vadd.f32 %v4570, 1.0
          %v4582 = vadd.f32 %v4572, 1.0
          %v4583 = vadd.f32 %v4574, 1.0
          %v4584 = vadd.f32 %v4576, 1.0
          %v4585 = vrcp.pop %v4577
          %v4586 = vmul.f32 1.0, %v4585
          %v4587 = vrcp.pop %v4578
          %v4588 = vmul.f32 1.0, %v4587
          %v4589 = vrcp.pop %v4579
          %v4590 = vmul.f32 1.0, %v4589
          %v4591 = vrcp.pop %v4580
          %v4592 = vmul.f32 1.0, %v4591
          %v4593 = vrcp.pop %v4581
          %v4594 = vmul.f32 1.0, %v4593
          %v4595 = vrcp.pop %v4582
          %v4596 = vmul.f32 1.0, %v4595
          %v4597 = vrcp.pop %v4583
          %v4598 = vmul.f32 1.0, %v4597
          %v4599 = vrcp.pop %v4584
          %v4600 = vmul.f32 1.0, %v4599
          %v4601 = vsel %vm1385, %v4545, %v4586
          %v4602 = vsel %vm1385, %v4546, %v4588
          %v4603 = vsel %vm1385, %v4547, %v4590
          %v4604 = vsel %vm1385, %v4548, %v4592
          %v4605 = vsel %vm1385, %v4549, %v4594
          %v4606 = vsel %vm1385, %v4550, %v4596
          %v4607 = vsel %vm1385, %v4551, %v4598
          %v4608 = vsel %vm1385, %v4552, %v4600
          %4617 = vrot.lane.b32.xlu0 %v4601, 64
          %v4618 = vpop.permute.xlu0 %4617
          %4619 = vrot.lane.b32.xlu0 %v4602, 64
          %v4620 = vpop.permute.xlu0 %4619
          %4621 = vrot.lane.b32.xlu0 %v4603, 64
          %v4622 = vpop.permute.xlu0 %4621
          %4623 = vrot.lane.b32.xlu0 %v4604, 64
          %v4624 = vpop.permute.xlu0 %4623
          %4625 = vrot.lane.b32.xlu0 %v4605, 64
          %v4626 = vpop.permute.xlu0 %4625
          %4627 = vrot.lane.b32.xlu0 %v4606, 64
          %v4628 = vpop.permute.xlu0 %4627
          %4629 = vrot.lane.b32.xlu0 %v4607, 64
          %v4630 = vpop.permute.xlu0 %4629
          %4631 = vrot.lane.b32.xlu0 %v4608, 64
          %v4632 = vpop.permute.xlu0 %4631
          %v4641 = vmul.f32 %v4601, %v4618
          %v4642 = vmul.f32 %v4602, %v4620
          %v4643 = vmul.f32 %v4603, %v4622
          %v4644 = vmul.f32 %v4604, %v4624
          %v4645 = vmul.f32 %v4605, %v4626
          %v4646 = vmul.f32 %v4606, %v4628
          %v4647 = vmul.f32 %v4607, %v4630
          %v4648 = vmul.f32 %v4608, %v4632
          %v4649 = vtanh.pop %v4641
          %v4650 = vtanh.pop %v4642
          %v4651 = vtanh.pop %v4643
          %v4652 = vtanh.pop %v4644
          %v4653 = vtanh.pop %v4645
          %v4654 = vtanh.pop %v4646
          %v4655 = vtanh.pop %v4647
          %v4656 = vtanh.pop %v4648
          %4665 = vrot.lane.b32.xlu0 %v4649, 96
          %v4666 = vpop.permute.xlu0 %4665
          %4667 = vrot.lane.b32.xlu0 %v4650, 96
          %v4668 = vpop.permute.xlu0 %4667
          %4669 = vrot.lane.b32.xlu0 %v4651, 96
          %v4670 = vpop.permute.xlu0 %4669
          %4671 = vrot.lane.b32.xlu0 %v4652, 96
          %v4672 = vpop.permute.xlu0 %4671
          %4673 = vrot.lane.b32.xlu0 %v4653, 96
          %v4674 = vpop.permute.xlu0 %4673
          %4675 = vrot.lane.b32.xlu0 %v4654, 96
          %v4676 = vpop.permute.xlu0 %4675
          %4677 = vrot.lane.b32.xlu0 %v4655, 96
          %v4678 = vpop.permute.xlu0 %4677
          %4679 = vrot.lane.b32.xlu0 %v4656, 96
          %v4680 = vpop.permute.xlu0 %4679
          %v4689 = vmul.f32 %v4601, %v4666
          %v4690 = vmul.f32 %v4602, %v4668
          %v4691 = vmul.f32 %v4603, %v4670
          %v4692 = vmul.f32 %v4604, %v4672
          %v4693 = vmul.f32 %v4605, %v4674
          %v4694 = vmul.f32 %v4606, %v4676
          %v4695 = vmul.f32 %v4607, %v4678
          %v4696 = vmul.f32 %v4608, %v4680
          %v4697 = vld [vmem:[%s6] sm:$0xff]
          %v4698 = vld [vmem:[%s6 + $0x8] sm:$0xff]
          %v4699 = vld [vmem:[%s6 + $0x10] sm:$0xff]
          %v4700 = vld [vmem:[%s6 + $0x18] sm:$0xff]
          %v4701 = vld [vmem:[%s7] sm:$0xff]
          %v4702 = vld [vmem:[%s7 + $0x8] sm:$0xff]
          %v4703 = vld [vmem:[%s7 + $0x10] sm:$0xff]
          %v4704 = vld [vmem:[%s7 + $0x18] sm:$0xff]
          %4713 = vrot.lane.b32.xlu0 %v4689, 32
          %v4714 = vpop.permute.xlu0 %4713
          %4715 = vrot.lane.b32.xlu0 %v4690, 32
          %v4716 = vpop.permute.xlu0 %4715
          %4717 = vrot.lane.b32.xlu0 %v4691, 32
          %v4718 = vpop.permute.xlu0 %4717
          %4719 = vrot.lane.b32.xlu0 %v4692, 32
          %v4720 = vpop.permute.xlu0 %4719
          %4721 = vrot.lane.b32.xlu0 %v4693, 32
          %v4722 = vpop.permute.xlu0 %4721
          %4723 = vrot.lane.b32.xlu0 %v4694, 32
          %v4724 = vpop.permute.xlu0 %4723
          %4725 = vrot.lane.b32.xlu0 %v4695, 32
          %v4726 = vpop.permute.xlu0 %4725
          %4727 = vrot.lane.b32.xlu0 %v4696, 32
          %v4728 = vpop.permute.xlu0 %4727
          %v4729 = vsel %vm735, %v4714, 0
          %v4731 = vsel %vm735, %v4716, 0
          %v4733 = vsel %vm735, %v4718, 0
          %v4735 = vsel %vm735, %v4720, 0
          %v4737 = vsel %vm735, %v4722, 0
          %v4739 = vsel %vm735, %v4724, 0
          %v4741 = vsel %vm735, %v4726, 0
          %v4743 = vsel %vm735, %v4728, 0
          %4745 = vmatprep.subr.mxu0 0.0
          %4746 = vmatpush1.msra.mxu0 0.0
          %4747 = vmatprep.subr.mxu0 0.0
          %4748 = vmatpush1.msra.mxu0 0.0
          %4749 = vmatprep.subr.mxu0 0.0
          %4750 = vmatpush1.msra.mxu0 0.0
          %4751 = vmatprep.subr.mxu0 0.0
          %4752 = vmatpush1.msra.mxu0 0.0
          %4753 = vmatprep.subr.mxu0 0.0
          %4754 = vmatpush1.msra.mxu0 0.0
          %4755 = vmatprep.subr.mxu0 0.0
          %4756 = vmatpush1.msra.mxu0 0.0
          %4757 = vmatprep.subr.mxu0 0.0
          %4758 = vmatpush1.msra.mxu0 0.0
          %4759 = vmatprep.subr.mxu0 0.0
          %4760 = vmatpush1.msra.mxu0 0.0
          %4761 = vmatprep.subr.mxu0 0.0
          %4762 = vmatpush1.msra.mxu0 0.0
          %4763 = vmatprep.subr.mxu0 0.0
          %4764 = vmatpush1.msra.mxu0 0.0
          %4765 = vmatprep.subr.mxu0 0.0
          %4766 = vmatpush1.msra.mxu0 0.0
          %4767 = vmatprep.subr.mxu0 0.0
          %4768 = vmatpush1.msra.mxu0 0.0
          %4769 = vmatprep.subr.mxu0 0.0
          %4770 = vmatpush1.msra.mxu0 %v4704
          %4771 = vmatprep.subr.mxu0 0.0
          %4772 = vmatpush1.msra.mxu0 %v4703
          %4773 = vmatprep.subr.mxu0 0.0
          %4774 = vmatpush1.msra.mxu0 %v4702
          %4775 = vmatprep.subr.mxu0 0.0
          %4776 = vmatpush1.msra.mxu0 %v4701
          %4777 = vmatprep.subr.mxu0 0.0
          %4778 = vmatpush2.msra.mxu0 0.0
          %4779 = vmatprep.subr.mxu0 0.0
          %4780 = vmatpush2.msra.mxu0 0.0
          %4781 = vmatprep.subr.mxu0 0.0
          %4782 = vmatpush2.msra.mxu0 0.0
          %4783 = vmatprep.subr.mxu0 0.0
          %4784 = vmatpush2.msra.mxu0 0.0
          %4785 = vmatprep.subr.mxu0 0.0
          %4786 = vmatpush2.msra.mxu0 0.0
          %4787 = vmatprep.subr.mxu0 0.0
          %4788 = vmatpush2.msra.mxu0 0.0
          %4789 = vmatprep.subr.mxu0 0.0
          %4790 = vmatpush2.msra.mxu0 0.0
          %4791 = vmatprep.subr.mxu0 0.0
          %4792 = vmatpush2.msra.mxu0 0.0
          %4793 = vmatprep.subr.mxu0 0.0
          %4794 = vmatpush2.msra.mxu0 0.0
          %4795 = vmatprep.subr.mxu0 0.0
          %4796 = vmatpush2.msra.mxu0 0.0
          %4797 = vmatprep.subr.mxu0 0.0
          %4798 = vmatpush2.msra.mxu0 0.0
          %4799 = vmatprep.subr.mxu0 0.0
          %4800 = vmatpush2.msra.mxu0 0.0
          %4801 = vmatprep.subr.mxu0 0.0
          %4802 = vmatpush2.msra.mxu0 0.0
          %4803 = vmatprep.subr.mxu0 0.0
          %4804 = vmatpush2.msra.mxu0 0.0
          %4805 = vmatprep.subr.mxu0 0.0
          %4806 = vmatpush2.msra.mxu0 0.0
          %4807 = vmatprep.subr.mxu0 0.0
          %4808 = vmatpush2.msra.mxu0 0.0
          %4809 = vmatprep.mubr.f32.mxu0 0.0
          %4810 = vmatmul.mubr.f32.gmra.mxu0 %v4729
          %v4811 = vpop.f32.mrf.mxu0
          %v4812 = vadd.f32 0.0, %v4811
          %v4813 = vpop.f32.mrf.mxu0
          %4814 = vmatprep.mubr.f32.mxu0 0.0
          %4815 = vmatmul.mubr.f32.gmra.mxu0 %v4731
          %v4816 = vpop.f32.mrf.mxu0
          %v4817 = vadd.f32 0.0, %v4816
          %v4818 = vpop.f32.mrf.mxu0
          %4819 = vmatprep.mubr.f32.mxu0 0.0
          %4820 = vmatmul.mubr.f32.gmra.mxu0 %v4733
          %v4821 = vpop.f32.mrf.mxu0
          %v4822 = vadd.f32 0.0, %v4821
          %v4823 = vpop.f32.mrf.mxu0
          %4824 = vmatprep.mubr.f32.mxu0 0.0
          %4825 = vmatmul.mubr.f32.gmra.mxu0 %v4735
          %v4826 = vpop.f32.mrf.mxu0
          %v4827 = vadd.f32 0.0, %v4826
          %v4828 = vpop.f32.mrf.mxu0
          %4829 = vmatprep.mubr.f32.mxu0 0.0
          %4830 = vmatmul.mubr.f32.gmra.mxu0 %v4737
          %v4831 = vpop.f32.mrf.mxu0
          %v4832 = vadd.f32 0.0, %v4831
          %v4833 = vpop.f32.mrf.mxu0
          %4834 = vmatprep.mubr.f32.mxu0 0.0
          %4835 = vmatmul.mubr.f32.gmra.mxu0 %v4739
          %v4836 = vpop.f32.mrf.mxu0
          %v4837 = vadd.f32 0.0, %v4836
          %v4838 = vpop.f32.mrf.mxu0
          %4839 = vmatprep.mubr.f32.mxu0 0.0
          %4840 = vmatmul.mubr.f32.gmra.mxu0 %v4741
          %v4841 = vpop.f32.mrf.mxu0
          %v4842 = vadd.f32 0.0, %v4841
          %v4843 = vpop.f32.mrf.mxu0
          %4844 = vmatprep.mubr.f32.mxu0 0.0
          %4845 = vmatmul.mubr.f32.gmra.mxu0 %v4743
          %v4846 = vpop.f32.mrf.mxu0
          %v4847 = vadd.f32 0.0, %v4846
          %v4848 = vpop.f32.mrf.mxu0
          %4849 = vdwg.mxu0
          %v4850 = vsel %vm735, %v4322, 0
          %v4852 = vsel %vm735, %v4324, 0
          %v4854 = vsel %vm735, %v4326, 0
          %v4856 = vsel %vm735, %v4328, 0
          %v4858 = vsel %vm735, %v4330, 0
          %v4860 = vsel %vm735, %v4332, 0
          %v4862 = vsel %vm735, %v4334, 0
          %v4864 = vsel %vm735, %v4336, 0
          %4866 = vmatprep.subr.mxu0 0.0
          %4867 = vmatpush1.msra.mxu0 0.0
          %4868 = vmatprep.subr.mxu0 0.0
          %4869 = vmatpush1.msra.mxu0 0.0
          %4870 = vmatprep.subr.mxu0 0.0
          %4871 = vmatpush1.msra.mxu0 0.0
          %4872 = vmatprep.subr.mxu0 0.0
          %4873 = vmatpush1.msra.mxu0 0.0
          %4874 = vmatprep.subr.mxu0 0.0
          %4875 = vmatpush1.msra.mxu0 0.0
          %4876 = vmatprep.subr.mxu0 0.0
          %4877 = vmatpush1.msra.mxu0 0.0
          %4878 = vmatprep.subr.mxu0 0.0
          %4879 = vmatpush1.msra.mxu0 0.0
          %4880 = vmatprep.subr.mxu0 0.0
          %4881 = vmatpush1.msra.mxu0 0.0
          %4882 = vmatprep.subr.mxu0 0.0
          %4883 = vmatpush1.msra.mxu0 0.0
          %4884 = vmatprep.subr.mxu0 0.0
          %4885 = vmatpush1.msra.mxu0 0.0
          %4886 = vmatprep.subr.mxu0 0.0
          %4887 = vmatpush1.msra.mxu0 0.0
          %4888 = vmatprep.subr.mxu0 0.0
          %4889 = vmatpush1.msra.mxu0 0.0
          %4890 = vmatprep.subr.mxu0 0.0
          %4891 = vmatpush1.msra.mxu0 %v4700
          %4892 = vmatprep.subr.mxu0 0.0
          %4893 = vmatpush1.msra.mxu0 %v4699
          %4894 = vmatprep.subr.mxu0 0.0
          %4895 = vmatpush1.msra.mxu0 %v4698
          %4896 = vmatprep.subr.mxu0 0.0
          %4897 = vmatpush1.msra.mxu0 %v4697
          %4898 = vmatprep.subr.mxu0 0.0
          %4899 = vmatpush2.msra.mxu0 0.0
          %4900 = vmatprep.subr.mxu0 0.0
          %4901 = vmatpush2.msra.mxu0 0.0
          %4902 = vmatprep.subr.mxu0 0.0
          %4903 = vmatpush2.msra.mxu0 0.0
          %4904 = vmatprep.subr.mxu0 0.0
          %4905 = vmatpush2.msra.mxu0 0.0
          %4906 = vmatprep.subr.mxu0 0.0
          %4907 = vmatpush2.msra.mxu0 0.0
          %4908 = vmatprep.subr.mxu0 0.0
          %4909 = vmatpush2.msra.mxu0 0.0
          %4910 = vmatprep.subr.mxu0 0.0
          %4911 = vmatpush2.msra.mxu0 0.0
          %4912 = vmatprep.subr.mxu0 0.0
          %4913 = vmatpush2.msra.mxu0 0.0
          %4914 = vmatprep.subr.mxu0 0.0
          %4915 = vmatpush2.msra.mxu0 0.0
          %4916 = vmatprep.subr.mxu0 0.0
          %4917 = vmatpush2.msra.mxu0 0.0
          %4918 = vmatprep.subr.mxu0 0.0
          %4919 = vmatpush2.msra.mxu0 0.0
          %4920 = vmatprep.subr.mxu0 0.0
          %4921 = vmatpush2.msra.mxu0 0.0
          %4922 = vmatprep.subr.mxu0 0.0
          %4923 = vmatpush2.msra.mxu0 0.0
          %4924 = vmatprep.subr.mxu0 0.0
          %4925 = vmatpush2.msra.mxu0 0.0
          %4926 = vmatprep.subr.mxu0 0.0
          %4927 = vmatpush2.msra.mxu0 0.0
          %4928 = vmatprep.subr.mxu0 0.0
          %4929 = vmatpush2.msra.mxu0 0.0
          %4930 = vmatprep.mubr.f32.mxu0 0.0
          %4931 = vmatmul.mubr.f32.gmra.mxu0 %v4850
          %v4932 = vpop.f32.mrf.mxu0
          %v4933 = vadd.f32 %v4812, %v4932
          %v4934 = vpop.f32.mrf.mxu0
          %4935 = vmatprep.mubr.f32.mxu0 0.0
          %4936 = vmatmul.mubr.f32.gmra.mxu0 %v4852
          %v4937 = vpop.f32.mrf.mxu0
          %v4938 = vadd.f32 %v4817, %v4937
          %v4939 = vpop.f32.mrf.mxu0
          %4940 = vmatprep.mubr.f32.mxu0 0.0
          %4941 = vmatmul.mubr.f32.gmra.mxu0 %v4854
          %v4942 = vpop.f32.mrf.mxu0
          %v4943 = vadd.f32 %v4822, %v4942
          %v4944 = vpop.f32.mrf.mxu0
          %4945 = vmatprep.mubr.f32.mxu0 0.0
          %4946 = vmatmul.mubr.f32.gmra.mxu0 %v4856
          %v4947 = vpop.f32.mrf.mxu0
          %v4948 = vadd.f32 %v4827, %v4947
          %v4949 = vpop.f32.mrf.mxu0
          %4950 = vmatprep.mubr.f32.mxu0 0.0
          %4951 = vmatmul.mubr.f32.gmra.mxu0 %v4858
          %v4952 = vpop.f32.mrf.mxu0
          %v4953 = vadd.f32 %v4832, %v4952
          %v4954 = vpop.f32.mrf.mxu0
          %4955 = vmatprep.mubr.f32.mxu0 0.0
          %4956 = vmatmul.mubr.f32.gmra.mxu0 %v4860
          %v4957 = vpop.f32.mrf.mxu0
          %v4958 = vadd.f32 %v4837, %v4957
          %v4959 = vpop.f32.mrf.mxu0
          %4960 = vmatprep.mubr.f32.mxu0 0.0
          %4961 = vmatmul.mubr.f32.gmra.mxu0 %v4862
          %v4962 = vpop.f32.mrf.mxu0
          %v4963 = vadd.f32 %v4842, %v4962
          %v4964 = vpop.f32.mrf.mxu0
          %4965 = vmatprep.mubr.f32.mxu0 0.0
          %4966 = vmatmul.mubr.f32.gmra.mxu0 %v4864
          %v4967 = vpop.f32.mrf.mxu0
          %v4968 = vadd.f32 %v4847, %v4967
          %v4969 = vpop.f32.mrf.mxu0
          %4970 = vdwg.mxu0
          %v4971 = vld [vmem:[%s8] sm:$0x1]
          %v4973 = vlaneseq
          %v4974 = vshrl.u32 %v4973, 7
          %v4975 = vsub.s32 0, %v4974
          %v4976 = vrot.slane %v4971, %v4975
          %v4978 = vadd.f32 %v4933, %v4976
          %v4979 = vadd.f32 %v4938, %v4976
          %v4980 = vadd.f32 %v4943, %v4976
          %v4981 = vadd.f32 %v4948, %v4976
          %v4982 = vadd.f32 %v4953, %v4976
          %v4983 = vadd.f32 %v4958, %v4976
          %v4984 = vadd.f32 %v4963, %v4976
          %v4985 = vadd.f32 %v4968, %v4976
          %4986 = vst [vmem:[%s635] sm:$0xff] %v4978
          %4987 = vst [vmem:[%s635 + $0x8] sm:$0xff] %v4979
          %4988 = vst [vmem:[%s635 + $0x10] sm:$0xff] %v4980
          %4989 = vst [vmem:[%s635 + $0x18] sm:$0xff] %v4981
          %4990 = vst [vmem:[%s635 + $0x20] sm:$0xff] %v4982
          %4991 = vst [vmem:[%s635 + $0x28] sm:$0xff] %v4983
          %4992 = vst [vmem:[%s635 + $0x30] sm:$0xff] %v4984
          %4993 = vst [vmem:[%s635 + $0x38] sm:$0xff] %v4985
        $region102: #{tpu_custom_call.1} parent=89 // pred_fallthru
          _
        %s4994 = sand.u32 %s239, 1
        %s4995 = scalar_lea.sflag [#allocation7], %s4994
        %s4996 = sand.u32 %s239, 1
        %s4997 = smul.addr %s4996, 64
        %s4998 = scalar_lea.vmem [#allocation6], %s4997
        // Predicated region
        $region103: #{tpu_custom_call.1} parent=89 // pred_check
          %p4999 = pneg %p249
        $region104: #{tpu_custom_call.1} parent=89 // pred_check_branch
          %5001 = sbr.rel (%p4999) target = $region106
        $region105: #{tpu_custom_call.1} parent=89 // pred_region
          %s5002 = smul.u32 8, %s27
          %s5004 = ssub.s32 1024, 1024
          %5005 = vsyncadd %s4995, %s5004
          %s5006 = smul.addr %s5002, 128
          %s5007 = scalar_lea.hbm %s9, %s5006
          %s5008 = sshll.u32 %s4998, 4
          %s5009 = int_to_ptr.vmem [resolvable:$true] %s5008
          %5014 = dma.vmem_to_hbm [thread:$0]  %s5009, 1024, %s5007, %s4995, 128, 128, 8
        $region106: #{tpu_custom_call.1} parent=89 // pred_fallthru
          _
      $region90: #{tpu_custom_call.1} parent=5 // pred_fallthru
        _
      %p5015 = scmp.le.s32.totalorder 2, %s18
      // Predicated region
      $region107: #{tpu_custom_call.1} parent=5 // pred_check
        %p5016 = pneg %p5015
      $region108: #{tpu_custom_call.1} parent=5 // pred_check_branch
        %5018 = sbr.rel (%p5016) target = $region110
      $region109: #{tpu_custom_call.1} parent=5 // pred_region
        %s5019 = ssub.s32 %s18, 2
        // Predicated region
        $region111: #{tpu_custom_call.1} parent=109 // pred_check
          %p5020 = pneg %p255
        $region112: #{tpu_custom_call.1} parent=109 // pred_check_branch
          %5022 = sbr.rel (%p5020) target = $region114
        $region113: #{tpu_custom_call.1} parent=109 // pred_region
          %s5023 = sand.u32 %s240, 1
          %s5024 = scalar_lea.sflag [#allocation7], %s5023
          %s5025 = sand.u32 %s240, 1
          %s5026 = smul.addr %s5025, 64
          %s5027 = scalar_lea.vmem [#allocation6], %s5026
          %5028 = dma.done %s5024, 1024
        $region114: #{tpu_custom_call.1} parent=109 // pred_fallthru
          _
      $region110: #{tpu_custom_call.1} parent=5 // pred_fallthru
        _
    $region6: #{tpu_custom_call.1} parent=1 // loop_footer
      %s22 = sadd.s32 1, %s18
    $region7: #{tpu_custom_call.1} parent=1 // loop_footer_branch
      %17 = sbr.rel target = $region3
    $region8: #{tpu_custom_call.1} parent=1 // loop_exit
      _
    %5029 = vsyncpa [#allocation7], 1
    %s5030 = scalar_lea.sflag [#allocation7], 1
    %5031 = vsyncpa %s5030, 1

</llo_original>
